<compile_context>
chip_gen: v7x
topology: tpu7x:2x2x1
jax: 0.10.0
libtpu: 0.0.40
codegen_flags: <defaults>
</compile_context>

<pallas_src>
import functools

import numpy as np
import jax
import jax.numpy as jnp
from jax.experimental import pallas as pl
from jax.experimental.pallas import tpu as pltpu

LN_EPS = 1e-5     # nn.LayerNorm default eps
L2_EPS = 1e-12    # F.normalize default eps

_FALLBACK_ERRORS = tuple(
    e for e in (getattr(pltpu, "LoweringException", None),
                NotImplementedError, ValueError, TypeError)
    if e is not None)


# ----------------------------- helpers ------------------------------------
def _largest_divisor_leq(n, cap):
    cap = max(1, min(n, cap))
    for d in range(cap, 0, -1):
        if n % d == 0:
            return d
    return 1


def _pick_block(n, cap):
    """Largest divisor of n <= cap, preferring multiples of 256 then 128."""
    cap = max(1, min(n, cap))
    for mult in (256, 128):
        d = (cap // mult) * mult
        while d >= mult:
            if n % d == 0:
                return d
            d -= mult
    return _largest_divisor_leq(n, cap)


def _hw_info():
    """(per-core VMEM bytes, bf16-EUP supported)."""
    kind = ""
    try:
        kind = jax.devices()[0].device_kind.lower()
    except Exception:   # no devices yet / CPU driver — keep conservative defaults
        pass
    vmem_cap = None
    try:
        vmem_cap = int(pltpu.get_tpu_info().vmem_capacity_bytes)
    except Exception:
        pass
    if vmem_cap is None:
        if "7x" in kind or "v7" in kind:
            vmem_cap = 64 * 1024 * 1024
        elif kind:
            vmem_cap = 128 * 1024 * 1024
        else:
            vmem_cap = 64 * 1024 * 1024       # unknown -> conservative
    bf16_eup = ("v6" in kind) or ("v7" in kind) or ("7x" in kind)
    return vmem_cap, bf16_eup


def _vmem_estimate_bytes(bb, kxb, n_l, dim, inner, heads, dim_head,
                         in_bytes, mxu_bytes):
    """Rough per-grid-step VMEM footprint (blocks + params + scratch + temps)."""
    rows_x = bb * kxb
    rows_l = bb * n_l
    est = 0
    # double-buffered pipelined blocks: x, latents, out
    est += 2 * rows_x * dim * in_bytes
    est += 4 * rows_l * dim * in_bytes
    # resident parameters (single copy): wkv_x + wqkv_l + wo (+ small vectors)
    est += 6 * dim * inner * mxu_bytes
    est += (5 * inner + 4 * dim + 2 * dim_head) * 4
    # scratch: q (mxu), acc (f32), m/l (f32)
    est += rows_l * inner * (mxu_bytes + 4) + 2 * rows_l * heads * 4
    # live temporaries of the per-chunk x path
    est += rows_x * dim * (4 + mxu_bytes)                    # x_hat f32 + xn
    est += rows_x * 2 * inner * (8 + 2 * mxu_bytes)          # kv proj + casts/splits
    est += rows_l * heads * kxb * 4 * 3                      # sim / p / exp temps
    return int(est)


# ----------------------------- kernel --------------------------------------
def perceiver_attention_kernel(
    x_ref, lat_ref,
    wkv_x_ref, bkv_x_ref, wqkv_l_ref, bqkv_l_ref,
    qs_ref, ks_ref, wo_ref, go_ref, bo_ref,
    o_ref,
    q_s, m_s, l_s, acc_s,
    *, heads, dim_head, mxu_dtype, exp_dtype):
    """Grid = (batch blocks [parallel], x-key chunks [arbitrary])."""
    bb, n_l, dim = lat_ref.shape
    _, kx, _ = x_ref.shape
    inner = heads * dim_head
    j = pl.program_id(1)

    def split_heads(t, rows):
        # (bb*rows, inner) -> (bb*heads, rows, dim_head); run on mxu_dtype data.
        t = t.reshape(bb, rows, heads, dim_head)
        t = jnp.transpose(t, (0, 2, 1, 3))
        return t.reshape(bb * heads, rows, dim_head)

    def centered_norm(t):
        # LayerNorm WITHOUT affine: gamma/beta are folded into the projections.
        mu = jnp.mean(t, axis=-1, keepdims=True)
        var = jnp.mean(jnp.square(t - mu), axis=-1, keepdims=True)
        return (t - mu) * jax.lax.rsqrt(var + LN_EPS)

    def l2norm_scale(t, scale):
        # F.normalize(t, dim=-1) * scale; sum-of-squares and rsqrt in f32 (EUP).
        tf = t.astype(jnp.float32)
        ss = jnp.sum(tf * tf, axis=-1, keepdims=True)
        inv = jax.lax.rsqrt(jnp.maximum(ss, L2_EPS * L2_EPS))
        return (tf * (inv * scale)).astype(mxu_dtype)

    k_scale = ks_ref[...].reshape(1, 1, dim_head)

    def online_update(k_h, v_h):
        # Flash-style running softmax over one block of keys.
        sim = jnp.einsum('bid,bjd->bij', q_s[...], k_h,
                         preferred_element_type=jnp.float32)   # (bb*H, n_l, rows)
        m_new = jnp.maximum(m_s[...], jnp.max(sim, axis=-1, keepdims=True))
        alpha = jnp.exp(m_s[...] - m_new)                       # tiny, keep f32
        p = jnp.exp((sim - m_new).astype(exp_dtype))            # bf16 EUP on v6e/v7x
        l_s[...] = alpha * l_s[...] + jnp.sum(
            p.astype(jnp.float32), axis=-1, keepdims=True)
        acc_s[...] = alpha * acc_s[...] + jnp.einsum(
            'bij,bjd->bid', p.astype(mxu_dtype), v_h,
            preferred_element_type=jnp.float32)
        m_s[...] = m_new

    # ---- first key chunk: init stats, build q, fold the latent keys in ----
    @pl.when(j == 0)
    def _():
        m_s[...] = jnp.full_like(m_s, -jnp.inf)
        l_s[...] = jnp.zeros_like(l_s)
        acc_s[...] = jnp.zeros_like(acc_s)

        lat = lat_ref[...].astype(jnp.float32).reshape(bb * n_l, dim)
        latn = centered_norm(lat).astype(mxu_dtype)
        # single matmul for q|k|v of the latents (gamma folded into weights,
        # beta folded into the (1, 3*inner) bias).
        qkv = (jnp.dot(latn, wqkv_l_ref[...], preferred_element_type=jnp.float32)
               + bqkv_l_ref[...])
        q = qkv[:, :inner].astype(mxu_dtype)
        kl = qkv[:, inner:2 * inner].astype(mxu_dtype)
        vl = qkv[:, 2 * inner:].astype(mxu_dtype)
        # q_scale already includes the attention `scale`.
        q_s[...] = l2norm_scale(split_heads(q, n_l),
                                qs_ref[...].reshape(1, 1, dim_head))
        klh = l2norm_scale(split_heads(kl, n_l), k_scale)
        vlh = split_heads(vl, n_l)
        online_update(klh, vlh)     # latent part of cat((x, latents)) keys

    # ---- current chunk of image-token keys ----
    x = x_ref[...].astype(jnp.float32).reshape(bb * kx, dim)
    xn = centered_norm(x).astype(mxu_dtype)
    kv = (jnp.dot(xn, wkv_x_ref[...], preferred_element_type=jnp.float32)
          + bkv_x_ref[...])
    kxp = kv[:, :inner].astype(mxu_dtype)       # cast BEFORE head-split relayout
    vxp = kv[:, inner:].astype(mxu_dtype)
    kxh = l2norm_scale(split_heads(kxp, kx), k_scale)
    vxh = split_heads(vxp, kx)
    online_update(kxh, vxh)

    # ---- last key chunk: normalize, output projection, final LayerNorm ----
    @pl.when(j == pl.num_programs(1) - 1)
    def _():
        out = acc_s[...] * pl.reciprocal(l_s[...], approx=True)  # (bb*H, n_l, dh)
        out = out.reshape(bb, heads, n_l, dim_head)
        out = jnp.transpose(out, (0, 2, 1, 3)).reshape(bb * n_l, inner)
        proj = jnp.dot(out.astype(mxu_dtype), wo_ref[...],
                       preferred_element_type=jnp.float32)
        mu = jnp.mean(proj, axis=-1, keepdims=True)
        var = jnp.mean(jnp.square(proj - mu), axis=-1, keepdims=True)
        y = (proj - mu) * jax.lax.rsqrt(var + LN_EPS) * go_ref[...] + bo_ref[...]
        o_ref[...] = y.reshape(bb, n_l, dim).astype(o_ref.dtype)


# ----------------------------- wrapper --------------------------------------
def prepare_perceiver_params(params, *, scale=8.0, mxu_dtype=jnp.float32):
    """One-time parameter preparation (LN-affine folding, concat, casts)."""
    f32 = jnp.float32
    gx = params["ln_x_g"].astype(f32).reshape(-1)
    bx = params["ln_x_b"].astype(f32).reshape(-1)
    gl = params["ln_l_g"].astype(f32).reshape(-1)
    bl = params["ln_l_b"].astype(f32).reshape(-1)
    wq = params["wq_t"].astype(f32)     # (dim, inner)
    wk = params["wk_t"].astype(f32)
    wv = params["wv_t"].astype(f32)
    wo = params["wo_t"].astype(f32)     # (inner, dim)

    # LN(x) @ W == x_hat @ (gamma * W) + beta @ W
    wkv_x = jnp.concatenate([wk * gx[:, None], wv * gx[:, None]], axis=1)
    bkv_x = jnp.concatenate([bx @ wk, bx @ wv], axis=0)[None, :]
    wqkv_l = jnp.concatenate(
        [wq * gl[:, None], wk * gl[:, None], wv * gl[:, None]], axis=1)
    bqkv_l = jnp.concatenate([bl @ wq, bl @ wk, bl @ wv], axis=0)[None, :]

    return {
        "wkv_x": wkv_x.astype(mxu_dtype),          # (dim, 2*inner)
        "bkv_x": bkv_x,                            # (1, 2*inner) f32
        "wqkv_l": wqkv_l.astype(mxu_dtype),        # (dim, 3*inner)
        "bqkv_l": bqkv_l,                          # (1, 3*inner) f32
        "q_scale": params["q_scale"].astype(f32).reshape(1, -1) * scale,
        "k_scale": params["k_scale"].astype(f32).reshape(1, -1),
        "wo": wo.astype(mxu_dtype),                # (inner, dim)
        "ln_o_g": params["ln_o_g"].astype(f32).reshape(1, -1),
        "ln_o_b": params["ln_o_b"].astype(f32).reshape(1, -1),
    }


def perceiver_attention(x, latents, prepared, *, heads, dim_head,
                        batch_block=None, kx_block=None, mxu_dtype=None,
                        exp_dtype=None, vmem_limit_bytes=None,
                        x_pipeline_buffers=None):
    b, n_x, dim = x.shape
    _, n_l, _ = latents.shape
    inner = heads * dim_head

    if mxu_dtype is None:
        mxu_dtype = prepared["wkv_x"].dtype
    vmem_cap, bf16_eup = _hw_info()
    if exp_dtype is None:
        # bf16 exp only when the MXU path is already bf16 AND the EUP has a
        # bf16 path (v6e/v7x); keep f32 on v5e / for f32 inputs.
        exp_dtype = (jnp.bfloat16
                     if (np.dtype(mxu_dtype) == np.dtype(jnp.bfloat16) and bf16_eup)
                     else jnp.float32)

    auto_bb, auto_kx = batch_block is None, kx_block is None
    if auto_bb:
        cap = max(1, 256 // max(n_l, 1))          # keep bb*n_l <= 256
        if b >= 2:
            cap = min(cap, b // 2)                # >= 2 parallel steps (v7x 2 TCs)
        batch_block = _largest_divisor_leq(b, max(1, cap))
    if auto_kx:
        kx_block = _pick_block(n_x, 256)

    in_bytes = np.dtype(x.dtype).itemsize
    mxu_bytes = np.dtype(mxu_dtype).itemsize

    def _est():
        return _vmem_estimate_bytes(batch_block, kx_block, n_l, dim, inner,
                                    heads, dim_head, in_bytes, mxu_bytes)

    budget = int(0.7 * vmem_cap)
    while _est() > budget:                        # shrink only auto-chosen dims
        if auto_kx and kx_block > 8 and n_x > 8:
            new_kx = _largest_divisor_leq(n_x, max(1, kx_block // 2))
            if new_kx < kx_block:
                kx_block = new_kx
                continue
        if auto_bb and batch_block > 1:
            batch_block = _largest_divisor_leq(b, max(1, batch_block // 2))
            continue
        break

    if vmem_limit_bytes is None:
        vmem_limit_bytes = int(min(0.8 * vmem_cap,
                                   max(2 * _est(), 32 * 1024 * 1024)))

    assert b % batch_block == 0 and n_x % kx_block == 0
    grid = (b // batch_block, n_x // kx_block)

    param_args = (
        prepared["wkv_x"], prepared["bkv_x"],
        prepared["wqkv_l"], prepared["bqkv_l"],
        prepared["q_scale"], prepared["k_scale"],
        prepared["wo"], prepared["ln_o_g"], prepared["ln_o_b"],
    )

    kernel = functools.partial(perceiver_attention_kernel, heads=heads,
                               dim_head=dim_head, mxu_dtype=mxu_dtype,
                               exp_dtype=exp_dtype)

    if x_pipeline_buffers is None:
        x_spec = pl.BlockSpec((batch_block, kx_block, dim), lambda i, j: (i, j, 0))
    else:
        x_spec = pl.BlockSpec((batch_block, kx_block, dim), lambda i, j: (i, j, 0),
                              pipeline_mode=pl.Buffered(x_pipeline_buffers))
    lat_spec = pl.BlockSpec((batch_block, n_l, dim), lambda i, j: (i, 0, 0))
    out_spec = pl.BlockSpec((batch_block, n_l, dim), lambda i, j: (i, 0, 0))

    scratch = [
        pltpu.VMEM((batch_block * heads, n_l, dim_head), mxu_dtype),    # q
        pltpu.VMEM((batch_block * heads, n_l, 1), jnp.float32),         # running max
        pltpu.VMEM((batch_block * heads, n_l, 1), jnp.float32),         # running sum
        pltpu.VMEM((batch_block * heads, n_l, dim_head), jnp.float32),  # running out
    ]

    def _param_specs(mode):
        specs = []
        for p in param_args:
            nd = p.ndim
            if mode == "vmem":
                # Whole array resident once in VMEM (no pipeline copies).
                specs.append(pl.BlockSpec(memory_space=pltpu.MemorySpace.VMEM))
            elif mode == "buffered1":
                specs.append(pl.BlockSpec(p.shape,
                                          lambda i, j, _nd=nd: (0,) * _nd,
                                          pipeline_mode=pl.Buffered(1)))
            else:
                specs.append(pl.BlockSpec(p.shape,
                                          lambda i, j, _nd=nd: (0,) * _nd))
        return specs

    def run(mode):
        return pl.pallas_call(
            kernel,
            out_shape=jax.ShapeDtypeStruct((b, n_l, dim), x.dtype),
            grid=grid,
            in_specs=[x_spec, lat_spec] + _param_specs(mode),
            out_specs=out_spec,
            scratch_shapes=scratch,
            compiler_params=pltpu.CompilerParams(
                dimension_semantics=("parallel", "arbitrary"),
                vmem_limit_bytes=vmem_limit_bytes),
        )(x, latents, *param_args)

    modes = ("vmem", "buffered1", "blocked")
    for n_mode, mode in enumerate(modes):
        try:
            return run(mode)
        except _FALLBACK_ERRORS:        # narrow: only lowering/spec-form errors
            if n_mode == len(modes) - 1:
                raise


# ----------------------------- reference -----------------------------------
def perceiver_attention_reference(x, latents, params, *, heads, dim_head, scale=8.0):
    """Pure-JAX reference replicating the PyTorch forward (mask=None)."""
    def ln(t, g, b):
        mu = t.mean(-1, keepdims=True)
        var = ((t - mu) ** 2).mean(-1, keepdims=True)
        return (t - mu) / jnp.sqrt(var + LN_EPS) * g + b

    def l2n(t):
        n = jnp.sqrt(jnp.sum(t * t, axis=-1, keepdims=True))
        return t / jnp.maximum(n, L2_EPS)

    inner = heads * dim_head
    xn = ln(x, params["ln_x_g"][0], params["ln_x_b"][0])
    latn = ln(latents, params["ln_l_g"][0], params["ln_l_b"][0])
    q = latn @ params["wq_t"]
    kv_in = jnp.concatenate([xn, latn], axis=1)
    k = kv_in @ params["wk_t"]
    v = kv_in @ params["wv_t"]

    def split(t):
        bsz, n, _ = t.shape
        return t.reshape(bsz, n, heads, dim_head).transpose(0, 2, 1, 3)

    q, k, v = map(split, (q, k, v))
    q = l2n(q) * params["q_scale"][0]
    k = l2n(k) * params["k_scale"][0]
    sim = jnp.einsum("bhid,bhjd->bhij", q, k) * scale
    attn = jax.nn.softmax(sim.astype(jnp.float32), axis=-1).astype(sim.dtype)
    out = jnp.einsum("bhij,bhjd->bhid", attn, v)
    out = out.transpose(0, 2, 1, 3).reshape(x.shape[0], -1, inner)
    proj = out @ params["wo_t"]
    return ln(proj, params["ln_o_g"][0], params["ln_o_b"][0])


if __name__ == "__main__":
    # Small shapes; heads/dim_head match the module defaults, dim is lane-dense.
    B, N_X, N_L = 2, 16, 8
    DIM, HEADS, DIM_HEAD, SCALE = 128, 8, 64, 8.0
    INNER = HEADS * DIM_HEAD

    key = jax.random.PRNGKey(0)
    k_x, k_l, k_q, k_k, k_v, k_o = jax.random.split(key, 6)

    x = jax.random.normal(k_x, (B, N_X, DIM), dtype=jnp.float32)
    latents = jax.random.normal(k_l, (B, N_L, DIM), dtype=jnp.float32)

    # Weights stored pre-transposed so y = x @ W^T directly; to_kv is given as
    # separate k/v halves (equivalent to chunk(2, dim=-1) of the torch layer).
    params = {
        "ln_x_g": jnp.ones((1, DIM), jnp.float32),
        "ln_x_b": jnp.zeros((1, DIM), jnp.float32),
        "ln_l_g": jnp.ones((1, DIM), jnp.float32),
        "ln_l_b": jnp.zeros((1, DIM), jnp.float32),
        "wq_t": 0.05 * jax.random.normal(k_q, (DIM, INNER), jnp.float32),
        "wk_t": 0.05 * jax.random.normal(k_k, (DIM, INNER), jnp.float32),
        "wv_t": 0.05 * jax.random.normal(k_v, (DIM, INNER), jnp.float32),
        "q_scale": jnp.ones((1, DIM_HEAD), jnp.float32),
        "k_scale": jnp.ones((1, DIM_HEAD), jnp.float32),
        "wo_t": 0.05 * jax.random.normal(k_o, (INNER, DIM), jnp.float32),
        "ln_o_g": jnp.ones((1, DIM), jnp.float32),
        "ln_o_b": jnp.zeros((1, DIM), jnp.float32),
    }

    # One-time parameter preparation (LN folding, concat, casts).
    prepared = prepare_perceiver_params(params, scale=SCALE, mxu_dtype=jnp.float32)

    # kx_block=8 -> two key chunks (exercises the online-softmax path);
    # batch_block auto -> 1, so grid=(2, 2) also exercises the parallel axis.
    out = perceiver_attention(x, latents, prepared, heads=HEADS,
                              dim_head=DIM_HEAD, kx_block=8)
    out = jax.block_until_ready(out)

    ref = jax.block_until_ready(
        perceiver_attention_reference(x, latents, params, heads=HEADS,
                                      dim_head=DIM_HEAD, scale=SCALE))

    assert out.shape == (B, N_L, DIM), out.shape
    assert jnp.allclose(out, ref, atol=1e-2, rtol=1e-2), float(
        jnp.max(jnp.abs(out - ref)))

    print("KERNEL_OK")
</pallas_src>

<mosaic_0001>
module attributes {stable_mosaic.version = 11 : i64} {
  func.func @perceiver_attention_kernel(%arg0: i32, %arg1: i32, %arg2: memref<1x8x128xf32, #tpu.memory_space<vmem>>, %arg3: memref<1x8x128xf32, #tpu.memory_space<vmem>>, %arg4: memref<128x1024xf32, #tpu.memory_space<vmem>>, %arg5: memref<1x1024xf32, #tpu.memory_space<vmem>>, %arg6: memref<128x1536xf32, #tpu.memory_space<vmem>>, %arg7: memref<1x1536xf32, #tpu.memory_space<vmem>>, %arg8: memref<1x64xf32, #tpu.memory_space<vmem>>, %arg9: memref<1x64xf32, #tpu.memory_space<vmem>>, %arg10: memref<512x128xf32, #tpu.memory_space<vmem>>, %arg11: memref<1x128xf32, #tpu.memory_space<vmem>>, %arg12: memref<1x128xf32, #tpu.memory_space<vmem>>, %arg13: memref<1x8x128xf32, #tpu.memory_space<vmem>>, %arg14: memref<8x8x64xf32, #tpu.memory_space<vmem>>, %arg15: memref<8x8x1xf32, #tpu.memory_space<vmem>>, %arg16: memref<8x8x1xf32, #tpu.memory_space<vmem>>, %arg17: memref<8x8x64xf32, #tpu.memory_space<vmem>>) attributes {dimension_semantics = [#tpu.dimension_semantics<parallel>, #tpu.dimension_semantics<arbitrary>], iteration_bounds = array<i64: 2, 2>, scalar_prefetch = 0 : i64, scratch_operands = 4 : i64, tpu.core_type = #tpu.core_type<tc>, window_params = [{transform_indices = @transform_0, window_bounds = array<i64: 1, 8, 128>}, {transform_indices = @transform_1, window_bounds = array<i64: 1, 8, 128>}, {pipeline_mode = #tpu.pipeline_mode<synchronous>, transform_indices = @transform_2, window_bounds = array<i64: 128, 1024>}, {pipeline_mode = #tpu.pipeline_mode<synchronous>, transform_indices = @transform_3, window_bounds = array<i64: 1, 1024>}, {pipeline_mode = #tpu.pipeline_mode<synchronous>, transform_indices = @transform_4, window_bounds = array<i64: 128, 1536>}, {pipeline_mode = #tpu.pipeline_mode<synchronous>, transform_indices = @transform_5, window_bounds = array<i64: 1, 1536>}, {pipeline_mode = #tpu.pipeline_mode<synchronous>, transform_indices = @transform_6, window_bounds = array<i64: 1, 64>}, {pipeline_mode = #tpu.pipeline_mode<synchronous>, transform_indices = @transform_7, window_bounds = array<i64: 1, 64>}, {pipeline_mode = #tpu.pipeline_mode<synchronous>, transform_indices = @transform_8, window_bounds = array<i64: 512, 128>}, {pipeline_mode = #tpu.pipeline_mode<synchronous>, transform_indices = @transform_9, window_bounds = array<i64: 1, 128>}, {pipeline_mode = #tpu.pipeline_mode<synchronous>, transform_indices = @transform_10, window_bounds = array<i64: 1, 128>}, {transform_indices = @transform_11, window_bounds = array<i64: 1, 8, 128>}]} {
    %c0 = arith.constant 0 : index
    %c0_0 = arith.constant 0 : index
    %0 = vector.load %arg9[%c0, %c0_0] : memref<1x64xf32, #tpu.memory_space<vmem>>, vector<1x64xf32>
    %1 = vector.shape_cast %0 : vector<1x64xf32> to vector<1x1x64xf32>
    %c0_i32 = arith.constant 0 : i32
    %2 = arith.cmpi eq, %arg1, %c0_i32 : i32
    %3 = arith.extui %2 : i1 to i32
    %c0_i32_1 = arith.constant 0 : i32
    %4 = arith.cmpi ne, %3, %c0_i32_1 : i32
    scf.if %4 {
      %cst_45 = arith.constant 0xFF800000 : f32
      %76 = vector.broadcast %cst_45 : f32 to vector<8x8x1xf32>
      %c0_46 = arith.constant 0 : index
      %c0_47 = arith.constant 0 : index
      %c0_48 = arith.constant 0 : index
      %77 = vector.load %arg15[%c0_46, %c0_47, %c0_48] : memref<8x8x1xf32, #tpu.memory_space<vmem>>, vector<8x8x1xf32>
      tpu.vector_store %arg15[%c0_46, %c0_47, %c0_48], %76 {strides = array<i32>} : memref<8x8x1xf32, #tpu.memory_space<vmem>>, vector<8x8x1xf32>,
      %cst_49 = arith.constant 0.000000e+00 : f32
      %78 = vector.broadcast %cst_49 : f32 to vector<8x8x1xf32>
      %c0_50 = arith.constant 0 : index
      %c0_51 = arith.constant 0 : index
      %c0_52 = arith.constant 0 : index
      %79 = vector.load %arg16[%c0_50, %c0_51, %c0_52] : memref<8x8x1xf32, #tpu.memory_space<vmem>>, vector<8x8x1xf32>
      tpu.vector_store %arg16[%c0_50, %c0_51, %c0_52], %78 {strides = array<i32>} : memref<8x8x1xf32, #tpu.memory_space<vmem>>, vector<8x8x1xf32>,
      %cst_53 = arith.constant 0.000000e+00 : f32
      %80 = vector.broadcast %cst_53 : f32 to vector<8x8x64xf32>
      %c0_54 = arith.constant 0 : index
      %c0_55 = arith.constant 0 : index
      %c0_56 = arith.constant 0 : index
      %81 = vector.load %arg17[%c0_54, %c0_55, %c0_56] : memref<8x8x64xf32, #tpu.memory_space<vmem>>, vector<8x8x64xf32>
      tpu.vector_store %arg17[%c0_54, %c0_55, %c0_56], %80 {strides = array<i32>} : memref<8x8x64xf32, #tpu.memory_space<vmem>>, vector<8x8x64xf32>,
      %c0_57 = arith.constant 0 : index
      %c0_58 = arith.constant 0 : index
      %c0_59 = arith.constant 0 : index
      %82 = vector.load %arg3[%c0_57, %c0_58, %c0_59] : memref<1x8x128xf32, #tpu.memory_space<vmem>>, vector<1x8x128xf32>
      %83 = vector.shape_cast %82 : vector<1x8x128xf32> to vector<8x128xf32>
      %cst_60 = arith.constant dense<0.000000e+00> : vector<8xf32>
      %84 = vector.multi_reduction <add>, %83, %cst_60 [1] : vector<8x128xf32> to vector<8xf32>
      %85 = vector.shape_cast %84 : vector<8xf32> to vector<8x1xf32>
      %cst_61 = arith.constant 1.280000e+02 : f32
      %86 = vector.broadcast %cst_61 : f32 to vector<8x1xf32>
      %87 = arith.divf %85, %86 : vector<8x1xf32>
      %88 = vector.broadcast %87 : vector<8x1xf32> to vector<8x128xf32>
      %89 = arith.subf %83, %88 : vector<8x128xf32>
      %90 = arith.mulf %89, %89 : vector<8x128xf32>
      %cst_62 = arith.constant dense<0.000000e+00> : vector<8xf32>
      %91 = vector.multi_reduction <add>, %90, %cst_62 [1] : vector<8x128xf32> to vector<8xf32>
      %92 = vector.shape_cast %91 : vector<8xf32> to vector<8x1xf32>
      %cst_63 = arith.constant 1.280000e+02 : f32
      %93 = vector.broadcast %cst_63 : f32 to vector<8x1xf32>
      %94 = arith.divf %92, %93 : vector<8x1xf32>
      %95 = vector.broadcast %87 : vector<8x1xf32> to vector<8x128xf32>
      %96 = arith.subf %83, %95 : vector<8x128xf32>
      %cst_64 = arith.constant 9.99999974E-6 : f32
      %97 = vector.broadcast %cst_64 : f32 to vector<8x1xf32>
      %98 = arith.addf %94, %97 : vector<8x1xf32>
      %99 = math.rsqrt %98 : vector<8x1xf32>
      %100 = vector.broadcast %99 : vector<8x1xf32> to vector<8x128xf32>
      %101 = arith.mulf %96, %100 : vector<8x128xf32>
      %c0_65 = arith.constant 0 : index
      %c0_66 = arith.constant 0 : index
      %102 = vector.load %arg6[%c0_65, %c0_66] : memref<128x1536xf32, #tpu.memory_space<vmem>>, vector<128x1536xf32>
      %cst_67 = arith.constant dense<0.000000e+00> : vector<8x1536xf32>
      %103 = tpu.matmul %101, %102, %cst_67 {dimension_numbers = #tpu.dot_dimension_numbers<[1], [0], [0], [1], [0, 0, 1, 1], [], []>} : vector<8x128xf32>, vector<128x1536xf32>, vector<8x1536xf32> -> vector<8x1536xf32>
      %c0_68 = arith.constant 0 : index
      %c0_69 = arith.constant 0 : index
      %104 = vector.load %arg7[%c0_68, %c0_69] : memref<1x1536xf32, #tpu.memory_space<vmem>>, vector<1x1536xf32>
      %105 = vector.broadcast %104 : vector<1x1536xf32> to vector<8x1536xf32>
      %106 = arith.addf %103, %105 : vector<8x1536xf32>
      %107 = vector.extract_strided_slice %106 {offsets = [0, 0], sizes = [8, 512], strides = [1, 1]} : vector<8x1536xf32> to vector<8x512xf32>
      %108 = vector.extract_strided_slice %106 {offsets = [0, 512], sizes = [8, 512], strides = [1, 1]} : vector<8x1536xf32> to vector<8x512xf32>
      %109 = vector.extract_strided_slice %106 {offsets = [0, 1024], sizes = [8, 512], strides = [1, 1]} : vector<8x1536xf32> to vector<8x512xf32>
      %110 = vector.shape_cast %107 : vector<8x512xf32> to vector<1x8x8x64xf32>
      %111 = tpu.transpose %110, [0, 2, 1, 3] : vector<1x8x8x64xf32> -> vector<1x8x8x64xf32>
      %112 = vector.shape_cast %111 : vector<1x8x8x64xf32> to vector<8x8x64xf32>
      %c0_70 = arith.constant 0 : index
      %c0_71 = arith.constant 0 : index
      %113 = vector.load %arg8[%c0_70, %c0_71] : memref<1x64xf32, #tpu.memory_space<vmem>>, vector<1x64xf32>
      %114 = vector.shape_cast %113 : vector<1x64xf32> to vector<1x1x64xf32>
      %115 = arith.mulf %112, %112 : vector<8x8x64xf32>
      %cst_72 = arith.constant dense<0.000000e+00> : vector<8x8xf32>
      %116 = vector.multi_reduction <add>, %115, %cst_72 [2] : vector<8x8x64xf32> to vector<8x8xf32>
      %117 = vector.shape_cast %116 : vector<8x8xf32> to vector<8x8x1xf32>
      %cst_73 = arith.constant 1.000000e-24 : f32
      %118 = vector.broadcast %cst_73 : f32 to vector<8x8x1xf32>
      %119 = arith.maximumf %117, %118 : vector<8x8x1xf32>
      %120 = math.rsqrt %119 : vector<8x8x1xf32>
      %121 = vector.broadcast %120 : vector<8x8x1xf32> to vector<8x8x64xf32>
      %122 = vector.broadcast %114 : vector<1x1x64xf32> to vector<8x8x64xf32>
      %123 = arith.mulf %121, %122 : vector<8x8x64xf32>
      %124 = arith.mulf %112, %123 : vector<8x8x64xf32>
      %c0_74 = arith.constant 0 : index
      %c0_75 = arith.constant 0 : index
      %c0_76 = arith.constant 0 : index
      %125 = vector.load %arg14[%c0_74, %c0_75, %c0_76] : memref<8x8x64xf32, #tpu.memory_space<vmem>>, vector<8x8x64xf32>
      tpu.vector_store %arg14[%c0_74, %c0_75, %c0_76], %124 {strides = array<i32>} : memref<8x8x64xf32, #tpu.memory_space<vmem>>, vector<8x8x64xf32>,
      %126 = vector.shape_cast %108 : vector<8x512xf32> to vector<1x8x8x64xf32>
      %127 = tpu.transpose %126, [0, 2, 1, 3] : vector<1x8x8x64xf32> -> vector<1x8x8x64xf32>
      %128 = vector.shape_cast %127 : vector<1x8x8x64xf32> to vector<8x8x64xf32>
      %129 = arith.mulf %128, %128 : vector<8x8x64xf32>
      %cst_77 = arith.constant dense<0.000000e+00> : vector<8x8xf32>
      %130 = vector.multi_reduction <add>, %129, %cst_77 [2] : vector<8x8x64xf32> to vector<8x8xf32>
      %131 = vector.shape_cast %130 : vector<8x8xf32> to vector<8x8x1xf32>
      %cst_78 = arith.constant 1.000000e-24 : f32
      %132 = vector.broadcast %cst_78 : f32 to vector<8x8x1xf32>
      %133 = arith.maximumf %131, %132 : vector<8x8x1xf32>
      %134 = math.rsqrt %133 : vector<8x8x1xf32>
      %135 = vector.broadcast %134 : vector<8x8x1xf32> to vector<8x8x64xf32>
      %136 = vector.broadcast %1 : vector<1x1x64xf32> to vector<8x8x64xf32>
      %137 = arith.mulf %135, %136 : vector<8x8x64xf32>
      %138 = arith.mulf %128, %137 : vector<8x8x64xf32>
      %139 = vector.shape_cast %109 : vector<8x512xf32> to vector<1x8x8x64xf32>
      %140 = tpu.transpose %139, [0, 2, 1, 3] : vector<1x8x8x64xf32> -> vector<1x8x8x64xf32>
      %141 = vector.shape_cast %140 : vector<1x8x8x64xf32> to vector<8x8x64xf32>
      %c0_79 = arith.constant 0 : index
      %c0_80 = arith.constant 0 : index
      %c0_81 = arith.constant 0 : index
      %142 = vector.load %arg14[%c0_79, %c0_80, %c0_81] : memref<8x8x64xf32, #tpu.memory_space<vmem>>, vector<8x8x64xf32>
      "tpu.trace_start"() <{level = 10 : i32, message = "bid,bjd->bij"}> : () -> ()
      %cst_82 = arith.constant dense<0.000000e+00> : vector<8x8x8xf32>
      %143 = tpu.matmul %142, %138, %cst_82 {dimension_numbers = #tpu.dot_dimension_numbers<[2], [2], [1], [1], [0, 0, 0, 1, 1, 1], [0], [0]>} : vector<8x8x64xf32>, vector<8x8x64xf32>, vector<8x8x8xf32> -> vector<8x8x8xf32>
      "tpu.trace_stop"() : () -> ()
      %c0_83 = arith.constant 0 : index
      %c0_84 = arith.constant 0 : index
      %c0_85 = arith.constant 0 : index
      %144 = vector.load %arg15[%c0_83, %c0_84, %c0_85] : memref<8x8x1xf32, #tpu.memory_space<vmem>>, vector<8x8x1xf32>
      %cst_86 = arith.constant dense<0xFF800000> : vector<8x8xf32>
      %145 = vector.multi_reduction <maximumf>, %143, %cst_86 [2] : vector<8x8x8xf32> to vector<8x8xf32>
      %146 = vector.shape_cast %145 : vector<8x8xf32> to vector<8x8x1xf32>
      %147 = arith.maximumf %144, %146 : vector<8x8x1xf32>
      %c0_87 = arith.constant 0 : index
      %c0_88 = arith.constant 0 : index
      %c0_89 = arith.constant 0 : index
      %148 = vector.load %arg15[%c0_87, %c0_88, %c0_89] : memref<8x8x1xf32, #tpu.memory_space<vmem>>, vector<8x8x1xf32>
      %149 = arith.subf %148, %147 : vector<8x8x1xf32>
      %150 = math.exp %149 : vector<8x8x1xf32>
      %151 = vector.broadcast %147 : vector<8x8x1xf32> to vector<8x8x8xf32>
      %152 = arith.subf %143, %151 : vector<8x8x8xf32>
      %153 = math.exp %152 : vector<8x8x8xf32>
      %c0_90 = arith.constant 0 : index
      %c0_91 = arith.constant 0 : index
      %c0_92 = arith.constant 0 : index
      %154 = vector.load %arg16[%c0_90, %c0_91, %c0_92] : memref<8x8x1xf32, #tpu.memory_space<vmem>>, vector<8x8x1xf32>
      %155 = arith.mulf %150, %154 : vector<8x8x1xf32>
      %cst_93 = arith.constant dense<0.000000e+00> : vector<8x8xf32>
      %156 = vector.multi_reduction <add>, %153, %cst_93 [2] : vector<8x8x8xf32> to vector<8x8xf32>
      %157 = vector.shape_cast %156 : vector<8x8xf32> to vector<8x8x1xf32>
      %158 = arith.addf %155, %157 : vector<8x8x1xf32>
      %c0_94 = arith.constant 0 : index
      %c0_95 = arith.constant 0 : index
      %c0_96 = arith.constant 0 : index
      %159 = vector.load %arg16[%c0_94, %c0_95, %c0_96] : memref<8x8x1xf32, #tpu.memory_space<vmem>>, vector<8x8x1xf32>
      tpu.vector_store %arg16[%c0_94, %c0_95, %c0_96], %158 {strides = array<i32>} : memref<8x8x1xf32, #tpu.memory_space<vmem>>, vector<8x8x1xf32>,
      %c0_97 = arith.constant 0 : index
      %c0_98 = arith.constant 0 : index
      %c0_99 = arith.constant 0 : index
      %160 = vector.load %arg17[%c0_97, %c0_98, %c0_99] : memref<8x8x64xf32, #tpu.memory_space<vmem>>, vector<8x8x64xf32>
      %161 = vector.broadcast %150 : vector<8x8x1xf32> to vector<8x8x64xf32>
      %162 = arith.mulf %161, %160 : vector<8x8x64xf32>
      "tpu.trace_start"() <{level = 10 : i32, message = "bij,bjd->bid"}> : () -> ()
      %cst_100 = arith.constant dense<0.000000e+00> : vector<8x8x64xf32>
      %163 = tpu.matmul %153, %141, %cst_100 {dimension_numbers = #tpu.dot_dimension_numbers<[2], [1], [1], [2], [0, 0, 0, 1, 1, 2], [0], [0]>} : vector<8x8x8xf32>, vector<8x8x64xf32>, vector<8x8x64xf32> -> vector<8x8x64xf32>
      "tpu.trace_stop"() : () -> ()
      %164 = arith.addf %162, %163 : vector<8x8x64xf32>
      %c0_101 = arith.constant 0 : index
      %c0_102 = arith.constant 0 : index
      %c0_103 = arith.constant 0 : index
      %165 = vector.load %arg17[%c0_101, %c0_102, %c0_103] : memref<8x8x64xf32, #tpu.memory_space<vmem>>, vector<8x8x64xf32>
      tpu.vector_store %arg17[%c0_101, %c0_102, %c0_103], %164 {strides = array<i32>} : memref<8x8x64xf32, #tpu.memory_space<vmem>>, vector<8x8x64xf32>,
      %c0_104 = arith.constant 0 : index
      %c0_105 = arith.constant 0 : index
      %c0_106 = arith.constant 0 : index
      %166 = vector.load %arg15[%c0_104, %c0_105, %c0_106] : memref<8x8x1xf32, #tpu.memory_space<vmem>>, vector<8x8x1xf32>
      tpu.vector_store %arg15[%c0_104, %c0_105, %c0_106], %147 {strides = array<i32>} : memref<8x8x1xf32, #tpu.memory_space<vmem>>, vector<8x8x1xf32>,
    } else {
    }
    %c0_2 = arith.constant 0 : index
    %c0_3 = arith.constant 0 : index
    %c0_4 = arith.constant 0 : index
    %5 = vector.load %arg2[%c0_2, %c0_3, %c0_4] : memref<1x8x128xf32, #tpu.memory_space<vmem>>, vector<1x8x128xf32>
    %6 = vector.shape_cast %5 : vector<1x8x128xf32> to vector<8x128xf32>
    %cst = arith.constant dense<0.000000e+00> : vector<8xf32>
    %7 = vector.multi_reduction <add>, %6, %cst [1] : vector<8x128xf32> to vector<8xf32>
    %8 = vector.shape_cast %7 : vector<8xf32> to vector<8x1xf32>
    %cst_5 = arith.constant 1.280000e+02 : f32
    %9 = vector.broadcast %cst_5 : f32 to vector<8x1xf32>
    %10 = arith.divf %8, %9 : vector<8x1xf32>
    %11 = vector.broadcast %10 : vector<8x1xf32> to vector<8x128xf32>
    %12 = arith.subf %6, %11 : vector<8x128xf32>
    %13 = arith.mulf %12, %12 : vector<8x128xf32>
    %cst_6 = arith.constant dense<0.000000e+00> : vector<8xf32>
    %14 = vector.multi_reduction <add>, %13, %cst_6 [1] : vector<8x128xf32> to vector<8xf32>
    %15 = vector.shape_cast %14 : vector<8xf32> to vector<8x1xf32>
    %cst_7 = arith.constant 1.280000e+02 : f32
    %16 = vector.broadcast %cst_7 : f32 to vector<8x1xf32>
    %17 = arith.divf %15, %16 : vector<8x1xf32>
    %18 = vector.broadcast %10 : vector<8x1xf32> to vector<8x128xf32>
    %19 = arith.subf %6, %18 : vector<8x128xf32>
    %cst_8 = arith.constant 9.99999974E-6 : f32
    %20 = vector.broadcast %cst_8 : f32 to vector<8x1xf32>
    %21 = arith.addf %17, %20 : vector<8x1xf32>
    %22 = math.rsqrt %21 : vector<8x1xf32>
    %23 = vector.broadcast %22 : vector<8x1xf32> to vector<8x128xf32>
    %24 = arith.mulf %19, %23 : vector<8x128xf32>
    %c0_9 = arith.constant 0 : index
    %c0_10 = arith.constant 0 : index
    %25 = vector.load %arg4[%c0_9, %c0_10] : memref<128x1024xf32, #tpu.memory_space<vmem>>, vector<128x1024xf32>
    %cst_11 = arith.constant dense<0.000000e+00> : vector<8x1024xf32>
    %26 = tpu.matmul %24, %25, %cst_11 {dimension_numbers = #tpu.dot_dimension_numbers<[1], [0], [0], [1], [0, 0, 1, 1], [], []>} : vector<8x128xf32>, vector<128x1024xf32>, vector<8x1024xf32> -> vector<8x1024xf32>
    %c0_12 = arith.constant 0 : index
    %c0_13 = arith.constant 0 : index
    %27 = vector.load %arg5[%c0_12, %c0_13] : memref<1x1024xf32, #tpu.memory_space<vmem>>, vector<1x1024xf32>
    %28 = vector.broadcast %27 : vector<1x1024xf32> to vector<8x1024xf32>
    %29 = arith.addf %26, %28 : vector<8x1024xf32>
    %30 = vector.extract_strided_slice %29 {offsets = [0, 0], sizes = [8, 512], strides = [1, 1]} : vector<8x1024xf32> to vector<8x512xf32>
    %31 = vector.extract_strided_slice %29 {offsets = [0, 512], sizes = [8, 512], strides = [1, 1]} : vector<8x1024xf32> to vector<8x512xf32>
    %32 = vector.shape_cast %30 : vector<8x512xf32> to vector<1x8x8x64xf32>
    %33 = tpu.transpose %32, [0, 2, 1, 3] : vector<1x8x8x64xf32> -> vector<1x8x8x64xf32>
    %34 = vector.shape_cast %33 : vector<1x8x8x64xf32> to vector<8x8x64xf32>
    %35 = arith.mulf %34, %34 : vector<8x8x64xf32>
    %cst_14 = arith.constant dense<0.000000e+00> : vector<8x8xf32>
    %36 = vector.multi_reduction <add>, %35, %cst_14 [2] : vector<8x8x64xf32> to vector<8x8xf32>
    %37 = vector.shape_cast %36 : vector<8x8xf32> to vector<8x8x1xf32>
    %cst_15 = arith.constant 1.000000e-24 : f32
    %38 = vector.broadcast %cst_15 : f32 to vector<8x8x1xf32>
    %39 = arith.maximumf %37, %38 : vector<8x8x1xf32>
    %40 = math.rsqrt %39 : vector<8x8x1xf32>
    %41 = vector.broadcast %40 : vector<8x8x1xf32> to vector<8x8x64xf32>
    %42 = vector.broadcast %1 : vector<1x1x64xf32> to vector<8x8x64xf32>
    %43 = arith.mulf %41, %42 : vector<8x8x64xf32>
    %44 = arith.mulf %34, %43 : vector<8x8x64xf32>
    %45 = vector.shape_cast %31 : vector<8x512xf32> to vector<1x8x8x64xf32>
    %46 = tpu.transpose %45, [0, 2, 1, 3] : vector<1x8x8x64xf32> -> vector<1x8x8x64xf32>
    %47 = vector.shape_cast %46 : vector<1x8x8x64xf32> to vector<8x8x64xf32>
    %c0_16 = arith.constant 0 : index
    %c0_17 = arith.constant 0 : index
    %c0_18 = arith.constant 0 : index
    %48 = vector.load %arg14[%c0_16, %c0_17, %c0_18] : memref<8x8x64xf32, #tpu.memory_space<vmem>>, vector<8x8x64xf32>
    "tpu.trace_start"() <{level = 10 : i32, message = "bid,bjd->bij"}> : () -> ()
    %cst_19 = arith.constant dense<0.000000e+00> : vector<8x8x8xf32>
    %49 = tpu.matmul %48, %44, %cst_19 {dimension_numbers = #tpu.dot_dimension_numbers<[2], [2], [1], [1], [0, 0, 0, 1, 1, 1], [0], [0]>} : vector<8x8x64xf32>, vector<8x8x64xf32>, vector<8x8x8xf32> -> vector<8x8x8xf32>
    "tpu.trace_stop"() : () -> ()
    %c0_20 = arith.constant 0 : index
    %c0_21 = arith.constant 0 : index
    %c0_22 = arith.constant 0 : index
    %50 = vector.load %arg15[%c0_20, %c0_21, %c0_22] : memref<8x8x1xf32, #tpu.memory_space<vmem>>, vector<8x8x1xf32>
    %cst_23 = arith.constant dense<0xFF800000> : vector<8x8xf32>
    %51 = vector.multi_reduction <maximumf>, %49, %cst_23 [2] : vector<8x8x8xf32> to vector<8x8xf32>
    %52 = vector.shape_cast %51 : vector<8x8xf32> to vector<8x8x1xf32>
    %53 = arith.maximumf %50, %52 : vector<8x8x1xf32>
    %c0_24 = arith.constant 0 : index
    %c0_25 = arith.constant 0 : index
    %c0_26 = arith.constant 0 : index
    %54 = vector.load %arg15[%c0_24, %c0_25, %c0_26] : memref<8x8x1xf32, #tpu.memory_space<vmem>>, vector<8x8x1xf32>
    %55 = arith.subf %54, %53 : vector<8x8x1xf32>
    %56 = math.exp %55 : vector<8x8x1xf32>
    %57 = vector.broadcast %53 : vector<8x8x1xf32> to vector<8x8x8xf32>
    %58 = arith.subf %49, %57 : vector<8x8x8xf32>
    %59 = math.exp %58 : vector<8x8x8xf32>
    %c0_27 = arith.constant 0 : index
    %c0_28 = arith.constant 0 : index
    %c0_29 = arith.constant 0 : index
    %60 = vector.load %arg16[%c0_27, %c0_28, %c0_29] : memref<8x8x1xf32, #tpu.memory_space<vmem>>, vector<8x8x1xf32>
    %61 = arith.mulf %56, %60 : vector<8x8x1xf32>
    %cst_30 = arith.constant dense<0.000000e+00> : vector<8x8xf32>
    %62 = vector.multi_reduction <add>, %59, %cst_30 [2] : vector<8x8x8xf32> to vector<8x8xf32>
    %63 = vector.shape_cast %62 : vector<8x8xf32> to vector<8x8x1xf32>
    %64 = arith.addf %61, %63 : vector<8x8x1xf32>
    %c0_31 = arith.constant 0 : index
    %c0_32 = arith.constant 0 : index
    %c0_33 = arith.constant 0 : index
    %65 = vector.load %arg16[%c0_31, %c0_32, %c0_33] : memref<8x8x1xf32, #tpu.memory_space<vmem>>, vector<8x8x1xf32>
    tpu.vector_store %arg16[%c0_31, %c0_32, %c0_33], %64 {strides = array<i32>} : memref<8x8x1xf32, #tpu.memory_space<vmem>>, vector<8x8x1xf32>,
    %c0_34 = arith.constant 0 : index
    %c0_35 = arith.constant 0 : index
    %c0_36 = arith.constant 0 : index
    %66 = vector.load %arg17[%c0_34, %c0_35, %c0_36] : memref<8x8x64xf32, #tpu.memory_space<vmem>>, vector<8x8x64xf32>
    %67 = vector.broadcast %56 : vector<8x8x1xf32> to vector<8x8x64xf32>
    %68 = arith.mulf %67, %66 : vector<8x8x64xf32>
    "tpu.trace_start"() <{level = 10 : i32, message = "bij,bjd->bid"}> : () -> ()
    %cst_37 = arith.constant dense<0.000000e+00> : vector<8x8x64xf32>
    %69 = tpu.matmul %59, %47, %cst_37 {dimension_numbers = #tpu.dot_dimension_numbers<[2], [1], [1], [2], [0, 0, 0, 1, 1, 2], [0], [0]>} : vector<8x8x8xf32>, vector<8x8x64xf32>, vector<8x8x64xf32> -> vector<8x8x64xf32>
    "tpu.trace_stop"() : () -> ()
    %70 = arith.addf %68, %69 : vector<8x8x64xf32>
    %c0_38 = arith.constant 0 : index
    %c0_39 = arith.constant 0 : index
    %c0_40 = arith.constant 0 : index
    %71 = vector.load %arg17[%c0_38, %c0_39, %c0_40] : memref<8x8x64xf32, #tpu.memory_space<vmem>>, vector<8x8x64xf32>
    tpu.vector_store %arg17[%c0_38, %c0_39, %c0_40], %70 {strides = array<i32>} : memref<8x8x64xf32, #tpu.memory_space<vmem>>, vector<8x8x64xf32>,
    %c0_41 = arith.constant 0 : index
    %c0_42 = arith.constant 0 : index
    %c0_43 = arith.constant 0 : index
    %72 = vector.load %arg15[%c0_41, %c0_42, %c0_43] : memref<8x8x1xf32, #tpu.memory_space<vmem>>, vector<8x8x1xf32>
    tpu.vector_store %arg15[%c0_41, %c0_42, %c0_43], %53 {strides = array<i32>} : memref<8x8x1xf32, #tpu.memory_space<vmem>>, vector<8x8x1xf32>,
    %c1_i32 = arith.constant 1 : i32
    %73 = arith.cmpi eq, %arg1, %c1_i32 : i32
    %74 = arith.extui %73 : i1 to i32
    %c0_i32_44 = arith.constant 0 : i32
    %75 = arith.cmpi ne, %74, %c0_i32_44 : i32
    scf.if %75 {
      %c0_45 = arith.constant 0 : index
      %c0_46 = arith.constant 0 : index
      %c0_47 = arith.constant 0 : index
      %76 = vector.load %arg17[%c0_45, %c0_46, %c0_47] : memref<8x8x64xf32, #tpu.memory_space<vmem>>, vector<8x8x64xf32>
      %c0_48 = arith.constant 0 : index
      %c0_49 = arith.constant 0 : index
      %c0_50 = arith.constant 0 : index
      %77 = vector.load %arg16[%c0_48, %c0_49, %c0_50] : memref<8x8x1xf32, #tpu.memory_space<vmem>>, vector<8x8x1xf32>
      %78 = tpu.reciprocal %77 {approx = true} : vector<8x8x1xf32> -> vector<8x8x1xf32>
      %79 = vector.broadcast %78 : vector<8x8x1xf32> to vector<8x8x64xf32>
      %80 = arith.mulf %76, %79 : vector<8x8x64xf32>
      %81 = vector.shape_cast %80 : vector<8x8x64xf32> to vector<1x8x8x64xf32>
      %82 = tpu.transpose %81, [0, 2, 1, 3] : vector<1x8x8x64xf32> -> vector<1x8x8x64xf32>
      %83 = vector.shape_cast %82 : vector<1x8x8x64xf32> to vector<8x512xf32>
      %c0_51 = arith.constant 0 : index
      %c0_52 = arith.constant 0 : index
      %84 = vector.load %arg10[%c0_51, %c0_52] : memref<512x128xf32, #tpu.memory_space<vmem>>, vector<512x128xf32>
      %cst_53 = arith.constant dense<0.000000e+00> : vector<8x128xf32>
      %85 = tpu.matmul %83, %84, %cst_53 {dimension_numbers = #tpu.dot_dimension_numbers<[1], [0], [0], [1], [0, 0, 1, 1], [], []>} : vector<8x512xf32>, vector<512x128xf32>, vector<8x128xf32> -> vector<8x128xf32>
      %cst_54 = arith.constant dense<0.000000e+00> : vector<8xf32>
      %86 = vector.multi_reduction <add>, %85, %cst_54 [1] : vector<8x128xf32> to vector<8xf32>
      %87 = vector.shape_cast %86 : vector<8xf32> to vector<8x1xf32>
      %cst_55 = arith.constant 1.280000e+02 : f32
      %88 = vector.broadcast %cst_55 : f32 to vector<8x1xf32>
      %89 = arith.divf %87, %88 : vector<8x1xf32>
      %90 = vector.broadcast %89 : vector<8x1xf32> to vector<8x128xf32>
      %91 = arith.subf %85, %90 : vector<8x128xf32>
      %92 = arith.mulf %91, %91 : vector<8x128xf32>
      %cst_56 = arith.constant dense<0.000000e+00> : vector<8xf32>
      %93 = vector.multi_reduction <add>, %92, %cst_56 [1] : vector<8x128xf32> to vector<8xf32>
      %94 = vector.shape_cast %93 : vector<8xf32> to vector<8x1xf32>
      %cst_57 = arith.constant 1.280000e+02 : f32
      %95 = vector.broadcast %cst_57 : f32 to vector<8x1xf32>
      %96 = arith.divf %94, %95 : vector<8x1xf32>
      %97 = vector.broadcast %89 : vector<8x1xf32> to vector<8x128xf32>
      %98 = arith.subf %85, %97 : vector<8x128xf32>
      %cst_58 = arith.constant 9.99999974E-6 : f32
      %99 = vector.broadcast %cst_58 : f32 to vector<8x1xf32>
      %100 = arith.addf %96, %99 : vector<8x1xf32>
      %101 = math.rsqrt %100 : vector<8x1xf32>
      %102 = vector.broadcast %101 : vector<8x1xf32> to vector<8x128xf32>
      %103 = arith.mulf %98, %102 : vector<8x128xf32>
      %c0_59 = arith.constant 0 : index
      %c0_60 = arith.constant 0 : index
      %104 = vector.load %arg11[%c0_59, %c0_60] : memref<1x128xf32, #tpu.memory_space<vmem>>, vector<1x128xf32>
      %105 = vector.broadcast %104 : vector<1x128xf32> to vector<8x128xf32>
      %106 = arith.mulf %103, %105 : vector<8x128xf32>
      %c0_61 = arith.constant 0 : index
      %c0_62 = arith.constant 0 : index
      %107 = vector.load %arg12[%c0_61, %c0_62] : memref<1x128xf32, #tpu.memory_space<vmem>>, vector<1x128xf32>
      %108 = vector.broadcast %107 : vector<1x128xf32> to vector<8x128xf32>
      %109 = arith.addf %106, %108 : vector<8x128xf32>
      %110 = vector.shape_cast %109 : vector<8x128xf32> to vector<1x8x128xf32>
      %c0_63 = arith.constant 0 : index
      %c0_64 = arith.constant 0 : index
      %c0_65 = arith.constant 0 : index
      %111 = vector.load %arg13[%c0_63, %c0_64, %c0_65] : memref<1x8x128xf32, #tpu.memory_space<vmem>>, vector<1x8x128xf32>
      tpu.vector_store %arg13[%c0_63, %c0_64, %c0_65], %110 {strides = array<i32>} : memref<1x8x128xf32, #tpu.memory_space<vmem>>, vector<1x8x128xf32>,
    } else {
    }
    return
  }
  func.func @transform_0(%arg0: i32, %arg1: i32) -> (i32, i32, i32) {
    %c0_i32 = arith.constant 0 : i32
    %c0_i32_0 = arith.constant 0 : i32
    return %arg0, %arg1, %c0_i32 : i32, i32, i32
  }
  func.func @transform_1(%arg0: i32, %arg1: i32) -> (i32, i32, i32) {
    %c0_i32 = arith.constant 0 : i32
    %c0_i32_0 = arith.constant 0 : i32
    %c0_i32_1 = arith.constant 0 : i32
    return %arg0, %c0_i32, %c0_i32_0 : i32, i32, i32
  }
  func.func @transform_2(%arg0: i32, %arg1: i32) -> (i32, i32) {
    %c0_i32 = arith.constant 0 : i32
    %c0_i32_0 = arith.constant 0 : i32
    %c0_i32_1 = arith.constant 0 : i32
    return %c0_i32, %c0_i32_0 : i32, i32
  }
  func.func @transform_3(%arg0: i32, %arg1: i32) -> (i32, i32) {
    %c0_i32 = arith.constant 0 : i32
    %c0_i32_0 = arith.constant 0 : i32
    %c0_i32_1 = arith.constant 0 : i32
    return %c0_i32, %c0_i32_0 : i32, i32
  }
  func.func @transform_4(%arg0: i32, %arg1: i32) -> (i32, i32) {
    %c0_i32 = arith.constant 0 : i32
    %c0_i32_0 = arith.constant 0 : i32
    %c0_i32_1 = arith.constant 0 : i32
    return %c0_i32, %c0_i32_0 : i32, i32
  }
  func.func @transform_5(%arg0: i32, %arg1: i32) -> (i32, i32) {
    %c0_i32 = arith.constant 0 : i32
    %c0_i32_0 = arith.constant 0 : i32
    %c0_i32_1 = arith.constant 0 : i32
    return %c0_i32, %c0_i32_0 : i32, i32
  }
  func.func @transform_6(%arg0: i32, %arg1: i32) -> (i32, i32) {
    %c0_i32 = arith.constant 0 : i32
    %c0_i32_0 = arith.constant 0 : i32
    %c0_i32_1 = arith.constant 0 : i32
    return %c0_i32, %c0_i32_0 : i32, i32
  }
  func.func @transform_7(%arg0: i32, %arg1: i32) -> (i32, i32) {
    %c0_i32 = arith.constant 0 : i32
    %c0_i32_0 = arith.constant 0 : i32
    %c0_i32_1 = arith.constant 0 : i32
    return %c0_i32, %c0_i32_0 : i32, i32
  }
  func.func @transform_8(%arg0: i32, %arg1: i32) -> (i32, i32) {
    %c0_i32 = arith.constant 0 : i32
    %c0_i32_0 = arith.constant 0 : i32
    %c0_i32_1 = arith.constant 0 : i32
    return %c0_i32, %c0_i32_0 : i32, i32
  }
  func.func @transform_9(%arg0: i32, %arg1: i32) -> (i32, i32) {
    %c0_i32 = arith.constant 0 : i32
    %c0_i32_0 = arith.constant 0 : i32
    %c0_i32_1 = arith.constant 0 : i32
    return %c0_i32, %c0_i32_0 : i32, i32
  }
  func.func @transform_10(%arg0: i32, %arg1: i32) -> (i32, i32) {
    %c0_i32 = arith.constant 0 : i32
    %c0_i32_0 = arith.constant 0 : i32
    %c0_i32_1 = arith.constant 0 : i32
    return %c0_i32, %c0_i32_0 : i32, i32
  }
  func.func @transform_11(%arg0: i32, %arg1: i32) -> (i32, i32, i32) {
    %c0_i32 = arith.constant 0 : i32
    %c0_i32_0 = arith.constant 0 : i32
    %c0_i32_1 = arith.constant 0 : i32
    return %arg0, %c0_i32, %c0_i32_0 : i32, i32, i32
  }
}

</mosaic_0001>

<llo_original>
// kernel: tpu_custom_call.1
$region0: #{tpu_custom_call.1}
  #allocation0 [shape = 'u32[]', space=smem, size = 0x4, offset = 0x4, fixed_abs, tag = 'smem constant byte address 0x4 - core index']
  #allocation1 [shape = 'u32[144,128]{1,0:T(1,128)}', space=vmem, size = 0x12000, scoped, tag = 'internal scratch']
  #allocation2 [shape = 'f32[8,8,64]{2,1,0:T(8,128)}', space=vmem, size = 0x8000, scoped, tag = 'scratch operand']
  #allocation3 [shape = 'f32[8,8,1]{2,1,0:T(8,128)}', space=vmem, size = 0x8000, scoped, tag = 'scratch operand']
  #allocation4 [shape = 'f32[8,8,1]{2,1,0:T(8,128)}', space=vmem, size = 0x8000, scoped, tag = 'scratch operand']
  #allocation5 [shape = 'f32[8,8,64]{2,1,0:T(8,128)}', space=vmem, size = 0x8000, scoped, tag = 'scratch operand']
  %s0 = inlined_call_operand.hbm [shape: f32[2,16,128], index: 0, kind: input, shape index: {}]
  %s1 = inlined_call_operand.hbm [shape: f32[2,8,128], index: 1, kind: input, shape index: {}]
  %s2 = inlined_call_operand.hbm [shape: f32[128,1024], index: 2, kind: input, shape index: {}]
  %s3 = inlined_call_operand.hbm [shape: f32[1,1024], index: 3, kind: input, shape index: {}]
  %s4 = inlined_call_operand.hbm [shape: f32[128,1536], index: 4, kind: input, shape index: {}]
  %s5 = inlined_call_operand.vmem [shape: f32[1,1536], index: 5, kind: input, shape index: {}]
  %s6 = inlined_call_operand.vmem [shape: f32[1,64], index: 6, kind: input, shape index: {}]
  %s7 = inlined_call_operand.vmem [shape: f32[1,64], index: 7, kind: input, shape index: {}]
  %s8 = inlined_call_operand.hbm [shape: f32[512,128], index: 8, kind: input, shape index: {}]
  %s9 = inlined_call_operand.vmem [shape: f32[1,128], index: 9, kind: input, shape index: {}]
  %s10 = inlined_call_operand.vmem [shape: f32[1,128], index: 10, kind: input, shape index: {}]
  %s11 = inlined_call_operand.hbm [shape: f32[2,8,128], index: 11, kind: output, shape index: {}]
  %s12 = sld [smem:[#allocation0]]
  $region109: #{tpu_custom_call.1} parent=0
    _
  %s14 = ssub.s32 1, %s12
  %s15 = scalar_select 0, %s14, %s12
  $region1: #{tpu_custom_call.1} parent=0
    #allocation6 [shape = 'u8[8192]{0}', space=vmem, size = 0x2000, scoped, tag = 'input window, operand 0']
    #allocation7 [shape = 's32[2]{0}', space=sflag, size = 0x8, scoped, tag = 'scoped memory for tpu_custom_call.1']
    #allocation8 [shape = 's32[2]{0}', space=sflag, size = 0x8, scoped, tag = 'scoped memory for tpu_custom_call.1']
    #allocation9 [shape = 'u8[8192]{0}', space=vmem, size = 0x2000, scoped, tag = 'input window, operand 1']
    #allocation10 [shape = 's32[2]{0}', space=sflag, size = 0x8, scoped, tag = 'scoped memory for tpu_custom_call.1']
    #allocation11 [shape = 'u8[524288]{0}', space=vmem, size = 0x80000, scoped, tag = 'input window, operand 2, single buffered']
    #allocation12 [shape = 'u8[4096]{0}', space=vmem, size = 0x1000, scoped, tag = 'input window, operand 3, single buffered']
    #allocation13 [shape = 's32[1]{0}', space=sflag, size = 0x4, scoped, tag = 'scoped memory for tpu_custom_call.1']
    #allocation14 [shape = 'u8[786432]{0}', space=vmem, size = 0xc0000, scoped, tag = 'input window, operand 4, single buffered']
    #allocation15 [shape = 'u8[262144]{0}', space=vmem, size = 0x40000, scoped, tag = 'input window, operand 8, single buffered']
    #allocation16 [shape = 's32[1]{0}', space=sflag, size = 0x4, scoped, tag = 'scoped memory for tpu_custom_call.1']
    #allocation17 [shape = 'u8[8192]{0}', space=vmem, size = 0x2000, scoped, tag = 'output window, operand 0']
    %16 = vsyncpa [#allocation7], 0
    %s17 = scalar_lea.sflag [#allocation7], 1
    %18 = vsyncpa %s17, 0
    %19 = vsyncpa [#allocation10], 0
    %s20 = scalar_lea.sflag [#allocation10], 1
    %21 = vsyncpa %s20, 0
    %22 = vsyncpa [#allocation13], 0
    %23 = vsyncpa [#allocation16], 0
    %24 = vsyncpa [#allocation8], 0
    %s25 = scalar_lea.sflag [#allocation8], 1
    %26 = vsyncpa %s25, 0
    loop: start=0, step=1, limit=6
    $region2: #{tpu_custom_call.1} parent=1 // loop_pre_header
      _
    $region3: #{tpu_custom_call.1} parent=1 // loop_header
      %s28 = sphi 0, %s32
      %p29 = scmp.ge.s32.totalorder %s28, 6
      %s35 = sphi 0, %s47
      %s36 = sphi 0, %s43
      %s37 = sphi 0, %s35
      %s38 = sphi 0, %s36
      %s39 = sphi 0, %s37
      %s40 = sphi 0, %s38
      %s52 = sphi 0, %s54
      %s55 = sphi 0, %s52
      %s56 = sphi 0, %s55
      %s72 = sphi 0, %s56
      %s78 = sphi 0, %s80
      %s81 = sphi 0, %s78
      %s82 = sphi 0, %s81
      %s98 = sphi 0, %s82
      %s102 = sphi 0, %s102
      %s104 = sphi 0, %s102
      %s105 = sphi 0, %s104
      %s119 = sphi 0, %s105
      %s123 = sphi 0, %s123
      %s125 = sphi 0, %s123
      %s126 = sphi 0, %s125
      %s140 = sphi 0, %s126
      %s144 = sphi 0, %s144
      %s146 = sphi 0, %s144
      %s147 = sphi 0, %s146
      %s161 = sphi 0, %s147
      %s165 = sphi 0, %s165
      %s167 = sphi 0, %s165
      %s168 = sphi 0, %s167
      %s182 = sphi 0, %s168
      %s186 = sphi 0, %s186
      %s188 = sphi 0, %s186
      %s189 = sphi 0, %s188
      %s203 = sphi 0, %s189
      %s207 = sphi 0, %s207
      %s209 = sphi 0, %s207
      %s210 = sphi 0, %s209
      %s224 = sphi 0, %s210
      %s228 = sphi 0, %s228
      %s230 = sphi 0, %s228
      %s231 = sphi 0, %s230
      %s245 = sphi 0, %s231
      %s249 = sphi 0, %s249
      %s251 = sphi 0, %s249
      %s252 = sphi 0, %s251
      %s266 = sphi 0, %s252
      %s270 = sphi 0, %s270
      %s272 = sphi 0, %s270
      %s273 = sphi 0, %s272
      %s287 = sphi 0, %s273
      %s293 = sphi 0, %s295
      %s296 = sphi 0, %s293
      %s297 = sphi 0, %s296
      %s313 = sphi 0, %s297
    $region4: #{tpu_custom_call.1} parent=1 // loop_header_branch
      %31 = sbr.rel (%p29) target = $region8
    $region5: #{tpu_custom_call.1} parent=1 // loop_body
      %s33 = ssub.s32 %s28, 1
      %s34 = ssub.s32 %s28, 2
      %s41 = sadd.s32 1, %s36
      %p42 = scmp.ge.s32.totalorder %s41, 2
      %s43 = scalar_select %p42, 0, %s41
      %s44 = sadd.s32 1, %s35
      %s45 = scalar_select %p42, %s44, %s35
      %p46 = scmp.ge.s32.totalorder %s45, 2
      %s47 = scalar_select %p46, 0, %s45
      %s48 = ssub.s32 %s35, %s47
      %s49 = ssub.s32 %s36, %s43
      %s50 = sor.u32 %s48, %s49
      %p51 = scmp.eq.s32.totalorder %s50, 0
      %s53 = sadd.s32 %s52, 1
      %s54 = scalar_select %p51, %s52, %s53
      %p57 = pneg %p51
      %p58 = scmp.eq.s32.totalorder %s28, 3
      %p59 = por %p57, %p58
      %p60 = scmp.ne.s32.totalorder %s52, %s55
      %p61 = scmp.eq.s32.totalorder %s28, 0
      %p62 = por %p60, %p61
      %p63 = scmp.ne.s32.totalorder %s52, %s55
      %p64 = scmp.eq.s32.totalorder %s33, 3
      %p65 = por %p63, %p64
      %p66 = scmp.ne.s32.totalorder %s55, %s56
      %p67 = scmp.eq.s32.totalorder %s33, 0
      %p68 = por %p66, %p67
      %p69 = scmp.ne.s32.totalorder %s55, %s56
      %p70 = scmp.eq.s32.totalorder %s34, 3
      %p71 = por %p69, %p70
      %p73 = scmp.ne.s32.totalorder %s56, %s72
      %p74 = scmp.eq.s32.totalorder %s34, 0
      %p75 = por %p73, %p74
      %s76 = ssub.s32 %s35, %s47
      %p77 = scmp.eq.s32.totalorder %s76, 0
      %s79 = sadd.s32 %s78, 1
      %s80 = scalar_select %p77, %s78, %s79
      %p83 = pneg %p77
      %p84 = scmp.eq.s32.totalorder %s28, 3
      %p85 = por %p83, %p84
      %p86 = scmp.ne.s32.totalorder %s78, %s81
      %p87 = scmp.eq.s32.totalorder %s28, 0
      %p88 = por %p86, %p87
      %p89 = scmp.ne.s32.totalorder %s78, %s81
      %p90 = scmp.eq.s32.totalorder %s33, 3
      %p91 = por %p89, %p90
      %p92 = scmp.ne.s32.totalorder %s81, %s82
      %p93 = scmp.eq.s32.totalorder %s33, 0
      %p94 = por %p92, %p93
      %p95 = scmp.ne.s32.totalorder %s81, %s82
      %p96 = scmp.eq.s32.totalorder %s34, 3
      %p97 = por %p95, %p96
      %p99 = scmp.ne.s32.totalorder %s82, %s98
      %p100 = scmp.eq.s32.totalorder %s34, 0
      %p101 = por %p99, %p100
      %s103 = sadd.s32 %s102, 1
      %p106 = scmp.eq.s32.totalorder %s28, 3
      %p107 = scmp.ne.s32.totalorder %s102, %s104
      %p108 = scmp.eq.s32.totalorder %s28, 0
      %p109 = por %p107, %p108
      %p110 = scmp.ne.s32.totalorder %s102, %s104
      %p111 = scmp.eq.s32.totalorder %s33, 3
      %p112 = por %p110, %p111
      %p113 = scmp.ne.s32.totalorder %s104, %s105
      %p114 = scmp.eq.s32.totalorder %s33, 0
      %p115 = por %p113, %p114
      %p116 = scmp.ne.s32.totalorder %s104, %s105
      %p117 = scmp.eq.s32.totalorder %s34, 3
      %p118 = por %p116, %p117
      %p120 = scmp.ne.s32.totalorder %s105, %s119
      %p121 = scmp.eq.s32.totalorder %s34, 0
      %p122 = por %p120, %p121
      %s124 = sadd.s32 %s123, 1
      %p127 = scmp.eq.s32.totalorder %s28, 3
      %p128 = scmp.ne.s32.totalorder %s123, %s125
      %p129 = scmp.eq.s32.totalorder %s28, 0
      %p130 = por %p128, %p129
      %p131 = scmp.ne.s32.totalorder %s123, %s125
      %p132 = scmp.eq.s32.totalorder %s33, 3
      %p133 = por %p131, %p132
      %p134 = scmp.ne.s32.totalorder %s125, %s126
      %p135 = scmp.eq.s32.totalorder %s33, 0
      %p136 = por %p134, %p135
      %p137 = scmp.ne.s32.totalorder %s125, %s126
      %p138 = scmp.eq.s32.totalorder %s34, 3
      %p139 = por %p137, %p138
      %p141 = scmp.ne.s32.totalorder %s126, %s140
      %p142 = scmp.eq.s32.totalorder %s34, 0
      %p143 = por %p141, %p142
      %s145 = sadd.s32 %s144, 1
      %p148 = scmp.eq.s32.totalorder %s28, 3
      %p149 = scmp.ne.s32.totalorder %s144, %s146
      %p150 = scmp.eq.s32.totalorder %s28, 0
      %p151 = por %p149, %p150
      %p152 = scmp.ne.s32.totalorder %s144, %s146
      %p153 = scmp.eq.s32.totalorder %s33, 3
      %p154 = por %p152, %p153
      %p155 = scmp.ne.s32.totalorder %s146, %s147
      %p156 = scmp.eq.s32.totalorder %s33, 0
      %p157 = por %p155, %p156
      %p158 = scmp.ne.s32.totalorder %s146, %s147
      %p159 = scmp.eq.s32.totalorder %s34, 3
      %p160 = por %p158, %p159
      %p162 = scmp.ne.s32.totalorder %s147, %s161
      %p163 = scmp.eq.s32.totalorder %s34, 0
      %p164 = por %p162, %p163
      %s166 = sadd.s32 %s165, 1
      %p169 = scmp.eq.s32.totalorder %s28, 3
      %p170 = scmp.ne.s32.totalorder %s165, %s167
      %p171 = scmp.eq.s32.totalorder %s28, 0
      %p172 = por %p170, %p171
      %p173 = scmp.ne.s32.totalorder %s165, %s167
      %p174 = scmp.eq.s32.totalorder %s33, 3
      %p175 = por %p173, %p174
      %p176 = scmp.ne.s32.totalorder %s167, %s168
      %p177 = scmp.eq.s32.totalorder %s33, 0
      %p178 = por %p176, %p177
      %p179 = scmp.ne.s32.totalorder %s167, %s168
      %p180 = scmp.eq.s32.totalorder %s34, 3
      %p181 = por %p179, %p180
      %p183 = scmp.ne.s32.totalorder %s168, %s182
      %p184 = scmp.eq.s32.totalorder %s34, 0
      %p185 = por %p183, %p184
      %s187 = sadd.s32 %s186, 1
      %p190 = scmp.eq.s32.totalorder %s28, 3
      %p191 = scmp.ne.s32.totalorder %s186, %s188
      %p192 = scmp.eq.s32.totalorder %s28, 0
      %p193 = por %p191, %p192
      %p194 = scmp.ne.s32.totalorder %s186, %s188
      %p195 = scmp.eq.s32.totalorder %s33, 3
      %p196 = por %p194, %p195
      %p197 = scmp.ne.s32.totalorder %s188, %s189
      %p198 = scmp.eq.s32.totalorder %s33, 0
      %p199 = por %p197, %p198
      %p200 = scmp.ne.s32.totalorder %s188, %s189
      %p201 = scmp.eq.s32.totalorder %s34, 3
      %p202 = por %p200, %p201
      %p204 = scmp.ne.s32.totalorder %s189, %s203
      %p205 = scmp.eq.s32.totalorder %s34, 0
      %p206 = por %p204, %p205
      %s208 = sadd.s32 %s207, 1
      %p211 = scmp.eq.s32.totalorder %s28, 3
      %p212 = scmp.ne.s32.totalorder %s207, %s209
      %p213 = scmp.eq.s32.totalorder %s28, 0
      %p214 = por %p212, %p213
      %p215 = scmp.ne.s32.totalorder %s207, %s209
      %p216 = scmp.eq.s32.totalorder %s33, 3
      %p217 = por %p215, %p216
      %p218 = scmp.ne.s32.totalorder %s209, %s210
      %p219 = scmp.eq.s32.totalorder %s33, 0
      %p220 = por %p218, %p219
      %p221 = scmp.ne.s32.totalorder %s209, %s210
      %p222 = scmp.eq.s32.totalorder %s34, 3
      %p223 = por %p221, %p222
      %p225 = scmp.ne.s32.totalorder %s210, %s224
      %p226 = scmp.eq.s32.totalorder %s34, 0
      %p227 = por %p225, %p226
      %s229 = sadd.s32 %s228, 1
      %p232 = scmp.eq.s32.totalorder %s28, 3
      %p233 = scmp.ne.s32.totalorder %s228, %s230
      %p234 = scmp.eq.s32.totalorder %s28, 0
      %p235 = por %p233, %p234
      %p236 = scmp.ne.s32.totalorder %s228, %s230
      %p237 = scmp.eq.s32.totalorder %s33, 3
      %p238 = por %p236, %p237
      %p239 = scmp.ne.s32.totalorder %s230, %s231
      %p240 = scmp.eq.s32.totalorder %s33, 0
      %p241 = por %p239, %p240
      %p242 = scmp.ne.s32.totalorder %s230, %s231
      %p243 = scmp.eq.s32.totalorder %s34, 3
      %p244 = por %p242, %p243
      %p246 = scmp.ne.s32.totalorder %s231, %s245
      %p247 = scmp.eq.s32.totalorder %s34, 0
      %p248 = por %p246, %p247
      %s250 = sadd.s32 %s249, 1
      %p253 = scmp.eq.s32.totalorder %s28, 3
      %p254 = scmp.ne.s32.totalorder %s249, %s251
      %p255 = scmp.eq.s32.totalorder %s28, 0
      %p256 = por %p254, %p255
      %p257 = scmp.ne.s32.totalorder %s249, %s251
      %p258 = scmp.eq.s32.totalorder %s33, 3
      %p259 = por %p257, %p258
      %p260 = scmp.ne.s32.totalorder %s251, %s252
      %p261 = scmp.eq.s32.totalorder %s33, 0
      %p262 = por %p260, %p261
      %p263 = scmp.ne.s32.totalorder %s251, %s252
      %p264 = scmp.eq.s32.totalorder %s34, 3
      %p265 = por %p263, %p264
      %p267 = scmp.ne.s32.totalorder %s252, %s266
      %p268 = scmp.eq.s32.totalorder %s34, 0
      %p269 = por %p267, %p268
      %s271 = sadd.s32 %s270, 1
      %p274 = scmp.eq.s32.totalorder %s28, 3
      %p275 = scmp.ne.s32.totalorder %s270, %s272
      %p276 = scmp.eq.s32.totalorder %s28, 0
      %p277 = por %p275, %p276
      %p278 = scmp.ne.s32.totalorder %s270, %s272
      %p279 = scmp.eq.s32.totalorder %s33, 3
      %p280 = por %p278, %p279
      %p281 = scmp.ne.s32.totalorder %s272, %s273
      %p282 = scmp.eq.s32.totalorder %s33, 0
      %p283 = por %p281, %p282
      %p284 = scmp.ne.s32.totalorder %s272, %s273
      %p285 = scmp.eq.s32.totalorder %s34, 3
      %p286 = por %p284, %p285
      %p288 = scmp.ne.s32.totalorder %s273, %s287
      %p289 = scmp.eq.s32.totalorder %s34, 0
      %p290 = por %p288, %p289
      %s291 = ssub.s32 %s35, %s47
      %p292 = scmp.eq.s32.totalorder %s291, 0
      %s294 = sadd.s32 %s293, 1
      %s295 = scalar_select %p292, %s293, %s294
      %p298 = pneg %p292
      %p299 = scmp.eq.s32.totalorder %s28, 3
      %p300 = por %p298, %p299
      %p301 = scmp.ne.s32.totalorder %s293, %s296
      %p302 = scmp.eq.s32.totalorder %s28, 0
      %p303 = por %p301, %p302
      %p304 = scmp.ne.s32.totalorder %s293, %s296
      %p305 = scmp.eq.s32.totalorder %s33, 3
      %p306 = por %p304, %p305
      %p307 = scmp.ne.s32.totalorder %s296, %s297
      %p308 = scmp.eq.s32.totalorder %s33, 0
      %p309 = por %p307, %p308
      %p310 = scmp.ne.s32.totalorder %s296, %s297
      %p311 = scmp.eq.s32.totalorder %s34, 3
      %p312 = por %p310, %p311
      %p314 = scmp.ne.s32.totalorder %s297, %s313
      %p315 = scmp.eq.s32.totalorder %s34, 0
      %p316 = por %p314, %p315
      %p317 = scmp.le.s32.totalorder 1, %s28
      %p318 = scmp.lt.s32.totalorder %s28, 5
      %p319 = pnand %p317, %p318
      %p320 = pneg %p319
      // Predicated region
      $region9: #{tpu_custom_call.1} parent=5 // pred_check
        _
      $region10: #{tpu_custom_call.1} parent=5 // pred_check_branch
        %322 = sbr.rel (%p319) target = $region12
      $region11: #{tpu_custom_call.1} parent=5 // pred_region
        %s323 = ssub.s32 %s28, 1
        // Predicated region
        $region13: #{tpu_custom_call.1} parent=11 // pred_check
          %p324 = pneg %p115
        $region14: #{tpu_custom_call.1} parent=11 // pred_check_branch
          %326 = sbr.rel (%p324) target = $region16
        $region15: #{tpu_custom_call.1} parent=11 // pred_region
          %s328 = ssub.s32 16384, 16384
          %329 = vsyncadd [#allocation10], %s328
          %s330 = sshll.u32 [#allocation11], 4
          %s331 = int_to_ptr.vmem [resolvable:$true] %s330
          %336 = dma.hbm_to_vmem [thread:$0]  %s2, 16384, %s331, [#allocation10], 1024, 1024, 64
        $region16: #{tpu_custom_call.1} parent=11 // pred_fallthru
          _
        // Predicated region
        $region17: #{tpu_custom_call.1} parent=11 // pred_check
          %p337 = pneg %p136
        $region18: #{tpu_custom_call.1} parent=11 // pred_check_branch
          %339 = sbr.rel (%p337) target = $region20
        $region19: #{tpu_custom_call.1} parent=11 // pred_region
          %s341 = ssub.s32 128, 128
          %342 = vsyncadd [#allocation13], %s341
          %s344 = sshll.u32 [#allocation12], 4
          %s345 = int_to_ptr.vmem [resolvable:$true] %s344
          %347 = dma.hbm_to_vmem [thread:$0]  %s3, 128, %s345, [#allocation13]
        $region20: #{tpu_custom_call.1} parent=11 // pred_fallthru
          _
        // Predicated region
        $region21: #{tpu_custom_call.1} parent=11 // pred_check
          %p348 = pneg %p157
        $region22: #{tpu_custom_call.1} parent=11 // pred_check_branch
          %350 = sbr.rel (%p348) target = $region24
        $region23: #{tpu_custom_call.1} parent=11 // pred_region
          %s352 = ssub.s32 24576, 24576
          %353 = vsyncadd [#allocation13], %s352
          %s354 = sshll.u32 [#allocation14], 4
          %s355 = int_to_ptr.vmem [resolvable:$true] %s354
          %360 = dma.hbm_to_vmem [thread:$0]  %s4, 24576, %s355, [#allocation13], 1536, 1536, 96
        $region24: #{tpu_custom_call.1} parent=11 // pred_fallthru
          _
        // Predicated region
        $region25: #{tpu_custom_call.1} parent=11 // pred_check
          %p361 = pneg %p178
        $region26: #{tpu_custom_call.1} parent=11 // pred_check_branch
          %363 = sbr.rel (%p361) target = $region28
        $region27: #{tpu_custom_call.1} parent=11 // pred_region
          _
        $region28: #{tpu_custom_call.1} parent=11 // pred_fallthru
          _
        // Predicated region
        $region29: #{tpu_custom_call.1} parent=11 // pred_check
          %p364 = pneg %p199
        $region30: #{tpu_custom_call.1} parent=11 // pred_check_branch
          %366 = sbr.rel (%p364) target = $region32
        $region31: #{tpu_custom_call.1} parent=11 // pred_region
          _
        $region32: #{tpu_custom_call.1} parent=11 // pred_fallthru
          _
        // Predicated region
        $region33: #{tpu_custom_call.1} parent=11 // pred_check
          %p367 = pneg %p220
        $region34: #{tpu_custom_call.1} parent=11 // pred_check_branch
          %369 = sbr.rel (%p367) target = $region36
        $region35: #{tpu_custom_call.1} parent=11 // pred_region
          _
        $region36: #{tpu_custom_call.1} parent=11 // pred_fallthru
          _
        // Predicated region
        $region37: #{tpu_custom_call.1} parent=11 // pred_check
          %p370 = pneg %p241
        $region38: #{tpu_custom_call.1} parent=11 // pred_check_branch
          %372 = sbr.rel (%p370) target = $region40
        $region39: #{tpu_custom_call.1} parent=11 // pred_region
          %s374 = ssub.s32 8192, 8192
          %375 = vsyncadd [#allocation16], %s374
          %s376 = sshll.u32 [#allocation15], 4
          %s377 = int_to_ptr.vmem [resolvable:$true] %s376
          %382 = dma.hbm_to_vmem [thread:$0]  %s8, 8192, %s377, [#allocation16], 128, 128, 8
        $region40: #{tpu_custom_call.1} parent=11 // pred_fallthru
          _
        // Predicated region
        $region41: #{tpu_custom_call.1} parent=11 // pred_check
          %p383 = pneg %p262
        $region42: #{tpu_custom_call.1} parent=11 // pred_check_branch
          %385 = sbr.rel (%p383) target = $region44
        $region43: #{tpu_custom_call.1} parent=11 // pred_region
          _
        $region44: #{tpu_custom_call.1} parent=11 // pred_fallthru
          _
        // Predicated region
        $region45: #{tpu_custom_call.1} parent=11 // pred_check
          %p386 = pneg %p283
        $region46: #{tpu_custom_call.1} parent=11 // pred_check_branch
          %388 = sbr.rel (%p386) target = $region48
        $region47: #{tpu_custom_call.1} parent=11 // pred_region
          _
        $region48: #{tpu_custom_call.1} parent=11 // pred_fallthru
          _
      $region12: #{tpu_custom_call.1} parent=5 // pred_fallthru
        _
      %p389 = scmp.lt.s32.totalorder %s28, 4
      // Predicated region
      $region49: #{tpu_custom_call.1} parent=5 // pred_check
        %p390 = pneg %p389
      $region50: #{tpu_custom_call.1} parent=5 // pred_check_branch
        %392 = sbr.rel (%p390) target = $region52
      $region51: #{tpu_custom_call.1} parent=5 // pred_region
        // Predicated region
        $region53: #{tpu_custom_call.1} parent=51 // pred_check
          %p393 = pneg %p62
        $region54: #{tpu_custom_call.1} parent=51 // pred_check_branch
          %395 = sbr.rel (%p393) target = $region56
        $region55: #{tpu_custom_call.1} parent=51 // pred_region
          %s396 = sand.u32 %s52, 1
          %s397 = scalar_lea.sflag [#allocation7], %s396
          %s398 = sand.u32 %s52, 1
          %s399 = smul.addr %s398, 8
          %s400 = scalar_lea.vmem [#allocation6], %s399
          %s402 = ssub.s32 128, 128
          %403 = vsyncadd %s397, %s402
          %s404 = smul.addr %s35, 2
          %s405 = sadd.s32 %s36, %s404
          %s406 = smul.addr %s405, 128
          %s407 = scalar_lea.hbm %s0, %s406
          %s409 = sshll.u32 %s400, 4
          %s410 = int_to_ptr.vmem [resolvable:$true] %s409
          %412 = dma.hbm_to_vmem [thread:$0]  %s407, 128, %s410, %s397
        $region56: #{tpu_custom_call.1} parent=51 // pred_fallthru
          _
        // Predicated region
        $region57: #{tpu_custom_call.1} parent=51 // pred_check
          %p413 = pneg %p88
        $region58: #{tpu_custom_call.1} parent=51 // pred_check_branch
          %415 = sbr.rel (%p413) target = $region60
        $region59: #{tpu_custom_call.1} parent=51 // pred_region
          %s416 = sand.u32 %s28, 1
          %s417 = scalar_lea.sflag [#allocation10], %s416
          %s418 = sand.u32 %s78, 1
          %s419 = smul.addr %s418, 8
          %s420 = scalar_lea.vmem [#allocation9], %s419
          %s422 = ssub.s32 128, 128
          %423 = vsyncadd %s417, %s422
          %s424 = smul.addr %s35, 128
          %s425 = scalar_lea.hbm %s1, %s424
          %s427 = sshll.u32 %s420, 4
          %s428 = int_to_ptr.vmem [resolvable:$true] %s427
          %430 = dma.hbm_to_vmem [thread:$0]  %s425, 128, %s428, %s417
        $region60: #{tpu_custom_call.1} parent=51 // pred_fallthru
          _
      $region52: #{tpu_custom_call.1} parent=5 // pred_fallthru
        _
      %p431 = scmp.le.s32.totalorder 1, %s28
      %p432 = scmp.lt.s32.totalorder %s28, 5
      %p433 = pnand %p431, %p432
      %p434 = pneg %p433
      // Predicated region
      $region61: #{tpu_custom_call.1} parent=5 // pred_check
        _
      $region62: #{tpu_custom_call.1} parent=5 // pred_check_branch
        %436 = sbr.rel (%p433) target = $region64
      $region63: #{tpu_custom_call.1} parent=5 // pred_region
        %s437 = ssub.s32 %s28, 1
        %s438 = sand.u32 %s55, 1
        %s439 = scalar_lea.sflag [#allocation7], %s438
        %s440 = sand.u32 %s55, 1
        %s441 = smul.addr %s440, 8
        %s442 = scalar_lea.vmem [#allocation6], %s441
        // Predicated region
        $region65: #{tpu_custom_call.1} parent=63 // pred_check
          %p443 = pneg %p68
        $region66: #{tpu_custom_call.1} parent=63 // pred_check_branch
          %445 = sbr.rel (%p443) target = $region68
        $region67: #{tpu_custom_call.1} parent=63 // pred_region
          %446 = dma.done %s439, 128
        $region68: #{tpu_custom_call.1} parent=63 // pred_fallthru
          _
        %s447 = sand.u32 %s33, 1
        %s448 = scalar_lea.sflag [#allocation10], %s447
        %s449 = sand.u32 %s81, 1
        %s450 = smul.addr %s449, 8
        %s451 = scalar_lea.vmem [#allocation9], %s450
        // Predicated region
        $region69: #{tpu_custom_call.1} parent=63 // pred_check
          %p452 = pneg %p94
        $region70: #{tpu_custom_call.1} parent=63 // pred_check_branch
          %454 = sbr.rel (%p452) target = $region72
        $region71: #{tpu_custom_call.1} parent=63 // pred_region
          %455 = dma.done %s448, 128
        $region72: #{tpu_custom_call.1} parent=63 // pred_fallthru
          _
        // Predicated region
        $region73: #{tpu_custom_call.1} parent=63 // pred_check
          %p456 = pneg %p115
        $region74: #{tpu_custom_call.1} parent=63 // pred_check_branch
          %458 = sbr.rel (%p456) target = $region76
        $region75: #{tpu_custom_call.1} parent=63 // pred_region
          %459 = dma.done [#allocation10], 16384
        $region76: #{tpu_custom_call.1} parent=63 // pred_fallthru
          _
        // Predicated region
        $region77: #{tpu_custom_call.1} parent=63 // pred_check
          %p460 = pneg %p136
        $region78: #{tpu_custom_call.1} parent=63 // pred_check_branch
          %462 = sbr.rel (%p460) target = $region80
        $region79: #{tpu_custom_call.1} parent=63 // pred_region
          %463 = dma.done [#allocation13], 128
        $region80: #{tpu_custom_call.1} parent=63 // pred_fallthru
          _
        // Predicated region
        $region81: #{tpu_custom_call.1} parent=63 // pred_check
          %p464 = pneg %p157
        $region82: #{tpu_custom_call.1} parent=63 // pred_check_branch
          %466 = sbr.rel (%p464) target = $region84
        $region83: #{tpu_custom_call.1} parent=63 // pred_region
          %467 = dma.done [#allocation13], 24576
        $region84: #{tpu_custom_call.1} parent=63 // pred_fallthru
          _
        // Predicated region
        $region85: #{tpu_custom_call.1} parent=63 // pred_check
          %p468 = pneg %p241
        $region86: #{tpu_custom_call.1} parent=63 // pred_check_branch
          %470 = sbr.rel (%p468) target = $region88
        $region87: #{tpu_custom_call.1} parent=63 // pred_region
          %471 = dma.done [#allocation16], 8192
        $region88: #{tpu_custom_call.1} parent=63 // pred_fallthru
          _
        %s472 = sand.u32 %s55, 1
        %s473 = scalar_lea.sflag [#allocation7], %s472
        %s474 = sand.u32 %s55, 1
        %s475 = smul.addr %s474, 8
        %s476 = scalar_lea.vmem [#allocation6], %s475
        %p477 = pneg %p68
        %p478 = pneg %p65
        %s479 = sand.u32 %s33, 1
        %s480 = scalar_lea.sflag [#allocation10], %s479
        %s481 = sand.u32 %s81, 1
        %s482 = smul.addr %s481, 8
        %s483 = scalar_lea.vmem [#allocation9], %s482
        %p484 = pneg %p94
        %p485 = pneg %p91
        %p486 = pneg %p115
        %p487 = pneg %p112
        %p488 = pneg %p136
        %p489 = pneg %p133
        %p490 = pneg %p157
        %p491 = pneg %p154
        %p492 = pneg %p178
        %p493 = pneg %p175
        %p494 = pneg %p199
        %p495 = pneg %p196
        %p496 = pneg %p220
        %p497 = pneg %p217
        %p498 = pneg %p241
        %p499 = pneg %p238
        %p500 = pneg %p262
        %p501 = pneg %p259
        %p502 = pneg %p283
        %p503 = pneg %p280
        %p504 = pneg %p309
        %p505 = pneg %p306
        %s506 = sand.u32 %s296, 1
        %s507 = scalar_lea.sflag [#allocation8], %s506
        %s508 = sand.u32 %s296, 1
        %s509 = smul.addr %s508, 8
        %s510 = scalar_lea.vmem [#allocation17], %s509
        %v511 = vld [vmem:[%s7] sm:$0x1]
        %p512 = scmp.eq.s32.totalorder %s38, 0
        // Predicated region
        $region89: #{tpu_custom_call.1} parent=63 // pred_check
          %p513 = pneg %p512
        $region90: #{tpu_custom_call.1} parent=63 // pred_check_branch
          %515 = sbr.rel (%p513) target = $region92
        $region91: #{tpu_custom_call.1} parent=63 // pred_region
          %vm516 = vcmask 7168
          %517 = vst.msk [vmem:[#allocation3] sm:$0xff] %vm516, -inf
          %518 = vst.msk [vmem:[#allocation3 + $0x8] sm:$0xff] %vm516, -inf
          %519 = vst.msk [vmem:[#allocation3 + $0x10] sm:$0xff] %vm516, -inf
          %520 = vst.msk [vmem:[#allocation3 + $0x18] sm:$0xff] %vm516, -inf
          %521 = vst.msk [vmem:[#allocation3 + $0x20] sm:$0xff] %vm516, -inf
          %522 = vst.msk [vmem:[#allocation3 + $0x28] sm:$0xff] %vm516, -inf
          %523 = vst.msk [vmem:[#allocation3 + $0x30] sm:$0xff] %vm516, -inf
          %524 = vst.msk [vmem:[#allocation3 + $0x38] sm:$0xff] %vm516, -inf
          %525 = vst.msk [vmem:[#allocation4] sm:$0xff] %vm516, 0.0
          %526 = vst.msk [vmem:[#allocation4 + $0x8] sm:$0xff] %vm516, 0.0
          %527 = vst.msk [vmem:[#allocation4 + $0x10] sm:$0xff] %vm516, 0.0
          %528 = vst.msk [vmem:[#allocation4 + $0x18] sm:$0xff] %vm516, 0.0
          %529 = vst.msk [vmem:[#allocation4 + $0x20] sm:$0xff] %vm516, 0.0
          %530 = vst.msk [vmem:[#allocation4 + $0x28] sm:$0xff] %vm516, 0.0
          %531 = vst.msk [vmem:[#allocation4 + $0x30] sm:$0xff] %vm516, 0.0
          %532 = vst.msk [vmem:[#allocation4 + $0x38] sm:$0xff] %vm516, 0.0
          %vm533 = vcmask 523264
          %534 = vst.msk [vmem:[#allocation5] sm:$0xff] %vm533, 0.0
          %535 = vst.msk [vmem:[#allocation5 + $0x8] sm:$0xff] %vm533, 0.0
          %536 = vst.msk [vmem:[#allocation5 + $0x10] sm:$0xff] %vm533, 0.0
          %537 = vst.msk [vmem:[#allocation5 + $0x18] sm:$0xff] %vm533, 0.0
          %538 = vst.msk [vmem:[#allocation5 + $0x20] sm:$0xff] %vm533, 0.0
          %539 = vst.msk [vmem:[#allocation5 + $0x28] sm:$0xff] %vm533, 0.0
          %540 = vst.msk [vmem:[#allocation5 + $0x30] sm:$0xff] %vm533, 0.0
          %541 = vst.msk [vmem:[#allocation5 + $0x38] sm:$0xff] %vm533, 0.0
          %v542 = vld [vmem:[%s451] sm:$0xff]
          %543 = vadd.xlane.f32.xlu0 %v542
          %v544 = vpop.xlane.xlu0 %543
          %v545 = vrcp.pop 128.0
          %v546 = vmul.f32 %v544, %v545
          %v547 = vsub.f32 %v542, %v546
          %v548 = vmul.f32 %v547, %v547
          %549 = vadd.xlane.f32.xlu0 %v548
          %v550 = vpop.xlane.xlu0 %549
          %v551 = vmul.f32 %v550, %v545
          %v552 = vadd.f32 %v551, 1e-05
          %v553 = vrsqrt.pop %v552
          %v554 = vmul.f32 %v547, %v553
          %v555 = vld [vmem:[#allocation14] sm:$0xff]
          %v556 = vld [vmem:[#allocation14 + $0x8] sm:$0xff]
          %v557 = vld [vmem:[#allocation14 + $0x10] sm:$0xff]
          %v558 = vld [vmem:[#allocation14 + $0x18] sm:$0xff]
          %v559 = vld [vmem:[#allocation14 + $0x20] sm:$0xff]
          %v560 = vld [vmem:[#allocation14 + $0x28] sm:$0xff]
          %v561 = vld [vmem:[#allocation14 + $0x30] sm:$0xff]
          %v562 = vld [vmem:[#allocation14 + $0x38] sm:$0xff]
          %v563 = vld [vmem:[#allocation14 + $0x40] sm:$0xff]
          %v564 = vld [vmem:[#allocation14 + $0x48] sm:$0xff]
          %v565 = vld [vmem:[#allocation14 + $0x50] sm:$0xff]
          %v566 = vld [vmem:[#allocation14 + $0x58] sm:$0xff]
          %v567 = vld [vmem:[#allocation14 + $0x60] sm:$0xff]
          %v568 = vld [vmem:[#allocation14 + $0x68] sm:$0xff]
          %v569 = vld [vmem:[#allocation14 + $0x70] sm:$0xff]
          %v570 = vld [vmem:[#allocation14 + $0x78] sm:$0xff]
          %v571 = vld [vmem:[#allocation14 + $0x80] sm:$0xff]
          %v572 = vld [vmem:[#allocation14 + $0x88] sm:$0xff]
          %v573 = vld [vmem:[#allocation14 + $0x90] sm:$0xff]
          %v574 = vld [vmem:[#allocation14 + $0x98] sm:$0xff]
          %v575 = vld [vmem:[#allocation14 + $0xa0] sm:$0xff]
          %v576 = vld [vmem:[#allocation14 + $0xa8] sm:$0xff]
          %v577 = vld [vmem:[#allocation14 + $0xb0] sm:$0xff]
          %v578 = vld [vmem:[#allocation14 + $0xb8] sm:$0xff]
          %v579 = vld [vmem:[#allocation14 + $0xc0] sm:$0xff]
          %v580 = vld [vmem:[#allocation14 + $0xc8] sm:$0xff]
          %v581 = vld [vmem:[#allocation14 + $0xd0] sm:$0xff]
          %v582 = vld [vmem:[#allocation14 + $0xd8] sm:$0xff]
          %v583 = vld [vmem:[#allocation14 + $0xe0] sm:$0xff]
          %v584 = vld [vmem:[#allocation14 + $0xe8] sm:$0xff]
          %v585 = vld [vmem:[#allocation14 + $0xf0] sm:$0xff]
          %v586 = vld [vmem:[#allocation14 + $0xf8] sm:$0xff]
          %v587 = vld [vmem:[#allocation14 + $0x100] sm:$0xff]
          %v588 = vld [vmem:[#allocation14 + $0x108] sm:$0xff]
          %v589 = vld [vmem:[#allocation14 + $0x110] sm:$0xff]
          %v590 = vld [vmem:[#allocation14 + $0x118] sm:$0xff]
          %v591 = vld [vmem:[#allocation14 + $0x120] sm:$0xff]
          %v592 = vld [vmem:[#allocation14 + $0x128] sm:$0xff]
          %v593 = vld [vmem:[#allocation14 + $0x130] sm:$0xff]
          %v594 = vld [vmem:[#allocation14 + $0x138] sm:$0xff]
          %v595 = vld [vmem:[#allocation14 + $0x140] sm:$0xff]
          %v596 = vld [vmem:[#allocation14 + $0x148] sm:$0xff]
          %v597 = vld [vmem:[#allocation14 + $0x150] sm:$0xff]
          %v598 = vld [vmem:[#allocation14 + $0x158] sm:$0xff]
          %v599 = vld [vmem:[#allocation14 + $0x160] sm:$0xff]
          %v600 = vld [vmem:[#allocation14 + $0x168] sm:$0xff]
          %v601 = vld [vmem:[#allocation14 + $0x170] sm:$0xff]
          %v602 = vld [vmem:[#allocation14 + $0x178] sm:$0xff]
          %v603 = vld [vmem:[#allocation14 + $0x180] sm:$0xff]
          %v604 = vld [vmem:[#allocation14 + $0x188] sm:$0xff]
          %v605 = vld [vmem:[#allocation14 + $0x190] sm:$0xff]
          %v606 = vld [vmem:[#allocation14 + $0x198] sm:$0xff]
          %v607 = vld [vmem:[#allocation14 + $0x1a0] sm:$0xff]
          %v608 = vld [vmem:[#allocation14 + $0x1a8] sm:$0xff]
          %v609 = vld [vmem:[#allocation14 + $0x1b0] sm:$0xff]
          %v610 = vld [vmem:[#allocation14 + $0x1b8] sm:$0xff]
          %v611 = vld [vmem:[#allocation14 + $0x1c0] sm:$0xff]
          %v612 = vld [vmem:[#allocation14 + $0x1c8] sm:$0xff]
          %v613 = vld [vmem:[#allocation14 + $0x1d0] sm:$0xff]
          %v614 = vld [vmem:[#allocation14 + $0x1d8] sm:$0xff]
          %v615 = vld [vmem:[#allocation14 + $0x1e0] sm:$0xff]
          %v616 = vld [vmem:[#allocation14 + $0x1e8] sm:$0xff]
          %v617 = vld [vmem:[#allocation14 + $0x1f0] sm:$0xff]
          %v618 = vld [vmem:[#allocation14 + $0x1f8] sm:$0xff]
          %v619 = vld [vmem:[#allocation14 + $0x200] sm:$0xff]
          %v620 = vld [vmem:[#allocation14 + $0x208] sm:$0xff]
          %v621 = vld [vmem:[#allocation14 + $0x210] sm:$0xff]
          %v622 = vld [vmem:[#allocation14 + $0x218] sm:$0xff]
          %v623 = vld [vmem:[#allocation14 + $0x220] sm:$0xff]
          %v624 = vld [vmem:[#allocation14 + $0x228] sm:$0xff]
          %v625 = vld [vmem:[#allocation14 + $0x230] sm:$0xff]
          %v626 = vld [vmem:[#allocation14 + $0x238] sm:$0xff]
          %v627 = vld [vmem:[#allocation14 + $0x240] sm:$0xff]
          %v628 = vld [vmem:[#allocation14 + $0x248] sm:$0xff]
          %v629 = vld [vmem:[#allocation14 + $0x250] sm:$0xff]
          %v630 = vld [vmem:[#allocation14 + $0x258] sm:$0xff]
          %v631 = vld [vmem:[#allocation14 + $0x260] sm:$0xff]
          %v632 = vld [vmem:[#allocation14 + $0x268] sm:$0xff]
          %v633 = vld [vmem:[#allocation14 + $0x270] sm:$0xff]
          %v634 = vld [vmem:[#allocation14 + $0x278] sm:$0xff]
          %v635 = vld [vmem:[#allocation14 + $0x280] sm:$0xff]
          %v636 = vld [vmem:[#allocation14 + $0x288] sm:$0xff]
          %v637 = vld [vmem:[#allocation14 + $0x290] sm:$0xff]
          %v638 = vld [vmem:[#allocation14 + $0x298] sm:$0xff]
          %v639 = vld [vmem:[#allocation14 + $0x2a0] sm:$0xff]
          %v640 = vld [vmem:[#allocation14 + $0x2a8] sm:$0xff]
          %v641 = vld [vmem:[#allocation14 + $0x2b0] sm:$0xff]
          %v642 = vld [vmem:[#allocation14 + $0x2b8] sm:$0xff]
          %v643 = vld [vmem:[#allocation14 + $0x2c0] sm:$0xff]
          %v644 = vld [vmem:[#allocation14 + $0x2c8] sm:$0xff]
          %v645 = vld [vmem:[#allocation14 + $0x2d0] sm:$0xff]
          %v646 = vld [vmem:[#allocation14 + $0x2d8] sm:$0xff]
          %v647 = vld [vmem:[#allocation14 + $0x2e0] sm:$0xff]
          %v648 = vld [vmem:[#allocation14 + $0x2e8] sm:$0xff]
          %v649 = vld [vmem:[#allocation14 + $0x2f0] sm:$0xff]
          %v650 = vld [vmem:[#allocation14 + $0x2f8] sm:$0xff]
          %v651 = vld [vmem:[#allocation14 + $0x300] sm:$0xff]
          %v652 = vld [vmem:[#allocation14 + $0x308] sm:$0xff]
          %v653 = vld [vmem:[#allocation14 + $0x310] sm:$0xff]
          %v654 = vld [vmem:[#allocation14 + $0x318] sm:$0xff]
          %v655 = vld [vmem:[#allocation14 + $0x320] sm:$0xff]
          %v656 = vld [vmem:[#allocation14 + $0x328] sm:$0xff]
          %v657 = vld [vmem:[#allocation14 + $0x330] sm:$0xff]
          %v658 = vld [vmem:[#allocation14 + $0x338] sm:$0xff]
          %v659 = vld [vmem:[#allocation14 + $0x340] sm:$0xff]
          %v660 = vld [vmem:[#allocation14 + $0x348] sm:$0xff]
          %v661 = vld [vmem:[#allocation14 + $0x350] sm:$0xff]
          %v662 = vld [vmem:[#allocation14 + $0x358] sm:$0xff]
          %v663 = vld [vmem:[#allocation14 + $0x360] sm:$0xff]
          %v664 = vld [vmem:[#allocation14 + $0x368] sm:$0xff]
          %v665 = vld [vmem:[#allocation14 + $0x370] sm:$0xff]
          %v666 = vld [vmem:[#allocation14 + $0x378] sm:$0xff]
          %v667 = vld [vmem:[#allocation14 + $0x380] sm:$0xff]
          %v668 = vld [vmem:[#allocation14 + $0x388] sm:$0xff]
          %v669 = vld [vmem:[#allocation14 + $0x390] sm:$0xff]
          %v670 = vld [vmem:[#allocation14 + $0x398] sm:$0xff]
          %v671 = vld [vmem:[#allocation14 + $0x3a0] sm:$0xff]
          %v672 = vld [vmem:[#allocation14 + $0x3a8] sm:$0xff]
          %v673 = vld [vmem:[#allocation14 + $0x3b0] sm:$0xff]
          %v674 = vld [vmem:[#allocation14 + $0x3b8] sm:$0xff]
          %v675 = vld [vmem:[#allocation14 + $0x3c0] sm:$0xff]
          %v676 = vld [vmem:[#allocation14 + $0x3c8] sm:$0xff]
          %v677 = vld [vmem:[#allocation14 + $0x3d0] sm:$0xff]
          %v678 = vld [vmem:[#allocation14 + $0x3d8] sm:$0xff]
          %v679 = vld [vmem:[#allocation14 + $0x3e0] sm:$0xff]
          %v680 = vld [vmem:[#allocation14 + $0x3e8] sm:$0xff]
          %v681 = vld [vmem:[#allocation14 + $0x3f0] sm:$0xff]
          %v682 = vld [vmem:[#allocation14 + $0x3f8] sm:$0xff]
          %v683 = vld [vmem:[#allocation14 + $0x400] sm:$0xff]
          %v684 = vld [vmem:[#allocation14 + $0x408] sm:$0xff]
          %v685 = vld [vmem:[#allocation14 + $0x410] sm:$0xff]
          %v686 = vld [vmem:[#allocation14 + $0x418] sm:$0xff]
          %v687 = vld [vmem:[#allocation14 + $0x420] sm:$0xff]
          %v688 = vld [vmem:[#allocation14 + $0x428] sm:$0xff]
          %v689 = vld [vmem:[#allocation14 + $0x430] sm:$0xff]
          %v690 = vld [vmem:[#allocation14 + $0x438] sm:$0xff]
          %v691 = vld [vmem:[#allocation14 + $0x440] sm:$0xff]
          %v692 = vld [vmem:[#allocation14 + $0x448] sm:$0xff]
          %v693 = vld [vmem:[#allocation14 + $0x450] sm:$0xff]
          %v694 = vld [vmem:[#allocation14 + $0x458] sm:$0xff]
          %v695 = vld [vmem:[#allocation14 + $0x460] sm:$0xff]
          %v696 = vld [vmem:[#allocation14 + $0x468] sm:$0xff]
          %v697 = vld [vmem:[#allocation14 + $0x470] sm:$0xff]
          %v698 = vld [vmem:[#allocation14 + $0x478] sm:$0xff]
          %v699 = vld [vmem:[#allocation14 + $0x480] sm:$0xff]
          %v700 = vld [vmem:[#allocation14 + $0x488] sm:$0xff]
          %v701 = vld [vmem:[#allocation14 + $0x490] sm:$0xff]
          %v702 = vld [vmem:[#allocation14 + $0x498] sm:$0xff]
          %v703 = vld [vmem:[#allocation14 + $0x4a0] sm:$0xff]
          %v704 = vld [vmem:[#allocation14 + $0x4a8] sm:$0xff]
          %v705 = vld [vmem:[#allocation14 + $0x4b0] sm:$0xff]
          %v706 = vld [vmem:[#allocation14 + $0x4b8] sm:$0xff]
          %v707 = vld [vmem:[#allocation14 + $0x4c0] sm:$0xff]
          %v708 = vld [vmem:[#allocation14 + $0x4c8] sm:$0xff]
          %v709 = vld [vmem:[#allocation14 + $0x4d0] sm:$0xff]
          %v710 = vld [vmem:[#allocation14 + $0x4d8] sm:$0xff]
          %v711 = vld [vmem:[#allocation14 + $0x4e0] sm:$0xff]
          %v712 = vld [vmem:[#allocation14 + $0x4e8] sm:$0xff]
          %v713 = vld [vmem:[#allocation14 + $0x4f0] sm:$0xff]
          %v714 = vld [vmem:[#allocation14 + $0x4f8] sm:$0xff]
          %v715 = vld [vmem:[#allocation14 + $0x500] sm:$0xff]
          %v716 = vld [vmem:[#allocation14 + $0x508] sm:$0xff]
          %v717 = vld [vmem:[#allocation14 + $0x510] sm:$0xff]
          %v718 = vld [vmem:[#allocation14 + $0x518] sm:$0xff]
          %v719 = vld [vmem:[#allocation14 + $0x520] sm:$0xff]
          %v720 = vld [vmem:[#allocation14 + $0x528] sm:$0xff]
          %v721 = vld [vmem:[#allocation14 + $0x530] sm:$0xff]
          %v722 = vld [vmem:[#allocation14 + $0x538] sm:$0xff]
          %v723 = vld [vmem:[#allocation14 + $0x540] sm:$0xff]
          %v724 = vld [vmem:[#allocation14 + $0x548] sm:$0xff]
          %v725 = vld [vmem:[#allocation14 + $0x550] sm:$0xff]
          %v726 = vld [vmem:[#allocation14 + $0x558] sm:$0xff]
          %v727 = vld [vmem:[#allocation14 + $0x560] sm:$0xff]
          %v728 = vld [vmem:[#allocation14 + $0x568] sm:$0xff]
          %v729 = vld [vmem:[#allocation14 + $0x570] sm:$0xff]
          %v730 = vld [vmem:[#allocation14 + $0x578] sm:$0xff]
          %v731 = vld [vmem:[#allocation14 + $0x580] sm:$0xff]
          %v732 = vld [vmem:[#allocation14 + $0x588] sm:$0xff]
          %v733 = vld [vmem:[#allocation14 + $0x590] sm:$0xff]
          %v734 = vld [vmem:[#allocation14 + $0x598] sm:$0xff]
          %v735 = vld [vmem:[#allocation14 + $0x5a0] sm:$0xff]
          %v736 = vld [vmem:[#allocation14 + $0x5a8] sm:$0xff]
          %v737 = vld [vmem:[#allocation14 + $0x5b0] sm:$0xff]
          %v738 = vld [vmem:[#allocation14 + $0x5b8] sm:$0xff]
          %v739 = vld [vmem:[#allocation14 + $0x5c0] sm:$0xff]
          %v740 = vld [vmem:[#allocation14 + $0x5c8] sm:$0xff]
          %v741 = vld [vmem:[#allocation14 + $0x5d0] sm:$0xff]
          %v742 = vld [vmem:[#allocation14 + $0x5d8] sm:$0xff]
          %v743 = vld [vmem:[#allocation14 + $0x5e0] sm:$0xff]
          %v744 = vld [vmem:[#allocation14 + $0x5e8] sm:$0xff]
          %v745 = vld [vmem:[#allocation14 + $0x5f0] sm:$0xff]
          %v746 = vld [vmem:[#allocation14 + $0x5f8] sm:$0xff]
          %v747 = vld [vmem:[%s5] sm:$0xff]
          %v748 = vld [vmem:[%s5 + $0x8] sm:$0xf]
          %v751 = vlaneseq
          %v752 = vshrl.u32 %v751, 7
          %v753 = vsub.s32 0, %v752
          %v754 = vrot.slane %v747, %v753
          %v755 = vlaneseq
          %v756 = vshrl.u32 %v755, 7
          %v757 = vsub.s32 1, %v756
          %v758 = vrot.slane %v747, %v757
          %v759 = vlaneseq
          %v760 = vshrl.u32 %v759, 7
          %v761 = vsub.s32 2, %v760
          %v762 = vrot.slane %v747, %v761
          %v763 = vlaneseq
          %v764 = vshrl.u32 %v763, 7
          %v765 = vsub.s32 3, %v764
          %v766 = vrot.slane %v747, %v765
          %v767 = vlaneseq
          %v768 = vshrl.u32 %v767, 7
          %v769 = vsub.s32 4, %v768
          %v770 = vrot.slane %v747, %v769
          %v771 = vlaneseq
          %v772 = vshrl.u32 %v771, 7
          %v773 = vsub.s32 5, %v772
          %v774 = vrot.slane %v747, %v773
          %v775 = vlaneseq
          %v776 = vshrl.u32 %v775, 7
          %v777 = vsub.s32 6, %v776
          %v778 = vrot.slane %v747, %v777
          %v779 = vlaneseq
          %v780 = vshrl.u32 %v779, 7
          %v781 = vsub.s32 7, %v780
          %v782 = vrot.slane %v747, %v781
          %v783 = vlaneseq
          %v784 = vshrl.u32 %v783, 7
          %v785 = vsub.s32 0, %v784
          %v786 = vrot.slane %v748, %v785
          %v787 = vlaneseq
          %v788 = vshrl.u32 %v787, 7
          %v789 = vsub.s32 1, %v788
          %v790 = vrot.slane %v748, %v789
          %v791 = vlaneseq
          %v792 = vshrl.u32 %v791, 7
          %v793 = vsub.s32 2, %v792
          %v794 = vrot.slane %v748, %v793
          %v795 = vlaneseq
          %v796 = vshrl.u32 %v795, 7
          %v797 = vsub.s32 3, %v796
          %v798 = vrot.slane %v748, %v797
          %811 = vmatprep.subr.mxu0 %v556
          %812 = vmatpush1.msra.mxu0 %v555
          %813 = vmatprep.subr.mxu0 %v568
          %814 = vmatpush1.msra.mxu0 %v567
          %815 = vmatprep.subr.mxu0 %v580
          %816 = vmatpush1.msra.mxu0 %v579
          %817 = vmatprep.subr.mxu0 %v592
          %818 = vmatpush1.msra.mxu0 %v591
          %819 = vmatprep.subr.mxu0 %v604
          %820 = vmatpush1.msra.mxu0 %v603
          %821 = vmatprep.subr.mxu0 %v616
          %822 = vmatpush1.msra.mxu0 %v615
          %823 = vmatprep.subr.mxu0 %v628
          %824 = vmatpush1.msra.mxu0 %v627
          %825 = vmatprep.subr.mxu0 %v640
          %826 = vmatpush1.msra.mxu0 %v639
          %827 = vmatprep.subr.mxu0 %v652
          %828 = vmatpush1.msra.mxu0 %v651
          %829 = vmatprep.subr.mxu0 %v664
          %830 = vmatpush1.msra.mxu0 %v663
          %831 = vmatprep.subr.mxu0 %v676
          %832 = vmatpush1.msra.mxu0 %v675
          %833 = vmatprep.subr.mxu0 %v688
          %834 = vmatpush1.msra.mxu0 %v687
          %835 = vmatprep.subr.mxu0 %v700
          %836 = vmatpush1.msra.mxu0 %v699
          %837 = vmatprep.subr.mxu0 %v712
          %838 = vmatpush1.msra.mxu0 %v711
          %839 = vmatprep.subr.mxu0 %v724
          %840 = vmatpush1.msra.mxu0 %v723
          %841 = vmatprep.subr.mxu0 %v736
          %842 = vmatpush1.msra.mxu0 %v735
          %843 = vmatprep.subr.mxu0 0.0
          %844 = vmatpush1.msra.mxu0 0.0
          %845 = vmatprep.subr.mxu0 0.0
          %846 = vmatpush1.msra.mxu0 0.0
          %847 = vmatprep.subr.mxu0 0.0
          %848 = vmatpush1.msra.mxu0 0.0
          %849 = vmatprep.subr.mxu0 0.0
          %850 = vmatpush1.msra.mxu0 0.0
          %851 = vmatprep.subr.mxu0 0.0
          %852 = vmatpush1.msra.mxu0 0.0
          %853 = vmatprep.subr.mxu0 0.0
          %854 = vmatpush1.msra.mxu0 0.0
          %855 = vmatprep.subr.mxu0 0.0
          %856 = vmatpush1.msra.mxu0 0.0
          %857 = vmatprep.subr.mxu0 0.0
          %858 = vmatpush1.msra.mxu0 0.0
          %859 = vmatprep.subr.mxu0 0.0
          %860 = vmatpush1.msra.mxu0 0.0
          %861 = vmatprep.subr.mxu0 0.0
          %862 = vmatpush1.msra.mxu0 0.0
          %863 = vmatprep.subr.mxu0 0.0
          %864 = vmatpush1.msra.mxu0 0.0
          %865 = vmatprep.subr.mxu0 0.0
          %866 = vmatpush1.msra.mxu0 0.0
          %867 = vmatprep.subr.mxu0 0.0
          %868 = vmatpush1.msra.mxu0 0.0
          %869 = vmatprep.subr.mxu0 0.0
          %870 = vmatpush1.msra.mxu0 0.0
          %871 = vmatprep.subr.mxu0 0.0
          %872 = vmatpush1.msra.mxu0 0.0
          %873 = vmatprep.subr.mxu0 0.0
          %874 = vmatpush1.msra.mxu0 0.0
          %875 = vmatprep.mubr.f32.mxu0 0.0
          %876 = vmatmul.mubr.f32.gmra.mrb[0].mxu0 %v554
          %v877 = vpop.f32.mrb[0].mxu0
          %v878 = vadd.f32 %v754, %v877
          %v879 = vpop.f32.mrb[0].mxu0
          %v880 = vadd.f32 %v758, %v879
          %881 = vdwg.mxu0
          %882 = vmatprep.subr.mxu0 %v558
          %883 = vmatpush1.msra.mxu0 %v557
          %884 = vmatprep.subr.mxu0 %v570
          %885 = vmatpush1.msra.mxu0 %v569
          %886 = vmatprep.subr.mxu0 %v582
          %887 = vmatpush1.msra.mxu0 %v581
          %888 = vmatprep.subr.mxu0 %v594
          %889 = vmatpush1.msra.mxu0 %v593
          %890 = vmatprep.subr.mxu0 %v606
          %891 = vmatpush1.msra.mxu0 %v605
          %892 = vmatprep.subr.mxu0 %v618
          %893 = vmatpush1.msra.mxu0 %v617
          %894 = vmatprep.subr.mxu0 %v630
          %895 = vmatpush1.msra.mxu0 %v629
          %896 = vmatprep.subr.mxu0 %v642
          %897 = vmatpush1.msra.mxu0 %v641
          %898 = vmatprep.subr.mxu0 %v654
          %899 = vmatpush1.msra.mxu0 %v653
          %900 = vmatprep.subr.mxu0 %v666
          %901 = vmatpush1.msra.mxu0 %v665
          %902 = vmatprep.subr.mxu0 %v678
          %903 = vmatpush1.msra.mxu0 %v677
          %904 = vmatprep.subr.mxu0 %v690
          %905 = vmatpush1.msra.mxu0 %v689
          %906 = vmatprep.subr.mxu0 %v702
          %907 = vmatpush1.msra.mxu0 %v701
          %908 = vmatprep.subr.mxu0 %v714
          %909 = vmatpush1.msra.mxu0 %v713
          %910 = vmatprep.subr.mxu0 %v726
          %911 = vmatpush1.msra.mxu0 %v725
          %912 = vmatprep.subr.mxu0 %v738
          %913 = vmatpush1.msra.mxu0 %v737
          %914 = vmatprep.subr.mxu0 0.0
          %915 = vmatpush1.msra.mxu0 0.0
          %916 = vmatprep.subr.mxu0 0.0
          %917 = vmatpush1.msra.mxu0 0.0
          %918 = vmatprep.subr.mxu0 0.0
          %919 = vmatpush1.msra.mxu0 0.0
          %920 = vmatprep.subr.mxu0 0.0
          %921 = vmatpush1.msra.mxu0 0.0
          %922 = vmatprep.subr.mxu0 0.0
          %923 = vmatpush1.msra.mxu0 0.0
          %924 = vmatprep.subr.mxu0 0.0
          %925 = vmatpush1.msra.mxu0 0.0
          %926 = vmatprep.subr.mxu0 0.0
          %927 = vmatpush1.msra.mxu0 0.0
          %928 = vmatprep.subr.mxu0 0.0
          %929 = vmatpush1.msra.mxu0 0.0
          %930 = vmatprep.subr.mxu0 0.0
          %931 = vmatpush1.msra.mxu0 0.0
          %932 = vmatprep.subr.mxu0 0.0
          %933 = vmatpush1.msra.mxu0 0.0
          %934 = vmatprep.subr.mxu0 0.0
          %935 = vmatpush1.msra.mxu0 0.0
          %936 = vmatprep.subr.mxu0 0.0
          %937 = vmatpush1.msra.mxu0 0.0
          %938 = vmatprep.subr.mxu0 0.0
          %939 = vmatpush1.msra.mxu0 0.0
          %940 = vmatprep.subr.mxu0 0.0
          %941 = vmatpush1.msra.mxu0 0.0
          %942 = vmatprep.subr.mxu0 0.0
          %943 = vmatpush1.msra.mxu0 0.0
          %944 = vmatprep.subr.mxu0 0.0
          %945 = vmatpush1.msra.mxu0 0.0
          %946 = vmatprep.mubr.f32.mxu0 0.0
          %947 = vmatmul.mubr.f32.gmra.mrb[0].mxu0 %v554
          %v948 = vpop.f32.mrb[0].mxu0
          %v949 = vadd.f32 %v762, %v948
          %v950 = vpop.f32.mrb[0].mxu0
          %v951 = vadd.f32 %v766, %v950
          %952 = vdwg.mxu0
          %953 = vmatprep.subr.mxu0 %v560
          %954 = vmatpush1.msra.mxu0 %v559
          %955 = vmatprep.subr.mxu0 %v572
          %956 = vmatpush1.msra.mxu0 %v571
          %957 = vmatprep.subr.mxu0 %v584
          %958 = vmatpush1.msra.mxu0 %v583
          %959 = vmatprep.subr.mxu0 %v596
          %960 = vmatpush1.msra.mxu0 %v595
          %961 = vmatprep.subr.mxu0 %v608
          %962 = vmatpush1.msra.mxu0 %v607
          %963 = vmatprep.subr.mxu0 %v620
          %964 = vmatpush1.msra.mxu0 %v619
          %965 = vmatprep.subr.mxu0 %v632
          %966 = vmatpush1.msra.mxu0 %v631
          %967 = vmatprep.subr.mxu0 %v644
          %968 = vmatpush1.msra.mxu0 %v643
          %969 = vmatprep.subr.mxu0 %v656
          %970 = vmatpush1.msra.mxu0 %v655
          %971 = vmatprep.subr.mxu0 %v668
          %972 = vmatpush1.msra.mxu0 %v667
          %973 = vmatprep.subr.mxu0 %v680
          %974 = vmatpush1.msra.mxu0 %v679
          %975 = vmatprep.subr.mxu0 %v692
          %976 = vmatpush1.msra.mxu0 %v691
          %977 = vmatprep.subr.mxu0 %v704
          %978 = vmatpush1.msra.mxu0 %v703
          %979 = vmatprep.subr.mxu0 %v716
          %980 = vmatpush1.msra.mxu0 %v715
          %981 = vmatprep.subr.mxu0 %v728
          %982 = vmatpush1.msra.mxu0 %v727
          %983 = vmatprep.subr.mxu0 %v740
          %984 = vmatpush1.msra.mxu0 %v739
          %985 = vmatprep.subr.mxu0 0.0
          %986 = vmatpush1.msra.mxu0 0.0
          %987 = vmatprep.subr.mxu0 0.0
          %988 = vmatpush1.msra.mxu0 0.0
          %989 = vmatprep.subr.mxu0 0.0
          %990 = vmatpush1.msra.mxu0 0.0
          %991 = vmatprep.subr.mxu0 0.0
          %992 = vmatpush1.msra.mxu0 0.0
          %993 = vmatprep.subr.mxu0 0.0
          %994 = vmatpush1.msra.mxu0 0.0
          %995 = vmatprep.subr.mxu0 0.0
          %996 = vmatpush1.msra.mxu0 0.0
          %997 = vmatprep.subr.mxu0 0.0
          %998 = vmatpush1.msra.mxu0 0.0
          %999 = vmatprep.subr.mxu0 0.0
          %1000 = vmatpush1.msra.mxu0 0.0
          %1001 = vmatprep.subr.mxu0 0.0
          %1002 = vmatpush1.msra.mxu0 0.0
          %1003 = vmatprep.subr.mxu0 0.0
          %1004 = vmatpush1.msra.mxu0 0.0
          %1005 = vmatprep.subr.mxu0 0.0
          %1006 = vmatpush1.msra.mxu0 0.0
          %1007 = vmatprep.subr.mxu0 0.0
          %1008 = vmatpush1.msra.mxu0 0.0
          %1009 = vmatprep.subr.mxu0 0.0
          %1010 = vmatpush1.msra.mxu0 0.0
          %1011 = vmatprep.subr.mxu0 0.0
          %1012 = vmatpush1.msra.mxu0 0.0
          %1013 = vmatprep.subr.mxu0 0.0
          %1014 = vmatpush1.msra.mxu0 0.0
          %1015 = vmatprep.subr.mxu0 0.0
          %1016 = vmatpush1.msra.mxu0 0.0
          %1017 = vmatprep.mubr.f32.mxu0 0.0
          %1018 = vmatmul.mubr.f32.gmra.mrb[0].mxu0 %v554
          %v1019 = vpop.f32.mrb[0].mxu0
          %v1020 = vadd.f32 %v770, %v1019
          %v1021 = vpop.f32.mrb[0].mxu0
          %v1022 = vadd.f32 %v774, %v1021
          %1023 = vdwg.mxu0
          %1024 = vmatprep.subr.mxu0 %v562
          %1025 = vmatpush1.msra.mxu0 %v561
          %1026 = vmatprep.subr.mxu0 %v574
          %1027 = vmatpush1.msra.mxu0 %v573
          %1028 = vmatprep.subr.mxu0 %v586
          %1029 = vmatpush1.msra.mxu0 %v585
          %1030 = vmatprep.subr.mxu0 %v598
          %1031 = vmatpush1.msra.mxu0 %v597
          %1032 = vmatprep.subr.mxu0 %v610
          %1033 = vmatpush1.msra.mxu0 %v609
          %1034 = vmatprep.subr.mxu0 %v622
          %1035 = vmatpush1.msra.mxu0 %v621
          %1036 = vmatprep.subr.mxu0 %v634
          %1037 = vmatpush1.msra.mxu0 %v633
          %1038 = vmatprep.subr.mxu0 %v646
          %1039 = vmatpush1.msra.mxu0 %v645
          %1040 = vmatprep.subr.mxu0 %v658
          %1041 = vmatpush1.msra.mxu0 %v657
          %1042 = vmatprep.subr.mxu0 %v670
          %1043 = vmatpush1.msra.mxu0 %v669
          %1044 = vmatprep.subr.mxu0 %v682
          %1045 = vmatpush1.msra.mxu0 %v681
          %1046 = vmatprep.subr.mxu0 %v694
          %1047 = vmatpush1.msra.mxu0 %v693
          %1048 = vmatprep.subr.mxu0 %v706
          %1049 = vmatpush1.msra.mxu0 %v705
          %1050 = vmatprep.subr.mxu0 %v718
          %1051 = vmatpush1.msra.mxu0 %v717
          %1052 = vmatprep.subr.mxu0 %v730
          %1053 = vmatpush1.msra.mxu0 %v729
          %1054 = vmatprep.subr.mxu0 %v742
          %1055 = vmatpush1.msra.mxu0 %v741
          %1056 = vmatprep.subr.mxu0 0.0
          %1057 = vmatpush1.msra.mxu0 0.0
          %1058 = vmatprep.subr.mxu0 0.0
          %1059 = vmatpush1.msra.mxu0 0.0
          %1060 = vmatprep.subr.mxu0 0.0
          %1061 = vmatpush1.msra.mxu0 0.0
          %1062 = vmatprep.subr.mxu0 0.0
          %1063 = vmatpush1.msra.mxu0 0.0
          %1064 = vmatprep.subr.mxu0 0.0
          %1065 = vmatpush1.msra.mxu0 0.0
          %1066 = vmatprep.subr.mxu0 0.0
          %1067 = vmatpush1.msra.mxu0 0.0
          %1068 = vmatprep.subr.mxu0 0.0
          %1069 = vmatpush1.msra.mxu0 0.0
          %1070 = vmatprep.subr.mxu0 0.0
          %1071 = vmatpush1.msra.mxu0 0.0
          %1072 = vmatprep.subr.mxu0 0.0
          %1073 = vmatpush1.msra.mxu0 0.0
          %1074 = vmatprep.subr.mxu0 0.0
          %1075 = vmatpush1.msra.mxu0 0.0
          %1076 = vmatprep.subr.mxu0 0.0
          %1077 = vmatpush1.msra.mxu0 0.0
          %1078 = vmatprep.subr.mxu0 0.0
          %1079 = vmatpush1.msra.mxu0 0.0
          %1080 = vmatprep.subr.mxu0 0.0
          %1081 = vmatpush1.msra.mxu0 0.0
          %1082 = vmatprep.subr.mxu0 0.0
          %1083 = vmatpush1.msra.mxu0 0.0
          %1084 = vmatprep.subr.mxu0 0.0
          %1085 = vmatpush1.msra.mxu0 0.0
          %1086 = vmatprep.subr.mxu0 0.0
          %1087 = vmatpush1.msra.mxu0 0.0
          %1088 = vmatprep.mubr.f32.mxu0 0.0
          %1089 = vmatmul.mubr.f32.gmra.mrb[0].mxu0 %v554
          %v1090 = vpop.f32.mrb[0].mxu0
          %v1091 = vadd.f32 %v778, %v1090
          %v1092 = vpop.f32.mrb[0].mxu0
          %v1093 = vadd.f32 %v782, %v1092
          %1094 = vdwg.mxu0
          %1095 = vmatprep.subr.mxu0 %v564
          %1096 = vmatpush1.msra.mxu0 %v563
          %1097 = vmatprep.subr.mxu0 %v576
          %1098 = vmatpush1.msra.mxu0 %v575
          %1099 = vmatprep.subr.mxu0 %v588
          %1100 = vmatpush1.msra.mxu0 %v587
          %1101 = vmatprep.subr.mxu0 %v600
          %1102 = vmatpush1.msra.mxu0 %v599
          %1103 = vmatprep.subr.mxu0 %v612
          %1104 = vmatpush1.msra.mxu0 %v611
          %1105 = vmatprep.subr.mxu0 %v624
          %1106 = vmatpush1.msra.mxu0 %v623
          %1107 = vmatprep.subr.mxu0 %v636
          %1108 = vmatpush1.msra.mxu0 %v635
          %1109 = vmatprep.subr.mxu0 %v648
          %1110 = vmatpush1.msra.mxu0 %v647
          %1111 = vmatprep.subr.mxu0 %v660
          %1112 = vmatpush1.msra.mxu0 %v659
          %1113 = vmatprep.subr.mxu0 %v672
          %1114 = vmatpush1.msra.mxu0 %v671
          %1115 = vmatprep.subr.mxu0 %v684
          %1116 = vmatpush1.msra.mxu0 %v683
          %1117 = vmatprep.subr.mxu0 %v696
          %1118 = vmatpush1.msra.mxu0 %v695
          %1119 = vmatprep.subr.mxu0 %v708
          %1120 = vmatpush1.msra.mxu0 %v707
          %1121 = vmatprep.subr.mxu0 %v720
          %1122 = vmatpush1.msra.mxu0 %v719
          %1123 = vmatprep.subr.mxu0 %v732
          %1124 = vmatpush1.msra.mxu0 %v731
          %1125 = vmatprep.subr.mxu0 %v744
          %1126 = vmatpush1.msra.mxu0 %v743
          %1127 = vmatprep.subr.mxu0 0.0
          %1128 = vmatpush1.msra.mxu0 0.0
          %1129 = vmatprep.subr.mxu0 0.0
          %1130 = vmatpush1.msra.mxu0 0.0
          %1131 = vmatprep.subr.mxu0 0.0
          %1132 = vmatpush1.msra.mxu0 0.0
          %1133 = vmatprep.subr.mxu0 0.0
          %1134 = vmatpush1.msra.mxu0 0.0
          %1135 = vmatprep.subr.mxu0 0.0
          %1136 = vmatpush1.msra.mxu0 0.0
          %1137 = vmatprep.subr.mxu0 0.0
          %1138 = vmatpush1.msra.mxu0 0.0
          %1139 = vmatprep.subr.mxu0 0.0
          %1140 = vmatpush1.msra.mxu0 0.0
          %1141 = vmatprep.subr.mxu0 0.0
          %1142 = vmatpush1.msra.mxu0 0.0
          %1143 = vmatprep.subr.mxu0 0.0
          %1144 = vmatpush1.msra.mxu0 0.0
          %1145 = vmatprep.subr.mxu0 0.0
          %1146 = vmatpush1.msra.mxu0 0.0
          %1147 = vmatprep.subr.mxu0 0.0
          %1148 = vmatpush1.msra.mxu0 0.0
          %1149 = vmatprep.subr.mxu0 0.0
          %1150 = vmatpush1.msra.mxu0 0.0
          %1151 = vmatprep.subr.mxu0 0.0
          %1152 = vmatpush1.msra.mxu0 0.0
          %1153 = vmatprep.subr.mxu0 0.0
          %1154 = vmatpush1.msra.mxu0 0.0
          %1155 = vmatprep.subr.mxu0 0.0
          %1156 = vmatpush1.msra.mxu0 0.0
          %1157 = vmatprep.subr.mxu0 0.0
          %1158 = vmatpush1.msra.mxu0 0.0
          %1159 = vmatprep.mubr.f32.mxu0 0.0
          %1160 = vmatmul.mubr.f32.gmra.mrb[0].mxu0 %v554
          %v1161 = vpop.f32.mrb[0].mxu0
          %v1162 = vadd.f32 %v786, %v1161
          %v1163 = vpop.f32.mrb[0].mxu0
          %v1164 = vadd.f32 %v790, %v1163
          %1165 = vdwg.mxu0
          %1166 = vmatprep.subr.mxu0 %v566
          %1167 = vmatpush1.msra.mxu0 %v565
          %1168 = vmatprep.subr.mxu0 %v578
          %1169 = vmatpush1.msra.mxu0 %v577
          %1170 = vmatprep.subr.mxu0 %v590
          %1171 = vmatpush1.msra.mxu0 %v589
          %1172 = vmatprep.subr.mxu0 %v602
          %1173 = vmatpush1.msra.mxu0 %v601
          %1174 = vmatprep.subr.mxu0 %v614
          %1175 = vmatpush1.msra.mxu0 %v613
          %1176 = vmatprep.subr.mxu0 %v626
          %1177 = vmatpush1.msra.mxu0 %v625
          %1178 = vmatprep.subr.mxu0 %v638
          %1179 = vmatpush1.msra.mxu0 %v637
          %1180 = vmatprep.subr.mxu0 %v650
          %1181 = vmatpush1.msra.mxu0 %v649
          %1182 = vmatprep.subr.mxu0 %v662
          %1183 = vmatpush1.msra.mxu0 %v661
          %1184 = vmatprep.subr.mxu0 %v674
          %1185 = vmatpush1.msra.mxu0 %v673
          %1186 = vmatprep.subr.mxu0 %v686
          %1187 = vmatpush1.msra.mxu0 %v685
          %1188 = vmatprep.subr.mxu0 %v698
          %1189 = vmatpush1.msra.mxu0 %v697
          %1190 = vmatprep.subr.mxu0 %v710
          %1191 = vmatpush1.msra.mxu0 %v709
          %1192 = vmatprep.subr.mxu0 %v722
          %1193 = vmatpush1.msra.mxu0 %v721
          %1194 = vmatprep.subr.mxu0 %v734
          %1195 = vmatpush1.msra.mxu0 %v733
          %1196 = vmatprep.subr.mxu0 %v746
          %1197 = vmatpush1.msra.mxu0 %v745
          %1198 = vmatprep.subr.mxu0 0.0
          %1199 = vmatpush1.msra.mxu0 0.0
          %1200 = vmatprep.subr.mxu0 0.0
          %1201 = vmatpush1.msra.mxu0 0.0
          %1202 = vmatprep.subr.mxu0 0.0
          %1203 = vmatpush1.msra.mxu0 0.0
          %1204 = vmatprep.subr.mxu0 0.0
          %1205 = vmatpush1.msra.mxu0 0.0
          %1206 = vmatprep.subr.mxu0 0.0
          %1207 = vmatpush1.msra.mxu0 0.0
          %1208 = vmatprep.subr.mxu0 0.0
          %1209 = vmatpush1.msra.mxu0 0.0
          %1210 = vmatprep.subr.mxu0 0.0
          %1211 = vmatpush1.msra.mxu0 0.0
          %1212 = vmatprep.subr.mxu0 0.0
          %1213 = vmatpush1.msra.mxu0 0.0
          %1214 = vmatprep.subr.mxu0 0.0
          %1215 = vmatpush1.msra.mxu0 0.0
          %1216 = vmatprep.subr.mxu0 0.0
          %1217 = vmatpush1.msra.mxu0 0.0
          %1218 = vmatprep.subr.mxu0 0.0
          %1219 = vmatpush1.msra.mxu0 0.0
          %1220 = vmatprep.subr.mxu0 0.0
          %1221 = vmatpush1.msra.mxu0 0.0
          %1222 = vmatprep.subr.mxu0 0.0
          %1223 = vmatpush1.msra.mxu0 0.0
          %1224 = vmatprep.subr.mxu0 0.0
          %1225 = vmatpush1.msra.mxu0 0.0
          %1226 = vmatprep.subr.mxu0 0.0
          %1227 = vmatpush1.msra.mxu0 0.0
          %1228 = vmatprep.subr.mxu0 0.0
          %1229 = vmatpush1.msra.mxu0 0.0
          %1230 = vmatprep.mubr.f32.mxu0 0.0
          %1231 = vmatmul.mubr.f32.gmra.mrb[0].mxu0 %v554
          %v1232 = vpop.f32.mrb[0].mxu0
          %v1233 = vadd.f32 %v794, %v1232
          %v1234 = vpop.f32.mrb[0].mxu0
          %v1235 = vadd.f32 %v798, %v1234
          %1236 = vdwg.mxu0
          %1238 = vrot.lane.b32.xlu0 %v878, 64
          %v1239 = vpop.permute.xlu0 %1238
          %1242 = vrot.lane.b32.xlu0 %v880, 64
          %v1243 = vpop.permute.xlu0 %1242
          %1246 = vrot.lane.b32.xlu0 %v949, 64
          %v1247 = vpop.permute.xlu0 %1246
          %1250 = vrot.lane.b32.xlu0 %v951, 64
          %v1251 = vpop.permute.xlu0 %1250
          %v1253 = vcombine.low %v878, %v880
          %v1254 = vcombine.high %v878, %v880
          %v1256 = vunpack.c.l.s4 1983009808
          %v1257 = vunpack.c.0.s8 %v1256
          %v1258 = vlaneseq
          %v1259 = vshrl.u32 %v1258, 7
          %v1260 = vsub.s32 %v1257, %v1259
          %v1261 = vrot.slane %v1253, %v1260
          %v1263 = vunpack.c.l.s4 1983009808
          %v1264 = vunpack.c.0.s8 %v1263
          %v1265 = vlaneseq
          %v1266 = vshrl.u32 %v1265, 7
          %v1267 = vsub.s32 %v1264, %v1266
          %v1268 = vrot.slane %v1254, %v1267
          %v1269 = vcombine.low %v1239, %v1243
          %v1270 = vcombine.high %v1239, %v1243
          %v1272 = vunpack.c.l.s4 1983009808
          %v1273 = vunpack.c.0.s8 %v1272
          %v1274 = vlaneseq
          %v1275 = vshrl.u32 %v1274, 7
          %v1276 = vsub.s32 %v1273, %v1275
          %v1277 = vrot.slane %v1269, %v1276
          %v1279 = vunpack.c.l.s4 1983009808
          %v1280 = vunpack.c.0.s8 %v1279
          %v1281 = vlaneseq
          %v1282 = vshrl.u32 %v1281, 7
          %v1283 = vsub.s32 %v1280, %v1282
          %v1284 = vrot.slane %v1270, %v1283
          %v1285 = vcombine.low %v949, %v951
          %v1286 = vcombine.high %v949, %v951
          %v1288 = vunpack.c.l.s4 1983009808
          %v1289 = vunpack.c.0.s8 %v1288
          %v1290 = vlaneseq
          %v1291 = vshrl.u32 %v1290, 7
          %v1292 = vsub.s32 %v1289, %v1291
          %v1293 = vrot.slane %v1285, %v1292
          %v1295 = vunpack.c.l.s4 1983009808
          %v1296 = vunpack.c.0.s8 %v1295
          %v1297 = vlaneseq
          %v1298 = vshrl.u32 %v1297, 7
          %v1299 = vsub.s32 %v1296, %v1298
          %v1300 = vrot.slane %v1286, %v1299
          %v1301 = vcombine.low %v1247, %v1251
          %v1302 = vcombine.high %v1247, %v1251
          %v1304 = vunpack.c.l.s4 1983009808
          %v1305 = vunpack.c.0.s8 %v1304
          %v1306 = vlaneseq
          %v1307 = vshrl.u32 %v1306, 7
          %v1308 = vsub.s32 %v1305, %v1307
          %v1309 = vrot.slane %v1301, %v1308
          %v1311 = vunpack.c.l.s4 1983009808
          %v1312 = vunpack.c.0.s8 %v1311
          %v1313 = vlaneseq
          %v1314 = vshrl.u32 %v1313, 7
          %v1315 = vsub.s32 %v1312, %v1314
          %v1316 = vrot.slane %v1302, %v1315
          %v1317 = vcombine.low %v1261, %v1277
          %v1318 = vcombine.high %v1261, %v1277
          %v1320 = vunpack.c.l.s4 1934713408
          %v1321 = vunpack.c.0.s8 %v1320
          %v1322 = vlaneseq
          %v1323 = vshrl.u32 %v1322, 7
          %v1324 = vsub.s32 %v1321, %v1323
          %v1325 = vrot.slane %v1317, %v1324
          %v1327 = vunpack.c.l.s4 1934713408
          %v1328 = vunpack.c.0.s8 %v1327
          %v1329 = vlaneseq
          %v1330 = vshrl.u32 %v1329, 7
          %v1331 = vsub.s32 %v1328, %v1330
          %v1332 = vrot.slane %v1318, %v1331
          %v1333 = vcombine.low %v1268, %v1284
          %v1334 = vcombine.high %v1268, %v1284
          %v1336 = vunpack.c.l.s4 1934713408
          %v1337 = vunpack.c.0.s8 %v1336
          %v1338 = vlaneseq
          %v1339 = vshrl.u32 %v1338, 7
          %v1340 = vsub.s32 %v1337, %v1339
          %v1341 = vrot.slane %v1333, %v1340
          %v1343 = vunpack.c.l.s4 1934713408
          %v1344 = vunpack.c.0.s8 %v1343
          %v1345 = vlaneseq
          %v1346 = vshrl.u32 %v1345, 7
          %v1347 = vsub.s32 %v1344, %v1346
          %v1348 = vrot.slane %v1334, %v1347
          %v1349 = vcombine.low %v1293, %v1309
          %v1350 = vcombine.high %v1293, %v1309
          %v1352 = vunpack.c.l.s4 1934713408
          %v1353 = vunpack.c.0.s8 %v1352
          %v1354 = vlaneseq
          %v1355 = vshrl.u32 %v1354, 7
          %v1356 = vsub.s32 %v1353, %v1355
          %v1357 = vrot.slane %v1349, %v1356
          %v1359 = vunpack.c.l.s4 1934713408
          %v1360 = vunpack.c.0.s8 %v1359
          %v1361 = vlaneseq
          %v1362 = vshrl.u32 %v1361, 7
          %v1363 = vsub.s32 %v1360, %v1362
          %v1364 = vrot.slane %v1350, %v1363
          %v1365 = vcombine.low %v1300, %v1316
          %v1366 = vcombine.high %v1300, %v1316
          %v1368 = vunpack.c.l.s4 1934713408
          %v1369 = vunpack.c.0.s8 %v1368
          %v1370 = vlaneseq
          %v1371 = vshrl.u32 %v1370, 7
          %v1372 = vsub.s32 %v1369, %v1371
          %v1373 = vrot.slane %v1365, %v1372
          %v1375 = vunpack.c.l.s4 1934713408
          %v1376 = vunpack.c.0.s8 %v1375
          %v1377 = vlaneseq
          %v1378 = vshrl.u32 %v1377, 7
          %v1379 = vsub.s32 %v1376, %v1378
          %v1380 = vrot.slane %v1366, %v1379
          %v1381 = vcombine.low %v1325, %v1357
          %v1382 = vcombine.high %v1325, %v1357
          %v1383 = vcombine.low %v1332, %v1364
          %v1384 = vcombine.high %v1332, %v1364
          %v1385 = vcombine.low %v1341, %v1373
          %v1386 = vcombine.high %v1341, %v1373
          %v1387 = vcombine.low %v1348, %v1380
          %v1388 = vcombine.high %v1348, %v1380
          %v1389 = vcombine.low %v1381, %v1383
          %v1390 = vcombine.high %v1381, %v1383
          %v1392 = vunpack.c.l.s4 1983009808
          %v1393 = vunpack.c.0.s8 %v1392
          %v1394 = vlaneseq
          %v1395 = vshrl.u32 %v1394, 7
          %v1396 = vsub.s32 %v1393, %v1395
          %v1397 = vrot.slane %v1389, %v1396
          %v1399 = vunpack.c.l.s4 1983009808
          %v1400 = vunpack.c.0.s8 %v1399
          %v1401 = vlaneseq
          %v1402 = vshrl.u32 %v1401, 7
          %v1403 = vsub.s32 %v1400, %v1402
          %v1404 = vrot.slane %v1390, %v1403
          %v1405 = vcombine.low %v1382, %v1384
          %v1406 = vcombine.high %v1382, %v1384
          %v1408 = vunpack.c.l.s4 1983009808
          %v1409 = vunpack.c.0.s8 %v1408
          %v1410 = vlaneseq
          %v1411 = vshrl.u32 %v1410, 7
          %v1412 = vsub.s32 %v1409, %v1411
          %v1413 = vrot.slane %v1405, %v1412
          %v1415 = vunpack.c.l.s4 1983009808
          %v1416 = vunpack.c.0.s8 %v1415
          %v1417 = vlaneseq
          %v1418 = vshrl.u32 %v1417, 7
          %v1419 = vsub.s32 %v1416, %v1418
          %v1420 = vrot.slane %v1406, %v1419
          %v1421 = vcombine.low %v1385, %v1387
          %v1422 = vcombine.high %v1385, %v1387
          %v1424 = vunpack.c.l.s4 1983009808
          %v1425 = vunpack.c.0.s8 %v1424
          %v1426 = vlaneseq
          %v1427 = vshrl.u32 %v1426, 7
          %v1428 = vsub.s32 %v1425, %v1427
          %v1429 = vrot.slane %v1421, %v1428
          %v1431 = vunpack.c.l.s4 1983009808
          %v1432 = vunpack.c.0.s8 %v1431
          %v1433 = vlaneseq
          %v1434 = vshrl.u32 %v1433, 7
          %v1435 = vsub.s32 %v1432, %v1434
          %v1436 = vrot.slane %v1422, %v1435
          %v1437 = vcombine.low %v1386, %v1388
          %v1438 = vcombine.high %v1386, %v1388
          %v1440 = vunpack.c.l.s4 1983009808
          %v1441 = vunpack.c.0.s8 %v1440
          %v1442 = vlaneseq
          %v1443 = vshrl.u32 %v1442, 7
          %v1444 = vsub.s32 %v1441, %v1443
          %v1445 = vrot.slane %v1437, %v1444
          %v1447 = vunpack.c.l.s4 1983009808
          %v1448 = vunpack.c.0.s8 %v1447
          %v1449 = vlaneseq
          %v1450 = vshrl.u32 %v1449, 7
          %v1451 = vsub.s32 %v1448, %v1450
          %v1452 = vrot.slane %v1438, %v1451
          %v1453 = vcombine.low %v1397, %v1413
          %v1454 = vcombine.high %v1397, %v1413
          %v1456 = vunpack.c.l.s4 1934713408
          %v1457 = vunpack.c.0.s8 %v1456
          %v1458 = vlaneseq
          %v1459 = vshrl.u32 %v1458, 7
          %v1460 = vsub.s32 %v1457, %v1459
          %v1461 = vrot.slane %v1453, %v1460
          %v1463 = vunpack.c.l.s4 1934713408
          %v1464 = vunpack.c.0.s8 %v1463
          %v1465 = vlaneseq
          %v1466 = vshrl.u32 %v1465, 7
          %v1467 = vsub.s32 %v1464, %v1466
          %v1468 = vrot.slane %v1454, %v1467
          %v1469 = vcombine.low %v1404, %v1420
          %v1470 = vcombine.high %v1404, %v1420
          %v1472 = vunpack.c.l.s4 1934713408
          %v1473 = vunpack.c.0.s8 %v1472
          %v1474 = vlaneseq
          %v1475 = vshrl.u32 %v1474, 7
          %v1476 = vsub.s32 %v1473, %v1475
          %v1477 = vrot.slane %v1469, %v1476
          %v1479 = vunpack.c.l.s4 1934713408
          %v1480 = vunpack.c.0.s8 %v1479
          %v1481 = vlaneseq
          %v1482 = vshrl.u32 %v1481, 7
          %v1483 = vsub.s32 %v1480, %v1482
          %v1484 = vrot.slane %v1470, %v1483
          %v1485 = vcombine.low %v1429, %v1445
          %v1486 = vcombine.high %v1429, %v1445
          %v1488 = vunpack.c.l.s4 1934713408
          %v1489 = vunpack.c.0.s8 %v1488
          %v1490 = vlaneseq
          %v1491 = vshrl.u32 %v1490, 7
          %v1492 = vsub.s32 %v1489, %v1491
          %v1493 = vrot.slane %v1485, %v1492
          %v1495 = vunpack.c.l.s4 1934713408
          %v1496 = vunpack.c.0.s8 %v1495
          %v1497 = vlaneseq
          %v1498 = vshrl.u32 %v1497, 7
          %v1499 = vsub.s32 %v1496, %v1498
          %v1500 = vrot.slane %v1486, %v1499
          %v1501 = vcombine.low %v1436, %v1452
          %v1502 = vcombine.high %v1436, %v1452
          %v1504 = vunpack.c.l.s4 1934713408
          %v1505 = vunpack.c.0.s8 %v1504
          %v1506 = vlaneseq
          %v1507 = vshrl.u32 %v1506, 7
          %v1508 = vsub.s32 %v1505, %v1507
          %v1509 = vrot.slane %v1501, %v1508
          %v1511 = vunpack.c.l.s4 1934713408
          %v1512 = vunpack.c.0.s8 %v1511
          %v1513 = vlaneseq
          %v1514 = vshrl.u32 %v1513, 7
          %v1515 = vsub.s32 %v1512, %v1514
          %v1516 = vrot.slane %v1502, %v1515
          %v1517 = vcombine.low %v1461, %v1493
          %v1518 = vcombine.high %v1461, %v1493
          %v1519 = vcombine.low %v1468, %v1500
          %v1520 = vcombine.high %v1468, %v1500
          %v1521 = vcombine.low %v1477, %v1509
          %v1522 = vcombine.high %v1477, %v1509
          %v1523 = vcombine.low %v1484, %v1516
          %v1524 = vcombine.high %v1484, %v1516
          %v1525 = vld [vmem:[%s6] sm:$0x1]
          %v1526 = vmul.f32 %v1517, %v1517
          %v1527 = vmul.f32 %v1518, %v1518
          %v1528 = vmul.f32 %v1519, %v1519
          %v1529 = vmul.f32 %v1520, %v1520
          %v1530 = vmul.f32 %v1521, %v1521
          %v1531 = vmul.f32 %v1522, %v1522
          %v1532 = vmul.f32 %v1523, %v1523
          %v1533 = vmul.f32 %v1524, %v1524
          %v1534 = vsel %vm533, %v1526, 0.0
          %1535 = vadd.xlane.f32.xlu0 %v1534
          %v1536 = vpop.xlane.xlu0 %1535
          %v1537 = vsel %vm533, %v1527, 0.0
          %1538 = vadd.xlane.f32.xlu0 %v1537
          %v1539 = vpop.xlane.xlu0 %1538
          %v1540 = vsel %vm533, %v1528, 0.0
          %1541 = vadd.xlane.f32.xlu0 %v1540
          %v1542 = vpop.xlane.xlu0 %1541
          %v1543 = vsel %vm533, %v1529, 0.0
          %1544 = vadd.xlane.f32.xlu0 %v1543
          %v1545 = vpop.xlane.xlu0 %1544
          %v1546 = vsel %vm533, %v1530, 0.0
          %1547 = vadd.xlane.f32.xlu0 %v1546
          %v1548 = vpop.xlane.xlu0 %1547
          %v1549 = vsel %vm533, %v1531, 0.0
          %1550 = vadd.xlane.f32.xlu0 %v1549
          %v1551 = vpop.xlane.xlu0 %1550
          %v1552 = vsel %vm533, %v1532, 0.0
          %1553 = vadd.xlane.f32.xlu0 %v1552
          %v1554 = vpop.xlane.xlu0 %1553
          %v1555 = vsel %vm533, %v1533, 0.0
          %1556 = vadd.xlane.f32.xlu0 %v1555
          %v1557 = vpop.xlane.xlu0 %1556
          %v1558 = vmax.f32 %v1536, 1e-24
          %v1559 = vmax.f32 %v1539, 1e-24
          %v1560 = vmax.f32 %v1542, 1e-24
          %v1561 = vmax.f32 %v1545, 1e-24
          %v1562 = vmax.f32 %v1548, 1e-24
          %v1563 = vmax.f32 %v1551, 1e-24
          %v1564 = vmax.f32 %v1554, 1e-24
          %v1565 = vmax.f32 %v1557, 1e-24
          %v1566 = vrsqrt.pop %v1558
          %v1567 = vrsqrt.pop %v1559
          %v1568 = vrsqrt.pop %v1560
          %v1569 = vrsqrt.pop %v1561
          %v1570 = vrsqrt.pop %v1562
          %v1571 = vrsqrt.pop %v1563
          %v1572 = vrsqrt.pop %v1564
          %v1573 = vrsqrt.pop %v1565
          %v1575 = vlaneseq
          %v1576 = vshrl.u32 %v1575, 7
          %v1577 = vsub.s32 0, %v1576
          %v1578 = vrot.slane %v1525, %v1577
          %v1580 = vmul.f32 %v1566, %v1578
          %v1581 = vmul.f32 %v1567, %v1578
          %v1582 = vmul.f32 %v1568, %v1578
          %v1583 = vmul.f32 %v1569, %v1578
          %v1584 = vmul.f32 %v1570, %v1578
          %v1585 = vmul.f32 %v1571, %v1578
          %v1586 = vmul.f32 %v1572, %v1578
          %v1587 = vmul.f32 %v1573, %v1578
          %v1588 = vmul.f32 %v1517, %v1580
          %v1589 = vmul.f32 %v1518, %v1581
          %v1590 = vmul.f32 %v1519, %v1582
          %v1591 = vmul.f32 %v1520, %v1583
          %v1592 = vmul.f32 %v1521, %v1584
          %v1593 = vmul.f32 %v1522, %v1585
          %v1594 = vmul.f32 %v1523, %v1586
          %v1595 = vmul.f32 %v1524, %v1587
          %1596 = vst.msk [vmem:[#allocation2] sm:$0xff] %vm533, %v1588
          %1597 = vst.msk [vmem:[#allocation2 + $0x8] sm:$0xff] %vm533, %v1589
          %1598 = vst.msk [vmem:[#allocation2 + $0x10] sm:$0xff] %vm533, %v1590
          %1599 = vst.msk [vmem:[#allocation2 + $0x18] sm:$0xff] %vm533, %v1591
          %1600 = vst.msk [vmem:[#allocation2 + $0x20] sm:$0xff] %vm533, %v1592
          %1601 = vst.msk [vmem:[#allocation2 + $0x28] sm:$0xff] %vm533, %v1593
          %1602 = vst.msk [vmem:[#allocation2 + $0x30] sm:$0xff] %vm533, %v1594
          %1603 = vst.msk [vmem:[#allocation2 + $0x38] sm:$0xff] %vm533, %v1595
          %1605 = vrot.lane.b32.xlu0 %v1020, 64
          %v1606 = vpop.permute.xlu0 %1605
          %1609 = vrot.lane.b32.xlu0 %v1022, 64
          %v1610 = vpop.permute.xlu0 %1609
          %1613 = vrot.lane.b32.xlu0 %v1091, 64
          %v1614 = vpop.permute.xlu0 %1613
          %1617 = vrot.lane.b32.xlu0 %v1093, 64
          %v1618 = vpop.permute.xlu0 %1617
          %v1620 = vcombine.low %v1020, %v1022
          %v1621 = vcombine.high %v1020, %v1022
          %v1623 = vunpack.c.l.s4 1983009808
          %v1624 = vunpack.c.0.s8 %v1623
          %v1625 = vlaneseq
          %v1626 = vshrl.u32 %v1625, 7
          %v1627 = vsub.s32 %v1624, %v1626
          %v1628 = vrot.slane %v1620, %v1627
          %v1630 = vunpack.c.l.s4 1983009808
          %v1631 = vunpack.c.0.s8 %v1630
          %v1632 = vlaneseq
          %v1633 = vshrl.u32 %v1632, 7
          %v1634 = vsub.s32 %v1631, %v1633
          %v1635 = vrot.slane %v1621, %v1634
          %v1636 = vcombine.low %v1606, %v1610
          %v1637 = vcombine.high %v1606, %v1610
          %v1639 = vunpack.c.l.s4 1983009808
          %v1640 = vunpack.c.0.s8 %v1639
          %v1641 = vlaneseq
          %v1642 = vshrl.u32 %v1641, 7
          %v1643 = vsub.s32 %v1640, %v1642
          %v1644 = vrot.slane %v1636, %v1643
          %v1646 = vunpack.c.l.s4 1983009808
          %v1647 = vunpack.c.0.s8 %v1646
          %v1648 = vlaneseq
          %v1649 = vshrl.u32 %v1648, 7
          %v1650 = vsub.s32 %v1647, %v1649
          %v1651 = vrot.slane %v1637, %v1650
          %v1652 = vcombine.low %v1091, %v1093
          %v1653 = vcombine.high %v1091, %v1093
          %v1655 = vunpack.c.l.s4 1983009808
          %v1656 = vunpack.c.0.s8 %v1655
          %v1657 = vlaneseq
          %v1658 = vshrl.u32 %v1657, 7
          %v1659 = vsub.s32 %v1656, %v1658
          %v1660 = vrot.slane %v1652, %v1659
          %v1662 = vunpack.c.l.s4 1983009808
          %v1663 = vunpack.c.0.s8 %v1662
          %v1664 = vlaneseq
          %v1665 = vshrl.u32 %v1664, 7
          %v1666 = vsub.s32 %v1663, %v1665
          %v1667 = vrot.slane %v1653, %v1666
          %v1668 = vcombine.low %v1614, %v1618
          %v1669 = vcombine.high %v1614, %v1618
          %v1671 = vunpack.c.l.s4 1983009808
          %v1672 = vunpack.c.0.s8 %v1671
          %v1673 = vlaneseq
          %v1674 = vshrl.u32 %v1673, 7
          %v1675 = vsub.s32 %v1672, %v1674
          %v1676 = vrot.slane %v1668, %v1675
          %v1678 = vunpack.c.l.s4 1983009808
          %v1679 = vunpack.c.0.s8 %v1678
          %v1680 = vlaneseq
          %v1681 = vshrl.u32 %v1680, 7
          %v1682 = vsub.s32 %v1679, %v1681
          %v1683 = vrot.slane %v1669, %v1682
          %v1684 = vcombine.low %v1628, %v1644
          %v1685 = vcombine.high %v1628, %v1644
          %v1687 = vunpack.c.l.s4 1934713408
          %v1688 = vunpack.c.0.s8 %v1687
          %v1689 = vlaneseq
          %v1690 = vshrl.u32 %v1689, 7
          %v1691 = vsub.s32 %v1688, %v1690
          %v1692 = vrot.slane %v1684, %v1691
          %v1694 = vunpack.c.l.s4 1934713408
          %v1695 = vunpack.c.0.s8 %v1694
          %v1696 = vlaneseq
          %v1697 = vshrl.u32 %v1696, 7
          %v1698 = vsub.s32 %v1695, %v1697
          %v1699 = vrot.slane %v1685, %v1698
          %v1700 = vcombine.low %v1635, %v1651
          %v1701 = vcombine.high %v1635, %v1651
          %v1703 = vunpack.c.l.s4 1934713408
          %v1704 = vunpack.c.0.s8 %v1703
          %v1705 = vlaneseq
          %v1706 = vshrl.u32 %v1705, 7
          %v1707 = vsub.s32 %v1704, %v1706
          %v1708 = vrot.slane %v1700, %v1707
          %v1710 = vunpack.c.l.s4 1934713408
          %v1711 = vunpack.c.0.s8 %v1710
          %v1712 = vlaneseq
          %v1713 = vshrl.u32 %v1712, 7
          %v1714 = vsub.s32 %v1711, %v1713
          %v1715 = vrot.slane %v1701, %v1714
          %v1716 = vcombine.low %v1660, %v1676
          %v1717 = vcombine.high %v1660, %v1676
          %v1719 = vunpack.c.l.s4 1934713408
          %v1720 = vunpack.c.0.s8 %v1719
          %v1721 = vlaneseq
          %v1722 = vshrl.u32 %v1721, 7
          %v1723 = vsub.s32 %v1720, %v1722
          %v1724 = vrot.slane %v1716, %v1723
          %v1726 = vunpack.c.l.s4 1934713408
          %v1727 = vunpack.c.0.s8 %v1726
          %v1728 = vlaneseq
          %v1729 = vshrl.u32 %v1728, 7
          %v1730 = vsub.s32 %v1727, %v1729
          %v1731 = vrot.slane %v1717, %v1730
          %v1732 = vcombine.low %v1667, %v1683
          %v1733 = vcombine.high %v1667, %v1683
          %v1735 = vunpack.c.l.s4 1934713408
          %v1736 = vunpack.c.0.s8 %v1735
          %v1737 = vlaneseq
          %v1738 = vshrl.u32 %v1737, 7
          %v1739 = vsub.s32 %v1736, %v1738
          %v1740 = vrot.slane %v1732, %v1739
          %v1742 = vunpack.c.l.s4 1934713408
          %v1743 = vunpack.c.0.s8 %v1742
          %v1744 = vlaneseq
          %v1745 = vshrl.u32 %v1744, 7
          %v1746 = vsub.s32 %v1743, %v1745
          %v1747 = vrot.slane %v1733, %v1746
          %v1748 = vcombine.low %v1692, %v1724
          %v1749 = vcombine.high %v1692, %v1724
          %v1750 = vcombine.low %v1699, %v1731
          %v1751 = vcombine.high %v1699, %v1731
          %v1752 = vcombine.low %v1708, %v1740
          %v1753 = vcombine.high %v1708, %v1740
          %v1754 = vcombine.low %v1715, %v1747
          %v1755 = vcombine.high %v1715, %v1747
          %v1756 = vcombine.low %v1748, %v1750
          %v1757 = vcombine.high %v1748, %v1750
          %v1759 = vunpack.c.l.s4 1983009808
          %v1760 = vunpack.c.0.s8 %v1759
          %v1761 = vlaneseq
          %v1762 = vshrl.u32 %v1761, 7
          %v1763 = vsub.s32 %v1760, %v1762
          %v1764 = vrot.slane %v1756, %v1763
          %v1766 = vunpack.c.l.s4 1983009808
          %v1767 = vunpack.c.0.s8 %v1766
          %v1768 = vlaneseq
          %v1769 = vshrl.u32 %v1768, 7
          %v1770 = vsub.s32 %v1767, %v1769
          %v1771 = vrot.slane %v1757, %v1770
          %v1772 = vcombine.low %v1749, %v1751
          %v1773 = vcombine.high %v1749, %v1751
          %v1775 = vunpack.c.l.s4 1983009808
          %v1776 = vunpack.c.0.s8 %v1775
          %v1777 = vlaneseq
          %v1778 = vshrl.u32 %v1777, 7
          %v1779 = vsub.s32 %v1776, %v1778
          %v1780 = vrot.slane %v1772, %v1779
          %v1782 = vunpack.c.l.s4 1983009808
          %v1783 = vunpack.c.0.s8 %v1782
          %v1784 = vlaneseq
          %v1785 = vshrl.u32 %v1784, 7
          %v1786 = vsub.s32 %v1783, %v1785
          %v1787 = vrot.slane %v1773, %v1786
          %v1788 = vcombine.low %v1752, %v1754
          %v1789 = vcombine.high %v1752, %v1754
          %v1791 = vunpack.c.l.s4 1983009808
          %v1792 = vunpack.c.0.s8 %v1791
          %v1793 = vlaneseq
          %v1794 = vshrl.u32 %v1793, 7
          %v1795 = vsub.s32 %v1792, %v1794
          %v1796 = vrot.slane %v1788, %v1795
          %v1798 = vunpack.c.l.s4 1983009808
          %v1799 = vunpack.c.0.s8 %v1798
          %v1800 = vlaneseq
          %v1801 = vshrl.u32 %v1800, 7
          %v1802 = vsub.s32 %v1799, %v1801
          %v1803 = vrot.slane %v1789, %v1802
          %v1804 = vcombine.low %v1753, %v1755
          %v1805 = vcombine.high %v1753, %v1755
          %v1807 = vunpack.c.l.s4 1983009808
          %v1808 = vunpack.c.0.s8 %v1807
          %v1809 = vlaneseq
          %v1810 = vshrl.u32 %v1809, 7
          %v1811 = vsub.s32 %v1808, %v1810
          %v1812 = vrot.slane %v1804, %v1811
          %v1814 = vunpack.c.l.s4 1983009808
          %v1815 = vunpack.c.0.s8 %v1814
          %v1816 = vlaneseq
          %v1817 = vshrl.u32 %v1816, 7
          %v1818 = vsub.s32 %v1815, %v1817
          %v1819 = vrot.slane %v1805, %v1818
          %v1820 = vcombine.low %v1764, %v1780
          %v1821 = vcombine.high %v1764, %v1780
          %v1823 = vunpack.c.l.s4 1934713408
          %v1824 = vunpack.c.0.s8 %v1823
          %v1825 = vlaneseq
          %v1826 = vshrl.u32 %v1825, 7
          %v1827 = vsub.s32 %v1824, %v1826
          %v1828 = vrot.slane %v1820, %v1827
          %v1830 = vunpack.c.l.s4 1934713408
          %v1831 = vunpack.c.0.s8 %v1830
          %v1832 = vlaneseq
          %v1833 = vshrl.u32 %v1832, 7
          %v1834 = vsub.s32 %v1831, %v1833
          %v1835 = vrot.slane %v1821, %v1834
          %v1836 = vcombine.low %v1771, %v1787
          %v1837 = vcombine.high %v1771, %v1787
          %v1839 = vunpack.c.l.s4 1934713408
          %v1840 = vunpack.c.0.s8 %v1839
          %v1841 = vlaneseq
          %v1842 = vshrl.u32 %v1841, 7
          %v1843 = vsub.s32 %v1840, %v1842
          %v1844 = vrot.slane %v1836, %v1843
          %v1846 = vunpack.c.l.s4 1934713408
          %v1847 = vunpack.c.0.s8 %v1846
          %v1848 = vlaneseq
          %v1849 = vshrl.u32 %v1848, 7
          %v1850 = vsub.s32 %v1847, %v1849
          %v1851 = vrot.slane %v1837, %v1850
          %v1852 = vcombine.low %v1796, %v1812
          %v1853 = vcombine.high %v1796, %v1812
          %v1855 = vunpack.c.l.s4 1934713408
          %v1856 = vunpack.c.0.s8 %v1855
          %v1857 = vlaneseq
          %v1858 = vshrl.u32 %v1857, 7
          %v1859 = vsub.s32 %v1856, %v1858
          %v1860 = vrot.slane %v1852, %v1859
          %v1862 = vunpack.c.l.s4 1934713408
          %v1863 = vunpack.c.0.s8 %v1862
          %v1864 = vlaneseq
          %v1865 = vshrl.u32 %v1864, 7
          %v1866 = vsub.s32 %v1863, %v1865
          %v1867 = vrot.slane %v1853, %v1866
          %v1868 = vcombine.low %v1803, %v1819
          %v1869 = vcombine.high %v1803, %v1819
          %v1871 = vunpack.c.l.s4 1934713408
          %v1872 = vunpack.c.0.s8 %v1871
          %v1873 = vlaneseq
          %v1874 = vshrl.u32 %v1873, 7
          %v1875 = vsub.s32 %v1872, %v1874
          %v1876 = vrot.slane %v1868, %v1875
          %v1878 = vunpack.c.l.s4 1934713408
          %v1879 = vunpack.c.0.s8 %v1878
          %v1880 = vlaneseq
          %v1881 = vshrl.u32 %v1880, 7
          %v1882 = vsub.s32 %v1879, %v1881
          %v1883 = vrot.slane %v1869, %v1882
          %v1884 = vcombine.low %v1828, %v1860
          %v1885 = vcombine.high %v1828, %v1860
          %v1886 = vcombine.low %v1835, %v1867
          %v1887 = vcombine.high %v1835, %v1867
          %v1888 = vcombine.low %v1844, %v1876
          %v1889 = vcombine.high %v1844, %v1876
          %v1890 = vcombine.low %v1851, %v1883
          %v1891 = vcombine.high %v1851, %v1883
          %v1892 = vmul.f32 %v1884, %v1884
          %v1893 = vmul.f32 %v1885, %v1885
          %v1894 = vmul.f32 %v1886, %v1886
          %v1895 = vmul.f32 %v1887, %v1887
          %v1896 = vmul.f32 %v1888, %v1888
          %v1897 = vmul.f32 %v1889, %v1889
          %v1898 = vmul.f32 %v1890, %v1890
          %v1899 = vmul.f32 %v1891, %v1891
          %v1900 = vsel %vm533, %v1892, 0.0
          %1901 = vadd.xlane.f32.xlu0 %v1900
          %v1902 = vpop.xlane.xlu0 %1901
          %v1903 = vsel %vm533, %v1893, 0.0
          %1904 = vadd.xlane.f32.xlu0 %v1903
          %v1905 = vpop.xlane.xlu0 %1904
          %v1906 = vsel %vm533, %v1894, 0.0
          %1907 = vadd.xlane.f32.xlu0 %v1906
          %v1908 = vpop.xlane.xlu0 %1907
          %v1909 = vsel %vm533, %v1895, 0.0
          %1910 = vadd.xlane.f32.xlu0 %v1909
          %v1911 = vpop.xlane.xlu0 %1910
          %v1912 = vsel %vm533, %v1896, 0.0
          %1913 = vadd.xlane.f32.xlu0 %v1912
          %v1914 = vpop.xlane.xlu0 %1913
          %v1915 = vsel %vm533, %v1897, 0.0
          %1916 = vadd.xlane.f32.xlu0 %v1915
          %v1917 = vpop.xlane.xlu0 %1916
          %v1918 = vsel %vm533, %v1898, 0.0
          %1919 = vadd.xlane.f32.xlu0 %v1918
          %v1920 = vpop.xlane.xlu0 %1919
          %v1921 = vsel %vm533, %v1899, 0.0
          %1922 = vadd.xlane.f32.xlu0 %v1921
          %v1923 = vpop.xlane.xlu0 %1922
          %v1924 = vmax.f32 %v1902, 1e-24
          %v1925 = vmax.f32 %v1905, 1e-24
          %v1926 = vmax.f32 %v1908, 1e-24
          %v1927 = vmax.f32 %v1911, 1e-24
          %v1928 = vmax.f32 %v1914, 1e-24
          %v1929 = vmax.f32 %v1917, 1e-24
          %v1930 = vmax.f32 %v1920, 1e-24
          %v1931 = vmax.f32 %v1923, 1e-24
          %v1932 = vrsqrt.pop %v1924
          %v1933 = vrsqrt.pop %v1925
          %v1934 = vrsqrt.pop %v1926
          %v1935 = vrsqrt.pop %v1927
          %v1936 = vrsqrt.pop %v1928
          %v1937 = vrsqrt.pop %v1929
          %v1938 = vrsqrt.pop %v1930
          %v1939 = vrsqrt.pop %v1931
          %v1941 = vlaneseq
          %v1942 = vshrl.u32 %v1941, 7
          %v1943 = vsub.s32 0, %v1942
          %v1944 = vrot.slane %v511, %v1943
          %v1946 = vmul.f32 %v1932, %v1944
          %v1947 = vmul.f32 %v1933, %v1944
          %v1948 = vmul.f32 %v1934, %v1944
          %v1949 = vmul.f32 %v1935, %v1944
          %v1950 = vmul.f32 %v1936, %v1944
          %v1951 = vmul.f32 %v1937, %v1944
          %v1952 = vmul.f32 %v1938, %v1944
          %v1953 = vmul.f32 %v1939, %v1944
          %v1954 = vmul.f32 %v1884, %v1946
          %v1955 = vmul.f32 %v1885, %v1947
          %v1956 = vmul.f32 %v1886, %v1948
          %v1957 = vmul.f32 %v1887, %v1949
          %v1958 = vmul.f32 %v1888, %v1950
          %v1959 = vmul.f32 %v1889, %v1951
          %v1960 = vmul.f32 %v1890, %v1952
          %v1961 = vmul.f32 %v1891, %v1953
          %1963 = vrot.lane.b32.xlu0 %v1162, 64
          %v1964 = vpop.permute.xlu0 %1963
          %1967 = vrot.lane.b32.xlu0 %v1164, 64
          %v1968 = vpop.permute.xlu0 %1967
          %1971 = vrot.lane.b32.xlu0 %v1233, 64
          %v1972 = vpop.permute.xlu0 %1971
          %1975 = vrot.lane.b32.xlu0 %v1235, 64
          %v1976 = vpop.permute.xlu0 %1975
          %v1978 = vcombine.low %v1162, %v1164
          %v1979 = vcombine.high %v1162, %v1164
          %v1981 = vunpack.c.l.s4 1983009808
          %v1982 = vunpack.c.0.s8 %v1981
          %v1983 = vlaneseq
          %v1984 = vshrl.u32 %v1983, 7
          %v1985 = vsub.s32 %v1982, %v1984
          %v1986 = vrot.slane %v1978, %v1985
          %v1988 = vunpack.c.l.s4 1983009808
          %v1989 = vunpack.c.0.s8 %v1988
          %v1990 = vlaneseq
          %v1991 = vshrl.u32 %v1990, 7
          %v1992 = vsub.s32 %v1989, %v1991
          %v1993 = vrot.slane %v1979, %v1992
          %v1994 = vcombine.low %v1964, %v1968
          %v1995 = vcombine.high %v1964, %v1968
          %v1997 = vunpack.c.l.s4 1983009808
          %v1998 = vunpack.c.0.s8 %v1997
          %v1999 = vlaneseq
          %v2000 = vshrl.u32 %v1999, 7
          %v2001 = vsub.s32 %v1998, %v2000
          %v2002 = vrot.slane %v1994, %v2001
          %v2004 = vunpack.c.l.s4 1983009808
          %v2005 = vunpack.c.0.s8 %v2004
          %v2006 = vlaneseq
          %v2007 = vshrl.u32 %v2006, 7
          %v2008 = vsub.s32 %v2005, %v2007
          %v2009 = vrot.slane %v1995, %v2008
          %v2010 = vcombine.low %v1233, %v1235
          %v2011 = vcombine.high %v1233, %v1235
          %v2013 = vunpack.c.l.s4 1983009808
          %v2014 = vunpack.c.0.s8 %v2013
          %v2015 = vlaneseq
          %v2016 = vshrl.u32 %v2015, 7
          %v2017 = vsub.s32 %v2014, %v2016
          %v2018 = vrot.slane %v2010, %v2017
          %v2020 = vunpack.c.l.s4 1983009808
          %v2021 = vunpack.c.0.s8 %v2020
          %v2022 = vlaneseq
          %v2023 = vshrl.u32 %v2022, 7
          %v2024 = vsub.s32 %v2021, %v2023
          %v2025 = vrot.slane %v2011, %v2024
          %v2026 = vcombine.low %v1972, %v1976
          %v2027 = vcombine.high %v1972, %v1976
          %v2029 = vunpack.c.l.s4 1983009808
          %v2030 = vunpack.c.0.s8 %v2029
          %v2031 = vlaneseq
          %v2032 = vshrl.u32 %v2031, 7
          %v2033 = vsub.s32 %v2030, %v2032
          %v2034 = vrot.slane %v2026, %v2033
          %v2036 = vunpack.c.l.s4 1983009808
          %v2037 = vunpack.c.0.s8 %v2036
          %v2038 = vlaneseq
          %v2039 = vshrl.u32 %v2038, 7
          %v2040 = vsub.s32 %v2037, %v2039
          %v2041 = vrot.slane %v2027, %v2040
          %v2042 = vcombine.low %v1986, %v2002
          %v2043 = vcombine.high %v1986, %v2002
          %v2045 = vunpack.c.l.s4 1934713408
          %v2046 = vunpack.c.0.s8 %v2045
          %v2047 = vlaneseq
          %v2048 = vshrl.u32 %v2047, 7
          %v2049 = vsub.s32 %v2046, %v2048
          %v2050 = vrot.slane %v2042, %v2049
          %v2052 = vunpack.c.l.s4 1934713408
          %v2053 = vunpack.c.0.s8 %v2052
          %v2054 = vlaneseq
          %v2055 = vshrl.u32 %v2054, 7
          %v2056 = vsub.s32 %v2053, %v2055
          %v2057 = vrot.slane %v2043, %v2056
          %v2058 = vcombine.low %v1993, %v2009
          %v2059 = vcombine.high %v1993, %v2009
          %v2061 = vunpack.c.l.s4 1934713408
          %v2062 = vunpack.c.0.s8 %v2061
          %v2063 = vlaneseq
          %v2064 = vshrl.u32 %v2063, 7
          %v2065 = vsub.s32 %v2062, %v2064
          %v2066 = vrot.slane %v2058, %v2065
          %v2068 = vunpack.c.l.s4 1934713408
          %v2069 = vunpack.c.0.s8 %v2068
          %v2070 = vlaneseq
          %v2071 = vshrl.u32 %v2070, 7
          %v2072 = vsub.s32 %v2069, %v2071
          %v2073 = vrot.slane %v2059, %v2072
          %v2074 = vcombine.low %v2018, %v2034
          %v2075 = vcombine.high %v2018, %v2034
          %v2077 = vunpack.c.l.s4 1934713408
          %v2078 = vunpack.c.0.s8 %v2077
          %v2079 = vlaneseq
          %v2080 = vshrl.u32 %v2079, 7
          %v2081 = vsub.s32 %v2078, %v2080
          %v2082 = vrot.slane %v2074, %v2081
          %v2084 = vunpack.c.l.s4 1934713408
          %v2085 = vunpack.c.0.s8 %v2084
          %v2086 = vlaneseq
          %v2087 = vshrl.u32 %v2086, 7
          %v2088 = vsub.s32 %v2085, %v2087
          %v2089 = vrot.slane %v2075, %v2088
          %v2090 = vcombine.low %v2025, %v2041
          %v2091 = vcombine.high %v2025, %v2041
          %v2093 = vunpack.c.l.s4 1934713408
          %v2094 = vunpack.c.0.s8 %v2093
          %v2095 = vlaneseq
          %v2096 = vshrl.u32 %v2095, 7
          %v2097 = vsub.s32 %v2094, %v2096
          %v2098 = vrot.slane %v2090, %v2097
          %v2100 = vunpack.c.l.s4 1934713408
          %v2101 = vunpack.c.0.s8 %v2100
          %v2102 = vlaneseq
          %v2103 = vshrl.u32 %v2102, 7
          %v2104 = vsub.s32 %v2101, %v2103
          %v2105 = vrot.slane %v2091, %v2104
          %v2106 = vcombine.low %v2050, %v2082
          %v2107 = vcombine.high %v2050, %v2082
          %v2108 = vcombine.low %v2057, %v2089
          %v2109 = vcombine.high %v2057, %v2089
          %v2110 = vcombine.low %v2066, %v2098
          %v2111 = vcombine.high %v2066, %v2098
          %v2112 = vcombine.low %v2073, %v2105
          %v2113 = vcombine.high %v2073, %v2105
          %v2114 = vcombine.low %v2106, %v2108
          %v2115 = vcombine.high %v2106, %v2108
          %v2117 = vunpack.c.l.s4 1983009808
          %v2118 = vunpack.c.0.s8 %v2117
          %v2119 = vlaneseq
          %v2120 = vshrl.u32 %v2119, 7
          %v2121 = vsub.s32 %v2118, %v2120
          %v2122 = vrot.slane %v2114, %v2121
          %v2124 = vunpack.c.l.s4 1983009808
          %v2125 = vunpack.c.0.s8 %v2124
          %v2126 = vlaneseq
          %v2127 = vshrl.u32 %v2126, 7
          %v2128 = vsub.s32 %v2125, %v2127
          %v2129 = vrot.slane %v2115, %v2128
          %v2130 = vcombine.low %v2107, %v2109
          %v2131 = vcombine.high %v2107, %v2109
          %v2133 = vunpack.c.l.s4 1983009808
          %v2134 = vunpack.c.0.s8 %v2133
          %v2135 = vlaneseq
          %v2136 = vshrl.u32 %v2135, 7
          %v2137 = vsub.s32 %v2134, %v2136
          %v2138 = vrot.slane %v2130, %v2137
          %v2140 = vunpack.c.l.s4 1983009808
          %v2141 = vunpack.c.0.s8 %v2140
          %v2142 = vlaneseq
          %v2143 = vshrl.u32 %v2142, 7
          %v2144 = vsub.s32 %v2141, %v2143
          %v2145 = vrot.slane %v2131, %v2144
          %v2146 = vcombine.low %v2110, %v2112
          %v2147 = vcombine.high %v2110, %v2112
          %v2149 = vunpack.c.l.s4 1983009808
          %v2150 = vunpack.c.0.s8 %v2149
          %v2151 = vlaneseq
          %v2152 = vshrl.u32 %v2151, 7
          %v2153 = vsub.s32 %v2150, %v2152
          %v2154 = vrot.slane %v2146, %v2153
          %v2156 = vunpack.c.l.s4 1983009808
          %v2157 = vunpack.c.0.s8 %v2156
          %v2158 = vlaneseq
          %v2159 = vshrl.u32 %v2158, 7
          %v2160 = vsub.s32 %v2157, %v2159
          %v2161 = vrot.slane %v2147, %v2160
          %v2162 = vcombine.low %v2111, %v2113
          %v2163 = vcombine.high %v2111, %v2113
          %v2165 = vunpack.c.l.s4 1983009808
          %v2166 = vunpack.c.0.s8 %v2165
          %v2167 = vlaneseq
          %v2168 = vshrl.u32 %v2167, 7
          %v2169 = vsub.s32 %v2166, %v2168
          %v2170 = vrot.slane %v2162, %v2169
          %v2172 = vunpack.c.l.s4 1983009808
          %v2173 = vunpack.c.0.s8 %v2172
          %v2174 = vlaneseq
          %v2175 = vshrl.u32 %v2174, 7
          %v2176 = vsub.s32 %v2173, %v2175
          %v2177 = vrot.slane %v2163, %v2176
          %v2178 = vcombine.low %v2122, %v2138
          %v2179 = vcombine.high %v2122, %v2138
          %v2181 = vunpack.c.l.s4 1934713408
          %v2182 = vunpack.c.0.s8 %v2181
          %v2183 = vlaneseq
          %v2184 = vshrl.u32 %v2183, 7
          %v2185 = vsub.s32 %v2182, %v2184
          %v2186 = vrot.slane %v2178, %v2185
          %v2188 = vunpack.c.l.s4 1934713408
          %v2189 = vunpack.c.0.s8 %v2188
          %v2190 = vlaneseq
          %v2191 = vshrl.u32 %v2190, 7
          %v2192 = vsub.s32 %v2189, %v2191
          %v2193 = vrot.slane %v2179, %v2192
          %v2194 = vcombine.low %v2129, %v2145
          %v2195 = vcombine.high %v2129, %v2145
          %v2197 = vunpack.c.l.s4 1934713408
          %v2198 = vunpack.c.0.s8 %v2197
          %v2199 = vlaneseq
          %v2200 = vshrl.u32 %v2199, 7
          %v2201 = vsub.s32 %v2198, %v2200
          %v2202 = vrot.slane %v2194, %v2201
          %v2204 = vunpack.c.l.s4 1934713408
          %v2205 = vunpack.c.0.s8 %v2204
          %v2206 = vlaneseq
          %v2207 = vshrl.u32 %v2206, 7
          %v2208 = vsub.s32 %v2205, %v2207
          %v2209 = vrot.slane %v2195, %v2208
          %v2210 = vcombine.low %v2154, %v2170
          %v2211 = vcombine.high %v2154, %v2170
          %v2213 = vunpack.c.l.s4 1934713408
          %v2214 = vunpack.c.0.s8 %v2213
          %v2215 = vlaneseq
          %v2216 = vshrl.u32 %v2215, 7
          %v2217 = vsub.s32 %v2214, %v2216
          %v2218 = vrot.slane %v2210, %v2217
          %v2220 = vunpack.c.l.s4 1934713408
          %v2221 = vunpack.c.0.s8 %v2220
          %v2222 = vlaneseq
          %v2223 = vshrl.u32 %v2222, 7
          %v2224 = vsub.s32 %v2221, %v2223
          %v2225 = vrot.slane %v2211, %v2224
          %v2226 = vcombine.low %v2161, %v2177
          %v2227 = vcombine.high %v2161, %v2177
          %v2229 = vunpack.c.l.s4 1934713408
          %v2230 = vunpack.c.0.s8 %v2229
          %v2231 = vlaneseq
          %v2232 = vshrl.u32 %v2231, 7
          %v2233 = vsub.s32 %v2230, %v2232
          %v2234 = vrot.slane %v2226, %v2233
          %v2236 = vunpack.c.l.s4 1934713408
          %v2237 = vunpack.c.0.s8 %v2236
          %v2238 = vlaneseq
          %v2239 = vshrl.u32 %v2238, 7
          %v2240 = vsub.s32 %v2237, %v2239
          %v2241 = vrot.slane %v2227, %v2240
          %v2242 = vcombine.low %v2186, %v2218
          %v2243 = vcombine.high %v2186, %v2218
          %v2244 = vcombine.low %v2193, %v2225
          %v2245 = vcombine.high %v2193, %v2225
          %v2246 = vcombine.low %v2202, %v2234
          %v2247 = vcombine.high %v2202, %v2234
          %v2248 = vcombine.low %v2209, %v2241
          %v2249 = vcombine.high %v2209, %v2241
          %v2250 = vld [vmem:[#allocation2] sm:$0xff]
          %v2251 = vld [vmem:[#allocation2 + $0x8] sm:$0xff]
          %v2252 = vld [vmem:[#allocation2 + $0x10] sm:$0xff]
          %v2253 = vld [vmem:[#allocation2 + $0x18] sm:$0xff]
          %v2254 = vld [vmem:[#allocation2 + $0x20] sm:$0xff]
          %v2255 = vld [vmem:[#allocation2 + $0x28] sm:$0xff]
          %v2256 = vld [vmem:[#allocation2 + $0x30] sm:$0xff]
          %v2257 = vld [vmem:[#allocation2 + $0x38] sm:$0xff]
          %v2259 = vsel %vm533, %v2250, 0
          %v2262 = vsel %vm533, %v1954, 0
          %2264 = vmatprep.subr.mxu0 0.0
          %2265 = vmatpush1.xpose.msra.mxu0 %v2262
          %2266 = vmatprep.subr.mxu0 0.0
          %2267 = vmatpush1.xpose.msra.mxu0 0.0
          %2268 = vmatprep.subr.mxu0 0.0
          %2269 = vmatpush1.xpose.msra.mxu0 0.0
          %2270 = vmatprep.subr.mxu0 0.0
          %2271 = vmatpush1.xpose.msra.mxu0 0.0
          %2272 = vmatprep.subr.mxu0 0.0
          %2273 = vmatpush1.xpose.msra.mxu0 0.0
          %2274 = vmatprep.subr.mxu0 0.0
          %2275 = vmatpush1.xpose.msra.mxu0 0.0
          %2276 = vmatprep.subr.mxu0 0.0
          %2277 = vmatpush1.xpose.msra.mxu0 0.0
          %2278 = vmatprep.subr.mxu0 0.0
          %2279 = vmatpush1.xpose.msra.mxu0 0.0
          %2280 = vmatprep.subr.mxu0 0.0
          %2281 = vmatpush1.xpose.msra.mxu0 0.0
          %2282 = vmatprep.subr.mxu0 0.0
          %2283 = vmatpush1.xpose.msra.mxu0 0.0
          %2284 = vmatprep.subr.mxu0 0.0
          %2285 = vmatpush1.xpose.msra.mxu0 0.0
          %2286 = vmatprep.subr.mxu0 0.0
          %2287 = vmatpush1.xpose.msra.mxu0 0.0
          %2288 = vmatprep.subr.mxu0 0.0
          %2289 = vmatpush1.xpose.msra.mxu0 0.0
          %2290 = vmatprep.subr.mxu0 0.0
          %2291 = vmatpush1.xpose.msra.mxu0 0.0
          %2292 = vmatprep.subr.mxu0 0.0
          %2293 = vmatpush1.xpose.msra.mxu0 0.0
          %2294 = vmatprep.subr.mxu0 0.0
          %2295 = vmatpush1.xpose.msra.mxu0 0.0
          %2296 = vmatprep.subr.mxu0 0.0
          %2297 = vmatpush1.xpose.msra.mxu0 0.0
          %2298 = vmatprep.subr.mxu0 0.0
          %2299 = vmatpush1.xpose.msra.mxu0 0.0
          %2300 = vmatprep.subr.mxu0 0.0
          %2301 = vmatpush1.xpose.msra.mxu0 0.0
          %2302 = vmatprep.subr.mxu0 0.0
          %2303 = vmatpush1.xpose.msra.mxu0 0.0
          %2304 = vmatprep.subr.mxu0 0.0
          %2305 = vmatpush1.xpose.msra.mxu0 0.0
          %2306 = vmatprep.subr.mxu0 0.0
          %2307 = vmatpush1.xpose.msra.mxu0 0.0
          %2308 = vmatprep.subr.mxu0 0.0
          %2309 = vmatpush1.xpose.msra.mxu0 0.0
          %2310 = vmatprep.subr.mxu0 0.0
          %2311 = vmatpush1.xpose.msra.mxu0 0.0
          %2312 = vmatprep.subr.mxu0 0.0
          %2313 = vmatpush1.xpose.msra.mxu0 0.0
          %2314 = vmatprep.subr.mxu0 0.0
          %2315 = vmatpush1.xpose.msra.mxu0 0.0
          %2316 = vmatprep.subr.mxu0 0.0
          %2317 = vmatpush1.xpose.msra.mxu0 0.0
          %2318 = vmatprep.subr.mxu0 0.0
          %2319 = vmatpush1.xpose.msra.mxu0 0.0
          %2320 = vmatprep.subr.mxu0 0.0
          %2321 = vmatpush1.xpose.msra.mxu0 0.0
          %2322 = vmatprep.subr.mxu0 0.0
          %2323 = vmatpush1.xpose.msra.mxu0 0.0
          %2324 = vmatprep.subr.mxu0 0.0
          %2325 = vmatpush1.xpose.msra.mxu0 0.0
          %2326 = vmatprep.subr.mxu0 0.0
          %2327 = vmatpush1.xpose.msra.mxu0 0.0
          %2328 = vmatprep.mubr.f32.mxu0 0.0
          %2329 = vmatmul.mubr.f32.gmra.mrb[0].mxu0 %v2259
          %v2330 = vpop.f32.mrb[0].mxu0
          %v2331 = vadd.f32 0.0, %v2330
          %v2332 = vpop.f32.mrb[0].mxu0
          %2333 = vdwg.mxu0
          %v2335 = vsel %vm533, %v2251, 0
          %v2338 = vsel %vm533, %v1955, 0
          %2340 = vmatprep.subr.mxu0 0.0
          %2341 = vmatpush1.xpose.msra.mxu0 %v2338
          %2342 = vmatprep.subr.mxu0 0.0
          %2343 = vmatpush1.xpose.msra.mxu0 0.0
          %2344 = vmatprep.subr.mxu0 0.0
          %2345 = vmatpush1.xpose.msra.mxu0 0.0
          %2346 = vmatprep.subr.mxu0 0.0
          %2347 = vmatpush1.xpose.msra.mxu0 0.0
          %2348 = vmatprep.subr.mxu0 0.0
          %2349 = vmatpush1.xpose.msra.mxu0 0.0
          %2350 = vmatprep.subr.mxu0 0.0
          %2351 = vmatpush1.xpose.msra.mxu0 0.0
          %2352 = vmatprep.subr.mxu0 0.0
          %2353 = vmatpush1.xpose.msra.mxu0 0.0
          %2354 = vmatprep.subr.mxu0 0.0
          %2355 = vmatpush1.xpose.msra.mxu0 0.0
          %2356 = vmatprep.subr.mxu0 0.0
          %2357 = vmatpush1.xpose.msra.mxu0 0.0
          %2358 = vmatprep.subr.mxu0 0.0
          %2359 = vmatpush1.xpose.msra.mxu0 0.0
          %2360 = vmatprep.subr.mxu0 0.0
          %2361 = vmatpush1.xpose.msra.mxu0 0.0
          %2362 = vmatprep.subr.mxu0 0.0
          %2363 = vmatpush1.xpose.msra.mxu0 0.0
          %2364 = vmatprep.subr.mxu0 0.0
          %2365 = vmatpush1.xpose.msra.mxu0 0.0
          %2366 = vmatprep.subr.mxu0 0.0
          %2367 = vmatpush1.xpose.msra.mxu0 0.0
          %2368 = vmatprep.subr.mxu0 0.0
          %2369 = vmatpush1.xpose.msra.mxu0 0.0
          %2370 = vmatprep.subr.mxu0 0.0
          %2371 = vmatpush1.xpose.msra.mxu0 0.0
          %2372 = vmatprep.subr.mxu0 0.0
          %2373 = vmatpush1.xpose.msra.mxu0 0.0
          %2374 = vmatprep.subr.mxu0 0.0
          %2375 = vmatpush1.xpose.msra.mxu0 0.0
          %2376 = vmatprep.subr.mxu0 0.0
          %2377 = vmatpush1.xpose.msra.mxu0 0.0
          %2378 = vmatprep.subr.mxu0 0.0
          %2379 = vmatpush1.xpose.msra.mxu0 0.0
          %2380 = vmatprep.subr.mxu0 0.0
          %2381 = vmatpush1.xpose.msra.mxu0 0.0
          %2382 = vmatprep.subr.mxu0 0.0
          %2383 = vmatpush1.xpose.msra.mxu0 0.0
          %2384 = vmatprep.subr.mxu0 0.0
          %2385 = vmatpush1.xpose.msra.mxu0 0.0
          %2386 = vmatprep.subr.mxu0 0.0
          %2387 = vmatpush1.xpose.msra.mxu0 0.0
          %2388 = vmatprep.subr.mxu0 0.0
          %2389 = vmatpush1.xpose.msra.mxu0 0.0
          %2390 = vmatprep.subr.mxu0 0.0
          %2391 = vmatpush1.xpose.msra.mxu0 0.0
          %2392 = vmatprep.subr.mxu0 0.0
          %2393 = vmatpush1.xpose.msra.mxu0 0.0
          %2394 = vmatprep.subr.mxu0 0.0
          %2395 = vmatpush1.xpose.msra.mxu0 0.0
          %2396 = vmatprep.subr.mxu0 0.0
          %2397 = vmatpush1.xpose.msra.mxu0 0.0
          %2398 = vmatprep.subr.mxu0 0.0
          %2399 = vmatpush1.xpose.msra.mxu0 0.0
          %2400 = vmatprep.subr.mxu0 0.0
          %2401 = vmatpush1.xpose.msra.mxu0 0.0
          %2402 = vmatprep.subr.mxu0 0.0
          %2403 = vmatpush1.xpose.msra.mxu0 0.0
          %2404 = vmatprep.mubr.f32.mxu0 0.0
          %2405 = vmatmul.mubr.f32.gmra.mrb[0].mxu0 %v2335
          %v2406 = vpop.f32.mrb[0].mxu0
          %v2407 = vadd.f32 0.0, %v2406
          %v2408 = vpop.f32.mrb[0].mxu0
          %2409 = vdwg.mxu0
          %v2411 = vsel %vm533, %v2252, 0
          %v2414 = vsel %vm533, %v1956, 0
          %2416 = vmatprep.subr.mxu0 0.0
          %2417 = vmatpush1.xpose.msra.mxu0 %v2414
          %2418 = vmatprep.subr.mxu0 0.0
          %2419 = vmatpush1.xpose.msra.mxu0 0.0
          %2420 = vmatprep.subr.mxu0 0.0
          %2421 = vmatpush1.xpose.msra.mxu0 0.0
          %2422 = vmatprep.subr.mxu0 0.0
          %2423 = vmatpush1.xpose.msra.mxu0 0.0
          %2424 = vmatprep.subr.mxu0 0.0
          %2425 = vmatpush1.xpose.msra.mxu0 0.0
          %2426 = vmatprep.subr.mxu0 0.0
          %2427 = vmatpush1.xpose.msra.mxu0 0.0
          %2428 = vmatprep.subr.mxu0 0.0
          %2429 = vmatpush1.xpose.msra.mxu0 0.0
          %2430 = vmatprep.subr.mxu0 0.0
          %2431 = vmatpush1.xpose.msra.mxu0 0.0
          %2432 = vmatprep.subr.mxu0 0.0
          %2433 = vmatpush1.xpose.msra.mxu0 0.0
          %2434 = vmatprep.subr.mxu0 0.0
          %2435 = vmatpush1.xpose.msra.mxu0 0.0
          %2436 = vmatprep.subr.mxu0 0.0
          %2437 = vmatpush1.xpose.msra.mxu0 0.0
          %2438 = vmatprep.subr.mxu0 0.0
          %2439 = vmatpush1.xpose.msra.mxu0 0.0
          %2440 = vmatprep.subr.mxu0 0.0
          %2441 = vmatpush1.xpose.msra.mxu0 0.0
          %2442 = vmatprep.subr.mxu0 0.0
          %2443 = vmatpush1.xpose.msra.mxu0 0.0
          %2444 = vmatprep.subr.mxu0 0.0
          %2445 = vmatpush1.xpose.msra.mxu0 0.0
          %2446 = vmatprep.subr.mxu0 0.0
          %2447 = vmatpush1.xpose.msra.mxu0 0.0
          %2448 = vmatprep.subr.mxu0 0.0
          %2449 = vmatpush1.xpose.msra.mxu0 0.0
          %2450 = vmatprep.subr.mxu0 0.0
          %2451 = vmatpush1.xpose.msra.mxu0 0.0
          %2452 = vmatprep.subr.mxu0 0.0
          %2453 = vmatpush1.xpose.msra.mxu0 0.0
          %2454 = vmatprep.subr.mxu0 0.0
          %2455 = vmatpush1.xpose.msra.mxu0 0.0
          %2456 = vmatprep.subr.mxu0 0.0
          %2457 = vmatpush1.xpose.msra.mxu0 0.0
          %2458 = vmatprep.subr.mxu0 0.0
          %2459 = vmatpush1.xpose.msra.mxu0 0.0
          %2460 = vmatprep.subr.mxu0 0.0
          %2461 = vmatpush1.xpose.msra.mxu0 0.0
          %2462 = vmatprep.subr.mxu0 0.0
          %2463 = vmatpush1.xpose.msra.mxu0 0.0
          %2464 = vmatprep.subr.mxu0 0.0
          %2465 = vmatpush1.xpose.msra.mxu0 0.0
          %2466 = vmatprep.subr.mxu0 0.0
          %2467 = vmatpush1.xpose.msra.mxu0 0.0
          %2468 = vmatprep.subr.mxu0 0.0
          %2469 = vmatpush1.xpose.msra.mxu0 0.0
          %2470 = vmatprep.subr.mxu0 0.0
          %2471 = vmatpush1.xpose.msra.mxu0 0.0
          %2472 = vmatprep.subr.mxu0 0.0
          %2473 = vmatpush1.xpose.msra.mxu0 0.0
          %2474 = vmatprep.subr.mxu0 0.0
          %2475 = vmatpush1.xpose.msra.mxu0 0.0
          %2476 = vmatprep.subr.mxu0 0.0
          %2477 = vmatpush1.xpose.msra.mxu0 0.0
          %2478 = vmatprep.subr.mxu0 0.0
          %2479 = vmatpush1.xpose.msra.mxu0 0.0
          %2480 = vmatprep.mubr.f32.mxu0 0.0
          %2481 = vmatmul.mubr.f32.gmra.mrb[0].mxu0 %v2411
          %v2482 = vpop.f32.mrb[0].mxu0
          %v2483 = vadd.f32 0.0, %v2482
          %v2484 = vpop.f32.mrb[0].mxu0
          %2485 = vdwg.mxu0
          %v2487 = vsel %vm533, %v2253, 0
          %v2490 = vsel %vm533, %v1957, 0
          %2492 = vmatprep.subr.mxu0 0.0
          %2493 = vmatpush1.xpose.msra.mxu0 %v2490
          %2494 = vmatprep.subr.mxu0 0.0
          %2495 = vmatpush1.xpose.msra.mxu0 0.0
          %2496 = vmatprep.subr.mxu0 0.0
          %2497 = vmatpush1.xpose.msra.mxu0 0.0
          %2498 = vmatprep.subr.mxu0 0.0
          %2499 = vmatpush1.xpose.msra.mxu0 0.0
          %2500 = vmatprep.subr.mxu0 0.0
          %2501 = vmatpush1.xpose.msra.mxu0 0.0
          %2502 = vmatprep.subr.mxu0 0.0
          %2503 = vmatpush1.xpose.msra.mxu0 0.0
          %2504 = vmatprep.subr.mxu0 0.0
          %2505 = vmatpush1.xpose.msra.mxu0 0.0
          %2506 = vmatprep.subr.mxu0 0.0
          %2507 = vmatpush1.xpose.msra.mxu0 0.0
          %2508 = vmatprep.subr.mxu0 0.0
          %2509 = vmatpush1.xpose.msra.mxu0 0.0
          %2510 = vmatprep.subr.mxu0 0.0
          %2511 = vmatpush1.xpose.msra.mxu0 0.0
          %2512 = vmatprep.subr.mxu0 0.0
          %2513 = vmatpush1.xpose.msra.mxu0 0.0
          %2514 = vmatprep.subr.mxu0 0.0
          %2515 = vmatpush1.xpose.msra.mxu0 0.0
          %2516 = vmatprep.subr.mxu0 0.0
          %2517 = vmatpush1.xpose.msra.mxu0 0.0
          %2518 = vmatprep.subr.mxu0 0.0
          %2519 = vmatpush1.xpose.msra.mxu0 0.0
          %2520 = vmatprep.subr.mxu0 0.0
          %2521 = vmatpush1.xpose.msra.mxu0 0.0
          %2522 = vmatprep.subr.mxu0 0.0
          %2523 = vmatpush1.xpose.msra.mxu0 0.0
          %2524 = vmatprep.subr.mxu0 0.0
          %2525 = vmatpush1.xpose.msra.mxu0 0.0
          %2526 = vmatprep.subr.mxu0 0.0
          %2527 = vmatpush1.xpose.msra.mxu0 0.0
          %2528 = vmatprep.subr.mxu0 0.0
          %2529 = vmatpush1.xpose.msra.mxu0 0.0
          %2530 = vmatprep.subr.mxu0 0.0
          %2531 = vmatpush1.xpose.msra.mxu0 0.0
          %2532 = vmatprep.subr.mxu0 0.0
          %2533 = vmatpush1.xpose.msra.mxu0 0.0
          %2534 = vmatprep.subr.mxu0 0.0
          %2535 = vmatpush1.xpose.msra.mxu0 0.0
          %2536 = vmatprep.subr.mxu0 0.0
          %2537 = vmatpush1.xpose.msra.mxu0 0.0
          %2538 = vmatprep.subr.mxu0 0.0
          %2539 = vmatpush1.xpose.msra.mxu0 0.0
          %2540 = vmatprep.subr.mxu0 0.0
          %2541 = vmatpush1.xpose.msra.mxu0 0.0
          %2542 = vmatprep.subr.mxu0 0.0
          %2543 = vmatpush1.xpose.msra.mxu0 0.0
          %2544 = vmatprep.subr.mxu0 0.0
          %2545 = vmatpush1.xpose.msra.mxu0 0.0
          %2546 = vmatprep.subr.mxu0 0.0
          %2547 = vmatpush1.xpose.msra.mxu0 0.0
          %2548 = vmatprep.subr.mxu0 0.0
          %2549 = vmatpush1.xpose.msra.mxu0 0.0
          %2550 = vmatprep.subr.mxu0 0.0
          %2551 = vmatpush1.xpose.msra.mxu0 0.0
          %2552 = vmatprep.subr.mxu0 0.0
          %2553 = vmatpush1.xpose.msra.mxu0 0.0
          %2554 = vmatprep.subr.mxu0 0.0
          %2555 = vmatpush1.xpose.msra.mxu0 0.0
          %2556 = vmatprep.mubr.f32.mxu0 0.0
          %2557 = vmatmul.mubr.f32.gmra.mrb[0].mxu0 %v2487
          %v2558 = vpop.f32.mrb[0].mxu0
          %v2559 = vadd.f32 0.0, %v2558
          %v2560 = vpop.f32.mrb[0].mxu0
          %2561 = vdwg.mxu0
          %v2563 = vsel %vm533, %v2254, 0
          %v2566 = vsel %vm533, %v1958, 0
          %2568 = vmatprep.subr.mxu0 0.0
          %2569 = vmatpush1.xpose.msra.mxu0 %v2566
          %2570 = vmatprep.subr.mxu0 0.0
          %2571 = vmatpush1.xpose.msra.mxu0 0.0
          %2572 = vmatprep.subr.mxu0 0.0
          %2573 = vmatpush1.xpose.msra.mxu0 0.0
          %2574 = vmatprep.subr.mxu0 0.0
          %2575 = vmatpush1.xpose.msra.mxu0 0.0
          %2576 = vmatprep.subr.mxu0 0.0
          %2577 = vmatpush1.xpose.msra.mxu0 0.0
          %2578 = vmatprep.subr.mxu0 0.0
          %2579 = vmatpush1.xpose.msra.mxu0 0.0
          %2580 = vmatprep.subr.mxu0 0.0
          %2581 = vmatpush1.xpose.msra.mxu0 0.0
          %2582 = vmatprep.subr.mxu0 0.0
          %2583 = vmatpush1.xpose.msra.mxu0 0.0
          %2584 = vmatprep.subr.mxu0 0.0
          %2585 = vmatpush1.xpose.msra.mxu0 0.0
          %2586 = vmatprep.subr.mxu0 0.0
          %2587 = vmatpush1.xpose.msra.mxu0 0.0
          %2588 = vmatprep.subr.mxu0 0.0
          %2589 = vmatpush1.xpose.msra.mxu0 0.0
          %2590 = vmatprep.subr.mxu0 0.0
          %2591 = vmatpush1.xpose.msra.mxu0 0.0
          %2592 = vmatprep.subr.mxu0 0.0
          %2593 = vmatpush1.xpose.msra.mxu0 0.0
          %2594 = vmatprep.subr.mxu0 0.0
          %2595 = vmatpush1.xpose.msra.mxu0 0.0
          %2596 = vmatprep.subr.mxu0 0.0
          %2597 = vmatpush1.xpose.msra.mxu0 0.0
          %2598 = vmatprep.subr.mxu0 0.0
          %2599 = vmatpush1.xpose.msra.mxu0 0.0
          %2600 = vmatprep.subr.mxu0 0.0
          %2601 = vmatpush1.xpose.msra.mxu0 0.0
          %2602 = vmatprep.subr.mxu0 0.0
          %2603 = vmatpush1.xpose.msra.mxu0 0.0
          %2604 = vmatprep.subr.mxu0 0.0
          %2605 = vmatpush1.xpose.msra.mxu0 0.0
          %2606 = vmatprep.subr.mxu0 0.0
          %2607 = vmatpush1.xpose.msra.mxu0 0.0
          %2608 = vmatprep.subr.mxu0 0.0
          %2609 = vmatpush1.xpose.msra.mxu0 0.0
          %2610 = vmatprep.subr.mxu0 0.0
          %2611 = vmatpush1.xpose.msra.mxu0 0.0
          %2612 = vmatprep.subr.mxu0 0.0
          %2613 = vmatpush1.xpose.msra.mxu0 0.0
          %2614 = vmatprep.subr.mxu0 0.0
          %2615 = vmatpush1.xpose.msra.mxu0 0.0
          %2616 = vmatprep.subr.mxu0 0.0
          %2617 = vmatpush1.xpose.msra.mxu0 0.0
          %2618 = vmatprep.subr.mxu0 0.0
          %2619 = vmatpush1.xpose.msra.mxu0 0.0
          %2620 = vmatprep.subr.mxu0 0.0
          %2621 = vmatpush1.xpose.msra.mxu0 0.0
          %2622 = vmatprep.subr.mxu0 0.0
          %2623 = vmatpush1.xpose.msra.mxu0 0.0
          %2624 = vmatprep.subr.mxu0 0.0
          %2625 = vmatpush1.xpose.msra.mxu0 0.0
          %2626 = vmatprep.subr.mxu0 0.0
          %2627 = vmatpush1.xpose.msra.mxu0 0.0
          %2628 = vmatprep.subr.mxu0 0.0
          %2629 = vmatpush1.xpose.msra.mxu0 0.0
          %2630 = vmatprep.subr.mxu0 0.0
          %2631 = vmatpush1.xpose.msra.mxu0 0.0
          %2632 = vmatprep.mubr.f32.mxu0 0.0
          %2633 = vmatmul.mubr.f32.gmra.mrb[0].mxu0 %v2563
          %v2634 = vpop.f32.mrb[0].mxu0
          %v2635 = vadd.f32 0.0, %v2634
          %v2636 = vpop.f32.mrb[0].mxu0
          %2637 = vdwg.mxu0
          %v2639 = vsel %vm533, %v2255, 0
          %v2642 = vsel %vm533, %v1959, 0
          %2644 = vmatprep.subr.mxu0 0.0
          %2645 = vmatpush1.xpose.msra.mxu0 %v2642
          %2646 = vmatprep.subr.mxu0 0.0
          %2647 = vmatpush1.xpose.msra.mxu0 0.0
          %2648 = vmatprep.subr.mxu0 0.0
          %2649 = vmatpush1.xpose.msra.mxu0 0.0
          %2650 = vmatprep.subr.mxu0 0.0
          %2651 = vmatpush1.xpose.msra.mxu0 0.0
          %2652 = vmatprep.subr.mxu0 0.0
          %2653 = vmatpush1.xpose.msra.mxu0 0.0
          %2654 = vmatprep.subr.mxu0 0.0
          %2655 = vmatpush1.xpose.msra.mxu0 0.0
          %2656 = vmatprep.subr.mxu0 0.0
          %2657 = vmatpush1.xpose.msra.mxu0 0.0
          %2658 = vmatprep.subr.mxu0 0.0
          %2659 = vmatpush1.xpose.msra.mxu0 0.0
          %2660 = vmatprep.subr.mxu0 0.0
          %2661 = vmatpush1.xpose.msra.mxu0 0.0
          %2662 = vmatprep.subr.mxu0 0.0
          %2663 = vmatpush1.xpose.msra.mxu0 0.0
          %2664 = vmatprep.subr.mxu0 0.0
          %2665 = vmatpush1.xpose.msra.mxu0 0.0
          %2666 = vmatprep.subr.mxu0 0.0
          %2667 = vmatpush1.xpose.msra.mxu0 0.0
          %2668 = vmatprep.subr.mxu0 0.0
          %2669 = vmatpush1.xpose.msra.mxu0 0.0
          %2670 = vmatprep.subr.mxu0 0.0
          %2671 = vmatpush1.xpose.msra.mxu0 0.0
          %2672 = vmatprep.subr.mxu0 0.0
          %2673 = vmatpush1.xpose.msra.mxu0 0.0
          %2674 = vmatprep.subr.mxu0 0.0
          %2675 = vmatpush1.xpose.msra.mxu0 0.0
          %2676 = vmatprep.subr.mxu0 0.0
          %2677 = vmatpush1.xpose.msra.mxu0 0.0
          %2678 = vmatprep.subr.mxu0 0.0
          %2679 = vmatpush1.xpose.msra.mxu0 0.0
          %2680 = vmatprep.subr.mxu0 0.0
          %2681 = vmatpush1.xpose.msra.mxu0 0.0
          %2682 = vmatprep.subr.mxu0 0.0
          %2683 = vmatpush1.xpose.msra.mxu0 0.0
          %2684 = vmatprep.subr.mxu0 0.0
          %2685 = vmatpush1.xpose.msra.mxu0 0.0
          %2686 = vmatprep.subr.mxu0 0.0
          %2687 = vmatpush1.xpose.msra.mxu0 0.0
          %2688 = vmatprep.subr.mxu0 0.0
          %2689 = vmatpush1.xpose.msra.mxu0 0.0
          %2690 = vmatprep.subr.mxu0 0.0
          %2691 = vmatpush1.xpose.msra.mxu0 0.0
          %2692 = vmatprep.subr.mxu0 0.0
          %2693 = vmatpush1.xpose.msra.mxu0 0.0
          %2694 = vmatprep.subr.mxu0 0.0
          %2695 = vmatpush1.xpose.msra.mxu0 0.0
          %2696 = vmatprep.subr.mxu0 0.0
          %2697 = vmatpush1.xpose.msra.mxu0 0.0
          %2698 = vmatprep.subr.mxu0 0.0
          %2699 = vmatpush1.xpose.msra.mxu0 0.0
          %2700 = vmatprep.subr.mxu0 0.0
          %2701 = vmatpush1.xpose.msra.mxu0 0.0
          %2702 = vmatprep.subr.mxu0 0.0
          %2703 = vmatpush1.xpose.msra.mxu0 0.0
          %2704 = vmatprep.subr.mxu0 0.0
          %2705 = vmatpush1.xpose.msra.mxu0 0.0
          %2706 = vmatprep.subr.mxu0 0.0
          %2707 = vmatpush1.xpose.msra.mxu0 0.0
          %2708 = vmatprep.mubr.f32.mxu0 0.0
          %2709 = vmatmul.mubr.f32.gmra.mrb[0].mxu0 %v2639
          %v2710 = vpop.f32.mrb[0].mxu0
          %v2711 = vadd.f32 0.0, %v2710
          %v2712 = vpop.f32.mrb[0].mxu0
          %2713 = vdwg.mxu0
          %v2715 = vsel %vm533, %v2256, 0
          %v2718 = vsel %vm533, %v1960, 0
          %2720 = vmatprep.subr.mxu0 0.0
          %2721 = vmatpush1.xpose.msra.mxu0 %v2718
          %2722 = vmatprep.subr.mxu0 0.0
          %2723 = vmatpush1.xpose.msra.mxu0 0.0
          %2724 = vmatprep.subr.mxu0 0.0
          %2725 = vmatpush1.xpose.msra.mxu0 0.0
          %2726 = vmatprep.subr.mxu0 0.0
          %2727 = vmatpush1.xpose.msra.mxu0 0.0
          %2728 = vmatprep.subr.mxu0 0.0
          %2729 = vmatpush1.xpose.msra.mxu0 0.0
          %2730 = vmatprep.subr.mxu0 0.0
          %2731 = vmatpush1.xpose.msra.mxu0 0.0
          %2732 = vmatprep.subr.mxu0 0.0
          %2733 = vmatpush1.xpose.msra.mxu0 0.0
          %2734 = vmatprep.subr.mxu0 0.0
          %2735 = vmatpush1.xpose.msra.mxu0 0.0
          %2736 = vmatprep.subr.mxu0 0.0
          %2737 = vmatpush1.xpose.msra.mxu0 0.0
          %2738 = vmatprep.subr.mxu0 0.0
          %2739 = vmatpush1.xpose.msra.mxu0 0.0
          %2740 = vmatprep.subr.mxu0 0.0
          %2741 = vmatpush1.xpose.msra.mxu0 0.0
          %2742 = vmatprep.subr.mxu0 0.0
          %2743 = vmatpush1.xpose.msra.mxu0 0.0
          %2744 = vmatprep.subr.mxu0 0.0
          %2745 = vmatpush1.xpose.msra.mxu0 0.0
          %2746 = vmatprep.subr.mxu0 0.0
          %2747 = vmatpush1.xpose.msra.mxu0 0.0
          %2748 = vmatprep.subr.mxu0 0.0
          %2749 = vmatpush1.xpose.msra.mxu0 0.0
          %2750 = vmatprep.subr.mxu0 0.0
          %2751 = vmatpush1.xpose.msra.mxu0 0.0
          %2752 = vmatprep.subr.mxu0 0.0
          %2753 = vmatpush1.xpose.msra.mxu0 0.0
          %2754 = vmatprep.subr.mxu0 0.0
          %2755 = vmatpush1.xpose.msra.mxu0 0.0
          %2756 = vmatprep.subr.mxu0 0.0
          %2757 = vmatpush1.xpose.msra.mxu0 0.0
          %2758 = vmatprep.subr.mxu0 0.0
          %2759 = vmatpush1.xpose.msra.mxu0 0.0
          %2760 = vmatprep.subr.mxu0 0.0
          %2761 = vmatpush1.xpose.msra.mxu0 0.0
          %2762 = vmatprep.subr.mxu0 0.0
          %2763 = vmatpush1.xpose.msra.mxu0 0.0
          %2764 = vmatprep.subr.mxu0 0.0
          %2765 = vmatpush1.xpose.msra.mxu0 0.0
          %2766 = vmatprep.subr.mxu0 0.0
          %2767 = vmatpush1.xpose.msra.mxu0 0.0
          %2768 = vmatprep.subr.mxu0 0.0
          %2769 = vmatpush1.xpose.msra.mxu0 0.0
          %2770 = vmatprep.subr.mxu0 0.0
          %2771 = vmatpush1.xpose.msra.mxu0 0.0
          %2772 = vmatprep.subr.mxu0 0.0
          %2773 = vmatpush1.xpose.msra.mxu0 0.0
          %2774 = vmatprep.subr.mxu0 0.0
          %2775 = vmatpush1.xpose.msra.mxu0 0.0
          %2776 = vmatprep.subr.mxu0 0.0
          %2777 = vmatpush1.xpose.msra.mxu0 0.0
          %2778 = vmatprep.subr.mxu0 0.0
          %2779 = vmatpush1.xpose.msra.mxu0 0.0
          %2780 = vmatprep.subr.mxu0 0.0
          %2781 = vmatpush1.xpose.msra.mxu0 0.0
          %2782 = vmatprep.subr.mxu0 0.0
          %2783 = vmatpush1.xpose.msra.mxu0 0.0
          %2784 = vmatprep.mubr.f32.mxu0 0.0
          %2785 = vmatmul.mubr.f32.gmra.mrb[0].mxu0 %v2715
          %v2786 = vpop.f32.mrb[0].mxu0
          %v2787 = vadd.f32 0.0, %v2786
          %v2788 = vpop.f32.mrb[0].mxu0
          %2789 = vdwg.mxu0
          %v2791 = vsel %vm533, %v2257, 0
          %v2794 = vsel %vm533, %v1961, 0
          %2796 = vmatprep.subr.mxu0 0.0
          %2797 = vmatpush1.xpose.msra.mxu0 %v2794
          %2798 = vmatprep.subr.mxu0 0.0
          %2799 = vmatpush1.xpose.msra.mxu0 0.0
          %2800 = vmatprep.subr.mxu0 0.0
          %2801 = vmatpush1.xpose.msra.mxu0 0.0
          %2802 = vmatprep.subr.mxu0 0.0
          %2803 = vmatpush1.xpose.msra.mxu0 0.0
          %2804 = vmatprep.subr.mxu0 0.0
          %2805 = vmatpush1.xpose.msra.mxu0 0.0
          %2806 = vmatprep.subr.mxu0 0.0
          %2807 = vmatpush1.xpose.msra.mxu0 0.0
          %2808 = vmatprep.subr.mxu0 0.0
          %2809 = vmatpush1.xpose.msra.mxu0 0.0
          %2810 = vmatprep.subr.mxu0 0.0
          %2811 = vmatpush1.xpose.msra.mxu0 0.0
          %2812 = vmatprep.subr.mxu0 0.0
          %2813 = vmatpush1.xpose.msra.mxu0 0.0
          %2814 = vmatprep.subr.mxu0 0.0
          %2815 = vmatpush1.xpose.msra.mxu0 0.0
          %2816 = vmatprep.subr.mxu0 0.0
          %2817 = vmatpush1.xpose.msra.mxu0 0.0
          %2818 = vmatprep.subr.mxu0 0.0
          %2819 = vmatpush1.xpose.msra.mxu0 0.0
          %2820 = vmatprep.subr.mxu0 0.0
          %2821 = vmatpush1.xpose.msra.mxu0 0.0
          %2822 = vmatprep.subr.mxu0 0.0
          %2823 = vmatpush1.xpose.msra.mxu0 0.0
          %2824 = vmatprep.subr.mxu0 0.0
          %2825 = vmatpush1.xpose.msra.mxu0 0.0
          %2826 = vmatprep.subr.mxu0 0.0
          %2827 = vmatpush1.xpose.msra.mxu0 0.0
          %2828 = vmatprep.subr.mxu0 0.0
          %2829 = vmatpush1.xpose.msra.mxu0 0.0
          %2830 = vmatprep.subr.mxu0 0.0
          %2831 = vmatpush1.xpose.msra.mxu0 0.0
          %2832 = vmatprep.subr.mxu0 0.0
          %2833 = vmatpush1.xpose.msra.mxu0 0.0
          %2834 = vmatprep.subr.mxu0 0.0
          %2835 = vmatpush1.xpose.msra.mxu0 0.0
          %2836 = vmatprep.subr.mxu0 0.0
          %2837 = vmatpush1.xpose.msra.mxu0 0.0
          %2838 = vmatprep.subr.mxu0 0.0
          %2839 = vmatpush1.xpose.msra.mxu0 0.0
          %2840 = vmatprep.subr.mxu0 0.0
          %2841 = vmatpush1.xpose.msra.mxu0 0.0
          %2842 = vmatprep.subr.mxu0 0.0
          %2843 = vmatpush1.xpose.msra.mxu0 0.0
          %2844 = vmatprep.subr.mxu0 0.0
          %2845 = vmatpush1.xpose.msra.mxu0 0.0
          %2846 = vmatprep.subr.mxu0 0.0
          %2847 = vmatpush1.xpose.msra.mxu0 0.0
          %2848 = vmatprep.subr.mxu0 0.0
          %2849 = vmatpush1.xpose.msra.mxu0 0.0
          %2850 = vmatprep.subr.mxu0 0.0
          %2851 = vmatpush1.xpose.msra.mxu0 0.0
          %2852 = vmatprep.subr.mxu0 0.0
          %2853 = vmatpush1.xpose.msra.mxu0 0.0
          %2854 = vmatprep.subr.mxu0 0.0
          %2855 = vmatpush1.xpose.msra.mxu0 0.0
          %2856 = vmatprep.subr.mxu0 0.0
          %2857 = vmatpush1.xpose.msra.mxu0 0.0
          %2858 = vmatprep.subr.mxu0 0.0
          %2859 = vmatpush1.xpose.msra.mxu0 0.0
          %2860 = vmatprep.mubr.f32.mxu0 0.0
          %2861 = vmatmul.mubr.f32.gmra.mrb[0].mxu0 %v2791
          %v2862 = vpop.f32.mrb[0].mxu0
          %v2863 = vadd.f32 0.0, %v2862
          %v2864 = vpop.f32.mrb[0].mxu0
          %2865 = vdwg.mxu0
          %v2866 = vld [vmem:[#allocation3] sm:$0xff]
          %v2867 = vld [vmem:[#allocation3 + $0x8] sm:$0xff]
          %v2868 = vld [vmem:[#allocation3 + $0x10] sm:$0xff]
          %v2869 = vld [vmem:[#allocation3 + $0x18] sm:$0xff]
          %v2870 = vld [vmem:[#allocation3 + $0x20] sm:$0xff]
          %v2871 = vld [vmem:[#allocation3 + $0x28] sm:$0xff]
          %v2872 = vld [vmem:[#allocation3 + $0x30] sm:$0xff]
          %v2873 = vld [vmem:[#allocation3 + $0x38] sm:$0xff]
          %vm2874 = vcmask 64512
          %v2875 = vsel %vm2874, %v2331, -inf
          %2876 = vmax.xlane.f32.xlu0 %v2875
          %v2877 = vpop.xlane.xlu0 %2876
          %v2878 = vsel %vm2874, %v2407, -inf
          %2879 = vmax.xlane.f32.xlu0 %v2878
          %v2880 = vpop.xlane.xlu0 %2879
          %v2881 = vsel %vm2874, %v2483, -inf
          %2882 = vmax.xlane.f32.xlu0 %v2881
          %v2883 = vpop.xlane.xlu0 %2882
          %v2884 = vsel %vm2874, %v2559, -inf
          %2885 = vmax.xlane.f32.xlu0 %v2884
          %v2886 = vpop.xlane.xlu0 %2885
          %v2887 = vsel %vm2874, %v2635, -inf
          %2888 = vmax.xlane.f32.xlu0 %v2887
          %v2889 = vpop.xlane.xlu0 %2888
          %v2890 = vsel %vm2874, %v2711, -inf
          %2891 = vmax.xlane.f32.xlu0 %v2890
          %v2892 = vpop.xlane.xlu0 %2891
          %v2893 = vsel %vm2874, %v2787, -inf
          %2894 = vmax.xlane.f32.xlu0 %v2893
          %v2895 = vpop.xlane.xlu0 %2894
          %v2896 = vsel %vm2874, %v2863, -inf
          %2897 = vmax.xlane.f32.xlu0 %v2896
          %v2898 = vpop.xlane.xlu0 %2897
          %v2899 = vmax.f32 %v2866, %v2877
          %v2900 = vmax.f32 %v2867, %v2880
          %v2901 = vmax.f32 %v2868, %v2883
          %v2902 = vmax.f32 %v2869, %v2886
          %v2903 = vmax.f32 %v2870, %v2889
          %v2904 = vmax.f32 %v2871, %v2892
          %v2905 = vmax.f32 %v2872, %v2895
          %v2906 = vmax.f32 %v2873, %v2898
          %v2907 = vsub.f32 %v2866, %v2899
          %v2908 = vsub.f32 %v2867, %v2900
          %v2909 = vsub.f32 %v2868, %v2901
          %v2910 = vsub.f32 %v2869, %v2902
          %v2911 = vsub.f32 %v2870, %v2903
          %v2912 = vsub.f32 %v2871, %v2904
          %v2913 = vsub.f32 %v2872, %v2905
          %v2914 = vsub.f32 %v2873, %v2906
          %v2915 = vmul.f32 %v2907, 1.442695
          %v2916 = vpow.pop %v2915
          %v2917 = vmul.f32 %v2908, 1.442695
          %v2918 = vpow.pop %v2917
          %v2919 = vmul.f32 %v2909, 1.442695
          %v2920 = vpow.pop %v2919
          %v2921 = vmul.f32 %v2910, 1.442695
          %v2922 = vpow.pop %v2921
          %v2923 = vmul.f32 %v2911, 1.442695
          %v2924 = vpow.pop %v2923
          %v2925 = vmul.f32 %v2912, 1.442695
          %v2926 = vpow.pop %v2925
          %v2927 = vmul.f32 %v2913, 1.442695
          %v2928 = vpow.pop %v2927
          %v2929 = vmul.f32 %v2914, 1.442695
          %v2930 = vpow.pop %v2929
          %2932 = vset.pattern.permute.xlu0 0
          %2933 = vperm.xlu0 %2932, %v2899
          %v2934 = vpop.permute.xlu0 %2933
          %2937 = vset.pattern.permute.xlu0 0
          %2938 = vperm.xlu0 %2937, %v2900
          %v2939 = vpop.permute.xlu0 %2938
          %2942 = vset.pattern.permute.xlu0 0
          %2943 = vperm.xlu0 %2942, %v2901
          %v2944 = vpop.permute.xlu0 %2943
          %2947 = vset.pattern.permute.xlu0 0
          %2948 = vperm.xlu0 %2947, %v2902
          %v2949 = vpop.permute.xlu0 %2948
          %2952 = vset.pattern.permute.xlu0 0
          %2953 = vperm.xlu0 %2952, %v2903
          %v2954 = vpop.permute.xlu0 %2953
          %2957 = vset.pattern.permute.xlu0 0
          %2958 = vperm.xlu0 %2957, %v2904
          %v2959 = vpop.permute.xlu0 %2958
          %2962 = vset.pattern.permute.xlu0 0
          %2963 = vperm.xlu0 %2962, %v2905
          %v2964 = vpop.permute.xlu0 %2963
          %2967 = vset.pattern.permute.xlu0 0
          %2968 = vperm.xlu0 %2967, %v2906
          %v2969 = vpop.permute.xlu0 %2968
          %v2971 = vsub.f32 %v2331, %v2934
          %v2972 = vsub.f32 %v2407, %v2939
          %v2973 = vsub.f32 %v2483, %v2944
          %v2974 = vsub.f32 %v2559, %v2949
          %v2975 = vsub.f32 %v2635, %v2954
          %v2976 = vsub.f32 %v2711, %v2959
          %v2977 = vsub.f32 %v2787, %v2964
          %v2978 = vsub.f32 %v2863, %v2969
          %v2979 = vmul.f32 %v2971, 1.442695
          %v2980 = vpow.pop %v2979
          %v2981 = vmul.f32 %v2972, 1.442695
          %v2982 = vpow.pop %v2981
          %v2983 = vmul.f32 %v2973, 1.442695
          %v2984 = vpow.pop %v2983
          %v2985 = vmul.f32 %v2974, 1.442695
          %v2986 = vpow.pop %v2985
          %v2987 = vmul.f32 %v2975, 1.442695
          %v2988 = vpow.pop %v2987
          %v2989 = vmul.f32 %v2976, 1.442695
          %v2990 = vpow.pop %v2989
          %v2991 = vmul.f32 %v2977, 1.442695
          %v2992 = vpow.pop %v2991
          %v2993 = vmul.f32 %v2978, 1.442695
          %v2994 = vpow.pop %v2993
          %v2995 = vld [vmem:[#allocation4] sm:$0xff]
          %v2996 = vld [vmem:[#allocation4 + $0x8] sm:$0xff]
          %v2997 = vld [vmem:[#allocation4 + $0x10] sm:$0xff]
          %v2998 = vld [vmem:[#allocation4 + $0x18] sm:$0xff]
          %v2999 = vld [vmem:[#allocation4 + $0x20] sm:$0xff]
          %v3000 = vld [vmem:[#allocation4 + $0x28] sm:$0xff]
          %v3001 = vld [vmem:[#allocation4 + $0x30] sm:$0xff]
          %v3002 = vld [vmem:[#allocation4 + $0x38] sm:$0xff]
          %v3003 = vmul.f32 %v2916, %v2995
          %v3004 = vmul.f32 %v2918, %v2996
          %v3005 = vmul.f32 %v2920, %v2997
          %v3006 = vmul.f32 %v2922, %v2998
          %v3007 = vmul.f32 %v2924, %v2999
          %v3008 = vmul.f32 %v2926, %v3000
          %v3009 = vmul.f32 %v2928, %v3001
          %v3010 = vmul.f32 %v2930, %v3002
          %v3011 = vsel %vm2874, %v2980, 0.0
          %3012 = vadd.xlane.f32.xlu0 %v3011
          %v3013 = vpop.xlane.xlu0 %3012
          %v3014 = vsel %vm2874, %v2982, 0.0
          %3015 = vadd.xlane.f32.xlu0 %v3014
          %v3016 = vpop.xlane.xlu0 %3015
          %v3017 = vsel %vm2874, %v2984, 0.0
          %3018 = vadd.xlane.f32.xlu0 %v3017
          %v3019 = vpop.xlane.xlu0 %3018
          %v3020 = vsel %vm2874, %v2986, 0.0
          %3021 = vadd.xlane.f32.xlu0 %v3020
          %v3022 = vpop.xlane.xlu0 %3021
          %v3023 = vsel %vm2874, %v2988, 0.0
          %3024 = vadd.xlane.f32.xlu0 %v3023
          %v3025 = vpop.xlane.xlu0 %3024
          %v3026 = vsel %vm2874, %v2990, 0.0
          %3027 = vadd.xlane.f32.xlu0 %v3026
          %v3028 = vpop.xlane.xlu0 %3027
          %v3029 = vsel %vm2874, %v2992, 0.0
          %3030 = vadd.xlane.f32.xlu0 %v3029
          %v3031 = vpop.xlane.xlu0 %3030
          %v3032 = vsel %vm2874, %v2994, 0.0
          %3033 = vadd.xlane.f32.xlu0 %v3032
          %v3034 = vpop.xlane.xlu0 %3033
          %v3035 = vadd.f32 %v3003, %v3013
          %v3036 = vadd.f32 %v3004, %v3016
          %v3037 = vadd.f32 %v3005, %v3019
          %v3038 = vadd.f32 %v3006, %v3022
          %v3039 = vadd.f32 %v3007, %v3025
          %v3040 = vadd.f32 %v3008, %v3028
          %v3041 = vadd.f32 %v3009, %v3031
          %v3042 = vadd.f32 %v3010, %v3034
          %3043 = vst.msk [vmem:[#allocation4] sm:$0xff] %vm516, %v3035
          %3044 = vst.msk [vmem:[#allocation4 + $0x8] sm:$0xff] %vm516, %v3036
          %3045 = vst.msk [vmem:[#allocation4 + $0x10] sm:$0xff] %vm516, %v3037
          %3046 = vst.msk [vmem:[#allocation4 + $0x18] sm:$0xff] %vm516, %v3038
          %3047 = vst.msk [vmem:[#allocation4 + $0x20] sm:$0xff] %vm516, %v3039
          %3048 = vst.msk [vmem:[#allocation4 + $0x28] sm:$0xff] %vm516, %v3040
          %3049 = vst.msk [vmem:[#allocation4 + $0x30] sm:$0xff] %vm516, %v3041
          %3050 = vst.msk [vmem:[#allocation4 + $0x38] sm:$0xff] %vm516, %v3042
          %v3051 = vld [vmem:[#allocation5] sm:$0xff]
          %v3052 = vld [vmem:[#allocation5 + $0x8] sm:$0xff]
          %v3053 = vld [vmem:[#allocation5 + $0x10] sm:$0xff]
          %v3054 = vld [vmem:[#allocation5 + $0x18] sm:$0xff]
          %v3055 = vld [vmem:[#allocation5 + $0x20] sm:$0xff]
          %v3056 = vld [vmem:[#allocation5 + $0x28] sm:$0xff]
          %v3057 = vld [vmem:[#allocation5 + $0x30] sm:$0xff]
          %v3058 = vld [vmem:[#allocation5 + $0x38] sm:$0xff]
          %3060 = vset.pattern.permute.xlu0 0
          %3061 = vperm.xlu0 %3060, %v2916
          %v3062 = vpop.permute.xlu0 %3061
          %3065 = vset.pattern.permute.xlu0 0
          %3066 = vperm.xlu0 %3065, %v2918
          %v3067 = vpop.permute.xlu0 %3066
          %3070 = vset.pattern.permute.xlu0 0
          %3071 = vperm.xlu0 %3070, %v2920
          %v3072 = vpop.permute.xlu0 %3071
          %3075 = vset.pattern.permute.xlu0 0
          %3076 = vperm.xlu0 %3075, %v2922
          %v3077 = vpop.permute.xlu0 %3076
          %3080 = vset.pattern.permute.xlu0 0
          %3081 = vperm.xlu0 %3080, %v2924
          %v3082 = vpop.permute.xlu0 %3081
          %3085 = vset.pattern.permute.xlu0 0
          %3086 = vperm.xlu0 %3085, %v2926
          %v3087 = vpop.permute.xlu0 %3086
          %3090 = vset.pattern.permute.xlu0 0
          %3091 = vperm.xlu0 %3090, %v2928
          %v3092 = vpop.permute.xlu0 %3091
          %3095 = vset.pattern.permute.xlu0 0
          %3096 = vperm.xlu0 %3095, %v2930
          %v3097 = vpop.permute.xlu0 %3096
          %v3099 = vmul.f32 %v3062, %v3051
          %v3100 = vmul.f32 %v3067, %v3052
          %v3101 = vmul.f32 %v3072, %v3053
          %v3102 = vmul.f32 %v3077, %v3054
          %v3103 = vmul.f32 %v3082, %v3055
          %v3104 = vmul.f32 %v3087, %v3056
          %v3105 = vmul.f32 %v3092, %v3057
          %v3106 = vmul.f32 %v3097, %v3058
          %v3108 = vsel %vm2874, %v2980, 0
          %3110 = vmatprep.subr.mxu0 0.0
          %3111 = vmatpush1.msra.mxu0 %v2242
          %3112 = vmatprep.subr.mxu0 0.0
          %3113 = vmatpush1.msra.mxu0 0.0
          %3114 = vmatprep.subr.mxu0 0.0
          %3115 = vmatpush1.msra.mxu0 0.0
          %3116 = vmatprep.subr.mxu0 0.0
          %3117 = vmatpush1.msra.mxu0 0.0
          %3118 = vmatprep.subr.mxu0 0.0
          %3119 = vmatpush1.msra.mxu0 0.0
          %3120 = vmatprep.subr.mxu0 0.0
          %3121 = vmatpush1.msra.mxu0 0.0
          %3122 = vmatprep.subr.mxu0 0.0
          %3123 = vmatpush1.msra.mxu0 0.0
          %3124 = vmatprep.subr.mxu0 0.0
          %3125 = vmatpush1.msra.mxu0 0.0
          %3126 = vmatprep.subr.mxu0 0.0
          %3127 = vmatpush1.msra.mxu0 0.0
          %3128 = vmatprep.subr.mxu0 0.0
          %3129 = vmatpush1.msra.mxu0 0.0
          %3130 = vmatprep.subr.mxu0 0.0
          %3131 = vmatpush1.msra.mxu0 0.0
          %3132 = vmatprep.subr.mxu0 0.0
          %3133 = vmatpush1.msra.mxu0 0.0
          %3134 = vmatprep.subr.mxu0 0.0
          %3135 = vmatpush1.msra.mxu0 0.0
          %3136 = vmatprep.subr.mxu0 0.0
          %3137 = vmatpush1.msra.mxu0 0.0
          %3138 = vmatprep.subr.mxu0 0.0
          %3139 = vmatpush1.msra.mxu0 0.0
          %3140 = vmatprep.subr.mxu0 0.0
          %3141 = vmatpush1.msra.mxu0 0.0
          %3142 = vmatprep.subr.mxu0 0.0
          %3143 = vmatpush1.msra.mxu0 0.0
          %3144 = vmatprep.subr.mxu0 0.0
          %3145 = vmatpush1.msra.mxu0 0.0
          %3146 = vmatprep.subr.mxu0 0.0
          %3147 = vmatpush1.msra.mxu0 0.0
          %3148 = vmatprep.subr.mxu0 0.0
          %3149 = vmatpush1.msra.mxu0 0.0
          %3150 = vmatprep.subr.mxu0 0.0
          %3151 = vmatpush1.msra.mxu0 0.0
          %3152 = vmatprep.subr.mxu0 0.0
          %3153 = vmatpush1.msra.mxu0 0.0
          %3154 = vmatprep.subr.mxu0 0.0
          %3155 = vmatpush1.msra.mxu0 0.0
          %3156 = vmatprep.subr.mxu0 0.0
          %3157 = vmatpush1.msra.mxu0 0.0
          %3158 = vmatprep.subr.mxu0 0.0
          %3159 = vmatpush1.msra.mxu0 0.0
          %3160 = vmatprep.subr.mxu0 0.0
          %3161 = vmatpush1.msra.mxu0 0.0
          %3162 = vmatprep.subr.mxu0 0.0
          %3163 = vmatpush1.msra.mxu0 0.0
          %3164 = vmatprep.subr.mxu0 0.0
          %3165 = vmatpush1.msra.mxu0 0.0
          %3166 = vmatprep.subr.mxu0 0.0
          %3167 = vmatpush1.msra.mxu0 0.0
          %3168 = vmatprep.subr.mxu0 0.0
          %3169 = vmatpush1.msra.mxu0 0.0
          %3170 = vmatprep.subr.mxu0 0.0
          %3171 = vmatpush1.msra.mxu0 0.0
          %3172 = vmatprep.subr.mxu0 0.0
          %3173 = vmatpush1.msra.mxu0 0.0
          %3174 = vmatprep.mubr.f32.mxu0 0.0
          %3175 = vmatmul.mubr.f32.gmra.mrb[0].mxu0 %v3108
          %v3176 = vpop.f32.mrb[0].mxu0
          %v3177 = vadd.f32 0.0, %v3176
          %v3178 = vpop.f32.mrb[0].mxu0
          %3179 = vdwg.mxu0
          %v3181 = vsel %vm2874, %v2982, 0
          %3183 = vmatprep.subr.mxu0 0.0
          %3184 = vmatpush1.msra.mxu0 %v2243
          %3185 = vmatprep.subr.mxu0 0.0
          %3186 = vmatpush1.msra.mxu0 0.0
          %3187 = vmatprep.subr.mxu0 0.0
          %3188 = vmatpush1.msra.mxu0 0.0
          %3189 = vmatprep.subr.mxu0 0.0
          %3190 = vmatpush1.msra.mxu0 0.0
          %3191 = vmatprep.subr.mxu0 0.0
          %3192 = vmatpush1.msra.mxu0 0.0
          %3193 = vmatprep.subr.mxu0 0.0
          %3194 = vmatpush1.msra.mxu0 0.0
          %3195 = vmatprep.subr.mxu0 0.0
          %3196 = vmatpush1.msra.mxu0 0.0
          %3197 = vmatprep.subr.mxu0 0.0
          %3198 = vmatpush1.msra.mxu0 0.0
          %3199 = vmatprep.subr.mxu0 0.0
          %3200 = vmatpush1.msra.mxu0 0.0
          %3201 = vmatprep.subr.mxu0 0.0
          %3202 = vmatpush1.msra.mxu0 0.0
          %3203 = vmatprep.subr.mxu0 0.0
          %3204 = vmatpush1.msra.mxu0 0.0
          %3205 = vmatprep.subr.mxu0 0.0
          %3206 = vmatpush1.msra.mxu0 0.0
          %3207 = vmatprep.subr.mxu0 0.0
          %3208 = vmatpush1.msra.mxu0 0.0
          %3209 = vmatprep.subr.mxu0 0.0
          %3210 = vmatpush1.msra.mxu0 0.0
          %3211 = vmatprep.subr.mxu0 0.0
          %3212 = vmatpush1.msra.mxu0 0.0
          %3213 = vmatprep.subr.mxu0 0.0
          %3214 = vmatpush1.msra.mxu0 0.0
          %3215 = vmatprep.subr.mxu0 0.0
          %3216 = vmatpush1.msra.mxu0 0.0
          %3217 = vmatprep.subr.mxu0 0.0
          %3218 = vmatpush1.msra.mxu0 0.0
          %3219 = vmatprep.subr.mxu0 0.0
          %3220 = vmatpush1.msra.mxu0 0.0
          %3221 = vmatprep.subr.mxu0 0.0
          %3222 = vmatpush1.msra.mxu0 0.0
          %3223 = vmatprep.subr.mxu0 0.0
          %3224 = vmatpush1.msra.mxu0 0.0
          %3225 = vmatprep.subr.mxu0 0.0
          %3226 = vmatpush1.msra.mxu0 0.0
          %3227 = vmatprep.subr.mxu0 0.0
          %3228 = vmatpush1.msra.mxu0 0.0
          %3229 = vmatprep.subr.mxu0 0.0
          %3230 = vmatpush1.msra.mxu0 0.0
          %3231 = vmatprep.subr.mxu0 0.0
          %3232 = vmatpush1.msra.mxu0 0.0
          %3233 = vmatprep.subr.mxu0 0.0
          %3234 = vmatpush1.msra.mxu0 0.0
          %3235 = vmatprep.subr.mxu0 0.0
          %3236 = vmatpush1.msra.mxu0 0.0
          %3237 = vmatprep.subr.mxu0 0.0
          %3238 = vmatpush1.msra.mxu0 0.0
          %3239 = vmatprep.subr.mxu0 0.0
          %3240 = vmatpush1.msra.mxu0 0.0
          %3241 = vmatprep.subr.mxu0 0.0
          %3242 = vmatpush1.msra.mxu0 0.0
          %3243 = vmatprep.subr.mxu0 0.0
          %3244 = vmatpush1.msra.mxu0 0.0
          %3245 = vmatprep.subr.mxu0 0.0
          %3246 = vmatpush1.msra.mxu0 0.0
          %3247 = vmatprep.mubr.f32.mxu0 0.0
          %3248 = vmatmul.mubr.f32.gmra.mrb[0].mxu0 %v3181
          %v3249 = vpop.f32.mrb[0].mxu0
          %v3250 = vadd.f32 0.0, %v3249
          %v3251 = vpop.f32.mrb[0].mxu0
          %3252 = vdwg.mxu0
          %v3254 = vsel %vm2874, %v2984, 0
          %3256 = vmatprep.subr.mxu0 0.0
          %3257 = vmatpush1.msra.mxu0 %v2244
          %3258 = vmatprep.subr.mxu0 0.0
          %3259 = vmatpush1.msra.mxu0 0.0
          %3260 = vmatprep.subr.mxu0 0.0
          %3261 = vmatpush1.msra.mxu0 0.0
          %3262 = vmatprep.subr.mxu0 0.0
          %3263 = vmatpush1.msra.mxu0 0.0
          %3264 = vmatprep.subr.mxu0 0.0
          %3265 = vmatpush1.msra.mxu0 0.0
          %3266 = vmatprep.subr.mxu0 0.0
          %3267 = vmatpush1.msra.mxu0 0.0
          %3268 = vmatprep.subr.mxu0 0.0
          %3269 = vmatpush1.msra.mxu0 0.0
          %3270 = vmatprep.subr.mxu0 0.0
          %3271 = vmatpush1.msra.mxu0 0.0
          %3272 = vmatprep.subr.mxu0 0.0
          %3273 = vmatpush1.msra.mxu0 0.0
          %3274 = vmatprep.subr.mxu0 0.0
          %3275 = vmatpush1.msra.mxu0 0.0
          %3276 = vmatprep.subr.mxu0 0.0
          %3277 = vmatpush1.msra.mxu0 0.0
          %3278 = vmatprep.subr.mxu0 0.0
          %3279 = vmatpush1.msra.mxu0 0.0
          %3280 = vmatprep.subr.mxu0 0.0
          %3281 = vmatpush1.msra.mxu0 0.0
          %3282 = vmatprep.subr.mxu0 0.0
          %3283 = vmatpush1.msra.mxu0 0.0
          %3284 = vmatprep.subr.mxu0 0.0
          %3285 = vmatpush1.msra.mxu0 0.0
          %3286 = vmatprep.subr.mxu0 0.0
          %3287 = vmatpush1.msra.mxu0 0.0
          %3288 = vmatprep.subr.mxu0 0.0
          %3289 = vmatpush1.msra.mxu0 0.0
          %3290 = vmatprep.subr.mxu0 0.0
          %3291 = vmatpush1.msra.mxu0 0.0
          %3292 = vmatprep.subr.mxu0 0.0
          %3293 = vmatpush1.msra.mxu0 0.0
          %3294 = vmatprep.subr.mxu0 0.0
          %3295 = vmatpush1.msra.mxu0 0.0
          %3296 = vmatprep.subr.mxu0 0.0
          %3297 = vmatpush1.msra.mxu0 0.0
          %3298 = vmatprep.subr.mxu0 0.0
          %3299 = vmatpush1.msra.mxu0 0.0
          %3300 = vmatprep.subr.mxu0 0.0
          %3301 = vmatpush1.msra.mxu0 0.0
          %3302 = vmatprep.subr.mxu0 0.0
          %3303 = vmatpush1.msra.mxu0 0.0
          %3304 = vmatprep.subr.mxu0 0.0
          %3305 = vmatpush1.msra.mxu0 0.0
          %3306 = vmatprep.subr.mxu0 0.0
          %3307 = vmatpush1.msra.mxu0 0.0
          %3308 = vmatprep.subr.mxu0 0.0
          %3309 = vmatpush1.msra.mxu0 0.0
          %3310 = vmatprep.subr.mxu0 0.0
          %3311 = vmatpush1.msra.mxu0 0.0
          %3312 = vmatprep.subr.mxu0 0.0
          %3313 = vmatpush1.msra.mxu0 0.0
          %3314 = vmatprep.subr.mxu0 0.0
          %3315 = vmatpush1.msra.mxu0 0.0
          %3316 = vmatprep.subr.mxu0 0.0
          %3317 = vmatpush1.msra.mxu0 0.0
          %3318 = vmatprep.subr.mxu0 0.0
          %3319 = vmatpush1.msra.mxu0 0.0
          %3320 = vmatprep.mubr.f32.mxu0 0.0
          %3321 = vmatmul.mubr.f32.gmra.mrb[0].mxu0 %v3254
          %v3322 = vpop.f32.mrb[0].mxu0
          %v3323 = vadd.f32 0.0, %v3322
          %v3324 = vpop.f32.mrb[0].mxu0
          %3325 = vdwg.mxu0
          %v3327 = vsel %vm2874, %v2986, 0
          %3329 = vmatprep.subr.mxu0 0.0
          %3330 = vmatpush1.msra.mxu0 %v2245
          %3331 = vmatprep.subr.mxu0 0.0
          %3332 = vmatpush1.msra.mxu0 0.0
          %3333 = vmatprep.subr.mxu0 0.0
          %3334 = vmatpush1.msra.mxu0 0.0
          %3335 = vmatprep.subr.mxu0 0.0
          %3336 = vmatpush1.msra.mxu0 0.0
          %3337 = vmatprep.subr.mxu0 0.0
          %3338 = vmatpush1.msra.mxu0 0.0
          %3339 = vmatprep.subr.mxu0 0.0
          %3340 = vmatpush1.msra.mxu0 0.0
          %3341 = vmatprep.subr.mxu0 0.0
          %3342 = vmatpush1.msra.mxu0 0.0
          %3343 = vmatprep.subr.mxu0 0.0
          %3344 = vmatpush1.msra.mxu0 0.0
          %3345 = vmatprep.subr.mxu0 0.0
          %3346 = vmatpush1.msra.mxu0 0.0
          %3347 = vmatprep.subr.mxu0 0.0
          %3348 = vmatpush1.msra.mxu0 0.0
          %3349 = vmatprep.subr.mxu0 0.0
          %3350 = vmatpush1.msra.mxu0 0.0
          %3351 = vmatprep.subr.mxu0 0.0
          %3352 = vmatpush1.msra.mxu0 0.0
          %3353 = vmatprep.subr.mxu0 0.0
          %3354 = vmatpush1.msra.mxu0 0.0
          %3355 = vmatprep.subr.mxu0 0.0
          %3356 = vmatpush1.msra.mxu0 0.0
          %3357 = vmatprep.subr.mxu0 0.0
          %3358 = vmatpush1.msra.mxu0 0.0
          %3359 = vmatprep.subr.mxu0 0.0
          %3360 = vmatpush1.msra.mxu0 0.0
          %3361 = vmatprep.subr.mxu0 0.0
          %3362 = vmatpush1.msra.mxu0 0.0
          %3363 = vmatprep.subr.mxu0 0.0
          %3364 = vmatpush1.msra.mxu0 0.0
          %3365 = vmatprep.subr.mxu0 0.0
          %3366 = vmatpush1.msra.mxu0 0.0
          %3367 = vmatprep.subr.mxu0 0.0
          %3368 = vmatpush1.msra.mxu0 0.0
          %3369 = vmatprep.subr.mxu0 0.0
          %3370 = vmatpush1.msra.mxu0 0.0
          %3371 = vmatprep.subr.mxu0 0.0
          %3372 = vmatpush1.msra.mxu0 0.0
          %3373 = vmatprep.subr.mxu0 0.0
          %3374 = vmatpush1.msra.mxu0 0.0
          %3375 = vmatprep.subr.mxu0 0.0
          %3376 = vmatpush1.msra.mxu0 0.0
          %3377 = vmatprep.subr.mxu0 0.0
          %3378 = vmatpush1.msra.mxu0 0.0
          %3379 = vmatprep.subr.mxu0 0.0
          %3380 = vmatpush1.msra.mxu0 0.0
          %3381 = vmatprep.subr.mxu0 0.0
          %3382 = vmatpush1.msra.mxu0 0.0
          %3383 = vmatprep.subr.mxu0 0.0
          %3384 = vmatpush1.msra.mxu0 0.0
          %3385 = vmatprep.subr.mxu0 0.0
          %3386 = vmatpush1.msra.mxu0 0.0
          %3387 = vmatprep.subr.mxu0 0.0
          %3388 = vmatpush1.msra.mxu0 0.0
          %3389 = vmatprep.subr.mxu0 0.0
          %3390 = vmatpush1.msra.mxu0 0.0
          %3391 = vmatprep.subr.mxu0 0.0
          %3392 = vmatpush1.msra.mxu0 0.0
          %3393 = vmatprep.mubr.f32.mxu0 0.0
          %3394 = vmatmul.mubr.f32.gmra.mrb[0].mxu0 %v3327
          %v3395 = vpop.f32.mrb[0].mxu0
          %v3396 = vadd.f32 0.0, %v3395
          %v3397 = vpop.f32.mrb[0].mxu0
          %3398 = vdwg.mxu0
          %v3400 = vsel %vm2874, %v2988, 0
          %3402 = vmatprep.subr.mxu0 0.0
          %3403 = vmatpush1.msra.mxu0 %v2246
          %3404 = vmatprep.subr.mxu0 0.0
          %3405 = vmatpush1.msra.mxu0 0.0
          %3406 = vmatprep.subr.mxu0 0.0
          %3407 = vmatpush1.msra.mxu0 0.0
          %3408 = vmatprep.subr.mxu0 0.0
          %3409 = vmatpush1.msra.mxu0 0.0
          %3410 = vmatprep.subr.mxu0 0.0
          %3411 = vmatpush1.msra.mxu0 0.0
          %3412 = vmatprep.subr.mxu0 0.0
          %3413 = vmatpush1.msra.mxu0 0.0
          %3414 = vmatprep.subr.mxu0 0.0
          %3415 = vmatpush1.msra.mxu0 0.0
          %3416 = vmatprep.subr.mxu0 0.0
          %3417 = vmatpush1.msra.mxu0 0.0
          %3418 = vmatprep.subr.mxu0 0.0
          %3419 = vmatpush1.msra.mxu0 0.0
          %3420 = vmatprep.subr.mxu0 0.0
          %3421 = vmatpush1.msra.mxu0 0.0
          %3422 = vmatprep.subr.mxu0 0.0
          %3423 = vmatpush1.msra.mxu0 0.0
          %3424 = vmatprep.subr.mxu0 0.0
          %3425 = vmatpush1.msra.mxu0 0.0
          %3426 = vmatprep.subr.mxu0 0.0
          %3427 = vmatpush1.msra.mxu0 0.0
          %3428 = vmatprep.subr.mxu0 0.0
          %3429 = vmatpush1.msra.mxu0 0.0
          %3430 = vmatprep.subr.mxu0 0.0
          %3431 = vmatpush1.msra.mxu0 0.0
          %3432 = vmatprep.subr.mxu0 0.0
          %3433 = vmatpush1.msra.mxu0 0.0
          %3434 = vmatprep.subr.mxu0 0.0
          %3435 = vmatpush1.msra.mxu0 0.0
          %3436 = vmatprep.subr.mxu0 0.0
          %3437 = vmatpush1.msra.mxu0 0.0
          %3438 = vmatprep.subr.mxu0 0.0
          %3439 = vmatpush1.msra.mxu0 0.0
          %3440 = vmatprep.subr.mxu0 0.0
          %3441 = vmatpush1.msra.mxu0 0.0
          %3442 = vmatprep.subr.mxu0 0.0
          %3443 = vmatpush1.msra.mxu0 0.0
          %3444 = vmatprep.subr.mxu0 0.0
          %3445 = vmatpush1.msra.mxu0 0.0
          %3446 = vmatprep.subr.mxu0 0.0
          %3447 = vmatpush1.msra.mxu0 0.0
          %3448 = vmatprep.subr.mxu0 0.0
          %3449 = vmatpush1.msra.mxu0 0.0
          %3450 = vmatprep.subr.mxu0 0.0
          %3451 = vmatpush1.msra.mxu0 0.0
          %3452 = vmatprep.subr.mxu0 0.0
          %3453 = vmatpush1.msra.mxu0 0.0
          %3454 = vmatprep.subr.mxu0 0.0
          %3455 = vmatpush1.msra.mxu0 0.0
          %3456 = vmatprep.subr.mxu0 0.0
          %3457 = vmatpush1.msra.mxu0 0.0
          %3458 = vmatprep.subr.mxu0 0.0
          %3459 = vmatpush1.msra.mxu0 0.0
          %3460 = vmatprep.subr.mxu0 0.0
          %3461 = vmatpush1.msra.mxu0 0.0
          %3462 = vmatprep.subr.mxu0 0.0
          %3463 = vmatpush1.msra.mxu0 0.0
          %3464 = vmatprep.subr.mxu0 0.0
          %3465 = vmatpush1.msra.mxu0 0.0
          %3466 = vmatprep.mubr.f32.mxu0 0.0
          %3467 = vmatmul.mubr.f32.gmra.mrb[0].mxu0 %v3400
          %v3468 = vpop.f32.mrb[0].mxu0
          %v3469 = vadd.f32 0.0, %v3468
          %v3470 = vpop.f32.mrb[0].mxu0
          %3471 = vdwg.mxu0
          %v3473 = vsel %vm2874, %v2990, 0
          %3475 = vmatprep.subr.mxu0 0.0
          %3476 = vmatpush1.msra.mxu0 %v2247
          %3477 = vmatprep.subr.mxu0 0.0
          %3478 = vmatpush1.msra.mxu0 0.0
          %3479 = vmatprep.subr.mxu0 0.0
          %3480 = vmatpush1.msra.mxu0 0.0
          %3481 = vmatprep.subr.mxu0 0.0
          %3482 = vmatpush1.msra.mxu0 0.0
          %3483 = vmatprep.subr.mxu0 0.0
          %3484 = vmatpush1.msra.mxu0 0.0
          %3485 = vmatprep.subr.mxu0 0.0
          %3486 = vmatpush1.msra.mxu0 0.0
          %3487 = vmatprep.subr.mxu0 0.0
          %3488 = vmatpush1.msra.mxu0 0.0
          %3489 = vmatprep.subr.mxu0 0.0
          %3490 = vmatpush1.msra.mxu0 0.0
          %3491 = vmatprep.subr.mxu0 0.0
          %3492 = vmatpush1.msra.mxu0 0.0
          %3493 = vmatprep.subr.mxu0 0.0
          %3494 = vmatpush1.msra.mxu0 0.0
          %3495 = vmatprep.subr.mxu0 0.0
          %3496 = vmatpush1.msra.mxu0 0.0
          %3497 = vmatprep.subr.mxu0 0.0
          %3498 = vmatpush1.msra.mxu0 0.0
          %3499 = vmatprep.subr.mxu0 0.0
          %3500 = vmatpush1.msra.mxu0 0.0
          %3501 = vmatprep.subr.mxu0 0.0
          %3502 = vmatpush1.msra.mxu0 0.0
          %3503 = vmatprep.subr.mxu0 0.0
          %3504 = vmatpush1.msra.mxu0 0.0
          %3505 = vmatprep.subr.mxu0 0.0
          %3506 = vmatpush1.msra.mxu0 0.0
          %3507 = vmatprep.subr.mxu0 0.0
          %3508 = vmatpush1.msra.mxu0 0.0
          %3509 = vmatprep.subr.mxu0 0.0
          %3510 = vmatpush1.msra.mxu0 0.0
          %3511 = vmatprep.subr.mxu0 0.0
          %3512 = vmatpush1.msra.mxu0 0.0
          %3513 = vmatprep.subr.mxu0 0.0
          %3514 = vmatpush1.msra.mxu0 0.0
          %3515 = vmatprep.subr.mxu0 0.0
          %3516 = vmatpush1.msra.mxu0 0.0
          %3517 = vmatprep.subr.mxu0 0.0
          %3518 = vmatpush1.msra.mxu0 0.0
          %3519 = vmatprep.subr.mxu0 0.0
          %3520 = vmatpush1.msra.mxu0 0.0
          %3521 = vmatprep.subr.mxu0 0.0
          %3522 = vmatpush1.msra.mxu0 0.0
          %3523 = vmatprep.subr.mxu0 0.0
          %3524 = vmatpush1.msra.mxu0 0.0
          %3525 = vmatprep.subr.mxu0 0.0
          %3526 = vmatpush1.msra.mxu0 0.0
          %3527 = vmatprep.subr.mxu0 0.0
          %3528 = vmatpush1.msra.mxu0 0.0
          %3529 = vmatprep.subr.mxu0 0.0
          %3530 = vmatpush1.msra.mxu0 0.0
          %3531 = vmatprep.subr.mxu0 0.0
          %3532 = vmatpush1.msra.mxu0 0.0
          %3533 = vmatprep.subr.mxu0 0.0
          %3534 = vmatpush1.msra.mxu0 0.0
          %3535 = vmatprep.subr.mxu0 0.0
          %3536 = vmatpush1.msra.mxu0 0.0
          %3537 = vmatprep.subr.mxu0 0.0
          %3538 = vmatpush1.msra.mxu0 0.0
          %3539 = vmatprep.mubr.f32.mxu0 0.0
          %3540 = vmatmul.mubr.f32.gmra.mrb[0].mxu0 %v3473
          %v3541 = vpop.f32.mrb[0].mxu0
          %v3542 = vadd.f32 0.0, %v3541
          %v3543 = vpop.f32.mrb[0].mxu0
          %3544 = vdwg.mxu0
          %v3546 = vsel %vm2874, %v2992, 0
          %3548 = vmatprep.subr.mxu0 0.0
          %3549 = vmatpush1.msra.mxu0 %v2248
          %3550 = vmatprep.subr.mxu0 0.0
          %3551 = vmatpush1.msra.mxu0 0.0
          %3552 = vmatprep.subr.mxu0 0.0
          %3553 = vmatpush1.msra.mxu0 0.0
          %3554 = vmatprep.subr.mxu0 0.0
          %3555 = vmatpush1.msra.mxu0 0.0
          %3556 = vmatprep.subr.mxu0 0.0
          %3557 = vmatpush1.msra.mxu0 0.0
          %3558 = vmatprep.subr.mxu0 0.0
          %3559 = vmatpush1.msra.mxu0 0.0
          %3560 = vmatprep.subr.mxu0 0.0
          %3561 = vmatpush1.msra.mxu0 0.0
          %3562 = vmatprep.subr.mxu0 0.0
          %3563 = vmatpush1.msra.mxu0 0.0
          %3564 = vmatprep.subr.mxu0 0.0
          %3565 = vmatpush1.msra.mxu0 0.0
          %3566 = vmatprep.subr.mxu0 0.0
          %3567 = vmatpush1.msra.mxu0 0.0
          %3568 = vmatprep.subr.mxu0 0.0
          %3569 = vmatpush1.msra.mxu0 0.0
          %3570 = vmatprep.subr.mxu0 0.0
          %3571 = vmatpush1.msra.mxu0 0.0
          %3572 = vmatprep.subr.mxu0 0.0
          %3573 = vmatpush1.msra.mxu0 0.0
          %3574 = vmatprep.subr.mxu0 0.0
          %3575 = vmatpush1.msra.mxu0 0.0
          %3576 = vmatprep.subr.mxu0 0.0
          %3577 = vmatpush1.msra.mxu0 0.0
          %3578 = vmatprep.subr.mxu0 0.0
          %3579 = vmatpush1.msra.mxu0 0.0
          %3580 = vmatprep.subr.mxu0 0.0
          %3581 = vmatpush1.msra.mxu0 0.0
          %3582 = vmatprep.subr.mxu0 0.0
          %3583 = vmatpush1.msra.mxu0 0.0
          %3584 = vmatprep.subr.mxu0 0.0
          %3585 = vmatpush1.msra.mxu0 0.0
          %3586 = vmatprep.subr.mxu0 0.0
          %3587 = vmatpush1.msra.mxu0 0.0
          %3588 = vmatprep.subr.mxu0 0.0
          %3589 = vmatpush1.msra.mxu0 0.0
          %3590 = vmatprep.subr.mxu0 0.0
          %3591 = vmatpush1.msra.mxu0 0.0
          %3592 = vmatprep.subr.mxu0 0.0
          %3593 = vmatpush1.msra.mxu0 0.0
          %3594 = vmatprep.subr.mxu0 0.0
          %3595 = vmatpush1.msra.mxu0 0.0
          %3596 = vmatprep.subr.mxu0 0.0
          %3597 = vmatpush1.msra.mxu0 0.0
          %3598 = vmatprep.subr.mxu0 0.0
          %3599 = vmatpush1.msra.mxu0 0.0
          %3600 = vmatprep.subr.mxu0 0.0
          %3601 = vmatpush1.msra.mxu0 0.0
          %3602 = vmatprep.subr.mxu0 0.0
          %3603 = vmatpush1.msra.mxu0 0.0
          %3604 = vmatprep.subr.mxu0 0.0
          %3605 = vmatpush1.msra.mxu0 0.0
          %3606 = vmatprep.subr.mxu0 0.0
          %3607 = vmatpush1.msra.mxu0 0.0
          %3608 = vmatprep.subr.mxu0 0.0
          %3609 = vmatpush1.msra.mxu0 0.0
          %3610 = vmatprep.subr.mxu0 0.0
          %3611 = vmatpush1.msra.mxu0 0.0
          %3612 = vmatprep.mubr.f32.mxu0 0.0
          %3613 = vmatmul.mubr.f32.gmra.mrb[0].mxu0 %v3546
          %v3614 = vpop.f32.mrb[0].mxu0
          %v3615 = vadd.f32 0.0, %v3614
          %v3616 = vpop.f32.mrb[0].mxu0
          %3617 = vdwg.mxu0
          %v3619 = vsel %vm2874, %v2994, 0
          %3621 = vmatprep.subr.mxu0 0.0
          %3622 = vmatpush1.msra.mxu0 %v2249
          %3623 = vmatprep.subr.mxu0 0.0
          %3624 = vmatpush1.msra.mxu0 0.0
          %3625 = vmatprep.subr.mxu0 0.0
          %3626 = vmatpush1.msra.mxu0 0.0
          %3627 = vmatprep.subr.mxu0 0.0
          %3628 = vmatpush1.msra.mxu0 0.0
          %3629 = vmatprep.subr.mxu0 0.0
          %3630 = vmatpush1.msra.mxu0 0.0
          %3631 = vmatprep.subr.mxu0 0.0
          %3632 = vmatpush1.msra.mxu0 0.0
          %3633 = vmatprep.subr.mxu0 0.0
          %3634 = vmatpush1.msra.mxu0 0.0
          %3635 = vmatprep.subr.mxu0 0.0
          %3636 = vmatpush1.msra.mxu0 0.0
          %3637 = vmatprep.subr.mxu0 0.0
          %3638 = vmatpush1.msra.mxu0 0.0
          %3639 = vmatprep.subr.mxu0 0.0
          %3640 = vmatpush1.msra.mxu0 0.0
          %3641 = vmatprep.subr.mxu0 0.0
          %3642 = vmatpush1.msra.mxu0 0.0
          %3643 = vmatprep.subr.mxu0 0.0
          %3644 = vmatpush1.msra.mxu0 0.0
          %3645 = vmatprep.subr.mxu0 0.0
          %3646 = vmatpush1.msra.mxu0 0.0
          %3647 = vmatprep.subr.mxu0 0.0
          %3648 = vmatpush1.msra.mxu0 0.0
          %3649 = vmatprep.subr.mxu0 0.0
          %3650 = vmatpush1.msra.mxu0 0.0
          %3651 = vmatprep.subr.mxu0 0.0
          %3652 = vmatpush1.msra.mxu0 0.0
          %3653 = vmatprep.subr.mxu0 0.0
          %3654 = vmatpush1.msra.mxu0 0.0
          %3655 = vmatprep.subr.mxu0 0.0
          %3656 = vmatpush1.msra.mxu0 0.0
          %3657 = vmatprep.subr.mxu0 0.0
          %3658 = vmatpush1.msra.mxu0 0.0
          %3659 = vmatprep.subr.mxu0 0.0
          %3660 = vmatpush1.msra.mxu0 0.0
          %3661 = vmatprep.subr.mxu0 0.0
          %3662 = vmatpush1.msra.mxu0 0.0
          %3663 = vmatprep.subr.mxu0 0.0
          %3664 = vmatpush1.msra.mxu0 0.0
          %3665 = vmatprep.subr.mxu0 0.0
          %3666 = vmatpush1.msra.mxu0 0.0
          %3667 = vmatprep.subr.mxu0 0.0
          %3668 = vmatpush1.msra.mxu0 0.0
          %3669 = vmatprep.subr.mxu0 0.0
          %3670 = vmatpush1.msra.mxu0 0.0
          %3671 = vmatprep.subr.mxu0 0.0
          %3672 = vmatpush1.msra.mxu0 0.0
          %3673 = vmatprep.subr.mxu0 0.0
          %3674 = vmatpush1.msra.mxu0 0.0
          %3675 = vmatprep.subr.mxu0 0.0
          %3676 = vmatpush1.msra.mxu0 0.0
          %3677 = vmatprep.subr.mxu0 0.0
          %3678 = vmatpush1.msra.mxu0 0.0
          %3679 = vmatprep.subr.mxu0 0.0
          %3680 = vmatpush1.msra.mxu0 0.0
          %3681 = vmatprep.subr.mxu0 0.0
          %3682 = vmatpush1.msra.mxu0 0.0
          %3683 = vmatprep.subr.mxu0 0.0
          %3684 = vmatpush1.msra.mxu0 0.0
          %3685 = vmatprep.mubr.f32.mxu0 0.0
          %3686 = vmatmul.mubr.f32.gmra.mrb[0].mxu0 %v3619
          %v3687 = vpop.f32.mrb[0].mxu0
          %v3688 = vadd.f32 0.0, %v3687
          %v3689 = vpop.f32.mrb[0].mxu0
          %3690 = vdwg.mxu0
          %v3691 = vadd.f32 %v3099, %v3177
          %v3692 = vadd.f32 %v3100, %v3250
          %v3693 = vadd.f32 %v3101, %v3323
          %v3694 = vadd.f32 %v3102, %v3396
          %v3695 = vadd.f32 %v3103, %v3469
          %v3696 = vadd.f32 %v3104, %v3542
          %v3697 = vadd.f32 %v3105, %v3615
          %v3698 = vadd.f32 %v3106, %v3688
          %3699 = vst.msk [vmem:[#allocation5] sm:$0xff] %vm533, %v3691
          %3700 = vst.msk [vmem:[#allocation5 + $0x8] sm:$0xff] %vm533, %v3692
          %3701 = vst.msk [vmem:[#allocation5 + $0x10] sm:$0xff] %vm533, %v3693
          %3702 = vst.msk [vmem:[#allocation5 + $0x18] sm:$0xff] %vm533, %v3694
          %3703 = vst.msk [vmem:[#allocation5 + $0x20] sm:$0xff] %vm533, %v3695
          %3704 = vst.msk [vmem:[#allocation5 + $0x28] sm:$0xff] %vm533, %v3696
          %3705 = vst.msk [vmem:[#allocation5 + $0x30] sm:$0xff] %vm533, %v3697
          %3706 = vst.msk [vmem:[#allocation5 + $0x38] sm:$0xff] %vm533, %v3698
          %3707 = vst.msk [vmem:[#allocation3] sm:$0xff] %vm516, %v2899
          %3708 = vst.msk [vmem:[#allocation3 + $0x8] sm:$0xff] %vm516, %v2900
          %3709 = vst.msk [vmem:[#allocation3 + $0x10] sm:$0xff] %vm516, %v2901
          %3710 = vst.msk [vmem:[#allocation3 + $0x18] sm:$0xff] %vm516, %v2902
          %3711 = vst.msk [vmem:[#allocation3 + $0x20] sm:$0xff] %vm516, %v2903
          %3712 = vst.msk [vmem:[#allocation3 + $0x28] sm:$0xff] %vm516, %v2904
          %3713 = vst.msk [vmem:[#allocation3 + $0x30] sm:$0xff] %vm516, %v2905
          %3714 = vst.msk [vmem:[#allocation3 + $0x38] sm:$0xff] %vm516, %v2906
        $region92: #{tpu_custom_call.1} parent=63 // pred_fallthru
          _
        %v3715 = vld [vmem:[%s442] sm:$0xff]
        %3716 = vadd.xlane.f32.xlu0 %v3715
        %v3717 = vpop.xlane.xlu0 %3716
        %v3718 = vrcp.pop 128.0
        %v3719 = vmul.f32 %v3717, %v3718
        %v3720 = vsub.f32 %v3715, %v3719
        %v3721 = vmul.f32 %v3720, %v3720
        %3722 = vadd.xlane.f32.xlu0 %v3721
        %v3723 = vpop.xlane.xlu0 %3722
        %v3724 = vmul.f32 %v3723, %v3718
        %v3725 = vadd.f32 %v3724, 1e-05
        %v3726 = vrsqrt.pop %v3725
        %v3727 = vmul.f32 %v3720, %v3726
        %v3728 = vld [vmem:[#allocation11] sm:$0xff]
        %v3729 = vld [vmem:[#allocation11 + $0x8] sm:$0xff]
        %v3730 = vld [vmem:[#allocation11 + $0x10] sm:$0xff]
        %v3731 = vld [vmem:[#allocation11 + $0x18] sm:$0xff]
        %v3732 = vld [vmem:[#allocation11 + $0x20] sm:$0xff]
        %v3733 = vld [vmem:[#allocation11 + $0x28] sm:$0xff]
        %v3734 = vld [vmem:[#allocation11 + $0x30] sm:$0xff]
        %v3735 = vld [vmem:[#allocation11 + $0x38] sm:$0xff]
        %v3736 = vld [vmem:[#allocation11 + $0x40] sm:$0xff]
        %v3737 = vld [vmem:[#allocation11 + $0x48] sm:$0xff]
        %v3738 = vld [vmem:[#allocation11 + $0x50] sm:$0xff]
        %v3739 = vld [vmem:[#allocation11 + $0x58] sm:$0xff]
        %v3740 = vld [vmem:[#allocation11 + $0x60] sm:$0xff]
        %v3741 = vld [vmem:[#allocation11 + $0x68] sm:$0xff]
        %v3742 = vld [vmem:[#allocation11 + $0x70] sm:$0xff]
        %v3743 = vld [vmem:[#allocation11 + $0x78] sm:$0xff]
        %v3744 = vld [vmem:[#allocation11 + $0x80] sm:$0xff]
        %v3745 = vld [vmem:[#allocation11 + $0x88] sm:$0xff]
        %v3746 = vld [vmem:[#allocation11 + $0x90] sm:$0xff]
        %v3747 = vld [vmem:[#allocation11 + $0x98] sm:$0xff]
        %v3748 = vld [vmem:[#allocation11 + $0xa0] sm:$0xff]
        %v3749 = vld [vmem:[#allocation11 + $0xa8] sm:$0xff]
        %v3750 = vld [vmem:[#allocation11 + $0xb0] sm:$0xff]
        %v3751 = vld [vmem:[#allocation11 + $0xb8] sm:$0xff]
        %v3752 = vld [vmem:[#allocation11 + $0xc0] sm:$0xff]
        %v3753 = vld [vmem:[#allocation11 + $0xc8] sm:$0xff]
        %v3754 = vld [vmem:[#allocation11 + $0xd0] sm:$0xff]
        %v3755 = vld [vmem:[#allocation11 + $0xd8] sm:$0xff]
        %v3756 = vld [vmem:[#allocation11 + $0xe0] sm:$0xff]
        %v3757 = vld [vmem:[#allocation11 + $0xe8] sm:$0xff]
        %v3758 = vld [vmem:[#allocation11 + $0xf0] sm:$0xff]
        %v3759 = vld [vmem:[#allocation11 + $0xf8] sm:$0xff]
        %v3760 = vld [vmem:[#allocation11 + $0x100] sm:$0xff]
        %v3761 = vld [vmem:[#allocation11 + $0x108] sm:$0xff]
        %v3762 = vld [vmem:[#allocation11 + $0x110] sm:$0xff]
        %v3763 = vld [vmem:[#allocation11 + $0x118] sm:$0xff]
        %v3764 = vld [vmem:[#allocation11 + $0x120] sm:$0xff]
        %v3765 = vld [vmem:[#allocation11 + $0x128] sm:$0xff]
        %v3766 = vld [vmem:[#allocation11 + $0x130] sm:$0xff]
        %v3767 = vld [vmem:[#allocation11 + $0x138] sm:$0xff]
        %v3768 = vld [vmem:[#allocation11 + $0x140] sm:$0xff]
        %v3769 = vld [vmem:[#allocation11 + $0x148] sm:$0xff]
        %v3770 = vld [vmem:[#allocation11 + $0x150] sm:$0xff]
        %v3771 = vld [vmem:[#allocation11 + $0x158] sm:$0xff]
        %v3772 = vld [vmem:[#allocation11 + $0x160] sm:$0xff]
        %v3773 = vld [vmem:[#allocation11 + $0x168] sm:$0xff]
        %v3774 = vld [vmem:[#allocation11 + $0x170] sm:$0xff]
        %v3775 = vld [vmem:[#allocation11 + $0x178] sm:$0xff]
        %v3776 = vld [vmem:[#allocation11 + $0x180] sm:$0xff]
        %v3777 = vld [vmem:[#allocation11 + $0x188] sm:$0xff]
        %v3778 = vld [vmem:[#allocation11 + $0x190] sm:$0xff]
        %v3779 = vld [vmem:[#allocation11 + $0x198] sm:$0xff]
        %v3780 = vld [vmem:[#allocation11 + $0x1a0] sm:$0xff]
        %v3781 = vld [vmem:[#allocation11 + $0x1a8] sm:$0xff]
        %v3782 = vld [vmem:[#allocation11 + $0x1b0] sm:$0xff]
        %v3783 = vld [vmem:[#allocation11 + $0x1b8] sm:$0xff]
        %v3784 = vld [vmem:[#allocation11 + $0x1c0] sm:$0xff]
        %v3785 = vld [vmem:[#allocation11 + $0x1c8] sm:$0xff]
        %v3786 = vld [vmem:[#allocation11 + $0x1d0] sm:$0xff]
        %v3787 = vld [vmem:[#allocation11 + $0x1d8] sm:$0xff]
        %v3788 = vld [vmem:[#allocation11 + $0x1e0] sm:$0xff]
        %v3789 = vld [vmem:[#allocation11 + $0x1e8] sm:$0xff]
        %v3790 = vld [vmem:[#allocation11 + $0x1f0] sm:$0xff]
        %v3791 = vld [vmem:[#allocation11 + $0x1f8] sm:$0xff]
        %v3792 = vld [vmem:[#allocation11 + $0x200] sm:$0xff]
        %v3793 = vld [vmem:[#allocation11 + $0x208] sm:$0xff]
        %v3794 = vld [vmem:[#allocation11 + $0x210] sm:$0xff]
        %v3795 = vld [vmem:[#allocation11 + $0x218] sm:$0xff]
        %v3796 = vld [vmem:[#allocation11 + $0x220] sm:$0xff]
        %v3797 = vld [vmem:[#allocation11 + $0x228] sm:$0xff]
        %v3798 = vld [vmem:[#allocation11 + $0x230] sm:$0xff]
        %v3799 = vld [vmem:[#allocation11 + $0x238] sm:$0xff]
        %v3800 = vld [vmem:[#allocation11 + $0x240] sm:$0xff]
        %v3801 = vld [vmem:[#allocation11 + $0x248] sm:$0xff]
        %v3802 = vld [vmem:[#allocation11 + $0x250] sm:$0xff]
        %v3803 = vld [vmem:[#allocation11 + $0x258] sm:$0xff]
        %v3804 = vld [vmem:[#allocation11 + $0x260] sm:$0xff]
        %v3805 = vld [vmem:[#allocation11 + $0x268] sm:$0xff]
        %v3806 = vld [vmem:[#allocation11 + $0x270] sm:$0xff]
        %v3807 = vld [vmem:[#allocation11 + $0x278] sm:$0xff]
        %v3808 = vld [vmem:[#allocation11 + $0x280] sm:$0xff]
        %v3809 = vld [vmem:[#allocation11 + $0x288] sm:$0xff]
        %v3810 = vld [vmem:[#allocation11 + $0x290] sm:$0xff]
        %v3811 = vld [vmem:[#allocation11 + $0x298] sm:$0xff]
        %v3812 = vld [vmem:[#allocation11 + $0x2a0] sm:$0xff]
        %v3813 = vld [vmem:[#allocation11 + $0x2a8] sm:$0xff]
        %v3814 = vld [vmem:[#allocation11 + $0x2b0] sm:$0xff]
        %v3815 = vld [vmem:[#allocation11 + $0x2b8] sm:$0xff]
        %v3816 = vld [vmem:[#allocation11 + $0x2c0] sm:$0xff]
        %v3817 = vld [vmem:[#allocation11 + $0x2c8] sm:$0xff]
        %v3818 = vld [vmem:[#allocation11 + $0x2d0] sm:$0xff]
        %v3819 = vld [vmem:[#allocation11 + $0x2d8] sm:$0xff]
        %v3820 = vld [vmem:[#allocation11 + $0x2e0] sm:$0xff]
        %v3821 = vld [vmem:[#allocation11 + $0x2e8] sm:$0xff]
        %v3822 = vld [vmem:[#allocation11 + $0x2f0] sm:$0xff]
        %v3823 = vld [vmem:[#allocation11 + $0x2f8] sm:$0xff]
        %v3824 = vld [vmem:[#allocation11 + $0x300] sm:$0xff]
        %v3825 = vld [vmem:[#allocation11 + $0x308] sm:$0xff]
        %v3826 = vld [vmem:[#allocation11 + $0x310] sm:$0xff]
        %v3827 = vld [vmem:[#allocation11 + $0x318] sm:$0xff]
        %v3828 = vld [vmem:[#allocation11 + $0x320] sm:$0xff]
        %v3829 = vld [vmem:[#allocation11 + $0x328] sm:$0xff]
        %v3830 = vld [vmem:[#allocation11 + $0x330] sm:$0xff]
        %v3831 = vld [vmem:[#allocation11 + $0x338] sm:$0xff]
        %v3832 = vld [vmem:[#allocation11 + $0x340] sm:$0xff]
        %v3833 = vld [vmem:[#allocation11 + $0x348] sm:$0xff]
        %v3834 = vld [vmem:[#allocation11 + $0x350] sm:$0xff]
        %v3835 = vld [vmem:[#allocation11 + $0x358] sm:$0xff]
        %v3836 = vld [vmem:[#allocation11 + $0x360] sm:$0xff]
        %v3837 = vld [vmem:[#allocation11 + $0x368] sm:$0xff]
        %v3838 = vld [vmem:[#allocation11 + $0x370] sm:$0xff]
        %v3839 = vld [vmem:[#allocation11 + $0x378] sm:$0xff]
        %v3840 = vld [vmem:[#allocation11 + $0x380] sm:$0xff]
        %v3841 = vld [vmem:[#allocation11 + $0x388] sm:$0xff]
        %v3842 = vld [vmem:[#allocation11 + $0x390] sm:$0xff]
        %v3843 = vld [vmem:[#allocation11 + $0x398] sm:$0xff]
        %v3844 = vld [vmem:[#allocation11 + $0x3a0] sm:$0xff]
        %v3845 = vld [vmem:[#allocation11 + $0x3a8] sm:$0xff]
        %v3846 = vld [vmem:[#allocation11 + $0x3b0] sm:$0xff]
        %v3847 = vld [vmem:[#allocation11 + $0x3b8] sm:$0xff]
        %v3848 = vld [vmem:[#allocation11 + $0x3c0] sm:$0xff]
        %v3849 = vld [vmem:[#allocation11 + $0x3c8] sm:$0xff]
        %v3850 = vld [vmem:[#allocation11 + $0x3d0] sm:$0xff]
        %v3851 = vld [vmem:[#allocation11 + $0x3d8] sm:$0xff]
        %v3852 = vld [vmem:[#allocation11 + $0x3e0] sm:$0xff]
        %v3853 = vld [vmem:[#allocation11 + $0x3e8] sm:$0xff]
        %v3854 = vld [vmem:[#allocation11 + $0x3f0] sm:$0xff]
        %v3855 = vld [vmem:[#allocation11 + $0x3f8] sm:$0xff]
        %v3856 = vld [vmem:[#allocation12] sm:$0xff]
        %v3858 = vlaneseq
        %v3859 = vshrl.u32 %v3858, 7
        %v3860 = vsub.s32 0, %v3859
        %v3861 = vrot.slane %v3856, %v3860
        %v3862 = vlaneseq
        %v3863 = vshrl.u32 %v3862, 7
        %v3864 = vsub.s32 1, %v3863
        %v3865 = vrot.slane %v3856, %v3864
        %v3866 = vlaneseq
        %v3867 = vshrl.u32 %v3866, 7
        %v3868 = vsub.s32 2, %v3867
        %v3869 = vrot.slane %v3856, %v3868
        %v3870 = vlaneseq
        %v3871 = vshrl.u32 %v3870, 7
        %v3872 = vsub.s32 3, %v3871
        %v3873 = vrot.slane %v3856, %v3872
        %v3874 = vlaneseq
        %v3875 = vshrl.u32 %v3874, 7
        %v3876 = vsub.s32 4, %v3875
        %v3877 = vrot.slane %v3856, %v3876
        %v3878 = vlaneseq
        %v3879 = vshrl.u32 %v3878, 7
        %v3880 = vsub.s32 5, %v3879
        %v3881 = vrot.slane %v3856, %v3880
        %v3882 = vlaneseq
        %v3883 = vshrl.u32 %v3882, 7
        %v3884 = vsub.s32 6, %v3883
        %v3885 = vrot.slane %v3856, %v3884
        %v3886 = vlaneseq
        %v3887 = vshrl.u32 %v3886, 7
        %v3888 = vsub.s32 7, %v3887
        %v3889 = vrot.slane %v3856, %v3888
        %3898 = vmatprep.subr.mxu0 %v3729
        %3899 = vmatpush1.msra.mxu0 %v3728
        %3900 = vmatprep.subr.mxu0 %v3737
        %3901 = vmatpush1.msra.mxu0 %v3736
        %3902 = vmatprep.subr.mxu0 %v3745
        %3903 = vmatpush1.msra.mxu0 %v3744
        %3904 = vmatprep.subr.mxu0 %v3753
        %3905 = vmatpush1.msra.mxu0 %v3752
        %3906 = vmatprep.subr.mxu0 %v3761
        %3907 = vmatpush1.msra.mxu0 %v3760
        %3908 = vmatprep.subr.mxu0 %v3769
        %3909 = vmatpush1.msra.mxu0 %v3768
        %3910 = vmatprep.subr.mxu0 %v3777
        %3911 = vmatpush1.msra.mxu0 %v3776
        %3912 = vmatprep.subr.mxu0 %v3785
        %3913 = vmatpush1.msra.mxu0 %v3784
        %3914 = vmatprep.subr.mxu0 %v3793
        %3915 = vmatpush1.msra.mxu0 %v3792
        %3916 = vmatprep.subr.mxu0 %v3801
        %3917 = vmatpush1.msra.mxu0 %v3800
        %3918 = vmatprep.subr.mxu0 %v3809
        %3919 = vmatpush1.msra.mxu0 %v3808
        %3920 = vmatprep.subr.mxu0 %v3817
        %3921 = vmatpush1.msra.mxu0 %v3816
        %3922 = vmatprep.subr.mxu0 %v3825
        %3923 = vmatpush1.msra.mxu0 %v3824
        %3924 = vmatprep.subr.mxu0 %v3833
        %3925 = vmatpush1.msra.mxu0 %v3832
        %3926 = vmatprep.subr.mxu0 %v3841
        %3927 = vmatpush1.msra.mxu0 %v3840
        %3928 = vmatprep.subr.mxu0 %v3849
        %3929 = vmatpush1.msra.mxu0 %v3848
        %3930 = vmatprep.subr.mxu0 0.0
        %3931 = vmatpush1.msra.mxu0 0.0
        %3932 = vmatprep.subr.mxu0 0.0
        %3933 = vmatpush1.msra.mxu0 0.0
        %3934 = vmatprep.subr.mxu0 0.0
        %3935 = vmatpush1.msra.mxu0 0.0
        %3936 = vmatprep.subr.mxu0 0.0
        %3937 = vmatpush1.msra.mxu0 0.0
        %3938 = vmatprep.subr.mxu0 0.0
        %3939 = vmatpush1.msra.mxu0 0.0
        %3940 = vmatprep.subr.mxu0 0.0
        %3941 = vmatpush1.msra.mxu0 0.0
        %3942 = vmatprep.subr.mxu0 0.0
        %3943 = vmatpush1.msra.mxu0 0.0
        %3944 = vmatprep.subr.mxu0 0.0
        %3945 = vmatpush1.msra.mxu0 0.0
        %3946 = vmatprep.subr.mxu0 0.0
        %3947 = vmatpush1.msra.mxu0 0.0
        %3948 = vmatprep.subr.mxu0 0.0
        %3949 = vmatpush1.msra.mxu0 0.0
        %3950 = vmatprep.subr.mxu0 0.0
        %3951 = vmatpush1.msra.mxu0 0.0
        %3952 = vmatprep.subr.mxu0 0.0
        %3953 = vmatpush1.msra.mxu0 0.0
        %3954 = vmatprep.subr.mxu0 0.0
        %3955 = vmatpush1.msra.mxu0 0.0
        %3956 = vmatprep.subr.mxu0 0.0
        %3957 = vmatpush1.msra.mxu0 0.0
        %3958 = vmatprep.subr.mxu0 0.0
        %3959 = vmatpush1.msra.mxu0 0.0
        %3960 = vmatprep.subr.mxu0 0.0
        %3961 = vmatpush1.msra.mxu0 0.0
        %3962 = vmatprep.mubr.f32.mxu0 0.0
        %3963 = vmatmul.mubr.f32.gmra.mrb[0].mxu0 %v3727
        %v3964 = vpop.f32.mrb[0].mxu0
        %v3965 = vadd.f32 %v3861, %v3964
        %v3966 = vpop.f32.mrb[0].mxu0
        %v3967 = vadd.f32 %v3865, %v3966
        %3968 = vdwg.mxu0
        %3969 = vmatprep.subr.mxu0 %v3731
        %3970 = vmatpush1.msra.mxu0 %v3730
        %3971 = vmatprep.subr.mxu0 %v3739
        %3972 = vmatpush1.msra.mxu0 %v3738
        %3973 = vmatprep.subr.mxu0 %v3747
        %3974 = vmatpush1.msra.mxu0 %v3746
        %3975 = vmatprep.subr.mxu0 %v3755
        %3976 = vmatpush1.msra.mxu0 %v3754
        %3977 = vmatprep.subr.mxu0 %v3763
        %3978 = vmatpush1.msra.mxu0 %v3762
        %3979 = vmatprep.subr.mxu0 %v3771
        %3980 = vmatpush1.msra.mxu0 %v3770
        %3981 = vmatprep.subr.mxu0 %v3779
        %3982 = vmatpush1.msra.mxu0 %v3778
        %3983 = vmatprep.subr.mxu0 %v3787
        %3984 = vmatpush1.msra.mxu0 %v3786
        %3985 = vmatprep.subr.mxu0 %v3795
        %3986 = vmatpush1.msra.mxu0 %v3794
        %3987 = vmatprep.subr.mxu0 %v3803
        %3988 = vmatpush1.msra.mxu0 %v3802
        %3989 = vmatprep.subr.mxu0 %v3811
        %3990 = vmatpush1.msra.mxu0 %v3810
        %3991 = vmatprep.subr.mxu0 %v3819
        %3992 = vmatpush1.msra.mxu0 %v3818
        %3993 = vmatprep.subr.mxu0 %v3827
        %3994 = vmatpush1.msra.mxu0 %v3826
        %3995 = vmatprep.subr.mxu0 %v3835
        %3996 = vmatpush1.msra.mxu0 %v3834
        %3997 = vmatprep.subr.mxu0 %v3843
        %3998 = vmatpush1.msra.mxu0 %v3842
        %3999 = vmatprep.subr.mxu0 %v3851
        %4000 = vmatpush1.msra.mxu0 %v3850
        %4001 = vmatprep.subr.mxu0 0.0
        %4002 = vmatpush1.msra.mxu0 0.0
        %4003 = vmatprep.subr.mxu0 0.0
        %4004 = vmatpush1.msra.mxu0 0.0
        %4005 = vmatprep.subr.mxu0 0.0
        %4006 = vmatpush1.msra.mxu0 0.0
        %4007 = vmatprep.subr.mxu0 0.0
        %4008 = vmatpush1.msra.mxu0 0.0
        %4009 = vmatprep.subr.mxu0 0.0
        %4010 = vmatpush1.msra.mxu0 0.0
        %4011 = vmatprep.subr.mxu0 0.0
        %4012 = vmatpush1.msra.mxu0 0.0
        %4013 = vmatprep.subr.mxu0 0.0
        %4014 = vmatpush1.msra.mxu0 0.0
        %4015 = vmatprep.subr.mxu0 0.0
        %4016 = vmatpush1.msra.mxu0 0.0
        %4017 = vmatprep.subr.mxu0 0.0
        %4018 = vmatpush1.msra.mxu0 0.0
        %4019 = vmatprep.subr.mxu0 0.0
        %4020 = vmatpush1.msra.mxu0 0.0
        %4021 = vmatprep.subr.mxu0 0.0
        %4022 = vmatpush1.msra.mxu0 0.0
        %4023 = vmatprep.subr.mxu0 0.0
        %4024 = vmatpush1.msra.mxu0 0.0
        %4025 = vmatprep.subr.mxu0 0.0
        %4026 = vmatpush1.msra.mxu0 0.0
        %4027 = vmatprep.subr.mxu0 0.0
        %4028 = vmatpush1.msra.mxu0 0.0
        %4029 = vmatprep.subr.mxu0 0.0
        %4030 = vmatpush1.msra.mxu0 0.0
        %4031 = vmatprep.subr.mxu0 0.0
        %4032 = vmatpush1.msra.mxu0 0.0
        %4033 = vmatprep.mubr.f32.mxu0 0.0
        %4034 = vmatmul.mubr.f32.gmra.mrb[0].mxu0 %v3727
        %v4035 = vpop.f32.mrb[0].mxu0
        %v4036 = vadd.f32 %v3869, %v4035
        %v4037 = vpop.f32.mrb[0].mxu0
        %v4038 = vadd.f32 %v3873, %v4037
        %4039 = vdwg.mxu0
        %4040 = vmatprep.subr.mxu0 %v3733
        %4041 = vmatpush1.msra.mxu0 %v3732
        %4042 = vmatprep.subr.mxu0 %v3741
        %4043 = vmatpush1.msra.mxu0 %v3740
        %4044 = vmatprep.subr.mxu0 %v3749
        %4045 = vmatpush1.msra.mxu0 %v3748
        %4046 = vmatprep.subr.mxu0 %v3757
        %4047 = vmatpush1.msra.mxu0 %v3756
        %4048 = vmatprep.subr.mxu0 %v3765
        %4049 = vmatpush1.msra.mxu0 %v3764
        %4050 = vmatprep.subr.mxu0 %v3773
        %4051 = vmatpush1.msra.mxu0 %v3772
        %4052 = vmatprep.subr.mxu0 %v3781
        %4053 = vmatpush1.msra.mxu0 %v3780
        %4054 = vmatprep.subr.mxu0 %v3789
        %4055 = vmatpush1.msra.mxu0 %v3788
        %4056 = vmatprep.subr.mxu0 %v3797
        %4057 = vmatpush1.msra.mxu0 %v3796
        %4058 = vmatprep.subr.mxu0 %v3805
        %4059 = vmatpush1.msra.mxu0 %v3804
        %4060 = vmatprep.subr.mxu0 %v3813
        %4061 = vmatpush1.msra.mxu0 %v3812
        %4062 = vmatprep.subr.mxu0 %v3821
        %4063 = vmatpush1.msra.mxu0 %v3820
        %4064 = vmatprep.subr.mxu0 %v3829
        %4065 = vmatpush1.msra.mxu0 %v3828
        %4066 = vmatprep.subr.mxu0 %v3837
        %4067 = vmatpush1.msra.mxu0 %v3836
        %4068 = vmatprep.subr.mxu0 %v3845
        %4069 = vmatpush1.msra.mxu0 %v3844
        %4070 = vmatprep.subr.mxu0 %v3853
        %4071 = vmatpush1.msra.mxu0 %v3852
        %4072 = vmatprep.subr.mxu0 0.0
        %4073 = vmatpush1.msra.mxu0 0.0
        %4074 = vmatprep.subr.mxu0 0.0
        %4075 = vmatpush1.msra.mxu0 0.0
        %4076 = vmatprep.subr.mxu0 0.0
        %4077 = vmatpush1.msra.mxu0 0.0
        %4078 = vmatprep.subr.mxu0 0.0
        %4079 = vmatpush1.msra.mxu0 0.0
        %4080 = vmatprep.subr.mxu0 0.0
        %4081 = vmatpush1.msra.mxu0 0.0
        %4082 = vmatprep.subr.mxu0 0.0
        %4083 = vmatpush1.msra.mxu0 0.0
        %4084 = vmatprep.subr.mxu0 0.0
        %4085 = vmatpush1.msra.mxu0 0.0
        %4086 = vmatprep.subr.mxu0 0.0
        %4087 = vmatpush1.msra.mxu0 0.0
        %4088 = vmatprep.subr.mxu0 0.0
        %4089 = vmatpush1.msra.mxu0 0.0
        %4090 = vmatprep.subr.mxu0 0.0
        %4091 = vmatpush1.msra.mxu0 0.0
        %4092 = vmatprep.subr.mxu0 0.0
        %4093 = vmatpush1.msra.mxu0 0.0
        %4094 = vmatprep.subr.mxu0 0.0
        %4095 = vmatpush1.msra.mxu0 0.0
        %4096 = vmatprep.subr.mxu0 0.0
        %4097 = vmatpush1.msra.mxu0 0.0
        %4098 = vmatprep.subr.mxu0 0.0
        %4099 = vmatpush1.msra.mxu0 0.0
        %4100 = vmatprep.subr.mxu0 0.0
        %4101 = vmatpush1.msra.mxu0 0.0
        %4102 = vmatprep.subr.mxu0 0.0
        %4103 = vmatpush1.msra.mxu0 0.0
        %4104 = vmatprep.mubr.f32.mxu0 0.0
        %4105 = vmatmul.mubr.f32.gmra.mrb[0].mxu0 %v3727
        %v4106 = vpop.f32.mrb[0].mxu0
        %v4107 = vadd.f32 %v3877, %v4106
        %v4108 = vpop.f32.mrb[0].mxu0
        %v4109 = vadd.f32 %v3881, %v4108
        %4110 = vdwg.mxu0
        %4111 = vmatprep.subr.mxu0 %v3735
        %4112 = vmatpush1.msra.mxu0 %v3734
        %4113 = vmatprep.subr.mxu0 %v3743
        %4114 = vmatpush1.msra.mxu0 %v3742
        %4115 = vmatprep.subr.mxu0 %v3751
        %4116 = vmatpush1.msra.mxu0 %v3750
        %4117 = vmatprep.subr.mxu0 %v3759
        %4118 = vmatpush1.msra.mxu0 %v3758
        %4119 = vmatprep.subr.mxu0 %v3767
        %4120 = vmatpush1.msra.mxu0 %v3766
        %4121 = vmatprep.subr.mxu0 %v3775
        %4122 = vmatpush1.msra.mxu0 %v3774
        %4123 = vmatprep.subr.mxu0 %v3783
        %4124 = vmatpush1.msra.mxu0 %v3782
        %4125 = vmatprep.subr.mxu0 %v3791
        %4126 = vmatpush1.msra.mxu0 %v3790
        %4127 = vmatprep.subr.mxu0 %v3799
        %4128 = vmatpush1.msra.mxu0 %v3798
        %4129 = vmatprep.subr.mxu0 %v3807
        %4130 = vmatpush1.msra.mxu0 %v3806
        %4131 = vmatprep.subr.mxu0 %v3815
        %4132 = vmatpush1.msra.mxu0 %v3814
        %4133 = vmatprep.subr.mxu0 %v3823
        %4134 = vmatpush1.msra.mxu0 %v3822
        %4135 = vmatprep.subr.mxu0 %v3831
        %4136 = vmatpush1.msra.mxu0 %v3830
        %4137 = vmatprep.subr.mxu0 %v3839
        %4138 = vmatpush1.msra.mxu0 %v3838
        %4139 = vmatprep.subr.mxu0 %v3847
        %4140 = vmatpush1.msra.mxu0 %v3846
        %4141 = vmatprep.subr.mxu0 %v3855
        %4142 = vmatpush1.msra.mxu0 %v3854
        %4143 = vmatprep.subr.mxu0 0.0
        %4144 = vmatpush1.msra.mxu0 0.0
        %4145 = vmatprep.subr.mxu0 0.0
        %4146 = vmatpush1.msra.mxu0 0.0
        %4147 = vmatprep.subr.mxu0 0.0
        %4148 = vmatpush1.msra.mxu0 0.0
        %4149 = vmatprep.subr.mxu0 0.0
        %4150 = vmatpush1.msra.mxu0 0.0
        %4151 = vmatprep.subr.mxu0 0.0
        %4152 = vmatpush1.msra.mxu0 0.0
        %4153 = vmatprep.subr.mxu0 0.0
        %4154 = vmatpush1.msra.mxu0 0.0
        %4155 = vmatprep.subr.mxu0 0.0
        %4156 = vmatpush1.msra.mxu0 0.0
        %4157 = vmatprep.subr.mxu0 0.0
        %4158 = vmatpush1.msra.mxu0 0.0
        %4159 = vmatprep.subr.mxu0 0.0
        %4160 = vmatpush1.msra.mxu0 0.0
        %4161 = vmatprep.subr.mxu0 0.0
        %4162 = vmatpush1.msra.mxu0 0.0
        %4163 = vmatprep.subr.mxu0 0.0
        %4164 = vmatpush1.msra.mxu0 0.0
        %4165 = vmatprep.subr.mxu0 0.0
        %4166 = vmatpush1.msra.mxu0 0.0
        %4167 = vmatprep.subr.mxu0 0.0
        %4168 = vmatpush1.msra.mxu0 0.0
        %4169 = vmatprep.subr.mxu0 0.0
        %4170 = vmatpush1.msra.mxu0 0.0
        %4171 = vmatprep.subr.mxu0 0.0
        %4172 = vmatpush1.msra.mxu0 0.0
        %4173 = vmatprep.subr.mxu0 0.0
        %4174 = vmatpush1.msra.mxu0 0.0
        %4175 = vmatprep.mubr.f32.mxu0 0.0
        %4176 = vmatmul.mubr.f32.gmra.mrb[0].mxu0 %v3727
        %v4177 = vpop.f32.mrb[0].mxu0
        %v4178 = vadd.f32 %v3885, %v4177
        %v4179 = vpop.f32.mrb[0].mxu0
        %v4180 = vadd.f32 %v3889, %v4179
        %4181 = vdwg.mxu0
        %4183 = vrot.lane.b32.xlu0 %v3965, 64
        %v4184 = vpop.permute.xlu0 %4183
        %4187 = vrot.lane.b32.xlu0 %v3967, 64
        %v4188 = vpop.permute.xlu0 %4187
        %4191 = vrot.lane.b32.xlu0 %v4036, 64
        %v4192 = vpop.permute.xlu0 %4191
        %4195 = vrot.lane.b32.xlu0 %v4038, 64
        %v4196 = vpop.permute.xlu0 %4195
        %v4198 = vcombine.low %v3965, %v3967
        %v4199 = vcombine.high %v3965, %v3967
        %v4201 = vunpack.c.l.s4 1983009808
        %v4202 = vunpack.c.0.s8 %v4201
        %v4203 = vlaneseq
        %v4204 = vshrl.u32 %v4203, 7
        %v4205 = vsub.s32 %v4202, %v4204
        %v4206 = vrot.slane %v4198, %v4205
        %v4208 = vunpack.c.l.s4 1983009808
        %v4209 = vunpack.c.0.s8 %v4208
        %v4210 = vlaneseq
        %v4211 = vshrl.u32 %v4210, 7
        %v4212 = vsub.s32 %v4209, %v4211
        %v4213 = vrot.slane %v4199, %v4212
        %v4214 = vcombine.low %v4184, %v4188
        %v4215 = vcombine.high %v4184, %v4188
        %v4217 = vunpack.c.l.s4 1983009808
        %v4218 = vunpack.c.0.s8 %v4217
        %v4219 = vlaneseq
        %v4220 = vshrl.u32 %v4219, 7
        %v4221 = vsub.s32 %v4218, %v4220
        %v4222 = vrot.slane %v4214, %v4221
        %v4224 = vunpack.c.l.s4 1983009808
        %v4225 = vunpack.c.0.s8 %v4224
        %v4226 = vlaneseq
        %v4227 = vshrl.u32 %v4226, 7
        %v4228 = vsub.s32 %v4225, %v4227
        %v4229 = vrot.slane %v4215, %v4228
        %v4230 = vcombine.low %v4036, %v4038
        %v4231 = vcombine.high %v4036, %v4038
        %v4233 = vunpack.c.l.s4 1983009808
        %v4234 = vunpack.c.0.s8 %v4233
        %v4235 = vlaneseq
        %v4236 = vshrl.u32 %v4235, 7
        %v4237 = vsub.s32 %v4234, %v4236
        %v4238 = vrot.slane %v4230, %v4237
        %v4240 = vunpack.c.l.s4 1983009808
        %v4241 = vunpack.c.0.s8 %v4240
        %v4242 = vlaneseq
        %v4243 = vshrl.u32 %v4242, 7
        %v4244 = vsub.s32 %v4241, %v4243
        %v4245 = vrot.slane %v4231, %v4244
        %v4246 = vcombine.low %v4192, %v4196
        %v4247 = vcombine.high %v4192, %v4196
        %v4249 = vunpack.c.l.s4 1983009808
        %v4250 = vunpack.c.0.s8 %v4249
        %v4251 = vlaneseq
        %v4252 = vshrl.u32 %v4251, 7
        %v4253 = vsub.s32 %v4250, %v4252
        %v4254 = vrot.slane %v4246, %v4253
        %v4256 = vunpack.c.l.s4 1983009808
        %v4257 = vunpack.c.0.s8 %v4256
        %v4258 = vlaneseq
        %v4259 = vshrl.u32 %v4258, 7
        %v4260 = vsub.s32 %v4257, %v4259
        %v4261 = vrot.slane %v4247, %v4260
        %v4262 = vcombine.low %v4206, %v4222
        %v4263 = vcombine.high %v4206, %v4222
        %v4265 = vunpack.c.l.s4 1934713408
        %v4266 = vunpack.c.0.s8 %v4265
        %v4267 = vlaneseq
        %v4268 = vshrl.u32 %v4267, 7
        %v4269 = vsub.s32 %v4266, %v4268
        %v4270 = vrot.slane %v4262, %v4269
        %v4272 = vunpack.c.l.s4 1934713408
        %v4273 = vunpack.c.0.s8 %v4272
        %v4274 = vlaneseq
        %v4275 = vshrl.u32 %v4274, 7
        %v4276 = vsub.s32 %v4273, %v4275
        %v4277 = vrot.slane %v4263, %v4276
        %v4278 = vcombine.low %v4213, %v4229
        %v4279 = vcombine.high %v4213, %v4229
        %v4281 = vunpack.c.l.s4 1934713408
        %v4282 = vunpack.c.0.s8 %v4281
        %v4283 = vlaneseq
        %v4284 = vshrl.u32 %v4283, 7
        %v4285 = vsub.s32 %v4282, %v4284
        %v4286 = vrot.slane %v4278, %v4285
        %v4288 = vunpack.c.l.s4 1934713408
        %v4289 = vunpack.c.0.s8 %v4288
        %v4290 = vlaneseq
        %v4291 = vshrl.u32 %v4290, 7
        %v4292 = vsub.s32 %v4289, %v4291
        %v4293 = vrot.slane %v4279, %v4292
        %v4294 = vcombine.low %v4238, %v4254
        %v4295 = vcombine.high %v4238, %v4254
        %v4297 = vunpack.c.l.s4 1934713408
        %v4298 = vunpack.c.0.s8 %v4297
        %v4299 = vlaneseq
        %v4300 = vshrl.u32 %v4299, 7
        %v4301 = vsub.s32 %v4298, %v4300
        %v4302 = vrot.slane %v4294, %v4301
        %v4304 = vunpack.c.l.s4 1934713408
        %v4305 = vunpack.c.0.s8 %v4304
        %v4306 = vlaneseq
        %v4307 = vshrl.u32 %v4306, 7
        %v4308 = vsub.s32 %v4305, %v4307
        %v4309 = vrot.slane %v4295, %v4308
        %v4310 = vcombine.low %v4245, %v4261
        %v4311 = vcombine.high %v4245, %v4261
        %v4313 = vunpack.c.l.s4 1934713408
        %v4314 = vunpack.c.0.s8 %v4313
        %v4315 = vlaneseq
        %v4316 = vshrl.u32 %v4315, 7
        %v4317 = vsub.s32 %v4314, %v4316
        %v4318 = vrot.slane %v4310, %v4317
        %v4320 = vunpack.c.l.s4 1934713408
        %v4321 = vunpack.c.0.s8 %v4320
        %v4322 = vlaneseq
        %v4323 = vshrl.u32 %v4322, 7
        %v4324 = vsub.s32 %v4321, %v4323
        %v4325 = vrot.slane %v4311, %v4324
        %v4326 = vcombine.low %v4270, %v4302
        %v4327 = vcombine.high %v4270, %v4302
        %v4328 = vcombine.low %v4277, %v4309
        %v4329 = vcombine.high %v4277, %v4309
        %v4330 = vcombine.low %v4286, %v4318
        %v4331 = vcombine.high %v4286, %v4318
        %v4332 = vcombine.low %v4293, %v4325
        %v4333 = vcombine.high %v4293, %v4325
        %v4334 = vcombine.low %v4326, %v4328
        %v4335 = vcombine.high %v4326, %v4328
        %v4337 = vunpack.c.l.s4 1983009808
        %v4338 = vunpack.c.0.s8 %v4337
        %v4339 = vlaneseq
        %v4340 = vshrl.u32 %v4339, 7
        %v4341 = vsub.s32 %v4338, %v4340
        %v4342 = vrot.slane %v4334, %v4341
        %v4344 = vunpack.c.l.s4 1983009808
        %v4345 = vunpack.c.0.s8 %v4344
        %v4346 = vlaneseq
        %v4347 = vshrl.u32 %v4346, 7
        %v4348 = vsub.s32 %v4345, %v4347
        %v4349 = vrot.slane %v4335, %v4348
        %v4350 = vcombine.low %v4327, %v4329
        %v4351 = vcombine.high %v4327, %v4329
        %v4353 = vunpack.c.l.s4 1983009808
        %v4354 = vunpack.c.0.s8 %v4353
        %v4355 = vlaneseq
        %v4356 = vshrl.u32 %v4355, 7
        %v4357 = vsub.s32 %v4354, %v4356
        %v4358 = vrot.slane %v4350, %v4357
        %v4360 = vunpack.c.l.s4 1983009808
        %v4361 = vunpack.c.0.s8 %v4360
        %v4362 = vlaneseq
        %v4363 = vshrl.u32 %v4362, 7
        %v4364 = vsub.s32 %v4361, %v4363
        %v4365 = vrot.slane %v4351, %v4364
        %v4366 = vcombine.low %v4330, %v4332
        %v4367 = vcombine.high %v4330, %v4332
        %v4369 = vunpack.c.l.s4 1983009808
        %v4370 = vunpack.c.0.s8 %v4369
        %v4371 = vlaneseq
        %v4372 = vshrl.u32 %v4371, 7
        %v4373 = vsub.s32 %v4370, %v4372
        %v4374 = vrot.slane %v4366, %v4373
        %v4376 = vunpack.c.l.s4 1983009808
        %v4377 = vunpack.c.0.s8 %v4376
        %v4378 = vlaneseq
        %v4379 = vshrl.u32 %v4378, 7
        %v4380 = vsub.s32 %v4377, %v4379
        %v4381 = vrot.slane %v4367, %v4380
        %v4382 = vcombine.low %v4331, %v4333
        %v4383 = vcombine.high %v4331, %v4333
        %v4385 = vunpack.c.l.s4 1983009808
        %v4386 = vunpack.c.0.s8 %v4385
        %v4387 = vlaneseq
        %v4388 = vshrl.u32 %v4387, 7
        %v4389 = vsub.s32 %v4386, %v4388
        %v4390 = vrot.slane %v4382, %v4389
        %v4392 = vunpack.c.l.s4 1983009808
        %v4393 = vunpack.c.0.s8 %v4392
        %v4394 = vlaneseq
        %v4395 = vshrl.u32 %v4394, 7
        %v4396 = vsub.s32 %v4393, %v4395
        %v4397 = vrot.slane %v4383, %v4396
        %v4398 = vcombine.low %v4342, %v4358
        %v4399 = vcombine.high %v4342, %v4358
        %v4401 = vunpack.c.l.s4 1934713408
        %v4402 = vunpack.c.0.s8 %v4401
        %v4403 = vlaneseq
        %v4404 = vshrl.u32 %v4403, 7
        %v4405 = vsub.s32 %v4402, %v4404
        %v4406 = vrot.slane %v4398, %v4405
        %v4408 = vunpack.c.l.s4 1934713408
        %v4409 = vunpack.c.0.s8 %v4408
        %v4410 = vlaneseq
        %v4411 = vshrl.u32 %v4410, 7
        %v4412 = vsub.s32 %v4409, %v4411
        %v4413 = vrot.slane %v4399, %v4412
        %v4414 = vcombine.low %v4349, %v4365
        %v4415 = vcombine.high %v4349, %v4365
        %v4417 = vunpack.c.l.s4 1934713408
        %v4418 = vunpack.c.0.s8 %v4417
        %v4419 = vlaneseq
        %v4420 = vshrl.u32 %v4419, 7
        %v4421 = vsub.s32 %v4418, %v4420
        %v4422 = vrot.slane %v4414, %v4421
        %v4424 = vunpack.c.l.s4 1934713408
        %v4425 = vunpack.c.0.s8 %v4424
        %v4426 = vlaneseq
        %v4427 = vshrl.u32 %v4426, 7
        %v4428 = vsub.s32 %v4425, %v4427
        %v4429 = vrot.slane %v4415, %v4428
        %v4430 = vcombine.low %v4374, %v4390
        %v4431 = vcombine.high %v4374, %v4390
        %v4433 = vunpack.c.l.s4 1934713408
        %v4434 = vunpack.c.0.s8 %v4433
        %v4435 = vlaneseq
        %v4436 = vshrl.u32 %v4435, 7
        %v4437 = vsub.s32 %v4434, %v4436
        %v4438 = vrot.slane %v4430, %v4437
        %v4440 = vunpack.c.l.s4 1934713408
        %v4441 = vunpack.c.0.s8 %v4440
        %v4442 = vlaneseq
        %v4443 = vshrl.u32 %v4442, 7
        %v4444 = vsub.s32 %v4441, %v4443
        %v4445 = vrot.slane %v4431, %v4444
        %v4446 = vcombine.low %v4381, %v4397
        %v4447 = vcombine.high %v4381, %v4397
        %v4449 = vunpack.c.l.s4 1934713408
        %v4450 = vunpack.c.0.s8 %v4449
        %v4451 = vlaneseq
        %v4452 = vshrl.u32 %v4451, 7
        %v4453 = vsub.s32 %v4450, %v4452
        %v4454 = vrot.slane %v4446, %v4453
        %v4456 = vunpack.c.l.s4 1934713408
        %v4457 = vunpack.c.0.s8 %v4456
        %v4458 = vlaneseq
        %v4459 = vshrl.u32 %v4458, 7
        %v4460 = vsub.s32 %v4457, %v4459
        %v4461 = vrot.slane %v4447, %v4460
        %v4462 = vcombine.low %v4406, %v4438
        %v4463 = vcombine.high %v4406, %v4438
        %v4464 = vcombine.low %v4413, %v4445
        %v4465 = vcombine.high %v4413, %v4445
        %v4466 = vcombine.low %v4422, %v4454
        %v4467 = vcombine.high %v4422, %v4454
        %v4468 = vcombine.low %v4429, %v4461
        %v4469 = vcombine.high %v4429, %v4461
        %v4470 = vmul.f32 %v4462, %v4462
        %v4471 = vmul.f32 %v4463, %v4463
        %v4472 = vmul.f32 %v4464, %v4464
        %v4473 = vmul.f32 %v4465, %v4465
        %v4474 = vmul.f32 %v4466, %v4466
        %v4475 = vmul.f32 %v4467, %v4467
        %v4476 = vmul.f32 %v4468, %v4468
        %v4477 = vmul.f32 %v4469, %v4469
        %vm4478 = vcmask 523264
        %v4479 = vsel %vm4478, %v4470, 0.0
        %4480 = vadd.xlane.f32.xlu0 %v4479
        %v4481 = vpop.xlane.xlu0 %4480
        %v4482 = vsel %vm4478, %v4471, 0.0
        %4483 = vadd.xlane.f32.xlu0 %v4482
        %v4484 = vpop.xlane.xlu0 %4483
        %v4485 = vsel %vm4478, %v4472, 0.0
        %4486 = vadd.xlane.f32.xlu0 %v4485
        %v4487 = vpop.xlane.xlu0 %4486
        %v4488 = vsel %vm4478, %v4473, 0.0
        %4489 = vadd.xlane.f32.xlu0 %v4488
        %v4490 = vpop.xlane.xlu0 %4489
        %v4491 = vsel %vm4478, %v4474, 0.0
        %4492 = vadd.xlane.f32.xlu0 %v4491
        %v4493 = vpop.xlane.xlu0 %4492
        %v4494 = vsel %vm4478, %v4475, 0.0
        %4495 = vadd.xlane.f32.xlu0 %v4494
        %v4496 = vpop.xlane.xlu0 %4495
        %v4497 = vsel %vm4478, %v4476, 0.0
        %4498 = vadd.xlane.f32.xlu0 %v4497
        %v4499 = vpop.xlane.xlu0 %4498
        %v4500 = vsel %vm4478, %v4477, 0.0
        %4501 = vadd.xlane.f32.xlu0 %v4500
        %v4502 = vpop.xlane.xlu0 %4501
        %v4503 = vmax.f32 %v4481, 1e-24
        %v4504 = vmax.f32 %v4484, 1e-24
        %v4505 = vmax.f32 %v4487, 1e-24
        %v4506 = vmax.f32 %v4490, 1e-24
        %v4507 = vmax.f32 %v4493, 1e-24
        %v4508 = vmax.f32 %v4496, 1e-24
        %v4509 = vmax.f32 %v4499, 1e-24
        %v4510 = vmax.f32 %v4502, 1e-24
        %v4511 = vrsqrt.pop %v4503
        %v4512 = vrsqrt.pop %v4504
        %v4513 = vrsqrt.pop %v4505
        %v4514 = vrsqrt.pop %v4506
        %v4515 = vrsqrt.pop %v4507
        %v4516 = vrsqrt.pop %v4508
        %v4517 = vrsqrt.pop %v4509
        %v4518 = vrsqrt.pop %v4510
        %v4520 = vlaneseq
        %v4521 = vshrl.u32 %v4520, 7
        %v4522 = vsub.s32 0, %v4521
        %v4523 = vrot.slane %v511, %v4522
        %v4525 = vmul.f32 %v4511, %v4523
        %v4526 = vmul.f32 %v4512, %v4523
        %v4527 = vmul.f32 %v4513, %v4523
        %v4528 = vmul.f32 %v4514, %v4523
        %v4529 = vmul.f32 %v4515, %v4523
        %v4530 = vmul.f32 %v4516, %v4523
        %v4531 = vmul.f32 %v4517, %v4523
        %v4532 = vmul.f32 %v4518, %v4523
        %v4533 = vmul.f32 %v4462, %v4525
        %v4534 = vmul.f32 %v4463, %v4526
        %v4535 = vmul.f32 %v4464, %v4527
        %v4536 = vmul.f32 %v4465, %v4528
        %v4537 = vmul.f32 %v4466, %v4529
        %v4538 = vmul.f32 %v4467, %v4530
        %v4539 = vmul.f32 %v4468, %v4531
        %v4540 = vmul.f32 %v4469, %v4532
        %4542 = vrot.lane.b32.xlu0 %v4107, 64
        %v4543 = vpop.permute.xlu0 %4542
        %4546 = vrot.lane.b32.xlu0 %v4109, 64
        %v4547 = vpop.permute.xlu0 %4546
        %4550 = vrot.lane.b32.xlu0 %v4178, 64
        %v4551 = vpop.permute.xlu0 %4550
        %4554 = vrot.lane.b32.xlu0 %v4180, 64
        %v4555 = vpop.permute.xlu0 %4554
        %v4557 = vcombine.low %v4107, %v4109
        %v4558 = vcombine.high %v4107, %v4109
        %v4560 = vunpack.c.l.s4 1983009808
        %v4561 = vunpack.c.0.s8 %v4560
        %v4562 = vlaneseq
        %v4563 = vshrl.u32 %v4562, 7
        %v4564 = vsub.s32 %v4561, %v4563
        %v4565 = vrot.slane %v4557, %v4564
        %v4567 = vunpack.c.l.s4 1983009808
        %v4568 = vunpack.c.0.s8 %v4567
        %v4569 = vlaneseq
        %v4570 = vshrl.u32 %v4569, 7
        %v4571 = vsub.s32 %v4568, %v4570
        %v4572 = vrot.slane %v4558, %v4571
        %v4573 = vcombine.low %v4543, %v4547
        %v4574 = vcombine.high %v4543, %v4547
        %v4576 = vunpack.c.l.s4 1983009808
        %v4577 = vunpack.c.0.s8 %v4576
        %v4578 = vlaneseq
        %v4579 = vshrl.u32 %v4578, 7
        %v4580 = vsub.s32 %v4577, %v4579
        %v4581 = vrot.slane %v4573, %v4580
        %v4583 = vunpack.c.l.s4 1983009808
        %v4584 = vunpack.c.0.s8 %v4583
        %v4585 = vlaneseq
        %v4586 = vshrl.u32 %v4585, 7
        %v4587 = vsub.s32 %v4584, %v4586
        %v4588 = vrot.slane %v4574, %v4587
        %v4589 = vcombine.low %v4178, %v4180
        %v4590 = vcombine.high %v4178, %v4180
        %v4592 = vunpack.c.l.s4 1983009808
        %v4593 = vunpack.c.0.s8 %v4592
        %v4594 = vlaneseq
        %v4595 = vshrl.u32 %v4594, 7
        %v4596 = vsub.s32 %v4593, %v4595
        %v4597 = vrot.slane %v4589, %v4596
        %v4599 = vunpack.c.l.s4 1983009808
        %v4600 = vunpack.c.0.s8 %v4599
        %v4601 = vlaneseq
        %v4602 = vshrl.u32 %v4601, 7
        %v4603 = vsub.s32 %v4600, %v4602
        %v4604 = vrot.slane %v4590, %v4603
        %v4605 = vcombine.low %v4551, %v4555
        %v4606 = vcombine.high %v4551, %v4555
        %v4608 = vunpack.c.l.s4 1983009808
        %v4609 = vunpack.c.0.s8 %v4608
        %v4610 = vlaneseq
        %v4611 = vshrl.u32 %v4610, 7
        %v4612 = vsub.s32 %v4609, %v4611
        %v4613 = vrot.slane %v4605, %v4612
        %v4615 = vunpack.c.l.s4 1983009808
        %v4616 = vunpack.c.0.s8 %v4615
        %v4617 = vlaneseq
        %v4618 = vshrl.u32 %v4617, 7
        %v4619 = vsub.s32 %v4616, %v4618
        %v4620 = vrot.slane %v4606, %v4619
        %v4621 = vcombine.low %v4565, %v4581
        %v4622 = vcombine.high %v4565, %v4581
        %v4624 = vunpack.c.l.s4 1934713408
        %v4625 = vunpack.c.0.s8 %v4624
        %v4626 = vlaneseq
        %v4627 = vshrl.u32 %v4626, 7
        %v4628 = vsub.s32 %v4625, %v4627
        %v4629 = vrot.slane %v4621, %v4628
        %v4631 = vunpack.c.l.s4 1934713408
        %v4632 = vunpack.c.0.s8 %v4631
        %v4633 = vlaneseq
        %v4634 = vshrl.u32 %v4633, 7
        %v4635 = vsub.s32 %v4632, %v4634
        %v4636 = vrot.slane %v4622, %v4635
        %v4637 = vcombine.low %v4572, %v4588
        %v4638 = vcombine.high %v4572, %v4588
        %v4640 = vunpack.c.l.s4 1934713408
        %v4641 = vunpack.c.0.s8 %v4640
        %v4642 = vlaneseq
        %v4643 = vshrl.u32 %v4642, 7
        %v4644 = vsub.s32 %v4641, %v4643
        %v4645 = vrot.slane %v4637, %v4644
        %v4647 = vunpack.c.l.s4 1934713408
        %v4648 = vunpack.c.0.s8 %v4647
        %v4649 = vlaneseq
        %v4650 = vshrl.u32 %v4649, 7
        %v4651 = vsub.s32 %v4648, %v4650
        %v4652 = vrot.slane %v4638, %v4651
        %v4653 = vcombine.low %v4597, %v4613
        %v4654 = vcombine.high %v4597, %v4613
        %v4656 = vunpack.c.l.s4 1934713408
        %v4657 = vunpack.c.0.s8 %v4656
        %v4658 = vlaneseq
        %v4659 = vshrl.u32 %v4658, 7
        %v4660 = vsub.s32 %v4657, %v4659
        %v4661 = vrot.slane %v4653, %v4660
        %v4663 = vunpack.c.l.s4 1934713408
        %v4664 = vunpack.c.0.s8 %v4663
        %v4665 = vlaneseq
        %v4666 = vshrl.u32 %v4665, 7
        %v4667 = vsub.s32 %v4664, %v4666
        %v4668 = vrot.slane %v4654, %v4667
        %v4669 = vcombine.low %v4604, %v4620
        %v4670 = vcombine.high %v4604, %v4620
        %v4672 = vunpack.c.l.s4 1934713408
        %v4673 = vunpack.c.0.s8 %v4672
        %v4674 = vlaneseq
        %v4675 = vshrl.u32 %v4674, 7
        %v4676 = vsub.s32 %v4673, %v4675
        %v4677 = vrot.slane %v4669, %v4676
        %v4679 = vunpack.c.l.s4 1934713408
        %v4680 = vunpack.c.0.s8 %v4679
        %v4681 = vlaneseq
        %v4682 = vshrl.u32 %v4681, 7
        %v4683 = vsub.s32 %v4680, %v4682
        %v4684 = vrot.slane %v4670, %v4683
        %v4685 = vcombine.low %v4629, %v4661
        %v4686 = vcombine.high %v4629, %v4661
        %v4687 = vcombine.low %v4636, %v4668
        %v4688 = vcombine.high %v4636, %v4668
        %v4689 = vcombine.low %v4645, %v4677
        %v4690 = vcombine.high %v4645, %v4677
        %v4691 = vcombine.low %v4652, %v4684
        %v4692 = vcombine.high %v4652, %v4684
        %v4693 = vcombine.low %v4685, %v4687
        %v4694 = vcombine.high %v4685, %v4687
        %v4696 = vunpack.c.l.s4 1983009808
        %v4697 = vunpack.c.0.s8 %v4696
        %v4698 = vlaneseq
        %v4699 = vshrl.u32 %v4698, 7
        %v4700 = vsub.s32 %v4697, %v4699
        %v4701 = vrot.slane %v4693, %v4700
        %v4703 = vunpack.c.l.s4 1983009808
        %v4704 = vunpack.c.0.s8 %v4703
        %v4705 = vlaneseq
        %v4706 = vshrl.u32 %v4705, 7
        %v4707 = vsub.s32 %v4704, %v4706
        %v4708 = vrot.slane %v4694, %v4707
        %v4709 = vcombine.low %v4686, %v4688
        %v4710 = vcombine.high %v4686, %v4688
        %v4712 = vunpack.c.l.s4 1983009808
        %v4713 = vunpack.c.0.s8 %v4712
        %v4714 = vlaneseq
        %v4715 = vshrl.u32 %v4714, 7
        %v4716 = vsub.s32 %v4713, %v4715
        %v4717 = vrot.slane %v4709, %v4716
        %v4719 = vunpack.c.l.s4 1983009808
        %v4720 = vunpack.c.0.s8 %v4719
        %v4721 = vlaneseq
        %v4722 = vshrl.u32 %v4721, 7
        %v4723 = vsub.s32 %v4720, %v4722
        %v4724 = vrot.slane %v4710, %v4723
        %v4725 = vcombine.low %v4689, %v4691
        %v4726 = vcombine.high %v4689, %v4691
        %v4728 = vunpack.c.l.s4 1983009808
        %v4729 = vunpack.c.0.s8 %v4728
        %v4730 = vlaneseq
        %v4731 = vshrl.u32 %v4730, 7
        %v4732 = vsub.s32 %v4729, %v4731
        %v4733 = vrot.slane %v4725, %v4732
        %v4735 = vunpack.c.l.s4 1983009808
        %v4736 = vunpack.c.0.s8 %v4735
        %v4737 = vlaneseq
        %v4738 = vshrl.u32 %v4737, 7
        %v4739 = vsub.s32 %v4736, %v4738
        %v4740 = vrot.slane %v4726, %v4739
        %v4741 = vcombine.low %v4690, %v4692
        %v4742 = vcombine.high %v4690, %v4692
        %v4744 = vunpack.c.l.s4 1983009808
        %v4745 = vunpack.c.0.s8 %v4744
        %v4746 = vlaneseq
        %v4747 = vshrl.u32 %v4746, 7
        %v4748 = vsub.s32 %v4745, %v4747
        %v4749 = vrot.slane %v4741, %v4748
        %v4751 = vunpack.c.l.s4 1983009808
        %v4752 = vunpack.c.0.s8 %v4751
        %v4753 = vlaneseq
        %v4754 = vshrl.u32 %v4753, 7
        %v4755 = vsub.s32 %v4752, %v4754
        %v4756 = vrot.slane %v4742, %v4755
        %v4757 = vcombine.low %v4701, %v4717
        %v4758 = vcombine.high %v4701, %v4717
        %v4760 = vunpack.c.l.s4 1934713408
        %v4761 = vunpack.c.0.s8 %v4760
        %v4762 = vlaneseq
        %v4763 = vshrl.u32 %v4762, 7
        %v4764 = vsub.s32 %v4761, %v4763
        %v4765 = vrot.slane %v4757, %v4764
        %v4767 = vunpack.c.l.s4 1934713408
        %v4768 = vunpack.c.0.s8 %v4767
        %v4769 = vlaneseq
        %v4770 = vshrl.u32 %v4769, 7
        %v4771 = vsub.s32 %v4768, %v4770
        %v4772 = vrot.slane %v4758, %v4771
        %v4773 = vcombine.low %v4708, %v4724
        %v4774 = vcombine.high %v4708, %v4724
        %v4776 = vunpack.c.l.s4 1934713408
        %v4777 = vunpack.c.0.s8 %v4776
        %v4778 = vlaneseq
        %v4779 = vshrl.u32 %v4778, 7
        %v4780 = vsub.s32 %v4777, %v4779
        %v4781 = vrot.slane %v4773, %v4780
        %v4783 = vunpack.c.l.s4 1934713408
        %v4784 = vunpack.c.0.s8 %v4783
        %v4785 = vlaneseq
        %v4786 = vshrl.u32 %v4785, 7
        %v4787 = vsub.s32 %v4784, %v4786
        %v4788 = vrot.slane %v4774, %v4787
        %v4789 = vcombine.low %v4733, %v4749
        %v4790 = vcombine.high %v4733, %v4749
        %v4792 = vunpack.c.l.s4 1934713408
        %v4793 = vunpack.c.0.s8 %v4792
        %v4794 = vlaneseq
        %v4795 = vshrl.u32 %v4794, 7
        %v4796 = vsub.s32 %v4793, %v4795
        %v4797 = vrot.slane %v4789, %v4796
        %v4799 = vunpack.c.l.s4 1934713408
        %v4800 = vunpack.c.0.s8 %v4799
        %v4801 = vlaneseq
        %v4802 = vshrl.u32 %v4801, 7
        %v4803 = vsub.s32 %v4800, %v4802
        %v4804 = vrot.slane %v4790, %v4803
        %v4805 = vcombine.low %v4740, %v4756
        %v4806 = vcombine.high %v4740, %v4756
        %v4808 = vunpack.c.l.s4 1934713408
        %v4809 = vunpack.c.0.s8 %v4808
        %v4810 = vlaneseq
        %v4811 = vshrl.u32 %v4810, 7
        %v4812 = vsub.s32 %v4809, %v4811
        %v4813 = vrot.slane %v4805, %v4812
        %v4815 = vunpack.c.l.s4 1934713408
        %v4816 = vunpack.c.0.s8 %v4815
        %v4817 = vlaneseq
        %v4818 = vshrl.u32 %v4817, 7
        %v4819 = vsub.s32 %v4816, %v4818
        %v4820 = vrot.slane %v4806, %v4819
        %v4821 = vcombine.low %v4765, %v4797
        %v4822 = vcombine.high %v4765, %v4797
        %v4823 = vcombine.low %v4772, %v4804
        %v4824 = vcombine.high %v4772, %v4804
        %v4825 = vcombine.low %v4781, %v4813
        %v4826 = vcombine.high %v4781, %v4813
        %v4827 = vcombine.low %v4788, %v4820
        %v4828 = vcombine.high %v4788, %v4820
        %v4829 = vld [vmem:[#allocation2] sm:$0xff]
        %v4830 = vld [vmem:[#allocation2 + $0x8] sm:$0xff]
        %v4831 = vld [vmem:[#allocation2 + $0x10] sm:$0xff]
        %v4832 = vld [vmem:[#allocation2 + $0x18] sm:$0xff]
        %v4833 = vld [vmem:[#allocation2 + $0x20] sm:$0xff]
        %v4834 = vld [vmem:[#allocation2 + $0x28] sm:$0xff]
        %v4835 = vld [vmem:[#allocation2 + $0x30] sm:$0xff]
        %v4836 = vld [vmem:[#allocation2 + $0x38] sm:$0xff]
        %v4838 = vsel %vm4478, %v4829, 0
        %v4841 = vsel %vm4478, %v4533, 0
        %4843 = vmatprep.subr.mxu0 0.0
        %4844 = vmatpush1.xpose.msra.mxu0 %v4841
        %4845 = vmatprep.subr.mxu0 0.0
        %4846 = vmatpush1.xpose.msra.mxu0 0.0
        %4847 = vmatprep.subr.mxu0 0.0
        %4848 = vmatpush1.xpose.msra.mxu0 0.0
        %4849 = vmatprep.subr.mxu0 0.0
        %4850 = vmatpush1.xpose.msra.mxu0 0.0
        %4851 = vmatprep.subr.mxu0 0.0
        %4852 = vmatpush1.xpose.msra.mxu0 0.0
        %4853 = vmatprep.subr.mxu0 0.0
        %4854 = vmatpush1.xpose.msra.mxu0 0.0
        %4855 = vmatprep.subr.mxu0 0.0
        %4856 = vmatpush1.xpose.msra.mxu0 0.0
        %4857 = vmatprep.subr.mxu0 0.0
        %4858 = vmatpush1.xpose.msra.mxu0 0.0
        %4859 = vmatprep.subr.mxu0 0.0
        %4860 = vmatpush1.xpose.msra.mxu0 0.0
        %4861 = vmatprep.subr.mxu0 0.0
        %4862 = vmatpush1.xpose.msra.mxu0 0.0
        %4863 = vmatprep.subr.mxu0 0.0
        %4864 = vmatpush1.xpose.msra.mxu0 0.0
        %4865 = vmatprep.subr.mxu0 0.0
        %4866 = vmatpush1.xpose.msra.mxu0 0.0
        %4867 = vmatprep.subr.mxu0 0.0
        %4868 = vmatpush1.xpose.msra.mxu0 0.0
        %4869 = vmatprep.subr.mxu0 0.0
        %4870 = vmatpush1.xpose.msra.mxu0 0.0
        %4871 = vmatprep.subr.mxu0 0.0
        %4872 = vmatpush1.xpose.msra.mxu0 0.0
        %4873 = vmatprep.subr.mxu0 0.0
        %4874 = vmatpush1.xpose.msra.mxu0 0.0
        %4875 = vmatprep.subr.mxu0 0.0
        %4876 = vmatpush1.xpose.msra.mxu0 0.0
        %4877 = vmatprep.subr.mxu0 0.0
        %4878 = vmatpush1.xpose.msra.mxu0 0.0
        %4879 = vmatprep.subr.mxu0 0.0
        %4880 = vmatpush1.xpose.msra.mxu0 0.0
        %4881 = vmatprep.subr.mxu0 0.0
        %4882 = vmatpush1.xpose.msra.mxu0 0.0
        %4883 = vmatprep.subr.mxu0 0.0
        %4884 = vmatpush1.xpose.msra.mxu0 0.0
        %4885 = vmatprep.subr.mxu0 0.0
        %4886 = vmatpush1.xpose.msra.mxu0 0.0
        %4887 = vmatprep.subr.mxu0 0.0
        %4888 = vmatpush1.xpose.msra.mxu0 0.0
        %4889 = vmatprep.subr.mxu0 0.0
        %4890 = vmatpush1.xpose.msra.mxu0 0.0
        %4891 = vmatprep.subr.mxu0 0.0
        %4892 = vmatpush1.xpose.msra.mxu0 0.0
        %4893 = vmatprep.subr.mxu0 0.0
        %4894 = vmatpush1.xpose.msra.mxu0 0.0
        %4895 = vmatprep.subr.mxu0 0.0
        %4896 = vmatpush1.xpose.msra.mxu0 0.0
        %4897 = vmatprep.subr.mxu0 0.0
        %4898 = vmatpush1.xpose.msra.mxu0 0.0
        %4899 = vmatprep.subr.mxu0 0.0
        %4900 = vmatpush1.xpose.msra.mxu0 0.0
        %4901 = vmatprep.subr.mxu0 0.0
        %4902 = vmatpush1.xpose.msra.mxu0 0.0
        %4903 = vmatprep.subr.mxu0 0.0
        %4904 = vmatpush1.xpose.msra.mxu0 0.0
        %4905 = vmatprep.subr.mxu0 0.0
        %4906 = vmatpush1.xpose.msra.mxu0 0.0
        %4907 = vmatprep.mubr.f32.mxu0 0.0
        %4908 = vmatmul.mubr.f32.gmra.mrb[0].mxu0 %v4838
        %v4909 = vpop.f32.mrb[0].mxu0
        %v4910 = vadd.f32 0.0, %v4909
        %v4911 = vpop.f32.mrb[0].mxu0
        %4912 = vdwg.mxu0
        %v4914 = vsel %vm4478, %v4830, 0
        %v4917 = vsel %vm4478, %v4534, 0
        %4919 = vmatprep.subr.mxu0 0.0
        %4920 = vmatpush1.xpose.msra.mxu0 %v4917
        %4921 = vmatprep.subr.mxu0 0.0
        %4922 = vmatpush1.xpose.msra.mxu0 0.0
        %4923 = vmatprep.subr.mxu0 0.0
        %4924 = vmatpush1.xpose.msra.mxu0 0.0
        %4925 = vmatprep.subr.mxu0 0.0
        %4926 = vmatpush1.xpose.msra.mxu0 0.0
        %4927 = vmatprep.subr.mxu0 0.0
        %4928 = vmatpush1.xpose.msra.mxu0 0.0
        %4929 = vmatprep.subr.mxu0 0.0
        %4930 = vmatpush1.xpose.msra.mxu0 0.0
        %4931 = vmatprep.subr.mxu0 0.0
        %4932 = vmatpush1.xpose.msra.mxu0 0.0
        %4933 = vmatprep.subr.mxu0 0.0
        %4934 = vmatpush1.xpose.msra.mxu0 0.0
        %4935 = vmatprep.subr.mxu0 0.0
        %4936 = vmatpush1.xpose.msra.mxu0 0.0
        %4937 = vmatprep.subr.mxu0 0.0
        %4938 = vmatpush1.xpose.msra.mxu0 0.0
        %4939 = vmatprep.subr.mxu0 0.0
        %4940 = vmatpush1.xpose.msra.mxu0 0.0
        %4941 = vmatprep.subr.mxu0 0.0
        %4942 = vmatpush1.xpose.msra.mxu0 0.0
        %4943 = vmatprep.subr.mxu0 0.0
        %4944 = vmatpush1.xpose.msra.mxu0 0.0
        %4945 = vmatprep.subr.mxu0 0.0
        %4946 = vmatpush1.xpose.msra.mxu0 0.0
        %4947 = vmatprep.subr.mxu0 0.0
        %4948 = vmatpush1.xpose.msra.mxu0 0.0
        %4949 = vmatprep.subr.mxu0 0.0
        %4950 = vmatpush1.xpose.msra.mxu0 0.0
        %4951 = vmatprep.subr.mxu0 0.0
        %4952 = vmatpush1.xpose.msra.mxu0 0.0
        %4953 = vmatprep.subr.mxu0 0.0
        %4954 = vmatpush1.xpose.msra.mxu0 0.0
        %4955 = vmatprep.subr.mxu0 0.0
        %4956 = vmatpush1.xpose.msra.mxu0 0.0
        %4957 = vmatprep.subr.mxu0 0.0
        %4958 = vmatpush1.xpose.msra.mxu0 0.0
        %4959 = vmatprep.subr.mxu0 0.0
        %4960 = vmatpush1.xpose.msra.mxu0 0.0
        %4961 = vmatprep.subr.mxu0 0.0
        %4962 = vmatpush1.xpose.msra.mxu0 0.0
        %4963 = vmatprep.subr.mxu0 0.0
        %4964 = vmatpush1.xpose.msra.mxu0 0.0
        %4965 = vmatprep.subr.mxu0 0.0
        %4966 = vmatpush1.xpose.msra.mxu0 0.0
        %4967 = vmatprep.subr.mxu0 0.0
        %4968 = vmatpush1.xpose.msra.mxu0 0.0
        %4969 = vmatprep.subr.mxu0 0.0
        %4970 = vmatpush1.xpose.msra.mxu0 0.0
        %4971 = vmatprep.subr.mxu0 0.0
        %4972 = vmatpush1.xpose.msra.mxu0 0.0
        %4973 = vmatprep.subr.mxu0 0.0
        %4974 = vmatpush1.xpose.msra.mxu0 0.0
        %4975 = vmatprep.subr.mxu0 0.0
        %4976 = vmatpush1.xpose.msra.mxu0 0.0
        %4977 = vmatprep.subr.mxu0 0.0
        %4978 = vmatpush1.xpose.msra.mxu0 0.0
        %4979 = vmatprep.subr.mxu0 0.0
        %4980 = vmatpush1.xpose.msra.mxu0 0.0
        %4981 = vmatprep.subr.mxu0 0.0
        %4982 = vmatpush1.xpose.msra.mxu0 0.0
        %4983 = vmatprep.mubr.f32.mxu0 0.0
        %4984 = vmatmul.mubr.f32.gmra.mrb[0].mxu0 %v4914
        %v4985 = vpop.f32.mrb[0].mxu0
        %v4986 = vadd.f32 0.0, %v4985
        %v4987 = vpop.f32.mrb[0].mxu0
        %4988 = vdwg.mxu0
        %v4990 = vsel %vm4478, %v4831, 0
        %v4993 = vsel %vm4478, %v4535, 0
        %4995 = vmatprep.subr.mxu0 0.0
        %4996 = vmatpush1.xpose.msra.mxu0 %v4993
        %4997 = vmatprep.subr.mxu0 0.0
        %4998 = vmatpush1.xpose.msra.mxu0 0.0
        %4999 = vmatprep.subr.mxu0 0.0
        %5000 = vmatpush1.xpose.msra.mxu0 0.0
        %5001 = vmatprep.subr.mxu0 0.0
        %5002 = vmatpush1.xpose.msra.mxu0 0.0
        %5003 = vmatprep.subr.mxu0 0.0
        %5004 = vmatpush1.xpose.msra.mxu0 0.0
        %5005 = vmatprep.subr.mxu0 0.0
        %5006 = vmatpush1.xpose.msra.mxu0 0.0
        %5007 = vmatprep.subr.mxu0 0.0
        %5008 = vmatpush1.xpose.msra.mxu0 0.0
        %5009 = vmatprep.subr.mxu0 0.0
        %5010 = vmatpush1.xpose.msra.mxu0 0.0
        %5011 = vmatprep.subr.mxu0 0.0
        %5012 = vmatpush1.xpose.msra.mxu0 0.0
        %5013 = vmatprep.subr.mxu0 0.0
        %5014 = vmatpush1.xpose.msra.mxu0 0.0
        %5015 = vmatprep.subr.mxu0 0.0
        %5016 = vmatpush1.xpose.msra.mxu0 0.0
        %5017 = vmatprep.subr.mxu0 0.0
        %5018 = vmatpush1.xpose.msra.mxu0 0.0
        %5019 = vmatprep.subr.mxu0 0.0
        %5020 = vmatpush1.xpose.msra.mxu0 0.0
        %5021 = vmatprep.subr.mxu0 0.0
        %5022 = vmatpush1.xpose.msra.mxu0 0.0
        %5023 = vmatprep.subr.mxu0 0.0
        %5024 = vmatpush1.xpose.msra.mxu0 0.0
        %5025 = vmatprep.subr.mxu0 0.0
        %5026 = vmatpush1.xpose.msra.mxu0 0.0
        %5027 = vmatprep.subr.mxu0 0.0
        %5028 = vmatpush1.xpose.msra.mxu0 0.0
        %5029 = vmatprep.subr.mxu0 0.0
        %5030 = vmatpush1.xpose.msra.mxu0 0.0
        %5031 = vmatprep.subr.mxu0 0.0
        %5032 = vmatpush1.xpose.msra.mxu0 0.0
        %5033 = vmatprep.subr.mxu0 0.0
        %5034 = vmatpush1.xpose.msra.mxu0 0.0
        %5035 = vmatprep.subr.mxu0 0.0
        %5036 = vmatpush1.xpose.msra.mxu0 0.0
        %5037 = vmatprep.subr.mxu0 0.0
        %5038 = vmatpush1.xpose.msra.mxu0 0.0
        %5039 = vmatprep.subr.mxu0 0.0
        %5040 = vmatpush1.xpose.msra.mxu0 0.0
        %5041 = vmatprep.subr.mxu0 0.0
        %5042 = vmatpush1.xpose.msra.mxu0 0.0
        %5043 = vmatprep.subr.mxu0 0.0
        %5044 = vmatpush1.xpose.msra.mxu0 0.0
        %5045 = vmatprep.subr.mxu0 0.0
        %5046 = vmatpush1.xpose.msra.mxu0 0.0
        %5047 = vmatprep.subr.mxu0 0.0
        %5048 = vmatpush1.xpose.msra.mxu0 0.0
        %5049 = vmatprep.subr.mxu0 0.0
        %5050 = vmatpush1.xpose.msra.mxu0 0.0
        %5051 = vmatprep.subr.mxu0 0.0
        %5052 = vmatpush1.xpose.msra.mxu0 0.0
        %5053 = vmatprep.subr.mxu0 0.0
        %5054 = vmatpush1.xpose.msra.mxu0 0.0
        %5055 = vmatprep.subr.mxu0 0.0
        %5056 = vmatpush1.xpose.msra.mxu0 0.0
        %5057 = vmatprep.subr.mxu0 0.0
        %5058 = vmatpush1.xpose.msra.mxu0 0.0
        %5059 = vmatprep.mubr.f32.mxu0 0.0
        %5060 = vmatmul.mubr.f32.gmra.mrb[0].mxu0 %v4990
        %v5061 = vpop.f32.mrb[0].mxu0
        %v5062 = vadd.f32 0.0, %v5061
        %v5063 = vpop.f32.mrb[0].mxu0
        %5064 = vdwg.mxu0
        %v5066 = vsel %vm4478, %v4832, 0
        %v5069 = vsel %vm4478, %v4536, 0
        %5071 = vmatprep.subr.mxu0 0.0
        %5072 = vmatpush1.xpose.msra.mxu0 %v5069
        %5073 = vmatprep.subr.mxu0 0.0
        %5074 = vmatpush1.xpose.msra.mxu0 0.0
        %5075 = vmatprep.subr.mxu0 0.0
        %5076 = vmatpush1.xpose.msra.mxu0 0.0
        %5077 = vmatprep.subr.mxu0 0.0
        %5078 = vmatpush1.xpose.msra.mxu0 0.0
        %5079 = vmatprep.subr.mxu0 0.0
        %5080 = vmatpush1.xpose.msra.mxu0 0.0
        %5081 = vmatprep.subr.mxu0 0.0
        %5082 = vmatpush1.xpose.msra.mxu0 0.0
        %5083 = vmatprep.subr.mxu0 0.0
        %5084 = vmatpush1.xpose.msra.mxu0 0.0
        %5085 = vmatprep.subr.mxu0 0.0
        %5086 = vmatpush1.xpose.msra.mxu0 0.0
        %5087 = vmatprep.subr.mxu0 0.0
        %5088 = vmatpush1.xpose.msra.mxu0 0.0
        %5089 = vmatprep.subr.mxu0 0.0
        %5090 = vmatpush1.xpose.msra.mxu0 0.0
        %5091 = vmatprep.subr.mxu0 0.0
        %5092 = vmatpush1.xpose.msra.mxu0 0.0
        %5093 = vmatprep.subr.mxu0 0.0
        %5094 = vmatpush1.xpose.msra.mxu0 0.0
        %5095 = vmatprep.subr.mxu0 0.0
        %5096 = vmatpush1.xpose.msra.mxu0 0.0
        %5097 = vmatprep.subr.mxu0 0.0
        %5098 = vmatpush1.xpose.msra.mxu0 0.0
        %5099 = vmatprep.subr.mxu0 0.0
        %5100 = vmatpush1.xpose.msra.mxu0 0.0
        %5101 = vmatprep.subr.mxu0 0.0
        %5102 = vmatpush1.xpose.msra.mxu0 0.0
        %5103 = vmatprep.subr.mxu0 0.0
        %5104 = vmatpush1.xpose.msra.mxu0 0.0
        %5105 = vmatprep.subr.mxu0 0.0
        %5106 = vmatpush1.xpose.msra.mxu0 0.0
        %5107 = vmatprep.subr.mxu0 0.0
        %5108 = vmatpush1.xpose.msra.mxu0 0.0
        %5109 = vmatprep.subr.mxu0 0.0
        %5110 = vmatpush1.xpose.msra.mxu0 0.0
        %5111 = vmatprep.subr.mxu0 0.0
        %5112 = vmatpush1.xpose.msra.mxu0 0.0
        %5113 = vmatprep.subr.mxu0 0.0
        %5114 = vmatpush1.xpose.msra.mxu0 0.0
        %5115 = vmatprep.subr.mxu0 0.0
        %5116 = vmatpush1.xpose.msra.mxu0 0.0
        %5117 = vmatprep.subr.mxu0 0.0
        %5118 = vmatpush1.xpose.msra.mxu0 0.0
        %5119 = vmatprep.subr.mxu0 0.0
        %5120 = vmatpush1.xpose.msra.mxu0 0.0
        %5121 = vmatprep.subr.mxu0 0.0
        %5122 = vmatpush1.xpose.msra.mxu0 0.0
        %5123 = vmatprep.subr.mxu0 0.0
        %5124 = vmatpush1.xpose.msra.mxu0 0.0
        %5125 = vmatprep.subr.mxu0 0.0
        %5126 = vmatpush1.xpose.msra.mxu0 0.0
        %5127 = vmatprep.subr.mxu0 0.0
        %5128 = vmatpush1.xpose.msra.mxu0 0.0
        %5129 = vmatprep.subr.mxu0 0.0
        %5130 = vmatpush1.xpose.msra.mxu0 0.0
        %5131 = vmatprep.subr.mxu0 0.0
        %5132 = vmatpush1.xpose.msra.mxu0 0.0
        %5133 = vmatprep.subr.mxu0 0.0
        %5134 = vmatpush1.xpose.msra.mxu0 0.0
        %5135 = vmatprep.mubr.f32.mxu0 0.0
        %5136 = vmatmul.mubr.f32.gmra.mrb[0].mxu0 %v5066
        %v5137 = vpop.f32.mrb[0].mxu0
        %v5138 = vadd.f32 0.0, %v5137
        %v5139 = vpop.f32.mrb[0].mxu0
        %5140 = vdwg.mxu0
        %v5142 = vsel %vm4478, %v4833, 0
        %v5145 = vsel %vm4478, %v4537, 0
        %5147 = vmatprep.subr.mxu0 0.0
        %5148 = vmatpush1.xpose.msra.mxu0 %v5145
        %5149 = vmatprep.subr.mxu0 0.0
        %5150 = vmatpush1.xpose.msra.mxu0 0.0
        %5151 = vmatprep.subr.mxu0 0.0
        %5152 = vmatpush1.xpose.msra.mxu0 0.0
        %5153 = vmatprep.subr.mxu0 0.0
        %5154 = vmatpush1.xpose.msra.mxu0 0.0
        %5155 = vmatprep.subr.mxu0 0.0
        %5156 = vmatpush1.xpose.msra.mxu0 0.0
        %5157 = vmatprep.subr.mxu0 0.0
        %5158 = vmatpush1.xpose.msra.mxu0 0.0
        %5159 = vmatprep.subr.mxu0 0.0
        %5160 = vmatpush1.xpose.msra.mxu0 0.0
        %5161 = vmatprep.subr.mxu0 0.0
        %5162 = vmatpush1.xpose.msra.mxu0 0.0
        %5163 = vmatprep.subr.mxu0 0.0
        %5164 = vmatpush1.xpose.msra.mxu0 0.0
        %5165 = vmatprep.subr.mxu0 0.0
        %5166 = vmatpush1.xpose.msra.mxu0 0.0
        %5167 = vmatprep.subr.mxu0 0.0
        %5168 = vmatpush1.xpose.msra.mxu0 0.0
        %5169 = vmatprep.subr.mxu0 0.0
        %5170 = vmatpush1.xpose.msra.mxu0 0.0
        %5171 = vmatprep.subr.mxu0 0.0
        %5172 = vmatpush1.xpose.msra.mxu0 0.0
        %5173 = vmatprep.subr.mxu0 0.0
        %5174 = vmatpush1.xpose.msra.mxu0 0.0
        %5175 = vmatprep.subr.mxu0 0.0
        %5176 = vmatpush1.xpose.msra.mxu0 0.0
        %5177 = vmatprep.subr.mxu0 0.0
        %5178 = vmatpush1.xpose.msra.mxu0 0.0
        %5179 = vmatprep.subr.mxu0 0.0
        %5180 = vmatpush1.xpose.msra.mxu0 0.0
        %5181 = vmatprep.subr.mxu0 0.0
        %5182 = vmatpush1.xpose.msra.mxu0 0.0
        %5183 = vmatprep.subr.mxu0 0.0
        %5184 = vmatpush1.xpose.msra.mxu0 0.0
        %5185 = vmatprep.subr.mxu0 0.0
        %5186 = vmatpush1.xpose.msra.mxu0 0.0
        %5187 = vmatprep.subr.mxu0 0.0
        %5188 = vmatpush1.xpose.msra.mxu0 0.0
        %5189 = vmatprep.subr.mxu0 0.0
        %5190 = vmatpush1.xpose.msra.mxu0 0.0
        %5191 = vmatprep.subr.mxu0 0.0
        %5192 = vmatpush1.xpose.msra.mxu0 0.0
        %5193 = vmatprep.subr.mxu0 0.0
        %5194 = vmatpush1.xpose.msra.mxu0 0.0
        %5195 = vmatprep.subr.mxu0 0.0
        %5196 = vmatpush1.xpose.msra.mxu0 0.0
        %5197 = vmatprep.subr.mxu0 0.0
        %5198 = vmatpush1.xpose.msra.mxu0 0.0
        %5199 = vmatprep.subr.mxu0 0.0
        %5200 = vmatpush1.xpose.msra.mxu0 0.0
        %5201 = vmatprep.subr.mxu0 0.0
        %5202 = vmatpush1.xpose.msra.mxu0 0.0
        %5203 = vmatprep.subr.mxu0 0.0
        %5204 = vmatpush1.xpose.msra.mxu0 0.0
        %5205 = vmatprep.subr.mxu0 0.0
        %5206 = vmatpush1.xpose.msra.mxu0 0.0
        %5207 = vmatprep.subr.mxu0 0.0
        %5208 = vmatpush1.xpose.msra.mxu0 0.0
        %5209 = vmatprep.subr.mxu0 0.0
        %5210 = vmatpush1.xpose.msra.mxu0 0.0
        %5211 = vmatprep.mubr.f32.mxu0 0.0
        %5212 = vmatmul.mubr.f32.gmra.mrb[0].mxu0 %v5142
        %v5213 = vpop.f32.mrb[0].mxu0
        %v5214 = vadd.f32 0.0, %v5213
        %v5215 = vpop.f32.mrb[0].mxu0
        %5216 = vdwg.mxu0
        %v5218 = vsel %vm4478, %v4834, 0
        %v5221 = vsel %vm4478, %v4538, 0
        %5223 = vmatprep.subr.mxu0 0.0
        %5224 = vmatpush1.xpose.msra.mxu0 %v5221
        %5225 = vmatprep.subr.mxu0 0.0
        %5226 = vmatpush1.xpose.msra.mxu0 0.0
        %5227 = vmatprep.subr.mxu0 0.0
        %5228 = vmatpush1.xpose.msra.mxu0 0.0
        %5229 = vmatprep.subr.mxu0 0.0
        %5230 = vmatpush1.xpose.msra.mxu0 0.0
        %5231 = vmatprep.subr.mxu0 0.0
        %5232 = vmatpush1.xpose.msra.mxu0 0.0
        %5233 = vmatprep.subr.mxu0 0.0
        %5234 = vmatpush1.xpose.msra.mxu0 0.0
        %5235 = vmatprep.subr.mxu0 0.0
        %5236 = vmatpush1.xpose.msra.mxu0 0.0
        %5237 = vmatprep.subr.mxu0 0.0
        %5238 = vmatpush1.xpose.msra.mxu0 0.0
        %5239 = vmatprep.subr.mxu0 0.0
        %5240 = vmatpush1.xpose.msra.mxu0 0.0
        %5241 = vmatprep.subr.mxu0 0.0
        %5242 = vmatpush1.xpose.msra.mxu0 0.0
        %5243 = vmatprep.subr.mxu0 0.0
        %5244 = vmatpush1.xpose.msra.mxu0 0.0
        %5245 = vmatprep.subr.mxu0 0.0
        %5246 = vmatpush1.xpose.msra.mxu0 0.0
        %5247 = vmatprep.subr.mxu0 0.0
        %5248 = vmatpush1.xpose.msra.mxu0 0.0
        %5249 = vmatprep.subr.mxu0 0.0
        %5250 = vmatpush1.xpose.msra.mxu0 0.0
        %5251 = vmatprep.subr.mxu0 0.0
        %5252 = vmatpush1.xpose.msra.mxu0 0.0
        %5253 = vmatprep.subr.mxu0 0.0
        %5254 = vmatpush1.xpose.msra.mxu0 0.0
        %5255 = vmatprep.subr.mxu0 0.0
        %5256 = vmatpush1.xpose.msra.mxu0 0.0
        %5257 = vmatprep.subr.mxu0 0.0
        %5258 = vmatpush1.xpose.msra.mxu0 0.0
        %5259 = vmatprep.subr.mxu0 0.0
        %5260 = vmatpush1.xpose.msra.mxu0 0.0
        %5261 = vmatprep.subr.mxu0 0.0
        %5262 = vmatpush1.xpose.msra.mxu0 0.0
        %5263 = vmatprep.subr.mxu0 0.0
        %5264 = vmatpush1.xpose.msra.mxu0 0.0
        %5265 = vmatprep.subr.mxu0 0.0
        %5266 = vmatpush1.xpose.msra.mxu0 0.0
        %5267 = vmatprep.subr.mxu0 0.0
        %5268 = vmatpush1.xpose.msra.mxu0 0.0
        %5269 = vmatprep.subr.mxu0 0.0
        %5270 = vmatpush1.xpose.msra.mxu0 0.0
        %5271 = vmatprep.subr.mxu0 0.0
        %5272 = vmatpush1.xpose.msra.mxu0 0.0
        %5273 = vmatprep.subr.mxu0 0.0
        %5274 = vmatpush1.xpose.msra.mxu0 0.0
        %5275 = vmatprep.subr.mxu0 0.0
        %5276 = vmatpush1.xpose.msra.mxu0 0.0
        %5277 = vmatprep.subr.mxu0 0.0
        %5278 = vmatpush1.xpose.msra.mxu0 0.0
        %5279 = vmatprep.subr.mxu0 0.0
        %5280 = vmatpush1.xpose.msra.mxu0 0.0
        %5281 = vmatprep.subr.mxu0 0.0
        %5282 = vmatpush1.xpose.msra.mxu0 0.0
        %5283 = vmatprep.subr.mxu0 0.0
        %5284 = vmatpush1.xpose.msra.mxu0 0.0
        %5285 = vmatprep.subr.mxu0 0.0
        %5286 = vmatpush1.xpose.msra.mxu0 0.0
        %5287 = vmatprep.mubr.f32.mxu0 0.0
        %5288 = vmatmul.mubr.f32.gmra.mrb[0].mxu0 %v5218
        %v5289 = vpop.f32.mrb[0].mxu0
        %v5290 = vadd.f32 0.0, %v5289
        %v5291 = vpop.f32.mrb[0].mxu0
        %5292 = vdwg.mxu0
        %v5294 = vsel %vm4478, %v4835, 0
        %v5297 = vsel %vm4478, %v4539, 0
        %5299 = vmatprep.subr.mxu0 0.0
        %5300 = vmatpush1.xpose.msra.mxu0 %v5297
        %5301 = vmatprep.subr.mxu0 0.0
        %5302 = vmatpush1.xpose.msra.mxu0 0.0
        %5303 = vmatprep.subr.mxu0 0.0
        %5304 = vmatpush1.xpose.msra.mxu0 0.0
        %5305 = vmatprep.subr.mxu0 0.0
        %5306 = vmatpush1.xpose.msra.mxu0 0.0
        %5307 = vmatprep.subr.mxu0 0.0
        %5308 = vmatpush1.xpose.msra.mxu0 0.0
        %5309 = vmatprep.subr.mxu0 0.0
        %5310 = vmatpush1.xpose.msra.mxu0 0.0
        %5311 = vmatprep.subr.mxu0 0.0
        %5312 = vmatpush1.xpose.msra.mxu0 0.0
        %5313 = vmatprep.subr.mxu0 0.0
        %5314 = vmatpush1.xpose.msra.mxu0 0.0
        %5315 = vmatprep.subr.mxu0 0.0
        %5316 = vmatpush1.xpose.msra.mxu0 0.0
        %5317 = vmatprep.subr.mxu0 0.0
        %5318 = vmatpush1.xpose.msra.mxu0 0.0
        %5319 = vmatprep.subr.mxu0 0.0
        %5320 = vmatpush1.xpose.msra.mxu0 0.0
        %5321 = vmatprep.subr.mxu0 0.0
        %5322 = vmatpush1.xpose.msra.mxu0 0.0
        %5323 = vmatprep.subr.mxu0 0.0
        %5324 = vmatpush1.xpose.msra.mxu0 0.0
        %5325 = vmatprep.subr.mxu0 0.0
        %5326 = vmatpush1.xpose.msra.mxu0 0.0
        %5327 = vmatprep.subr.mxu0 0.0
        %5328 = vmatpush1.xpose.msra.mxu0 0.0
        %5329 = vmatprep.subr.mxu0 0.0
        %5330 = vmatpush1.xpose.msra.mxu0 0.0
        %5331 = vmatprep.subr.mxu0 0.0
        %5332 = vmatpush1.xpose.msra.mxu0 0.0
        %5333 = vmatprep.subr.mxu0 0.0
        %5334 = vmatpush1.xpose.msra.mxu0 0.0
        %5335 = vmatprep.subr.mxu0 0.0
        %5336 = vmatpush1.xpose.msra.mxu0 0.0
        %5337 = vmatprep.subr.mxu0 0.0
        %5338 = vmatpush1.xpose.msra.mxu0 0.0
        %5339 = vmatprep.subr.mxu0 0.0
        %5340 = vmatpush1.xpose.msra.mxu0 0.0
        %5341 = vmatprep.subr.mxu0 0.0
        %5342 = vmatpush1.xpose.msra.mxu0 0.0
        %5343 = vmatprep.subr.mxu0 0.0
        %5344 = vmatpush1.xpose.msra.mxu0 0.0
        %5345 = vmatprep.subr.mxu0 0.0
        %5346 = vmatpush1.xpose.msra.mxu0 0.0
        %5347 = vmatprep.subr.mxu0 0.0
        %5348 = vmatpush1.xpose.msra.mxu0 0.0
        %5349 = vmatprep.subr.mxu0 0.0
        %5350 = vmatpush1.xpose.msra.mxu0 0.0
        %5351 = vmatprep.subr.mxu0 0.0
        %5352 = vmatpush1.xpose.msra.mxu0 0.0
        %5353 = vmatprep.subr.mxu0 0.0
        %5354 = vmatpush1.xpose.msra.mxu0 0.0
        %5355 = vmatprep.subr.mxu0 0.0
        %5356 = vmatpush1.xpose.msra.mxu0 0.0
        %5357 = vmatprep.subr.mxu0 0.0
        %5358 = vmatpush1.xpose.msra.mxu0 0.0
        %5359 = vmatprep.subr.mxu0 0.0
        %5360 = vmatpush1.xpose.msra.mxu0 0.0
        %5361 = vmatprep.subr.mxu0 0.0
        %5362 = vmatpush1.xpose.msra.mxu0 0.0
        %5363 = vmatprep.mubr.f32.mxu0 0.0
        %5364 = vmatmul.mubr.f32.gmra.mrb[0].mxu0 %v5294
        %v5365 = vpop.f32.mrb[0].mxu0
        %v5366 = vadd.f32 0.0, %v5365
        %v5367 = vpop.f32.mrb[0].mxu0
        %5368 = vdwg.mxu0
        %v5370 = vsel %vm4478, %v4836, 0
        %v5373 = vsel %vm4478, %v4540, 0
        %5375 = vmatprep.subr.mxu0 0.0
        %5376 = vmatpush1.xpose.msra.mxu0 %v5373
        %5377 = vmatprep.subr.mxu0 0.0
        %5378 = vmatpush1.xpose.msra.mxu0 0.0
        %5379 = vmatprep.subr.mxu0 0.0
        %5380 = vmatpush1.xpose.msra.mxu0 0.0
        %5381 = vmatprep.subr.mxu0 0.0
        %5382 = vmatpush1.xpose.msra.mxu0 0.0
        %5383 = vmatprep.subr.mxu0 0.0
        %5384 = vmatpush1.xpose.msra.mxu0 0.0
        %5385 = vmatprep.subr.mxu0 0.0
        %5386 = vmatpush1.xpose.msra.mxu0 0.0
        %5387 = vmatprep.subr.mxu0 0.0
        %5388 = vmatpush1.xpose.msra.mxu0 0.0
        %5389 = vmatprep.subr.mxu0 0.0
        %5390 = vmatpush1.xpose.msra.mxu0 0.0
        %5391 = vmatprep.subr.mxu0 0.0
        %5392 = vmatpush1.xpose.msra.mxu0 0.0
        %5393 = vmatprep.subr.mxu0 0.0
        %5394 = vmatpush1.xpose.msra.mxu0 0.0
        %5395 = vmatprep.subr.mxu0 0.0
        %5396 = vmatpush1.xpose.msra.mxu0 0.0
        %5397 = vmatprep.subr.mxu0 0.0
        %5398 = vmatpush1.xpose.msra.mxu0 0.0
        %5399 = vmatprep.subr.mxu0 0.0
        %5400 = vmatpush1.xpose.msra.mxu0 0.0
        %5401 = vmatprep.subr.mxu0 0.0
        %5402 = vmatpush1.xpose.msra.mxu0 0.0
        %5403 = vmatprep.subr.mxu0 0.0
        %5404 = vmatpush1.xpose.msra.mxu0 0.0
        %5405 = vmatprep.subr.mxu0 0.0
        %5406 = vmatpush1.xpose.msra.mxu0 0.0
        %5407 = vmatprep.subr.mxu0 0.0
        %5408 = vmatpush1.xpose.msra.mxu0 0.0
        %5409 = vmatprep.subr.mxu0 0.0
        %5410 = vmatpush1.xpose.msra.mxu0 0.0
        %5411 = vmatprep.subr.mxu0 0.0
        %5412 = vmatpush1.xpose.msra.mxu0 0.0
        %5413 = vmatprep.subr.mxu0 0.0
        %5414 = vmatpush1.xpose.msra.mxu0 0.0
        %5415 = vmatprep.subr.mxu0 0.0
        %5416 = vmatpush1.xpose.msra.mxu0 0.0
        %5417 = vmatprep.subr.mxu0 0.0
        %5418 = vmatpush1.xpose.msra.mxu0 0.0
        %5419 = vmatprep.subr.mxu0 0.0
        %5420 = vmatpush1.xpose.msra.mxu0 0.0
        %5421 = vmatprep.subr.mxu0 0.0
        %5422 = vmatpush1.xpose.msra.mxu0 0.0
        %5423 = vmatprep.subr.mxu0 0.0
        %5424 = vmatpush1.xpose.msra.mxu0 0.0
        %5425 = vmatprep.subr.mxu0 0.0
        %5426 = vmatpush1.xpose.msra.mxu0 0.0
        %5427 = vmatprep.subr.mxu0 0.0
        %5428 = vmatpush1.xpose.msra.mxu0 0.0
        %5429 = vmatprep.subr.mxu0 0.0
        %5430 = vmatpush1.xpose.msra.mxu0 0.0
        %5431 = vmatprep.subr.mxu0 0.0
        %5432 = vmatpush1.xpose.msra.mxu0 0.0
        %5433 = vmatprep.subr.mxu0 0.0
        %5434 = vmatpush1.xpose.msra.mxu0 0.0
        %5435 = vmatprep.subr.mxu0 0.0
        %5436 = vmatpush1.xpose.msra.mxu0 0.0
        %5437 = vmatprep.subr.mxu0 0.0
        %5438 = vmatpush1.xpose.msra.mxu0 0.0
        %5439 = vmatprep.mubr.f32.mxu0 0.0
        %5440 = vmatmul.mubr.f32.gmra.mrb[0].mxu0 %v5370
        %v5441 = vpop.f32.mrb[0].mxu0
        %v5442 = vadd.f32 0.0, %v5441
        %v5443 = vpop.f32.mrb[0].mxu0
        %5444 = vdwg.mxu0
        %v5445 = vld [vmem:[#allocation3] sm:$0xff]
        %v5446 = vld [vmem:[#allocation3 + $0x8] sm:$0xff]
        %v5447 = vld [vmem:[#allocation3 + $0x10] sm:$0xff]
        %v5448 = vld [vmem:[#allocation3 + $0x18] sm:$0xff]
        %v5449 = vld [vmem:[#allocation3 + $0x20] sm:$0xff]
        %v5450 = vld [vmem:[#allocation3 + $0x28] sm:$0xff]
        %v5451 = vld [vmem:[#allocation3 + $0x30] sm:$0xff]
        %v5452 = vld [vmem:[#allocation3 + $0x38] sm:$0xff]
        %vm5453 = vcmask 64512
        %v5454 = vsel %vm5453, %v4910, -inf
        %5455 = vmax.xlane.f32.xlu0 %v5454
        %v5456 = vpop.xlane.xlu0 %5455
        %v5457 = vsel %vm5453, %v4986, -inf
        %5458 = vmax.xlane.f32.xlu0 %v5457
        %v5459 = vpop.xlane.xlu0 %5458
        %v5460 = vsel %vm5453, %v5062, -inf
        %5461 = vmax.xlane.f32.xlu0 %v5460
        %v5462 = vpop.xlane.xlu0 %5461
        %v5463 = vsel %vm5453, %v5138, -inf
        %5464 = vmax.xlane.f32.xlu0 %v5463
        %v5465 = vpop.xlane.xlu0 %5464
        %v5466 = vsel %vm5453, %v5214, -inf
        %5467 = vmax.xlane.f32.xlu0 %v5466
        %v5468 = vpop.xlane.xlu0 %5467
        %v5469 = vsel %vm5453, %v5290, -inf
        %5470 = vmax.xlane.f32.xlu0 %v5469
        %v5471 = vpop.xlane.xlu0 %5470
        %v5472 = vsel %vm5453, %v5366, -inf
        %5473 = vmax.xlane.f32.xlu0 %v5472
        %v5474 = vpop.xlane.xlu0 %5473
        %v5475 = vsel %vm5453, %v5442, -inf
        %5476 = vmax.xlane.f32.xlu0 %v5475
        %v5477 = vpop.xlane.xlu0 %5476
        %v5478 = vmax.f32 %v5445, %v5456
        %v5479 = vmax.f32 %v5446, %v5459
        %v5480 = vmax.f32 %v5447, %v5462
        %v5481 = vmax.f32 %v5448, %v5465
        %v5482 = vmax.f32 %v5449, %v5468
        %v5483 = vmax.f32 %v5450, %v5471
        %v5484 = vmax.f32 %v5451, %v5474
        %v5485 = vmax.f32 %v5452, %v5477
        %v5486 = vsub.f32 %v5445, %v5478
        %v5487 = vsub.f32 %v5446, %v5479
        %v5488 = vsub.f32 %v5447, %v5480
        %v5489 = vsub.f32 %v5448, %v5481
        %v5490 = vsub.f32 %v5449, %v5482
        %v5491 = vsub.f32 %v5450, %v5483
        %v5492 = vsub.f32 %v5451, %v5484
        %v5493 = vsub.f32 %v5452, %v5485
        %v5494 = vmul.f32 %v5486, 1.442695
        %v5495 = vpow.pop %v5494
        %v5496 = vmul.f32 %v5487, 1.442695
        %v5497 = vpow.pop %v5496
        %v5498 = vmul.f32 %v5488, 1.442695
        %v5499 = vpow.pop %v5498
        %v5500 = vmul.f32 %v5489, 1.442695
        %v5501 = vpow.pop %v5500
        %v5502 = vmul.f32 %v5490, 1.442695
        %v5503 = vpow.pop %v5502
        %v5504 = vmul.f32 %v5491, 1.442695
        %v5505 = vpow.pop %v5504
        %v5506 = vmul.f32 %v5492, 1.442695
        %v5507 = vpow.pop %v5506
        %v5508 = vmul.f32 %v5493, 1.442695
        %v5509 = vpow.pop %v5508
        %5511 = vset.pattern.permute.xlu0 0
        %5512 = vperm.xlu0 %5511, %v5478
        %v5513 = vpop.permute.xlu0 %5512
        %5516 = vset.pattern.permute.xlu0 0
        %5517 = vperm.xlu0 %5516, %v5479
        %v5518 = vpop.permute.xlu0 %5517
        %5521 = vset.pattern.permute.xlu0 0
        %5522 = vperm.xlu0 %5521, %v5480
        %v5523 = vpop.permute.xlu0 %5522
        %5526 = vset.pattern.permute.xlu0 0
        %5527 = vperm.xlu0 %5526, %v5481
        %v5528 = vpop.permute.xlu0 %5527
        %5531 = vset.pattern.permute.xlu0 0
        %5532 = vperm.xlu0 %5531, %v5482
        %v5533 = vpop.permute.xlu0 %5532
        %5536 = vset.pattern.permute.xlu0 0
        %5537 = vperm.xlu0 %5536, %v5483
        %v5538 = vpop.permute.xlu0 %5537
        %5541 = vset.pattern.permute.xlu0 0
        %5542 = vperm.xlu0 %5541, %v5484
        %v5543 = vpop.permute.xlu0 %5542
        %5546 = vset.pattern.permute.xlu0 0
        %5547 = vperm.xlu0 %5546, %v5485
        %v5548 = vpop.permute.xlu0 %5547
        %v5550 = vsub.f32 %v4910, %v5513
        %v5551 = vsub.f32 %v4986, %v5518
        %v5552 = vsub.f32 %v5062, %v5523
        %v5553 = vsub.f32 %v5138, %v5528
        %v5554 = vsub.f32 %v5214, %v5533
        %v5555 = vsub.f32 %v5290, %v5538
        %v5556 = vsub.f32 %v5366, %v5543
        %v5557 = vsub.f32 %v5442, %v5548
        %v5558 = vmul.f32 %v5550, 1.442695
        %v5559 = vpow.pop %v5558
        %v5560 = vmul.f32 %v5551, 1.442695
        %v5561 = vpow.pop %v5560
        %v5562 = vmul.f32 %v5552, 1.442695
        %v5563 = vpow.pop %v5562
        %v5564 = vmul.f32 %v5553, 1.442695
        %v5565 = vpow.pop %v5564
        %v5566 = vmul.f32 %v5554, 1.442695
        %v5567 = vpow.pop %v5566
        %v5568 = vmul.f32 %v5555, 1.442695
        %v5569 = vpow.pop %v5568
        %v5570 = vmul.f32 %v5556, 1.442695
        %v5571 = vpow.pop %v5570
        %v5572 = vmul.f32 %v5557, 1.442695
        %v5573 = vpow.pop %v5572
        %v5574 = vld [vmem:[#allocation4] sm:$0xff]
        %v5575 = vld [vmem:[#allocation4 + $0x8] sm:$0xff]
        %v5576 = vld [vmem:[#allocation4 + $0x10] sm:$0xff]
        %v5577 = vld [vmem:[#allocation4 + $0x18] sm:$0xff]
        %v5578 = vld [vmem:[#allocation4 + $0x20] sm:$0xff]
        %v5579 = vld [vmem:[#allocation4 + $0x28] sm:$0xff]
        %v5580 = vld [vmem:[#allocation4 + $0x30] sm:$0xff]
        %v5581 = vld [vmem:[#allocation4 + $0x38] sm:$0xff]
        %v5582 = vmul.f32 %v5495, %v5574
        %v5583 = vmul.f32 %v5497, %v5575
        %v5584 = vmul.f32 %v5499, %v5576
        %v5585 = vmul.f32 %v5501, %v5577
        %v5586 = vmul.f32 %v5503, %v5578
        %v5587 = vmul.f32 %v5505, %v5579
        %v5588 = vmul.f32 %v5507, %v5580
        %v5589 = vmul.f32 %v5509, %v5581
        %v5590 = vsel %vm5453, %v5559, 0.0
        %5591 = vadd.xlane.f32.xlu0 %v5590
        %v5592 = vpop.xlane.xlu0 %5591
        %v5593 = vsel %vm5453, %v5561, 0.0
        %5594 = vadd.xlane.f32.xlu0 %v5593
        %v5595 = vpop.xlane.xlu0 %5594
        %v5596 = vsel %vm5453, %v5563, 0.0
        %5597 = vadd.xlane.f32.xlu0 %v5596
        %v5598 = vpop.xlane.xlu0 %5597
        %v5599 = vsel %vm5453, %v5565, 0.0
        %5600 = vadd.xlane.f32.xlu0 %v5599
        %v5601 = vpop.xlane.xlu0 %5600
        %v5602 = vsel %vm5453, %v5567, 0.0
        %5603 = vadd.xlane.f32.xlu0 %v5602
        %v5604 = vpop.xlane.xlu0 %5603
        %v5605 = vsel %vm5453, %v5569, 0.0
        %5606 = vadd.xlane.f32.xlu0 %v5605
        %v5607 = vpop.xlane.xlu0 %5606
        %v5608 = vsel %vm5453, %v5571, 0.0
        %5609 = vadd.xlane.f32.xlu0 %v5608
        %v5610 = vpop.xlane.xlu0 %5609
        %v5611 = vsel %vm5453, %v5573, 0.0
        %5612 = vadd.xlane.f32.xlu0 %v5611
        %v5613 = vpop.xlane.xlu0 %5612
        %v5614 = vadd.f32 %v5582, %v5592
        %v5615 = vadd.f32 %v5583, %v5595
        %v5616 = vadd.f32 %v5584, %v5598
        %v5617 = vadd.f32 %v5585, %v5601
        %v5618 = vadd.f32 %v5586, %v5604
        %v5619 = vadd.f32 %v5587, %v5607
        %v5620 = vadd.f32 %v5588, %v5610
        %v5621 = vadd.f32 %v5589, %v5613
        %vm5622 = vcmask 7168
        %5623 = vst.msk [vmem:[#allocation4] sm:$0xff] %vm5622, %v5614
        %5624 = vst.msk [vmem:[#allocation4 + $0x8] sm:$0xff] %vm5622, %v5615
        %5625 = vst.msk [vmem:[#allocation4 + $0x10] sm:$0xff] %vm5622, %v5616
        %5626 = vst.msk [vmem:[#allocation4 + $0x18] sm:$0xff] %vm5622, %v5617
        %5627 = vst.msk [vmem:[#allocation4 + $0x20] sm:$0xff] %vm5622, %v5618
        %5628 = vst.msk [vmem:[#allocation4 + $0x28] sm:$0xff] %vm5622, %v5619
        %5629 = vst.msk [vmem:[#allocation4 + $0x30] sm:$0xff] %vm5622, %v5620
        %5630 = vst.msk [vmem:[#allocation4 + $0x38] sm:$0xff] %vm5622, %v5621
        %v5631 = vld [vmem:[#allocation5] sm:$0xff]
        %v5632 = vld [vmem:[#allocation5 + $0x8] sm:$0xff]
        %v5633 = vld [vmem:[#allocation5 + $0x10] sm:$0xff]
        %v5634 = vld [vmem:[#allocation5 + $0x18] sm:$0xff]
        %v5635 = vld [vmem:[#allocation5 + $0x20] sm:$0xff]
        %v5636 = vld [vmem:[#allocation5 + $0x28] sm:$0xff]
        %v5637 = vld [vmem:[#allocation5 + $0x30] sm:$0xff]
        %v5638 = vld [vmem:[#allocation5 + $0x38] sm:$0xff]
        %5640 = vset.pattern.permute.xlu0 0
        %5641 = vperm.xlu0 %5640, %v5495
        %v5642 = vpop.permute.xlu0 %5641
        %5645 = vset.pattern.permute.xlu0 0
        %5646 = vperm.xlu0 %5645, %v5497
        %v5647 = vpop.permute.xlu0 %5646
        %5650 = vset.pattern.permute.xlu0 0
        %5651 = vperm.xlu0 %5650, %v5499
        %v5652 = vpop.permute.xlu0 %5651
        %5655 = vset.pattern.permute.xlu0 0
        %5656 = vperm.xlu0 %5655, %v5501
        %v5657 = vpop.permute.xlu0 %5656
        %5660 = vset.pattern.permute.xlu0 0
        %5661 = vperm.xlu0 %5660, %v5503
        %v5662 = vpop.permute.xlu0 %5661
        %5665 = vset.pattern.permute.xlu0 0
        %5666 = vperm.xlu0 %5665, %v5505
        %v5667 = vpop.permute.xlu0 %5666
        %5670 = vset.pattern.permute.xlu0 0
        %5671 = vperm.xlu0 %5670, %v5507
        %v5672 = vpop.permute.xlu0 %5671
        %5675 = vset.pattern.permute.xlu0 0
        %5676 = vperm.xlu0 %5675, %v5509
        %v5677 = vpop.permute.xlu0 %5676
        %v5679 = vmul.f32 %v5642, %v5631
        %v5680 = vmul.f32 %v5647, %v5632
        %v5681 = vmul.f32 %v5652, %v5633
        %v5682 = vmul.f32 %v5657, %v5634
        %v5683 = vmul.f32 %v5662, %v5635
        %v5684 = vmul.f32 %v5667, %v5636
        %v5685 = vmul.f32 %v5672, %v5637
        %v5686 = vmul.f32 %v5677, %v5638
        %v5688 = vsel %vm5453, %v5559, 0
        %5690 = vmatprep.subr.mxu0 0.0
        %5691 = vmatpush1.msra.mxu0 %v4821
        %5692 = vmatprep.subr.mxu0 0.0
        %5693 = vmatpush1.msra.mxu0 0.0
        %5694 = vmatprep.subr.mxu0 0.0
        %5695 = vmatpush1.msra.mxu0 0.0
        %5696 = vmatprep.subr.mxu0 0.0
        %5697 = vmatpush1.msra.mxu0 0.0
        %5698 = vmatprep.subr.mxu0 0.0
        %5699 = vmatpush1.msra.mxu0 0.0
        %5700 = vmatprep.subr.mxu0 0.0
        %5701 = vmatpush1.msra.mxu0 0.0
        %5702 = vmatprep.subr.mxu0 0.0
        %5703 = vmatpush1.msra.mxu0 0.0
        %5704 = vmatprep.subr.mxu0 0.0
        %5705 = vmatpush1.msra.mxu0 0.0
        %5706 = vmatprep.subr.mxu0 0.0
        %5707 = vmatpush1.msra.mxu0 0.0
        %5708 = vmatprep.subr.mxu0 0.0
        %5709 = vmatpush1.msra.mxu0 0.0
        %5710 = vmatprep.subr.mxu0 0.0
        %5711 = vmatpush1.msra.mxu0 0.0
        %5712 = vmatprep.subr.mxu0 0.0
        %5713 = vmatpush1.msra.mxu0 0.0
        %5714 = vmatprep.subr.mxu0 0.0
        %5715 = vmatpush1.msra.mxu0 0.0
        %5716 = vmatprep.subr.mxu0 0.0
        %5717 = vmatpush1.msra.mxu0 0.0
        %5718 = vmatprep.subr.mxu0 0.0
        %5719 = vmatpush1.msra.mxu0 0.0
        %5720 = vmatprep.subr.mxu0 0.0
        %5721 = vmatpush1.msra.mxu0 0.0
        %5722 = vmatprep.subr.mxu0 0.0
        %5723 = vmatpush1.msra.mxu0 0.0
        %5724 = vmatprep.subr.mxu0 0.0
        %5725 = vmatpush1.msra.mxu0 0.0
        %5726 = vmatprep.subr.mxu0 0.0
        %5727 = vmatpush1.msra.mxu0 0.0
        %5728 = vmatprep.subr.mxu0 0.0
        %5729 = vmatpush1.msra.mxu0 0.0
        %5730 = vmatprep.subr.mxu0 0.0
        %5731 = vmatpush1.msra.mxu0 0.0
        %5732 = vmatprep.subr.mxu0 0.0
        %5733 = vmatpush1.msra.mxu0 0.0
        %5734 = vmatprep.subr.mxu0 0.0
        %5735 = vmatpush1.msra.mxu0 0.0
        %5736 = vmatprep.subr.mxu0 0.0
        %5737 = vmatpush1.msra.mxu0 0.0
        %5738 = vmatprep.subr.mxu0 0.0
        %5739 = vmatpush1.msra.mxu0 0.0
        %5740 = vmatprep.subr.mxu0 0.0
        %5741 = vmatpush1.msra.mxu0 0.0
        %5742 = vmatprep.subr.mxu0 0.0
        %5743 = vmatpush1.msra.mxu0 0.0
        %5744 = vmatprep.subr.mxu0 0.0
        %5745 = vmatpush1.msra.mxu0 0.0
        %5746 = vmatprep.subr.mxu0 0.0
        %5747 = vmatpush1.msra.mxu0 0.0
        %5748 = vmatprep.subr.mxu0 0.0
        %5749 = vmatpush1.msra.mxu0 0.0
        %5750 = vmatprep.subr.mxu0 0.0
        %5751 = vmatpush1.msra.mxu0 0.0
        %5752 = vmatprep.subr.mxu0 0.0
        %5753 = vmatpush1.msra.mxu0 0.0
        %5754 = vmatprep.mubr.f32.mxu0 0.0
        %5755 = vmatmul.mubr.f32.gmra.mrb[0].mxu0 %v5688
        %v5756 = vpop.f32.mrb[0].mxu0
        %v5757 = vadd.f32 0.0, %v5756
        %v5758 = vpop.f32.mrb[0].mxu0
        %5759 = vdwg.mxu0
        %v5761 = vsel %vm5453, %v5561, 0
        %5763 = vmatprep.subr.mxu0 0.0
        %5764 = vmatpush1.msra.mxu0 %v4822
        %5765 = vmatprep.subr.mxu0 0.0
        %5766 = vmatpush1.msra.mxu0 0.0
        %5767 = vmatprep.subr.mxu0 0.0
        %5768 = vmatpush1.msra.mxu0 0.0
        %5769 = vmatprep.subr.mxu0 0.0
        %5770 = vmatpush1.msra.mxu0 0.0
        %5771 = vmatprep.subr.mxu0 0.0
        %5772 = vmatpush1.msra.mxu0 0.0
        %5773 = vmatprep.subr.mxu0 0.0
        %5774 = vmatpush1.msra.mxu0 0.0
        %5775 = vmatprep.subr.mxu0 0.0
        %5776 = vmatpush1.msra.mxu0 0.0
        %5777 = vmatprep.subr.mxu0 0.0
        %5778 = vmatpush1.msra.mxu0 0.0
        %5779 = vmatprep.subr.mxu0 0.0
        %5780 = vmatpush1.msra.mxu0 0.0
        %5781 = vmatprep.subr.mxu0 0.0
        %5782 = vmatpush1.msra.mxu0 0.0
        %5783 = vmatprep.subr.mxu0 0.0
        %5784 = vmatpush1.msra.mxu0 0.0
        %5785 = vmatprep.subr.mxu0 0.0
        %5786 = vmatpush1.msra.mxu0 0.0
        %5787 = vmatprep.subr.mxu0 0.0
        %5788 = vmatpush1.msra.mxu0 0.0
        %5789 = vmatprep.subr.mxu0 0.0
        %5790 = vmatpush1.msra.mxu0 0.0
        %5791 = vmatprep.subr.mxu0 0.0
        %5792 = vmatpush1.msra.mxu0 0.0
        %5793 = vmatprep.subr.mxu0 0.0
        %5794 = vmatpush1.msra.mxu0 0.0
        %5795 = vmatprep.subr.mxu0 0.0
        %5796 = vmatpush1.msra.mxu0 0.0
        %5797 = vmatprep.subr.mxu0 0.0
        %5798 = vmatpush1.msra.mxu0 0.0
        %5799 = vmatprep.subr.mxu0 0.0
        %5800 = vmatpush1.msra.mxu0 0.0
        %5801 = vmatprep.subr.mxu0 0.0
        %5802 = vmatpush1.msra.mxu0 0.0
        %5803 = vmatprep.subr.mxu0 0.0
        %5804 = vmatpush1.msra.mxu0 0.0
        %5805 = vmatprep.subr.mxu0 0.0
        %5806 = vmatpush1.msra.mxu0 0.0
        %5807 = vmatprep.subr.mxu0 0.0
        %5808 = vmatpush1.msra.mxu0 0.0
        %5809 = vmatprep.subr.mxu0 0.0
        %5810 = vmatpush1.msra.mxu0 0.0
        %5811 = vmatprep.subr.mxu0 0.0
        %5812 = vmatpush1.msra.mxu0 0.0
        %5813 = vmatprep.subr.mxu0 0.0
        %5814 = vmatpush1.msra.mxu0 0.0
        %5815 = vmatprep.subr.mxu0 0.0
        %5816 = vmatpush1.msra.mxu0 0.0
        %5817 = vmatprep.subr.mxu0 0.0
        %5818 = vmatpush1.msra.mxu0 0.0
        %5819 = vmatprep.subr.mxu0 0.0
        %5820 = vmatpush1.msra.mxu0 0.0
        %5821 = vmatprep.subr.mxu0 0.0
        %5822 = vmatpush1.msra.mxu0 0.0
        %5823 = vmatprep.subr.mxu0 0.0
        %5824 = vmatpush1.msra.mxu0 0.0
        %5825 = vmatprep.subr.mxu0 0.0
        %5826 = vmatpush1.msra.mxu0 0.0
        %5827 = vmatprep.mubr.f32.mxu0 0.0
        %5828 = vmatmul.mubr.f32.gmra.mrb[0].mxu0 %v5761
        %v5829 = vpop.f32.mrb[0].mxu0
        %v5830 = vadd.f32 0.0, %v5829
        %v5831 = vpop.f32.mrb[0].mxu0
        %5832 = vdwg.mxu0
        %v5834 = vsel %vm5453, %v5563, 0
        %5836 = vmatprep.subr.mxu0 0.0
        %5837 = vmatpush1.msra.mxu0 %v4823
        %5838 = vmatprep.subr.mxu0 0.0
        %5839 = vmatpush1.msra.mxu0 0.0
        %5840 = vmatprep.subr.mxu0 0.0
        %5841 = vmatpush1.msra.mxu0 0.0
        %5842 = vmatprep.subr.mxu0 0.0
        %5843 = vmatpush1.msra.mxu0 0.0
        %5844 = vmatprep.subr.mxu0 0.0
        %5845 = vmatpush1.msra.mxu0 0.0
        %5846 = vmatprep.subr.mxu0 0.0
        %5847 = vmatpush1.msra.mxu0 0.0
        %5848 = vmatprep.subr.mxu0 0.0
        %5849 = vmatpush1.msra.mxu0 0.0
        %5850 = vmatprep.subr.mxu0 0.0
        %5851 = vmatpush1.msra.mxu0 0.0
        %5852 = vmatprep.subr.mxu0 0.0
        %5853 = vmatpush1.msra.mxu0 0.0
        %5854 = vmatprep.subr.mxu0 0.0
        %5855 = vmatpush1.msra.mxu0 0.0
        %5856 = vmatprep.subr.mxu0 0.0
        %5857 = vmatpush1.msra.mxu0 0.0
        %5858 = vmatprep.subr.mxu0 0.0
        %5859 = vmatpush1.msra.mxu0 0.0
        %5860 = vmatprep.subr.mxu0 0.0
        %5861 = vmatpush1.msra.mxu0 0.0
        %5862 = vmatprep.subr.mxu0 0.0
        %5863 = vmatpush1.msra.mxu0 0.0
        %5864 = vmatprep.subr.mxu0 0.0
        %5865 = vmatpush1.msra.mxu0 0.0
        %5866 = vmatprep.subr.mxu0 0.0
        %5867 = vmatpush1.msra.mxu0 0.0
        %5868 = vmatprep.subr.mxu0 0.0
        %5869 = vmatpush1.msra.mxu0 0.0
        %5870 = vmatprep.subr.mxu0 0.0
        %5871 = vmatpush1.msra.mxu0 0.0
        %5872 = vmatprep.subr.mxu0 0.0
        %5873 = vmatpush1.msra.mxu0 0.0
        %5874 = vmatprep.subr.mxu0 0.0
        %5875 = vmatpush1.msra.mxu0 0.0
        %5876 = vmatprep.subr.mxu0 0.0
        %5877 = vmatpush1.msra.mxu0 0.0
        %5878 = vmatprep.subr.mxu0 0.0
        %5879 = vmatpush1.msra.mxu0 0.0
        %5880 = vmatprep.subr.mxu0 0.0
        %5881 = vmatpush1.msra.mxu0 0.0
        %5882 = vmatprep.subr.mxu0 0.0
        %5883 = vmatpush1.msra.mxu0 0.0
        %5884 = vmatprep.subr.mxu0 0.0
        %5885 = vmatpush1.msra.mxu0 0.0
        %5886 = vmatprep.subr.mxu0 0.0
        %5887 = vmatpush1.msra.mxu0 0.0
        %5888 = vmatprep.subr.mxu0 0.0
        %5889 = vmatpush1.msra.mxu0 0.0
        %5890 = vmatprep.subr.mxu0 0.0
        %5891 = vmatpush1.msra.mxu0 0.0
        %5892 = vmatprep.subr.mxu0 0.0
        %5893 = vmatpush1.msra.mxu0 0.0
        %5894 = vmatprep.subr.mxu0 0.0
        %5895 = vmatpush1.msra.mxu0 0.0
        %5896 = vmatprep.subr.mxu0 0.0
        %5897 = vmatpush1.msra.mxu0 0.0
        %5898 = vmatprep.subr.mxu0 0.0
        %5899 = vmatpush1.msra.mxu0 0.0
        %5900 = vmatprep.mubr.f32.mxu0 0.0
        %5901 = vmatmul.mubr.f32.gmra.mrb[0].mxu0 %v5834
        %v5902 = vpop.f32.mrb[0].mxu0
        %v5903 = vadd.f32 0.0, %v5902
        %v5904 = vpop.f32.mrb[0].mxu0
        %5905 = vdwg.mxu0
        %v5907 = vsel %vm5453, %v5565, 0
        %5909 = vmatprep.subr.mxu0 0.0
        %5910 = vmatpush1.msra.mxu0 %v4824
        %5911 = vmatprep.subr.mxu0 0.0
        %5912 = vmatpush1.msra.mxu0 0.0
        %5913 = vmatprep.subr.mxu0 0.0
        %5914 = vmatpush1.msra.mxu0 0.0
        %5915 = vmatprep.subr.mxu0 0.0
        %5916 = vmatpush1.msra.mxu0 0.0
        %5917 = vmatprep.subr.mxu0 0.0
        %5918 = vmatpush1.msra.mxu0 0.0
        %5919 = vmatprep.subr.mxu0 0.0
        %5920 = vmatpush1.msra.mxu0 0.0
        %5921 = vmatprep.subr.mxu0 0.0
        %5922 = vmatpush1.msra.mxu0 0.0
        %5923 = vmatprep.subr.mxu0 0.0
        %5924 = vmatpush1.msra.mxu0 0.0
        %5925 = vmatprep.subr.mxu0 0.0
        %5926 = vmatpush1.msra.mxu0 0.0
        %5927 = vmatprep.subr.mxu0 0.0
        %5928 = vmatpush1.msra.mxu0 0.0
        %5929 = vmatprep.subr.mxu0 0.0
        %5930 = vmatpush1.msra.mxu0 0.0
        %5931 = vmatprep.subr.mxu0 0.0
        %5932 = vmatpush1.msra.mxu0 0.0
        %5933 = vmatprep.subr.mxu0 0.0
        %5934 = vmatpush1.msra.mxu0 0.0
        %5935 = vmatprep.subr.mxu0 0.0
        %5936 = vmatpush1.msra.mxu0 0.0
        %5937 = vmatprep.subr.mxu0 0.0
        %5938 = vmatpush1.msra.mxu0 0.0
        %5939 = vmatprep.subr.mxu0 0.0
        %5940 = vmatpush1.msra.mxu0 0.0
        %5941 = vmatprep.subr.mxu0 0.0
        %5942 = vmatpush1.msra.mxu0 0.0
        %5943 = vmatprep.subr.mxu0 0.0
        %5944 = vmatpush1.msra.mxu0 0.0
        %5945 = vmatprep.subr.mxu0 0.0
        %5946 = vmatpush1.msra.mxu0 0.0
        %5947 = vmatprep.subr.mxu0 0.0
        %5948 = vmatpush1.msra.mxu0 0.0
        %5949 = vmatprep.subr.mxu0 0.0
        %5950 = vmatpush1.msra.mxu0 0.0
        %5951 = vmatprep.subr.mxu0 0.0
        %5952 = vmatpush1.msra.mxu0 0.0
        %5953 = vmatprep.subr.mxu0 0.0
        %5954 = vmatpush1.msra.mxu0 0.0
        %5955 = vmatprep.subr.mxu0 0.0
        %5956 = vmatpush1.msra.mxu0 0.0
        %5957 = vmatprep.subr.mxu0 0.0
        %5958 = vmatpush1.msra.mxu0 0.0
        %5959 = vmatprep.subr.mxu0 0.0
        %5960 = vmatpush1.msra.mxu0 0.0
        %5961 = vmatprep.subr.mxu0 0.0
        %5962 = vmatpush1.msra.mxu0 0.0
        %5963 = vmatprep.subr.mxu0 0.0
        %5964 = vmatpush1.msra.mxu0 0.0
        %5965 = vmatprep.subr.mxu0 0.0
        %5966 = vmatpush1.msra.mxu0 0.0
        %5967 = vmatprep.subr.mxu0 0.0
        %5968 = vmatpush1.msra.mxu0 0.0
        %5969 = vmatprep.subr.mxu0 0.0
        %5970 = vmatpush1.msra.mxu0 0.0
        %5971 = vmatprep.subr.mxu0 0.0
        %5972 = vmatpush1.msra.mxu0 0.0
        %5973 = vmatprep.mubr.f32.mxu0 0.0
        %5974 = vmatmul.mubr.f32.gmra.mrb[0].mxu0 %v5907
        %v5975 = vpop.f32.mrb[0].mxu0
        %v5976 = vadd.f32 0.0, %v5975
        %v5977 = vpop.f32.mrb[0].mxu0
        %5978 = vdwg.mxu0
        %v5980 = vsel %vm5453, %v5567, 0
        %5982 = vmatprep.subr.mxu0 0.0
        %5983 = vmatpush1.msra.mxu0 %v4825
        %5984 = vmatprep.subr.mxu0 0.0
        %5985 = vmatpush1.msra.mxu0 0.0
        %5986 = vmatprep.subr.mxu0 0.0
        %5987 = vmatpush1.msra.mxu0 0.0
        %5988 = vmatprep.subr.mxu0 0.0
        %5989 = vmatpush1.msra.mxu0 0.0
        %5990 = vmatprep.subr.mxu0 0.0
        %5991 = vmatpush1.msra.mxu0 0.0
        %5992 = vmatprep.subr.mxu0 0.0
        %5993 = vmatpush1.msra.mxu0 0.0
        %5994 = vmatprep.subr.mxu0 0.0
        %5995 = vmatpush1.msra.mxu0 0.0
        %5996 = vmatprep.subr.mxu0 0.0
        %5997 = vmatpush1.msra.mxu0 0.0
        %5998 = vmatprep.subr.mxu0 0.0
        %5999 = vmatpush1.msra.mxu0 0.0
        %6000 = vmatprep.subr.mxu0 0.0
        %6001 = vmatpush1.msra.mxu0 0.0
        %6002 = vmatprep.subr.mxu0 0.0
        %6003 = vmatpush1.msra.mxu0 0.0
        %6004 = vmatprep.subr.mxu0 0.0
        %6005 = vmatpush1.msra.mxu0 0.0
        %6006 = vmatprep.subr.mxu0 0.0
        %6007 = vmatpush1.msra.mxu0 0.0
        %6008 = vmatprep.subr.mxu0 0.0
        %6009 = vmatpush1.msra.mxu0 0.0
        %6010 = vmatprep.subr.mxu0 0.0
        %6011 = vmatpush1.msra.mxu0 0.0
        %6012 = vmatprep.subr.mxu0 0.0
        %6013 = vmatpush1.msra.mxu0 0.0
        %6014 = vmatprep.subr.mxu0 0.0
        %6015 = vmatpush1.msra.mxu0 0.0
        %6016 = vmatprep.subr.mxu0 0.0
        %6017 = vmatpush1.msra.mxu0 0.0
        %6018 = vmatprep.subr.mxu0 0.0
        %6019 = vmatpush1.msra.mxu0 0.0
        %6020 = vmatprep.subr.mxu0 0.0
        %6021 = vmatpush1.msra.mxu0 0.0
        %6022 = vmatprep.subr.mxu0 0.0
        %6023 = vmatpush1.msra.mxu0 0.0
        %6024 = vmatprep.subr.mxu0 0.0
        %6025 = vmatpush1.msra.mxu0 0.0
        %6026 = vmatprep.subr.mxu0 0.0
        %6027 = vmatpush1.msra.mxu0 0.0
        %6028 = vmatprep.subr.mxu0 0.0
        %6029 = vmatpush1.msra.mxu0 0.0
        %6030 = vmatprep.subr.mxu0 0.0
        %6031 = vmatpush1.msra.mxu0 0.0
        %6032 = vmatprep.subr.mxu0 0.0
        %6033 = vmatpush1.msra.mxu0 0.0
        %6034 = vmatprep.subr.mxu0 0.0
        %6035 = vmatpush1.msra.mxu0 0.0
        %6036 = vmatprep.subr.mxu0 0.0
        %6037 = vmatpush1.msra.mxu0 0.0
        %6038 = vmatprep.subr.mxu0 0.0
        %6039 = vmatpush1.msra.mxu0 0.0
        %6040 = vmatprep.subr.mxu0 0.0
        %6041 = vmatpush1.msra.mxu0 0.0
        %6042 = vmatprep.subr.mxu0 0.0
        %6043 = vmatpush1.msra.mxu0 0.0
        %6044 = vmatprep.subr.mxu0 0.0
        %6045 = vmatpush1.msra.mxu0 0.0
        %6046 = vmatprep.mubr.f32.mxu0 0.0
        %6047 = vmatmul.mubr.f32.gmra.mrb[0].mxu0 %v5980
        %v6048 = vpop.f32.mrb[0].mxu0
        %v6049 = vadd.f32 0.0, %v6048
        %v6050 = vpop.f32.mrb[0].mxu0
        %6051 = vdwg.mxu0
        %v6053 = vsel %vm5453, %v5569, 0
        %6055 = vmatprep.subr.mxu0 0.0
        %6056 = vmatpush1.msra.mxu0 %v4826
        %6057 = vmatprep.subr.mxu0 0.0
        %6058 = vmatpush1.msra.mxu0 0.0
        %6059 = vmatprep.subr.mxu0 0.0
        %6060 = vmatpush1.msra.mxu0 0.0
        %6061 = vmatprep.subr.mxu0 0.0
        %6062 = vmatpush1.msra.mxu0 0.0
        %6063 = vmatprep.subr.mxu0 0.0
        %6064 = vmatpush1.msra.mxu0 0.0
        %6065 = vmatprep.subr.mxu0 0.0
        %6066 = vmatpush1.msra.mxu0 0.0
        %6067 = vmatprep.subr.mxu0 0.0
        %6068 = vmatpush1.msra.mxu0 0.0
        %6069 = vmatprep.subr.mxu0 0.0
        %6070 = vmatpush1.msra.mxu0 0.0
        %6071 = vmatprep.subr.mxu0 0.0
        %6072 = vmatpush1.msra.mxu0 0.0
        %6073 = vmatprep.subr.mxu0 0.0
        %6074 = vmatpush1.msra.mxu0 0.0
        %6075 = vmatprep.subr.mxu0 0.0
        %6076 = vmatpush1.msra.mxu0 0.0
        %6077 = vmatprep.subr.mxu0 0.0
        %6078 = vmatpush1.msra.mxu0 0.0
        %6079 = vmatprep.subr.mxu0 0.0
        %6080 = vmatpush1.msra.mxu0 0.0
        %6081 = vmatprep.subr.mxu0 0.0
        %6082 = vmatpush1.msra.mxu0 0.0
        %6083 = vmatprep.subr.mxu0 0.0
        %6084 = vmatpush1.msra.mxu0 0.0
        %6085 = vmatprep.subr.mxu0 0.0
        %6086 = vmatpush1.msra.mxu0 0.0
        %6087 = vmatprep.subr.mxu0 0.0
        %6088 = vmatpush1.msra.mxu0 0.0
        %6089 = vmatprep.subr.mxu0 0.0
        %6090 = vmatpush1.msra.mxu0 0.0
        %6091 = vmatprep.subr.mxu0 0.0
        %6092 = vmatpush1.msra.mxu0 0.0
        %6093 = vmatprep.subr.mxu0 0.0
        %6094 = vmatpush1.msra.mxu0 0.0
        %6095 = vmatprep.subr.mxu0 0.0
        %6096 = vmatpush1.msra.mxu0 0.0
        %6097 = vmatprep.subr.mxu0 0.0
        %6098 = vmatpush1.msra.mxu0 0.0
        %6099 = vmatprep.subr.mxu0 0.0
        %6100 = vmatpush1.msra.mxu0 0.0
        %6101 = vmatprep.subr.mxu0 0.0
        %6102 = vmatpush1.msra.mxu0 0.0
        %6103 = vmatprep.subr.mxu0 0.0
        %6104 = vmatpush1.msra.mxu0 0.0
        %6105 = vmatprep.subr.mxu0 0.0
        %6106 = vmatpush1.msra.mxu0 0.0
        %6107 = vmatprep.subr.mxu0 0.0
        %6108 = vmatpush1.msra.mxu0 0.0
        %6109 = vmatprep.subr.mxu0 0.0
        %6110 = vmatpush1.msra.mxu0 0.0
        %6111 = vmatprep.subr.mxu0 0.0
        %6112 = vmatpush1.msra.mxu0 0.0
        %6113 = vmatprep.subr.mxu0 0.0
        %6114 = vmatpush1.msra.mxu0 0.0
        %6115 = vmatprep.subr.mxu0 0.0
        %6116 = vmatpush1.msra.mxu0 0.0
        %6117 = vmatprep.subr.mxu0 0.0
        %6118 = vmatpush1.msra.mxu0 0.0
        %6119 = vmatprep.mubr.f32.mxu0 0.0
        %6120 = vmatmul.mubr.f32.gmra.mrb[0].mxu0 %v6053
        %v6121 = vpop.f32.mrb[0].mxu0
        %v6122 = vadd.f32 0.0, %v6121
        %v6123 = vpop.f32.mrb[0].mxu0
        %6124 = vdwg.mxu0
        %v6126 = vsel %vm5453, %v5571, 0
        %6128 = vmatprep.subr.mxu0 0.0
        %6129 = vmatpush1.msra.mxu0 %v4827
        %6130 = vmatprep.subr.mxu0 0.0
        %6131 = vmatpush1.msra.mxu0 0.0
        %6132 = vmatprep.subr.mxu0 0.0
        %6133 = vmatpush1.msra.mxu0 0.0
        %6134 = vmatprep.subr.mxu0 0.0
        %6135 = vmatpush1.msra.mxu0 0.0
        %6136 = vmatprep.subr.mxu0 0.0
        %6137 = vmatpush1.msra.mxu0 0.0
        %6138 = vmatprep.subr.mxu0 0.0
        %6139 = vmatpush1.msra.mxu0 0.0
        %6140 = vmatprep.subr.mxu0 0.0
        %6141 = vmatpush1.msra.mxu0 0.0
        %6142 = vmatprep.subr.mxu0 0.0
        %6143 = vmatpush1.msra.mxu0 0.0
        %6144 = vmatprep.subr.mxu0 0.0
        %6145 = vmatpush1.msra.mxu0 0.0
        %6146 = vmatprep.subr.mxu0 0.0
        %6147 = vmatpush1.msra.mxu0 0.0
        %6148 = vmatprep.subr.mxu0 0.0
        %6149 = vmatpush1.msra.mxu0 0.0
        %6150 = vmatprep.subr.mxu0 0.0
        %6151 = vmatpush1.msra.mxu0 0.0
        %6152 = vmatprep.subr.mxu0 0.0
        %6153 = vmatpush1.msra.mxu0 0.0
        %6154 = vmatprep.subr.mxu0 0.0
        %6155 = vmatpush1.msra.mxu0 0.0
        %6156 = vmatprep.subr.mxu0 0.0
        %6157 = vmatpush1.msra.mxu0 0.0
        %6158 = vmatprep.subr.mxu0 0.0
        %6159 = vmatpush1.msra.mxu0 0.0
        %6160 = vmatprep.subr.mxu0 0.0
        %6161 = vmatpush1.msra.mxu0 0.0
        %6162 = vmatprep.subr.mxu0 0.0
        %6163 = vmatpush1.msra.mxu0 0.0
        %6164 = vmatprep.subr.mxu0 0.0
        %6165 = vmatpush1.msra.mxu0 0.0
        %6166 = vmatprep.subr.mxu0 0.0
        %6167 = vmatpush1.msra.mxu0 0.0
        %6168 = vmatprep.subr.mxu0 0.0
        %6169 = vmatpush1.msra.mxu0 0.0
        %6170 = vmatprep.subr.mxu0 0.0
        %6171 = vmatpush1.msra.mxu0 0.0
        %6172 = vmatprep.subr.mxu0 0.0
        %6173 = vmatpush1.msra.mxu0 0.0
        %6174 = vmatprep.subr.mxu0 0.0
        %6175 = vmatpush1.msra.mxu0 0.0
        %6176 = vmatprep.subr.mxu0 0.0
        %6177 = vmatpush1.msra.mxu0 0.0
        %6178 = vmatprep.subr.mxu0 0.0
        %6179 = vmatpush1.msra.mxu0 0.0
        %6180 = vmatprep.subr.mxu0 0.0
        %6181 = vmatpush1.msra.mxu0 0.0
        %6182 = vmatprep.subr.mxu0 0.0
        %6183 = vmatpush1.msra.mxu0 0.0
        %6184 = vmatprep.subr.mxu0 0.0
        %6185 = vmatpush1.msra.mxu0 0.0
        %6186 = vmatprep.subr.mxu0 0.0
        %6187 = vmatpush1.msra.mxu0 0.0
        %6188 = vmatprep.subr.mxu0 0.0
        %6189 = vmatpush1.msra.mxu0 0.0
        %6190 = vmatprep.subr.mxu0 0.0
        %6191 = vmatpush1.msra.mxu0 0.0
        %6192 = vmatprep.mubr.f32.mxu0 0.0
        %6193 = vmatmul.mubr.f32.gmra.mrb[0].mxu0 %v6126
        %v6194 = vpop.f32.mrb[0].mxu0
        %v6195 = vadd.f32 0.0, %v6194
        %v6196 = vpop.f32.mrb[0].mxu0
        %6197 = vdwg.mxu0
        %v6199 = vsel %vm5453, %v5573, 0
        %6201 = vmatprep.subr.mxu0 0.0
        %6202 = vmatpush1.msra.mxu0 %v4828
        %6203 = vmatprep.subr.mxu0 0.0
        %6204 = vmatpush1.msra.mxu0 0.0
        %6205 = vmatprep.subr.mxu0 0.0
        %6206 = vmatpush1.msra.mxu0 0.0
        %6207 = vmatprep.subr.mxu0 0.0
        %6208 = vmatpush1.msra.mxu0 0.0
        %6209 = vmatprep.subr.mxu0 0.0
        %6210 = vmatpush1.msra.mxu0 0.0
        %6211 = vmatprep.subr.mxu0 0.0
        %6212 = vmatpush1.msra.mxu0 0.0
        %6213 = vmatprep.subr.mxu0 0.0
        %6214 = vmatpush1.msra.mxu0 0.0
        %6215 = vmatprep.subr.mxu0 0.0
        %6216 = vmatpush1.msra.mxu0 0.0
        %6217 = vmatprep.subr.mxu0 0.0
        %6218 = vmatpush1.msra.mxu0 0.0
        %6219 = vmatprep.subr.mxu0 0.0
        %6220 = vmatpush1.msra.mxu0 0.0
        %6221 = vmatprep.subr.mxu0 0.0
        %6222 = vmatpush1.msra.mxu0 0.0
        %6223 = vmatprep.subr.mxu0 0.0
        %6224 = vmatpush1.msra.mxu0 0.0
        %6225 = vmatprep.subr.mxu0 0.0
        %6226 = vmatpush1.msra.mxu0 0.0
        %6227 = vmatprep.subr.mxu0 0.0
        %6228 = vmatpush1.msra.mxu0 0.0
        %6229 = vmatprep.subr.mxu0 0.0
        %6230 = vmatpush1.msra.mxu0 0.0
        %6231 = vmatprep.subr.mxu0 0.0
        %6232 = vmatpush1.msra.mxu0 0.0
        %6233 = vmatprep.subr.mxu0 0.0
        %6234 = vmatpush1.msra.mxu0 0.0
        %6235 = vmatprep.subr.mxu0 0.0
        %6236 = vmatpush1.msra.mxu0 0.0
        %6237 = vmatprep.subr.mxu0 0.0
        %6238 = vmatpush1.msra.mxu0 0.0
        %6239 = vmatprep.subr.mxu0 0.0
        %6240 = vmatpush1.msra.mxu0 0.0
        %6241 = vmatprep.subr.mxu0 0.0
        %6242 = vmatpush1.msra.mxu0 0.0
        %6243 = vmatprep.subr.mxu0 0.0
        %6244 = vmatpush1.msra.mxu0 0.0
        %6245 = vmatprep.subr.mxu0 0.0
        %6246 = vmatpush1.msra.mxu0 0.0
        %6247 = vmatprep.subr.mxu0 0.0
        %6248 = vmatpush1.msra.mxu0 0.0
        %6249 = vmatprep.subr.mxu0 0.0
        %6250 = vmatpush1.msra.mxu0 0.0
        %6251 = vmatprep.subr.mxu0 0.0
        %6252 = vmatpush1.msra.mxu0 0.0
        %6253 = vmatprep.subr.mxu0 0.0
        %6254 = vmatpush1.msra.mxu0 0.0
        %6255 = vmatprep.subr.mxu0 0.0
        %6256 = vmatpush1.msra.mxu0 0.0
        %6257 = vmatprep.subr.mxu0 0.0
        %6258 = vmatpush1.msra.mxu0 0.0
        %6259 = vmatprep.subr.mxu0 0.0
        %6260 = vmatpush1.msra.mxu0 0.0
        %6261 = vmatprep.subr.mxu0 0.0
        %6262 = vmatpush1.msra.mxu0 0.0
        %6263 = vmatprep.subr.mxu0 0.0
        %6264 = vmatpush1.msra.mxu0 0.0
        %6265 = vmatprep.mubr.f32.mxu0 0.0
        %6266 = vmatmul.mubr.f32.gmra.mrb[0].mxu0 %v6199
        %v6267 = vpop.f32.mrb[0].mxu0
        %v6268 = vadd.f32 0.0, %v6267
        %v6269 = vpop.f32.mrb[0].mxu0
        %6270 = vdwg.mxu0
        %v6271 = vadd.f32 %v5679, %v5757
        %v6272 = vadd.f32 %v5680, %v5830
        %v6273 = vadd.f32 %v5681, %v5903
        %v6274 = vadd.f32 %v5682, %v5976
        %v6275 = vadd.f32 %v5683, %v6049
        %v6276 = vadd.f32 %v5684, %v6122
        %v6277 = vadd.f32 %v5685, %v6195
        %v6278 = vadd.f32 %v5686, %v6268
        %6279 = vst.msk [vmem:[#allocation5] sm:$0xff] %vm4478, %v6271
        %6280 = vst.msk [vmem:[#allocation5 + $0x8] sm:$0xff] %vm4478, %v6272
        %6281 = vst.msk [vmem:[#allocation5 + $0x10] sm:$0xff] %vm4478, %v6273
        %6282 = vst.msk [vmem:[#allocation5 + $0x18] sm:$0xff] %vm4478, %v6274
        %6283 = vst.msk [vmem:[#allocation5 + $0x20] sm:$0xff] %vm4478, %v6275
        %6284 = vst.msk [vmem:[#allocation5 + $0x28] sm:$0xff] %vm4478, %v6276
        %6285 = vst.msk [vmem:[#allocation5 + $0x30] sm:$0xff] %vm4478, %v6277
        %6286 = vst.msk [vmem:[#allocation5 + $0x38] sm:$0xff] %vm4478, %v6278
        %6287 = vst.msk [vmem:[#allocation3] sm:$0xff] %vm5622, %v5478
        %6288 = vst.msk [vmem:[#allocation3 + $0x8] sm:$0xff] %vm5622, %v5479
        %6289 = vst.msk [vmem:[#allocation3 + $0x10] sm:$0xff] %vm5622, %v5480
        %6290 = vst.msk [vmem:[#allocation3 + $0x18] sm:$0xff] %vm5622, %v5481
        %6291 = vst.msk [vmem:[#allocation3 + $0x20] sm:$0xff] %vm5622, %v5482
        %6292 = vst.msk [vmem:[#allocation3 + $0x28] sm:$0xff] %vm5622, %v5483
        %6293 = vst.msk [vmem:[#allocation3 + $0x30] sm:$0xff] %vm5622, %v5484
        %6294 = vst.msk [vmem:[#allocation3 + $0x38] sm:$0xff] %vm5622, %v5485
        %p6295 = scmp.eq.s32.totalorder %s38, 1
        // Predicated region
        $region93: #{tpu_custom_call.1} parent=63 // pred_check
          %p6296 = pneg %p6295
        $region94: #{tpu_custom_call.1} parent=63 // pred_check_branch
          %6298 = sbr.rel (%p6296) target = $region96
        $region95: #{tpu_custom_call.1} parent=63 // pred_region
          %v6299 = vld [vmem:[#allocation5] sm:$0xff]
          %v6300 = vld [vmem:[#allocation5 + $0x8] sm:$0xff]
          %v6301 = vld [vmem:[#allocation5 + $0x10] sm:$0xff]
          %v6302 = vld [vmem:[#allocation5 + $0x18] sm:$0xff]
          %v6303 = vld [vmem:[#allocation5 + $0x20] sm:$0xff]
          %v6304 = vld [vmem:[#allocation5 + $0x28] sm:$0xff]
          %v6305 = vld [vmem:[#allocation5 + $0x30] sm:$0xff]
          %v6306 = vld [vmem:[#allocation5 + $0x38] sm:$0xff]
          %v6307 = vld [vmem:[#allocation4] sm:$0xff]
          %v6308 = vld [vmem:[#allocation4 + $0x8] sm:$0xff]
          %v6309 = vld [vmem:[#allocation4 + $0x10] sm:$0xff]
          %v6310 = vld [vmem:[#allocation4 + $0x18] sm:$0xff]
          %v6311 = vld [vmem:[#allocation4 + $0x20] sm:$0xff]
          %v6312 = vld [vmem:[#allocation4 + $0x28] sm:$0xff]
          %v6313 = vld [vmem:[#allocation4 + $0x30] sm:$0xff]
          %v6314 = vld [vmem:[#allocation4 + $0x38] sm:$0xff]
          %v6315 = vrcp.pop %v6307
          %v6316 = vrcp.pop %v6308
          %v6317 = vrcp.pop %v6309
          %v6318 = vrcp.pop %v6310
          %v6319 = vrcp.pop %v6311
          %v6320 = vrcp.pop %v6312
          %v6321 = vrcp.pop %v6313
          %v6322 = vrcp.pop %v6314
          %6324 = vset.pattern.permute.xlu0 0
          %6325 = vperm.xlu0 %6324, %v6315
          %v6326 = vpop.permute.xlu0 %6325
          %6329 = vset.pattern.permute.xlu0 0
          %6330 = vperm.xlu0 %6329, %v6316
          %v6331 = vpop.permute.xlu0 %6330
          %6334 = vset.pattern.permute.xlu0 0
          %6335 = vperm.xlu0 %6334, %v6317
          %v6336 = vpop.permute.xlu0 %6335
          %6339 = vset.pattern.permute.xlu0 0
          %6340 = vperm.xlu0 %6339, %v6318
          %v6341 = vpop.permute.xlu0 %6340
          %6344 = vset.pattern.permute.xlu0 0
          %6345 = vperm.xlu0 %6344, %v6319
          %v6346 = vpop.permute.xlu0 %6345
          %6349 = vset.pattern.permute.xlu0 0
          %6350 = vperm.xlu0 %6349, %v6320
          %v6351 = vpop.permute.xlu0 %6350
          %6354 = vset.pattern.permute.xlu0 0
          %6355 = vperm.xlu0 %6354, %v6321
          %v6356 = vpop.permute.xlu0 %6355
          %6359 = vset.pattern.permute.xlu0 0
          %6360 = vperm.xlu0 %6359, %v6322
          %v6361 = vpop.permute.xlu0 %6360
          %v6363 = vmul.f32 %v6299, %v6326
          %v6364 = vmul.f32 %v6300, %v6331
          %v6365 = vmul.f32 %v6301, %v6336
          %v6366 = vmul.f32 %v6302, %v6341
          %v6367 = vmul.f32 %v6303, %v6346
          %v6368 = vmul.f32 %v6304, %v6351
          %v6369 = vmul.f32 %v6305, %v6356
          %v6370 = vmul.f32 %v6306, %v6361
          %v6371 = vcombine.low %v6363, %v6365
          %v6372 = vcombine.high %v6363, %v6365
          %v6374 = vunpack.c.l.s4 1983009808
          %v6375 = vunpack.c.0.s8 %v6374
          %v6376 = vlaneseq
          %v6377 = vshrl.u32 %v6376, 7
          %v6378 = vsub.s32 %v6375, %v6377
          %v6379 = vrot.slane %v6371, %v6378
          %v6381 = vunpack.c.l.s4 1983009808
          %v6382 = vunpack.c.0.s8 %v6381
          %v6383 = vlaneseq
          %v6384 = vshrl.u32 %v6383, 7
          %v6385 = vsub.s32 %v6382, %v6384
          %v6386 = vrot.slane %v6372, %v6385
          %v6387 = vcombine.low %v6364, %v6366
          %v6388 = vcombine.high %v6364, %v6366
          %v6390 = vunpack.c.l.s4 1983009808
          %v6391 = vunpack.c.0.s8 %v6390
          %v6392 = vlaneseq
          %v6393 = vshrl.u32 %v6392, 7
          %v6394 = vsub.s32 %v6391, %v6393
          %v6395 = vrot.slane %v6387, %v6394
          %v6397 = vunpack.c.l.s4 1983009808
          %v6398 = vunpack.c.0.s8 %v6397
          %v6399 = vlaneseq
          %v6400 = vshrl.u32 %v6399, 7
          %v6401 = vsub.s32 %v6398, %v6400
          %v6402 = vrot.slane %v6388, %v6401
          %v6403 = vcombine.low %v6367, %v6369
          %v6404 = vcombine.high %v6367, %v6369
          %v6406 = vunpack.c.l.s4 1983009808
          %v6407 = vunpack.c.0.s8 %v6406
          %v6408 = vlaneseq
          %v6409 = vshrl.u32 %v6408, 7
          %v6410 = vsub.s32 %v6407, %v6409
          %v6411 = vrot.slane %v6403, %v6410
          %v6413 = vunpack.c.l.s4 1983009808
          %v6414 = vunpack.c.0.s8 %v6413
          %v6415 = vlaneseq
          %v6416 = vshrl.u32 %v6415, 7
          %v6417 = vsub.s32 %v6414, %v6416
          %v6418 = vrot.slane %v6404, %v6417
          %v6419 = vcombine.low %v6368, %v6370
          %v6420 = vcombine.high %v6368, %v6370
          %v6422 = vunpack.c.l.s4 1983009808
          %v6423 = vunpack.c.0.s8 %v6422
          %v6424 = vlaneseq
          %v6425 = vshrl.u32 %v6424, 7
          %v6426 = vsub.s32 %v6423, %v6425
          %v6427 = vrot.slane %v6419, %v6426
          %v6429 = vunpack.c.l.s4 1983009808
          %v6430 = vunpack.c.0.s8 %v6429
          %v6431 = vlaneseq
          %v6432 = vshrl.u32 %v6431, 7
          %v6433 = vsub.s32 %v6430, %v6432
          %v6434 = vrot.slane %v6420, %v6433
          %v6435 = vcombine.low %v6379, %v6395
          %v6436 = vcombine.high %v6379, %v6395
          %v6438 = vunpack.c.l.s4 1934713408
          %v6439 = vunpack.c.0.s8 %v6438
          %v6440 = vlaneseq
          %v6441 = vshrl.u32 %v6440, 7
          %v6442 = vsub.s32 %v6439, %v6441
          %v6443 = vrot.slane %v6435, %v6442
          %v6445 = vunpack.c.l.s4 1934713408
          %v6446 = vunpack.c.0.s8 %v6445
          %v6447 = vlaneseq
          %v6448 = vshrl.u32 %v6447, 7
          %v6449 = vsub.s32 %v6446, %v6448
          %v6450 = vrot.slane %v6436, %v6449
          %v6451 = vcombine.low %v6386, %v6402
          %v6452 = vcombine.high %v6386, %v6402
          %v6454 = vunpack.c.l.s4 1934713408
          %v6455 = vunpack.c.0.s8 %v6454
          %v6456 = vlaneseq
          %v6457 = vshrl.u32 %v6456, 7
          %v6458 = vsub.s32 %v6455, %v6457
          %v6459 = vrot.slane %v6451, %v6458
          %v6461 = vunpack.c.l.s4 1934713408
          %v6462 = vunpack.c.0.s8 %v6461
          %v6463 = vlaneseq
          %v6464 = vshrl.u32 %v6463, 7
          %v6465 = vsub.s32 %v6462, %v6464
          %v6466 = vrot.slane %v6452, %v6465
          %v6467 = vcombine.low %v6411, %v6427
          %v6468 = vcombine.high %v6411, %v6427
          %v6470 = vunpack.c.l.s4 1934713408
          %v6471 = vunpack.c.0.s8 %v6470
          %v6472 = vlaneseq
          %v6473 = vshrl.u32 %v6472, 7
          %v6474 = vsub.s32 %v6471, %v6473
          %v6475 = vrot.slane %v6467, %v6474
          %v6477 = vunpack.c.l.s4 1934713408
          %v6478 = vunpack.c.0.s8 %v6477
          %v6479 = vlaneseq
          %v6480 = vshrl.u32 %v6479, 7
          %v6481 = vsub.s32 %v6478, %v6480
          %v6482 = vrot.slane %v6468, %v6481
          %v6483 = vcombine.low %v6418, %v6434
          %v6484 = vcombine.high %v6418, %v6434
          %v6486 = vunpack.c.l.s4 1934713408
          %v6487 = vunpack.c.0.s8 %v6486
          %v6488 = vlaneseq
          %v6489 = vshrl.u32 %v6488, 7
          %v6490 = vsub.s32 %v6487, %v6489
          %v6491 = vrot.slane %v6483, %v6490
          %v6493 = vunpack.c.l.s4 1934713408
          %v6494 = vunpack.c.0.s8 %v6493
          %v6495 = vlaneseq
          %v6496 = vshrl.u32 %v6495, 7
          %v6497 = vsub.s32 %v6494, %v6496
          %v6498 = vrot.slane %v6484, %v6497
          %v6499 = vcombine.low %v6443, %v6475
          %v6500 = vcombine.high %v6443, %v6475
          %v6501 = vcombine.low %v6450, %v6482
          %v6502 = vcombine.high %v6450, %v6482
          %v6503 = vcombine.low %v6459, %v6491
          %v6504 = vcombine.high %v6459, %v6491
          %v6505 = vcombine.low %v6466, %v6498
          %v6506 = vcombine.high %v6466, %v6498
          %v6507 = vcombine.low %v6499, %v6501
          %v6508 = vcombine.high %v6499, %v6501
          %v6510 = vunpack.c.l.s4 1983009808
          %v6511 = vunpack.c.0.s8 %v6510
          %v6512 = vlaneseq
          %v6513 = vshrl.u32 %v6512, 7
          %v6514 = vsub.s32 %v6511, %v6513
          %v6515 = vrot.slane %v6507, %v6514
          %v6517 = vunpack.c.l.s4 1983009808
          %v6518 = vunpack.c.0.s8 %v6517
          %v6519 = vlaneseq
          %v6520 = vshrl.u32 %v6519, 7
          %v6521 = vsub.s32 %v6518, %v6520
          %v6522 = vrot.slane %v6508, %v6521
          %v6523 = vcombine.low %v6500, %v6502
          %v6524 = vcombine.high %v6500, %v6502
          %v6526 = vunpack.c.l.s4 1983009808
          %v6527 = vunpack.c.0.s8 %v6526
          %v6528 = vlaneseq
          %v6529 = vshrl.u32 %v6528, 7
          %v6530 = vsub.s32 %v6527, %v6529
          %v6531 = vrot.slane %v6523, %v6530
          %v6533 = vunpack.c.l.s4 1983009808
          %v6534 = vunpack.c.0.s8 %v6533
          %v6535 = vlaneseq
          %v6536 = vshrl.u32 %v6535, 7
          %v6537 = vsub.s32 %v6534, %v6536
          %v6538 = vrot.slane %v6524, %v6537
          %v6539 = vcombine.low %v6503, %v6505
          %v6540 = vcombine.high %v6503, %v6505
          %v6542 = vunpack.c.l.s4 1983009808
          %v6543 = vunpack.c.0.s8 %v6542
          %v6544 = vlaneseq
          %v6545 = vshrl.u32 %v6544, 7
          %v6546 = vsub.s32 %v6543, %v6545
          %v6547 = vrot.slane %v6539, %v6546
          %v6549 = vunpack.c.l.s4 1983009808
          %v6550 = vunpack.c.0.s8 %v6549
          %v6551 = vlaneseq
          %v6552 = vshrl.u32 %v6551, 7
          %v6553 = vsub.s32 %v6550, %v6552
          %v6554 = vrot.slane %v6540, %v6553
          %v6555 = vcombine.low %v6504, %v6506
          %v6556 = vcombine.high %v6504, %v6506
          %v6558 = vunpack.c.l.s4 1983009808
          %v6559 = vunpack.c.0.s8 %v6558
          %v6560 = vlaneseq
          %v6561 = vshrl.u32 %v6560, 7
          %v6562 = vsub.s32 %v6559, %v6561
          %v6563 = vrot.slane %v6555, %v6562
          %v6565 = vunpack.c.l.s4 1983009808
          %v6566 = vunpack.c.0.s8 %v6565
          %v6567 = vlaneseq
          %v6568 = vshrl.u32 %v6567, 7
          %v6569 = vsub.s32 %v6566, %v6568
          %v6570 = vrot.slane %v6556, %v6569
          %v6571 = vcombine.low %v6515, %v6531
          %v6572 = vcombine.high %v6515, %v6531
          %v6574 = vunpack.c.l.s4 1934713408
          %v6575 = vunpack.c.0.s8 %v6574
          %v6576 = vlaneseq
          %v6577 = vshrl.u32 %v6576, 7
          %v6578 = vsub.s32 %v6575, %v6577
          %v6579 = vrot.slane %v6571, %v6578
          %v6581 = vunpack.c.l.s4 1934713408
          %v6582 = vunpack.c.0.s8 %v6581
          %v6583 = vlaneseq
          %v6584 = vshrl.u32 %v6583, 7
          %v6585 = vsub.s32 %v6582, %v6584
          %v6586 = vrot.slane %v6572, %v6585
          %v6587 = vcombine.low %v6522, %v6538
          %v6588 = vcombine.high %v6522, %v6538
          %v6590 = vunpack.c.l.s4 1934713408
          %v6591 = vunpack.c.0.s8 %v6590
          %v6592 = vlaneseq
          %v6593 = vshrl.u32 %v6592, 7
          %v6594 = vsub.s32 %v6591, %v6593
          %v6595 = vrot.slane %v6587, %v6594
          %v6597 = vunpack.c.l.s4 1934713408
          %v6598 = vunpack.c.0.s8 %v6597
          %v6599 = vlaneseq
          %v6600 = vshrl.u32 %v6599, 7
          %v6601 = vsub.s32 %v6598, %v6600
          %v6602 = vrot.slane %v6588, %v6601
          %v6603 = vcombine.low %v6547, %v6563
          %v6604 = vcombine.high %v6547, %v6563
          %v6606 = vunpack.c.l.s4 1934713408
          %v6607 = vunpack.c.0.s8 %v6606
          %v6608 = vlaneseq
          %v6609 = vshrl.u32 %v6608, 7
          %v6610 = vsub.s32 %v6607, %v6609
          %v6611 = vrot.slane %v6603, %v6610
          %v6613 = vunpack.c.l.s4 1934713408
          %v6614 = vunpack.c.0.s8 %v6613
          %v6615 = vlaneseq
          %v6616 = vshrl.u32 %v6615, 7
          %v6617 = vsub.s32 %v6614, %v6616
          %v6618 = vrot.slane %v6604, %v6617
          %v6619 = vcombine.low %v6554, %v6570
          %v6620 = vcombine.high %v6554, %v6570
          %v6622 = vunpack.c.l.s4 1934713408
          %v6623 = vunpack.c.0.s8 %v6622
          %v6624 = vlaneseq
          %v6625 = vshrl.u32 %v6624, 7
          %v6626 = vsub.s32 %v6623, %v6625
          %v6627 = vrot.slane %v6619, %v6626
          %v6629 = vunpack.c.l.s4 1934713408
          %v6630 = vunpack.c.0.s8 %v6629
          %v6631 = vlaneseq
          %v6632 = vshrl.u32 %v6631, 7
          %v6633 = vsub.s32 %v6630, %v6632
          %v6634 = vrot.slane %v6620, %v6633
          %v6635 = vcombine.low %v6579, %v6611
          %v6636 = vcombine.high %v6579, %v6611
          %v6637 = vcombine.low %v6586, %v6618
          %v6638 = vcombine.high %v6586, %v6618
          %v6639 = vcombine.low %v6595, %v6627
          %v6640 = vcombine.high %v6595, %v6627
          %v6641 = vcombine.low %v6602, %v6634
          %v6642 = vcombine.high %v6602, %v6634
          %6644 = vrot.lane.b32.xlu0 %v6636, 64
          %v6645 = vpop.permute.xlu0 %6644
          %6648 = vrot.lane.b32.xlu0 %v6638, 64
          %v6649 = vpop.permute.xlu0 %6648
          %6652 = vrot.lane.b32.xlu0 %v6640, 64
          %v6653 = vpop.permute.xlu0 %6652
          %6656 = vrot.lane.b32.xlu0 %v6642, 64
          %v6657 = vpop.permute.xlu0 %6656
          %v6659 = vsel %vm4478, %v6635, %v6645
          %v6660 = vsel %vm4478, %v6637, %v6649
          %v6661 = vsel %vm4478, %v6639, %v6653
          %v6662 = vsel %vm4478, %v6641, %v6657
          %v6663 = vld [vmem:[#allocation15] sm:$0xff]
          %v6664 = vld [vmem:[#allocation15 + $0x8] sm:$0xff]
          %v6665 = vld [vmem:[#allocation15 + $0x10] sm:$0xff]
          %v6666 = vld [vmem:[#allocation15 + $0x18] sm:$0xff]
          %v6667 = vld [vmem:[#allocation15 + $0x20] sm:$0xff]
          %v6668 = vld [vmem:[#allocation15 + $0x28] sm:$0xff]
          %v6669 = vld [vmem:[#allocation15 + $0x30] sm:$0xff]
          %v6670 = vld [vmem:[#allocation15 + $0x38] sm:$0xff]
          %v6671 = vld [vmem:[#allocation15 + $0x40] sm:$0xff]
          %v6672 = vld [vmem:[#allocation15 + $0x48] sm:$0xff]
          %v6673 = vld [vmem:[#allocation15 + $0x50] sm:$0xff]
          %v6674 = vld [vmem:[#allocation15 + $0x58] sm:$0xff]
          %v6675 = vld [vmem:[#allocation15 + $0x60] sm:$0xff]
          %v6676 = vld [vmem:[#allocation15 + $0x68] sm:$0xff]
          %v6677 = vld [vmem:[#allocation15 + $0x70] sm:$0xff]
          %v6678 = vld [vmem:[#allocation15 + $0x78] sm:$0xff]
          %v6679 = vld [vmem:[#allocation15 + $0x80] sm:$0xff]
          %v6680 = vld [vmem:[#allocation15 + $0x88] sm:$0xff]
          %v6681 = vld [vmem:[#allocation15 + $0x90] sm:$0xff]
          %v6682 = vld [vmem:[#allocation15 + $0x98] sm:$0xff]
          %v6683 = vld [vmem:[#allocation15 + $0xa0] sm:$0xff]
          %v6684 = vld [vmem:[#allocation15 + $0xa8] sm:$0xff]
          %v6685 = vld [vmem:[#allocation15 + $0xb0] sm:$0xff]
          %v6686 = vld [vmem:[#allocation15 + $0xb8] sm:$0xff]
          %v6687 = vld [vmem:[#allocation15 + $0xc0] sm:$0xff]
          %v6688 = vld [vmem:[#allocation15 + $0xc8] sm:$0xff]
          %v6689 = vld [vmem:[#allocation15 + $0xd0] sm:$0xff]
          %v6690 = vld [vmem:[#allocation15 + $0xd8] sm:$0xff]
          %v6691 = vld [vmem:[#allocation15 + $0xe0] sm:$0xff]
          %v6692 = vld [vmem:[#allocation15 + $0xe8] sm:$0xff]
          %v6693 = vld [vmem:[#allocation15 + $0xf0] sm:$0xff]
          %v6694 = vld [vmem:[#allocation15 + $0xf8] sm:$0xff]
          %v6695 = vld [vmem:[#allocation15 + $0x100] sm:$0xff]
          %v6696 = vld [vmem:[#allocation15 + $0x108] sm:$0xff]
          %v6697 = vld [vmem:[#allocation15 + $0x110] sm:$0xff]
          %v6698 = vld [vmem:[#allocation15 + $0x118] sm:$0xff]
          %v6699 = vld [vmem:[#allocation15 + $0x120] sm:$0xff]
          %v6700 = vld [vmem:[#allocation15 + $0x128] sm:$0xff]
          %v6701 = vld [vmem:[#allocation15 + $0x130] sm:$0xff]
          %v6702 = vld [vmem:[#allocation15 + $0x138] sm:$0xff]
          %v6703 = vld [vmem:[#allocation15 + $0x140] sm:$0xff]
          %v6704 = vld [vmem:[#allocation15 + $0x148] sm:$0xff]
          %v6705 = vld [vmem:[#allocation15 + $0x150] sm:$0xff]
          %v6706 = vld [vmem:[#allocation15 + $0x158] sm:$0xff]
          %v6707 = vld [vmem:[#allocation15 + $0x160] sm:$0xff]
          %v6708 = vld [vmem:[#allocation15 + $0x168] sm:$0xff]
          %v6709 = vld [vmem:[#allocation15 + $0x170] sm:$0xff]
          %v6710 = vld [vmem:[#allocation15 + $0x178] sm:$0xff]
          %v6711 = vld [vmem:[#allocation15 + $0x180] sm:$0xff]
          %v6712 = vld [vmem:[#allocation15 + $0x188] sm:$0xff]
          %v6713 = vld [vmem:[#allocation15 + $0x190] sm:$0xff]
          %v6714 = vld [vmem:[#allocation15 + $0x198] sm:$0xff]
          %v6715 = vld [vmem:[#allocation15 + $0x1a0] sm:$0xff]
          %v6716 = vld [vmem:[#allocation15 + $0x1a8] sm:$0xff]
          %v6717 = vld [vmem:[#allocation15 + $0x1b0] sm:$0xff]
          %v6718 = vld [vmem:[#allocation15 + $0x1b8] sm:$0xff]
          %v6719 = vld [vmem:[#allocation15 + $0x1c0] sm:$0xff]
          %v6720 = vld [vmem:[#allocation15 + $0x1c8] sm:$0xff]
          %v6721 = vld [vmem:[#allocation15 + $0x1d0] sm:$0xff]
          %v6722 = vld [vmem:[#allocation15 + $0x1d8] sm:$0xff]
          %v6723 = vld [vmem:[#allocation15 + $0x1e0] sm:$0xff]
          %v6724 = vld [vmem:[#allocation15 + $0x1e8] sm:$0xff]
          %v6725 = vld [vmem:[#allocation15 + $0x1f0] sm:$0xff]
          %v6726 = vld [vmem:[#allocation15 + $0x1f8] sm:$0xff]
          %6727 = vmatprep.subr.mxu0 0.0
          %6728 = vmatpush1.msra.mxu0 %v6663
          %6729 = vmatprep.subr.mxu0 0.0
          %6730 = vmatpush1.msra.mxu0 %v6664
          %6731 = vmatprep.subr.mxu0 0.0
          %6732 = vmatpush1.msra.mxu0 %v6665
          %6733 = vmatprep.subr.mxu0 0.0
          %6734 = vmatpush1.msra.mxu0 %v6666
          %6735 = vmatprep.subr.mxu0 0.0
          %6736 = vmatpush1.msra.mxu0 %v6667
          %6737 = vmatprep.subr.mxu0 0.0
          %6738 = vmatpush1.msra.mxu0 %v6668
          %6739 = vmatprep.subr.mxu0 0.0
          %6740 = vmatpush1.msra.mxu0 %v6669
          %6741 = vmatprep.subr.mxu0 0.0
          %6742 = vmatpush1.msra.mxu0 %v6670
          %6743 = vmatprep.subr.mxu0 0.0
          %6744 = vmatpush1.msra.mxu0 %v6671
          %6745 = vmatprep.subr.mxu0 0.0
          %6746 = vmatpush1.msra.mxu0 %v6672
          %6747 = vmatprep.subr.mxu0 0.0
          %6748 = vmatpush1.msra.mxu0 %v6673
          %6749 = vmatprep.subr.mxu0 0.0
          %6750 = vmatpush1.msra.mxu0 %v6674
          %6751 = vmatprep.subr.mxu0 0.0
          %6752 = vmatpush1.msra.mxu0 %v6675
          %6753 = vmatprep.subr.mxu0 0.0
          %6754 = vmatpush1.msra.mxu0 %v6676
          %6755 = vmatprep.subr.mxu0 0.0
          %6756 = vmatpush1.msra.mxu0 %v6677
          %6757 = vmatprep.subr.mxu0 0.0
          %6758 = vmatpush1.msra.mxu0 %v6678
          %6759 = vmatprep.subr.mxu0 0.0
          %6760 = vmatpush1.msra.mxu0 %v6679
          %6761 = vmatprep.subr.mxu0 0.0
          %6762 = vmatpush1.msra.mxu0 %v6680
          %6763 = vmatprep.subr.mxu0 0.0
          %6764 = vmatpush1.msra.mxu0 %v6681
          %6765 = vmatprep.subr.mxu0 0.0
          %6766 = vmatpush1.msra.mxu0 %v6682
          %6767 = vmatprep.subr.mxu0 0.0
          %6768 = vmatpush1.msra.mxu0 %v6683
          %6769 = vmatprep.subr.mxu0 0.0
          %6770 = vmatpush1.msra.mxu0 %v6684
          %6771 = vmatprep.subr.mxu0 0.0
          %6772 = vmatpush1.msra.mxu0 %v6685
          %6773 = vmatprep.subr.mxu0 0.0
          %6774 = vmatpush1.msra.mxu0 %v6686
          %6775 = vmatprep.subr.mxu0 0.0
          %6776 = vmatpush1.msra.mxu0 %v6687
          %6777 = vmatprep.subr.mxu0 0.0
          %6778 = vmatpush1.msra.mxu0 %v6688
          %6779 = vmatprep.subr.mxu0 0.0
          %6780 = vmatpush1.msra.mxu0 %v6689
          %6781 = vmatprep.subr.mxu0 0.0
          %6782 = vmatpush1.msra.mxu0 %v6690
          %6783 = vmatprep.subr.mxu0 0.0
          %6784 = vmatpush1.msra.mxu0 %v6691
          %6785 = vmatprep.subr.mxu0 0.0
          %6786 = vmatpush1.msra.mxu0 %v6692
          %6787 = vmatprep.subr.mxu0 0.0
          %6788 = vmatpush1.msra.mxu0 %v6693
          %6789 = vmatprep.subr.mxu0 0.0
          %6790 = vmatpush1.msra.mxu0 %v6694
          %6791 = vmatprep.mubr.f32.mxu0 %v6660
          %6792 = vmatmul.mubr.f32.gmra.mrb[0].mxu0 %v6659
          %v6793 = vpop.f32.mrb[0].mxu0
          %v6794 = vadd.f32 0.0, %v6793
          %v6795 = vpop.f32.mrb[0].mxu0
          %6796 = vdwg.mxu0
          %6797 = vmatprep.subr.mxu0 0.0
          %6798 = vmatpush1.msra.mxu0 %v6695
          %6799 = vmatprep.subr.mxu0 0.0
          %6800 = vmatpush1.msra.mxu0 %v6696
          %6801 = vmatprep.subr.mxu0 0.0
          %6802 = vmatpush1.msra.mxu0 %v6697
          %6803 = vmatprep.subr.mxu0 0.0
          %6804 = vmatpush1.msra.mxu0 %v6698
          %6805 = vmatprep.subr.mxu0 0.0
          %6806 = vmatpush1.msra.mxu0 %v6699
          %6807 = vmatprep.subr.mxu0 0.0
          %6808 = vmatpush1.msra.mxu0 %v6700
          %6809 = vmatprep.subr.mxu0 0.0
          %6810 = vmatpush1.msra.mxu0 %v6701
          %6811 = vmatprep.subr.mxu0 0.0
          %6812 = vmatpush1.msra.mxu0 %v6702
          %6813 = vmatprep.subr.mxu0 0.0
          %6814 = vmatpush1.msra.mxu0 %v6703
          %6815 = vmatprep.subr.mxu0 0.0
          %6816 = vmatpush1.msra.mxu0 %v6704
          %6817 = vmatprep.subr.mxu0 0.0
          %6818 = vmatpush1.msra.mxu0 %v6705
          %6819 = vmatprep.subr.mxu0 0.0
          %6820 = vmatpush1.msra.mxu0 %v6706
          %6821 = vmatprep.subr.mxu0 0.0
          %6822 = vmatpush1.msra.mxu0 %v6707
          %6823 = vmatprep.subr.mxu0 0.0
          %6824 = vmatpush1.msra.mxu0 %v6708
          %6825 = vmatprep.subr.mxu0 0.0
          %6826 = vmatpush1.msra.mxu0 %v6709
          %6827 = vmatprep.subr.mxu0 0.0
          %6828 = vmatpush1.msra.mxu0 %v6710
          %6829 = vmatprep.subr.mxu0 0.0
          %6830 = vmatpush1.msra.mxu0 %v6711
          %6831 = vmatprep.subr.mxu0 0.0
          %6832 = vmatpush1.msra.mxu0 %v6712
          %6833 = vmatprep.subr.mxu0 0.0
          %6834 = vmatpush1.msra.mxu0 %v6713
          %6835 = vmatprep.subr.mxu0 0.0
          %6836 = vmatpush1.msra.mxu0 %v6714
          %6837 = vmatprep.subr.mxu0 0.0
          %6838 = vmatpush1.msra.mxu0 %v6715
          %6839 = vmatprep.subr.mxu0 0.0
          %6840 = vmatpush1.msra.mxu0 %v6716
          %6841 = vmatprep.subr.mxu0 0.0
          %6842 = vmatpush1.msra.mxu0 %v6717
          %6843 = vmatprep.subr.mxu0 0.0
          %6844 = vmatpush1.msra.mxu0 %v6718
          %6845 = vmatprep.subr.mxu0 0.0
          %6846 = vmatpush1.msra.mxu0 %v6719
          %6847 = vmatprep.subr.mxu0 0.0
          %6848 = vmatpush1.msra.mxu0 %v6720
          %6849 = vmatprep.subr.mxu0 0.0
          %6850 = vmatpush1.msra.mxu0 %v6721
          %6851 = vmatprep.subr.mxu0 0.0
          %6852 = vmatpush1.msra.mxu0 %v6722
          %6853 = vmatprep.subr.mxu0 0.0
          %6854 = vmatpush1.msra.mxu0 %v6723
          %6855 = vmatprep.subr.mxu0 0.0
          %6856 = vmatpush1.msra.mxu0 %v6724
          %6857 = vmatprep.subr.mxu0 0.0
          %6858 = vmatpush1.msra.mxu0 %v6725
          %6859 = vmatprep.subr.mxu0 0.0
          %6860 = vmatpush1.msra.mxu0 %v6726
          %6861 = vmatprep.mubr.f32.mxu0 %v6662
          %6862 = vmatmul.mubr.f32.gmra.mrb[0].mxu0 %v6661
          %v6863 = vpop.f32.mrb[0].mxu0
          %v6864 = vadd.f32 %v6794, %v6863
          %v6865 = vpop.f32.mrb[0].mxu0
          %6866 = vdwg.mxu0
          %6867 = vadd.xlane.f32.xlu0 %v6864
          %v6868 = vpop.xlane.xlu0 %6867
          %v6869 = vmul.f32 %v6868, %v3718
          %v6870 = vsub.f32 %v6864, %v6869
          %v6871 = vmul.f32 %v6870, %v6870
          %6872 = vadd.xlane.f32.xlu0 %v6871
          %v6873 = vpop.xlane.xlu0 %6872
          %v6874 = vmul.f32 %v6873, %v3718
          %v6875 = vadd.f32 %v6874, 1e-05
          %v6876 = vrsqrt.pop %v6875
          %v6877 = vmul.f32 %v6870, %v6876
          %v6878 = vld [vmem:[%s9] sm:$0x1]
          %v6880 = vlaneseq
          %v6881 = vshrl.u32 %v6880, 7
          %v6882 = vsub.s32 0, %v6881
          %v6883 = vrot.slane %v6878, %v6882
          %v6885 = vmul.f32 %v6877, %v6883
          %v6886 = vld [vmem:[%s10] sm:$0x1]
          %v6888 = vlaneseq
          %v6889 = vshrl.u32 %v6888, 7
          %v6890 = vsub.s32 0, %v6889
          %v6891 = vrot.slane %v6886, %v6890
          %v6893 = vadd.f32 %v6885, %v6891
          %6894 = vst [vmem:[%s510] sm:$0xff] %v6893
        $region96: #{tpu_custom_call.1} parent=63 // pred_fallthru
          _
        %s6895 = sand.u32 %s296, 1
        %s6896 = scalar_lea.sflag [#allocation8], %s6895
        %s6897 = sand.u32 %s296, 1
        %s6898 = smul.addr %s6897, 8
        %s6899 = scalar_lea.vmem [#allocation17], %s6898
        // Predicated region
        $region97: #{tpu_custom_call.1} parent=63 // pred_check
          %p6900 = pneg %p306
        $region98: #{tpu_custom_call.1} parent=63 // pred_check_branch
          %6902 = sbr.rel (%p6900) target = $region100
        $region99: #{tpu_custom_call.1} parent=63 // pred_region
          %s6904 = ssub.s32 128, 128
          %6905 = vsyncadd %s6896, %s6904
          %s6906 = smul.addr %s37, 128
          %s6907 = scalar_lea.hbm %s11, %s6906
          %s6909 = sshll.u32 %s6899, 4
          %s6910 = int_to_ptr.vmem [resolvable:$true] %s6909
          %6912 = dma.vmem_to_hbm [thread:$0]  %s6910, 128, %s6907, %s6896
        $region100: #{tpu_custom_call.1} parent=63 // pred_fallthru
          _
      $region64: #{tpu_custom_call.1} parent=5 // pred_fallthru
        _
      %p6913 = scmp.le.s32.totalorder 2, %s28
      // Predicated region
      $region101: #{tpu_custom_call.1} parent=5 // pred_check
        %p6914 = pneg %p6913
      $region102: #{tpu_custom_call.1} parent=5 // pred_check_branch
        %6916 = sbr.rel (%p6914) target = $region104
      $region103: #{tpu_custom_call.1} parent=5 // pred_region
        %s6917 = ssub.s32 %s28, 2
        // Predicated region
        $region105: #{tpu_custom_call.1} parent=103 // pred_check
          %p6918 = pneg %p312
        $region106: #{tpu_custom_call.1} parent=103 // pred_check_branch
          %6920 = sbr.rel (%p6918) target = $region108
        $region107: #{tpu_custom_call.1} parent=103 // pred_region
          %s6921 = sand.u32 %s297, 1
          %s6922 = scalar_lea.sflag [#allocation8], %s6921
          %s6923 = sand.u32 %s297, 1
          %s6924 = smul.addr %s6923, 8
          %s6925 = scalar_lea.vmem [#allocation17], %s6924
          %6926 = dma.done %s6922, 128
        $region108: #{tpu_custom_call.1} parent=103 // pred_fallthru
          _
      $region104: #{tpu_custom_call.1} parent=5 // pred_fallthru
        _
    $region6: #{tpu_custom_call.1} parent=1 // loop_footer
      %s32 = sadd.s32 1, %s28
    $region7: #{tpu_custom_call.1} parent=1 // loop_footer_branch
      %27 = sbr.rel target = $region3
    $region8: #{tpu_custom_call.1} parent=1 // loop_exit
      _
    %6927 = vsyncpa [#allocation7], 1
    %s6928 = scalar_lea.sflag [#allocation7], 1
    %6929 = vsyncpa %s6928, 1
    %6930 = vsyncpa [#allocation10], 1
    %s6931 = scalar_lea.sflag [#allocation10], 1
    %6932 = vsyncpa %s6931, 1
    %6933 = vsyncpa [#allocation13], 1
    %6934 = vsyncpa [#allocation16], 1
    %6935 = vsyncpa [#allocation8], 1
    %s6936 = scalar_lea.sflag [#allocation8], 1
    %6937 = vsyncpa %s6936, 1

</llo_original>
